<compile_context>
chip_gen: v7x
topology: tpu7x:2x2x1
jax: 0.10.0
libtpu: 0.0.40
codegen_flags: <defaults>
</compile_context>

<pallas_src>
import functools
import math

import jax
import jax.numpy as jnp
from jax.experimental import pallas as pl
from jax.experimental.pallas import tpu as pltpu

_LN_EPS = 1e-6          # DecoderLayer(norm_layer=nn.LayerNorm, epsilon=1e-06)
_NEG_BIG = -1e30        # finite "masked" logit (exp underflows to exactly 0)


# ----------------------------------------------------------------------------
# Single fused kernel: full CPPDDecoder.forward_test for one batch element.
# ----------------------------------------------------------------------------

def _cppd_kernel(pos_vis_ref,
                 wq_ref, bq_ref, wkv_ref, bkv_ref, wp_ref, bp_ref,
                 g1_ref, be1_ref, w1_ref, b1_ref, w2_ref, b2_ref,
                 g2_ref, be2_ref,
                 fcw_ref, fcb_ref,
                 out_ref, *,
                 num_heads, head_dim, max_len_p1, num_layer, rec_layer,
                 base_scale, eps):
    L = max_len_p1
    H = num_heads
    D = head_dim

    def layer_norm(y, g, b):
        mu = jnp.mean(y, axis=-1, keepdims=True)
        var = jnp.mean((y - mu) ** 2, axis=-1, keepdims=True)
        return (y - mu) * jax.lax.rsqrt(var + eps) * g + b

    def attention(xq, xkv, li, scale, causal):
        C = xq.shape[-1]
        QN = xq.shape[0]
        N = xkv.shape[0]

        # Wide, lane-dense projections (single bf16 matmuls, f32 accumulate).
        qp = jnp.dot(xq.astype(jnp.bfloat16), wq_ref[li],
                     preferred_element_type=jnp.float32) + bq_ref[li]
        kvp = jnp.dot(xkv.astype(jnp.bfloat16), wkv_ref[li],
                      preferred_element_type=jnp.float32) + bkv_ref[li]
        qp = qp * scale
        kp = kvp[:, :C]          # k columns (PyTorch kv-linear layout)
        vp = kvp[:, C:]          # v columns

        if causal:
            row = jax.lax.broadcasted_iota(jnp.int32, (QN, N), 0)
            col = jax.lax.broadcasted_iota(jnp.int32, (QN, N), 1)
            neg = jnp.where(col <= row, 0.0, _NEG_BIG).astype(jnp.float32)

        # Per-head attention via static lane slices of the wide projections.
        ctx_heads = []
        for h in range(H):
            qh = qp[:, h * D:(h + 1) * D].astype(jnp.bfloat16)
            kh = kp[:, h * D:(h + 1) * D].astype(jnp.bfloat16)
            vh = vp[:, h * D:(h + 1) * D].astype(jnp.bfloat16)
            s = jax.lax.dot_general(
                qh, kh, (((1,), (1,)), ((), ())),
                preferred_element_type=jnp.float32)               # (QN, N)
            if causal:
                s = s + neg
            m = jnp.max(s, axis=-1, keepdims=True)
            p = jnp.exp(s - m)
            p = p / jnp.sum(p, axis=-1, keepdims=True)            # exact
            ctx_heads.append(jnp.dot(p.astype(jnp.bfloat16), vh,
                                     preferred_element_type=jnp.float32))

        # proj(concat_h ctx_h): single (QN, C) x (C, C) matmul.
        ctx = jnp.concatenate(ctx_heads, axis=-1)                 # (QN, C)
        return jnp.dot(ctx.astype(jnp.bfloat16), wp_ref[li],
                       preferred_element_type=jnp.float32) + bp_ref[li]

    def decoder_layer(xq, xkv, li, scale, causal=False):
        a = attention(xq, xkv, li, scale, causal)
        x1 = layer_norm(xq + a, g1_ref[li], be1_ref[li])
        hm = jnp.dot(x1.astype(jnp.bfloat16), w1_ref[li],
                     preferred_element_type=jnp.float32) + b1_ref[li]
        hm = 0.5 * hm * (1.0 + jax.lax.erf(hm * (1.0 / math.sqrt(2.0))))
        mo = jnp.dot(hm.astype(jnp.bfloat16), w2_ref[li],
                     preferred_element_type=jnp.float32) + b2_ref[li]
        return layer_norm(x1 + mo, g2_ref[li], be2_ref[li])

    # ---- activations (all VMEM-resident for the whole stack) ----------------
    x_pos = pos_vis_ref[0]                       # (L + S, C) = [pos_embed ; vis]
    x_char = x_pos[L:, :]                        # (S, C)  visual features

    # char / pos node decoder stacks (independent streams).
    for i in range(num_layer):
        x_char = decoder_layer(x_char, x_char, i, base_scale)
        x_pos = decoder_layer(x_pos, x_pos[L:, :], num_layer + i, base_scale)

    # edge decoder.
    pos_feats = x_pos[:L, :]                     # (L, C)
    for i in range(rec_layer):
        li = 2 * num_layer + i
        if (rec_layer + i) % 2 == 0:
            pos_feats = decoder_layer(pos_feats, pos_feats, li, base_scale,
                                      causal=True)
        else:
            pos_feats = decoder_layer(pos_feats, x_char, li, 1.0)

    # edge_fc + softmax (lane-dense padded output; padded logits biased to
    # -1e30 -> exactly zero probability, normalization unaffected).
    logits = jnp.dot(pos_feats.astype(jnp.bfloat16), fcw_ref[...],
                     preferred_element_type=jnp.float32) + fcb_ref[...]
    m = jnp.max(logits, axis=-1, keepdims=True)
    p = jnp.exp(logits - m)
    out_ref[0] = p / jnp.sum(p, axis=-1, keepdims=True)


def _const_spec(shape):
    return pl.BlockSpec(shape, lambda b, _n=len(shape): (0,) * _n)


def cppd_forward_test(x, P, *, num_heads, max_len_p1, num_layer, rec_layer,
                      out_channels):
    """Full CPPDDecoder.forward_test: one fused pallas_call over the stack."""
    B, S, C = x.shape
    L = max_len_p1
    NTOT = L + S
    LT = 2 * num_layer + rec_layer
    HID = P["w1_all"].shape[-1]
    OPAD = P["fc_w_pad"].shape[-1]
    D = C // num_heads
    base_scale = D ** -0.5

    # One-time glue outside the hot path (embedding scale + concat).
    visual_feats = x + P["vis_pos_embed"]                         # (B, S, C)
    pos_node_embed = P["pos_node_embed_tab"] * math.sqrt(C)       # (L, C)
    pos_node_embed = pos_node_embed[None] + P["char_pos_embed"]   # (1, L, C)
    pos_node_embed = jnp.tile(pos_node_embed, (B, 1, 1))          # (B, L, C)
    pos_vis0 = jnp.concatenate([pos_node_embed, visual_feats], axis=1)

    kernel = functools.partial(
        _cppd_kernel, num_heads=num_heads, head_dim=D, max_len_p1=L,
        num_layer=num_layer, rec_layer=rec_layer, base_scale=base_scale,
        eps=_LN_EPS)

    in_specs = [
        pl.BlockSpec((1, NTOT, C), lambda b: (b, 0, 0)),   # [pos_embed ; vis]
        _const_spec((LT, C, C)),       # wq
        _const_spec((LT, 1, C)),       # bq
        _const_spec((LT, C, 2 * C)),   # wkv
        _const_spec((LT, 1, 2 * C)),   # bkv
        _const_spec((LT, C, C)),       # wp
        _const_spec((LT, 1, C)),       # bp
        _const_spec((LT, 1, C)),       # ln1_g
        _const_spec((LT, 1, C)),       # ln1_b
        _const_spec((LT, C, HID)),     # w1
        _const_spec((LT, 1, HID)),     # b1
        _const_spec((LT, HID, C)),     # w2
        _const_spec((LT, 1, C)),       # b2
        _const_spec((LT, 1, C)),       # ln2_g
        _const_spec((LT, 1, C)),       # ln2_b
        _const_spec((C, OPAD)),        # edge_fc w (padded, lane-dense)
        _const_spec((1, OPAD)),        # edge_fc b (padded)
    ]

    probs = pl.pallas_call(
        kernel,
        out_shape=jax.ShapeDtypeStruct((B, L, OPAD), jnp.float32),
        grid=(B,),
        in_specs=in_specs,
        out_specs=pl.BlockSpec((1, L, OPAD), lambda b: (b, 0, 0)),
        compiler_params=pltpu.CompilerParams(
            dimension_semantics=("parallel",),
            vmem_limit_bytes=32 * 1024 * 1024),
    )(pos_vis0,
      P["wq_all"], P["bq_all"], P["wkv_all"], P["bkv_all"],
      P["wp_all"], P["bp_all"],
      P["ln1g_all"], P["ln1b_all"],
      P["w1_all"], P["b1_all"], P["w2_all"], P["b2_all"],
      P["ln2g_all"], P["ln2b_all"],
      P["fc_w_pad"], P["fc_b_pad"])

    return probs[:, :, :out_channels]


# ----------------------------------------------------------------------------
# Pure-JAX reference (PyTorch-layout weights) for correctness checking
# ----------------------------------------------------------------------------

def _ref_ln(y, g, b, eps=_LN_EPS):
    mu = y.mean(-1, keepdims=True)
    var = ((y - mu) ** 2).mean(-1, keepdims=True)
    return (y - mu) * jax.lax.rsqrt(var + eps) * g + b


def _ref_attention(q, kv, p, num_heads, scale, mask=None):
    B, QN, C = q.shape
    N = kv.shape[1]
    D = C // num_heads
    qp = (q @ p["wq"] + p["bq"]).reshape(B, QN, num_heads, D).transpose(0, 2, 1, 3)
    qp = qp * scale
    kvp = kv @ p["wkv"] + p["bkv"]
    k = kvp[..., :C].reshape(B, N, num_heads, D).transpose(0, 2, 1, 3)
    v = kvp[..., C:].reshape(B, N, num_heads, D).transpose(0, 2, 1, 3)
    attn = qp @ jnp.swapaxes(k, -1, -2)
    if mask is not None:
        attn = attn + mask[None, None]
    attn = jax.nn.softmax(attn, axis=-1)
    x = (attn @ v).transpose(0, 2, 1, 3).reshape(B, QN, C)
    return x @ p["wp"] + p["bp"]


def _ref_decoder_layer(q, kv, lp, num_heads, scale, mask=None):
    a = _ref_attention(q, kv, lp["attn"], num_heads, scale, mask)
    x1 = _ref_ln(q + a, lp["ln1_g"], lp["ln1_b"])
    h = x1 @ lp["mlp"]["w1"] + lp["mlp"]["b1"]
    h = 0.5 * h * (1.0 + jax.lax.erf(h / math.sqrt(2.0)))
    m = h @ lp["mlp"]["w2"] + lp["mlp"]["b2"]
    return _ref_ln(x1 + m, lp["ln2_g"], lp["ln2_b"])


def cppd_forward_ref(x, P, *, num_heads, max_len_p1):
    dim = x.shape[-1]
    bs = x.shape[0]
    base_scale = (dim // num_heads) ** -0.5
    visual_feats = x + P["vis_pos_embed"]
    pos_node_embed = P["pos_node_embed_tab"] * math.sqrt(dim)
    pos_node_embed = pos_node_embed[None] + P["char_pos_embed"]
    pos_node_embed = jnp.tile(pos_node_embed, (bs, 1, 1))
    char_q = visual_feats
    pos_q = jnp.concatenate([pos_node_embed, visual_feats], axis=1)
    for lc, lpo in zip(P["char_layers"], P["pos_layers"]):
        char_q = _ref_decoder_layer(char_q, char_q, lc, num_heads, base_scale)
        pos_q = _ref_decoder_layer(pos_q, pos_q[:, max_len_p1:, :], lpo,
                                   num_heads, base_scale)
    pos_feats = pos_q[:, :max_len_p1, :]
    char_vis = char_q
    rln = len(P["edge_layers"])
    for i, le in enumerate(P["edge_layers"]):
        if (rln + i) % 2 == 0:
            pos_feats = _ref_decoder_layer(pos_feats, pos_feats, le,
                                           num_heads, base_scale,
                                           mask=P["self_mask"])
        else:
            pos_feats = _ref_decoder_layer(pos_feats, char_vis, le,
                                           num_heads, 1.0)
    logits = pos_feats @ P["edge_fc_w"] + P["edge_fc_b"]
    return jax.nn.softmax(logits, axis=-1)


# ----------------------------------------------------------------------------
# Parameter init (PyTorch layout) and kernel-layout preparation
# ----------------------------------------------------------------------------

def _linear(key, din, dout):
    kw, kb = jax.random.split(key)
    # NOTE: the PyTorch module zero-inits biases / unit LN; small random values
    # are used here so the reference check exercises every parameter path.
    w = jax.random.normal(kw, (din, dout), jnp.float32) * 0.02
    b = jax.random.normal(kb, (1, dout), jnp.float32) * 0.02
    return w, b


def _raw_layer(key, dim, mlp_ratio=4.0):
    ks = jax.random.split(key, 9)
    wq, bq = _linear(ks[0], dim, dim)
    wkv, bkv = _linear(ks[1], dim, 2 * dim)
    wp, bp = _linear(ks[2], dim, dim)
    hid = int(dim * mlp_ratio)
    w1, b1 = _linear(ks[3], dim, hid)
    w2, b2 = _linear(ks[4], hid, dim)
    return {
        "attn": {"wq": wq, "bq": bq, "wkv": wkv, "bkv": bkv, "wp": wp, "bp": bp},
        "ln1_g": 1.0 + 0.1 * jax.random.normal(ks[5], (1, dim), jnp.float32),
        "ln1_b": 0.02 * jax.random.normal(ks[6], (1, dim), jnp.float32),
        "mlp": {"w1": w1, "b1": b1, "w2": w2, "b2": b2},
        "ln2_g": 1.0 + 0.1 * jax.random.normal(ks[7], (1, dim), jnp.float32),
        "ln2_b": 0.02 * jax.random.normal(ks[8], (1, dim), jnp.float32),
    }


def init_raw_params(key, *, dim, out_channels, max_len_p1, vis_seq,
                    num_layer, rec_layer):
    keys = jax.random.split(key, 4 + 2 * num_layer + rec_layer)
    it = iter(keys)
    P = {}
    P["pos_node_embed_tab"] = (
        jax.random.normal(next(it), (max_len_p1, dim), jnp.float32) * 0.02)
    P["char_pos_embed"] = (
        jax.random.normal(next(it), (1, max_len_p1, dim), jnp.float32) * 0.02)
    P["vis_pos_embed"] = (
        jax.random.normal(next(it), (1, vis_seq, dim), jnp.float32) * 0.02)
    P["char_layers"] = [_raw_layer(next(it), dim) for _ in range(num_layer)]
    P["pos_layers"] = [_raw_layer(next(it), dim) for _ in range(num_layer)]
    P["edge_layers"] = [_raw_layer(next(it), dim) for _ in range(rec_layer)]
    P["edge_fc_w"], P["edge_fc_b"] = _linear(next(it), dim, out_channels)
    # reference-path causal additive mask (strict causal -> -inf is safe here)
    tri = jnp.tril(jnp.ones((max_len_p1, max_len_p1), jnp.float32))
    P["self_mask"] = jnp.where(tri > 0, 0.0, -jnp.inf)
    return P


def prepare_params(Praw, *, out_channels):
    """Stack per-layer weights [char..., pos..., edge...] for the fused kernel."""
    layers = Praw["char_layers"] + Praw["pos_layers"] + Praw["edge_layers"]

    def stack(get, dtype):
        return jnp.stack([get(l) for l in layers]).astype(dtype)

    dim = Praw["edge_fc_w"].shape[0]
    opad = ((out_channels + 127) // 128) * 128          # lane-dense output
    w_pad = jnp.zeros((dim, opad), jnp.float32)
    w_pad = w_pad.at[:, :out_channels].set(Praw["edge_fc_w"])
    b_pad = jnp.full((1, opad), _NEG_BIG, jnp.float32)  # padded logits -> 0 prob
    b_pad = b_pad.at[:, :out_channels].set(Praw["edge_fc_b"])

    return {
        "vis_pos_embed": Praw["vis_pos_embed"],
        "pos_node_embed_tab": Praw["pos_node_embed_tab"],
        "char_pos_embed": Praw["char_pos_embed"],
        "wq_all": stack(lambda l: l["attn"]["wq"], jnp.bfloat16),
        "bq_all": stack(lambda l: l["attn"]["bq"], jnp.float32),
        "wkv_all": stack(lambda l: l["attn"]["wkv"], jnp.bfloat16),
        "bkv_all": stack(lambda l: l["attn"]["bkv"], jnp.float32),
        "wp_all": stack(lambda l: l["attn"]["wp"], jnp.bfloat16),
        "bp_all": stack(lambda l: l["attn"]["bp"], jnp.float32),
        "ln1g_all": stack(lambda l: l["ln1_g"], jnp.float32),
        "ln1b_all": stack(lambda l: l["ln1_b"], jnp.float32),
        "w1_all": stack(lambda l: l["mlp"]["w1"], jnp.bfloat16),
        "b1_all": stack(lambda l: l["mlp"]["b1"], jnp.float32),
        "w2_all": stack(lambda l: l["mlp"]["w2"], jnp.bfloat16),
        "b2_all": stack(lambda l: l["mlp"]["b2"], jnp.float32),
        "ln2g_all": stack(lambda l: l["ln2_g"], jnp.float32),
        "ln2b_all": stack(lambda l: l["ln2_b"], jnp.float32),
        "fc_w_pad": w_pad.astype(jnp.bfloat16),
        "fc_b_pad": b_pad,
    }


# ----------------------------------------------------------------------------
# Main
# ----------------------------------------------------------------------------

if __name__ == "__main__":
    B = 2
    DIM = 64                 # in_channels
    OUT_CH = 10              # out_channels
    MAX_LEN = 4              # module max_len -> internal max_len+1 = 5
    VIS_SEQ = 16
    NUM_LAYER = 2
    REC_LAYER = 2            # exercises both edge variants (masked self + cross)
    NUM_HEADS = DIM // 32    # = 2, as in the PyTorch default

    key = jax.random.PRNGKey(0)
    kx, kp = jax.random.split(key)
    x = jax.random.normal(kx, (B, VIS_SEQ, DIM), jnp.float32)

    raw_params = init_raw_params(kp, dim=DIM, out_channels=OUT_CH,
                                 max_len_p1=MAX_LEN + 1, vis_seq=VIS_SEQ,
                                 num_layer=NUM_LAYER, rec_layer=REC_LAYER)
    params = prepare_params(raw_params, out_channels=OUT_CH)

    forward = jax.jit(functools.partial(
        cppd_forward_test, num_heads=NUM_HEADS, max_len_p1=MAX_LEN + 1,
        num_layer=NUM_LAYER, rec_layer=REC_LAYER, out_channels=OUT_CH))
    reference = jax.jit(functools.partial(
        cppd_forward_ref, num_heads=NUM_HEADS, max_len_p1=MAX_LEN + 1))

    edge_logits = forward(x, params)
    jax.block_until_ready(edge_logits)

    ref_logits = reference(x, raw_params)
    jax.block_until_ready(ref_logits)

    assert edge_logits.shape == (B, MAX_LEN + 1, OUT_CH)
    # softmax rows sum to 1 (exact normalization in the fused kernel)
    assert jnp.allclose(edge_logits.sum(-1), 1.0, atol=1e-4)
    # matches the f32 pure-JAX reference within bf16-matmul tolerance
    assert jnp.allclose(edge_logits, ref_logits, atol=2e-2), \
        float(jnp.max(jnp.abs(edge_logits - ref_logits)))
    print("KERNEL_OK")
</pallas_src>

<mosaic_0001>
module attributes {stable_mosaic.version = 11 : i64} {
  func.func @_cppd_kernel(%arg0: i32, %arg1: memref<1x21x64xf32, #tpu.memory_space<vmem>>, %arg2: memref<6x64x64xbf16, #tpu.memory_space<vmem>>, %arg3: memref<6x1x64xf32, #tpu.memory_space<vmem>>, %arg4: memref<6x64x128xbf16, #tpu.memory_space<vmem>>, %arg5: memref<6x1x128xf32, #tpu.memory_space<vmem>>, %arg6: memref<6x64x64xbf16, #tpu.memory_space<vmem>>, %arg7: memref<6x1x64xf32, #tpu.memory_space<vmem>>, %arg8: memref<6x1x64xf32, #tpu.memory_space<vmem>>, %arg9: memref<6x1x64xf32, #tpu.memory_space<vmem>>, %arg10: memref<6x64x256xbf16, #tpu.memory_space<vmem>>, %arg11: memref<6x1x256xf32, #tpu.memory_space<vmem>>, %arg12: memref<6x256x64xbf16, #tpu.memory_space<vmem>>, %arg13: memref<6x1x64xf32, #tpu.memory_space<vmem>>, %arg14: memref<6x1x64xf32, #tpu.memory_space<vmem>>, %arg15: memref<6x1x64xf32, #tpu.memory_space<vmem>>, %arg16: memref<64x128xbf16, #tpu.memory_space<vmem>>, %arg17: memref<1x128xf32, #tpu.memory_space<vmem>>, %arg18: memref<1x5x128xf32, #tpu.memory_space<vmem>>) attributes {dimension_semantics = [#tpu.dimension_semantics<parallel>], iteration_bounds = array<i64: 2>, scalar_prefetch = 0 : i64, scratch_operands = 0 : i64, tpu.core_type = #tpu.core_type<tc>, window_params = [{transform_indices = @transform_0, window_bounds = array<i64: 1, 21, 64>}, {pipeline_mode = #tpu.pipeline_mode<synchronous>, transform_indices = @transform_1, window_bounds = array<i64: 6, 64, 64>}, {pipeline_mode = #tpu.pipeline_mode<synchronous>, transform_indices = @transform_2, window_bounds = array<i64: 6, 1, 64>}, {pipeline_mode = #tpu.pipeline_mode<synchronous>, transform_indices = @transform_3, window_bounds = array<i64: 6, 64, 128>}, {pipeline_mode = #tpu.pipeline_mode<synchronous>, transform_indices = @transform_4, window_bounds = array<i64: 6, 1, 128>}, {pipeline_mode = #tpu.pipeline_mode<synchronous>, transform_indices = @transform_5, window_bounds = array<i64: 6, 64, 64>}, {pipeline_mode = #tpu.pipeline_mode<synchronous>, transform_indices = @transform_6, window_bounds = array<i64: 6, 1, 64>}, {pipeline_mode = #tpu.pipeline_mode<synchronous>, transform_indices = @transform_7, window_bounds = array<i64: 6, 1, 64>}, {pipeline_mode = #tpu.pipeline_mode<synchronous>, transform_indices = @transform_8, window_bounds = array<i64: 6, 1, 64>}, {pipeline_mode = #tpu.pipeline_mode<synchronous>, transform_indices = @transform_9, window_bounds = array<i64: 6, 64, 256>}, {pipeline_mode = #tpu.pipeline_mode<synchronous>, transform_indices = @transform_10, window_bounds = array<i64: 6, 1, 256>}, {pipeline_mode = #tpu.pipeline_mode<synchronous>, transform_indices = @transform_11, window_bounds = array<i64: 6, 256, 64>}, {pipeline_mode = #tpu.pipeline_mode<synchronous>, transform_indices = @transform_12, window_bounds = array<i64: 6, 1, 64>}, {pipeline_mode = #tpu.pipeline_mode<synchronous>, transform_indices = @transform_13, window_bounds = array<i64: 6, 1, 64>}, {pipeline_mode = #tpu.pipeline_mode<synchronous>, transform_indices = @transform_14, window_bounds = array<i64: 6, 1, 64>}, {pipeline_mode = #tpu.pipeline_mode<synchronous>, transform_indices = @transform_15, window_bounds = array<i64: 64, 128>}, {pipeline_mode = #tpu.pipeline_mode<synchronous>, transform_indices = @transform_16, window_bounds = array<i64: 1, 128>}, {transform_indices = @transform_17, window_bounds = array<i64: 1, 5, 128>}]} {
    %c0 = arith.constant 0 : index
    %c0_0 = arith.constant 0 : index
    %c0_1 = arith.constant 0 : index
    %0 = vector.load %arg1[%c0, %c0_0, %c0_1] : memref<1x21x64xf32, #tpu.memory_space<vmem>>, vector<1x21x64xf32>
    %1 = vector.shape_cast %0 : vector<1x21x64xf32> to vector<21x64xf32>
    %2 = vector.extract_strided_slice %1 {offsets = [5, 0], sizes = [16, 64], strides = [1, 1]} : vector<21x64xf32> to vector<16x64xf32>
    %3 = arith.truncf %2 : vector<16x64xf32> to vector<16x64xbf16>
    %c0_2 = arith.constant 0 : index
    %c0_3 = arith.constant 0 : index
    %c0_4 = arith.constant 0 : index
    %4 = vector.load %arg2[%c0_2, %c0_3, %c0_4] : memref<6x64x64xbf16, #tpu.memory_space<vmem>>, vector<1x64x64xbf16>
    %5 = vector.shape_cast %4 : vector<1x64x64xbf16> to vector<64x64xbf16>
    %cst = arith.constant dense<0.000000e+00> : vector<16x64xf32>
    %6 = tpu.matmul %3, %5, %cst {dimension_numbers = #tpu.dot_dimension_numbers<[1], [0], [0], [1], [0, 0, 1, 1], [], []>} : vector<16x64xbf16>, vector<64x64xbf16>, vector<16x64xf32> -> vector<16x64xf32>
    %c0_5 = arith.constant 0 : index
    %c0_6 = arith.constant 0 : index
    %c0_7 = arith.constant 0 : index
    %7 = vector.load %arg3[%c0_5, %c0_6, %c0_7] : memref<6x1x64xf32, #tpu.memory_space<vmem>>, vector<1x1x64xf32>
    %8 = vector.shape_cast %7 : vector<1x1x64xf32> to vector<1x64xf32>
    %9 = vector.broadcast %8 : vector<1x64xf32> to vector<16x64xf32>
    %10 = arith.addf %6, %9 : vector<16x64xf32>
    %11 = arith.truncf %2 : vector<16x64xf32> to vector<16x64xbf16>
    %c0_8 = arith.constant 0 : index
    %c0_9 = arith.constant 0 : index
    %c0_10 = arith.constant 0 : index
    %12 = vector.load %arg4[%c0_8, %c0_9, %c0_10] : memref<6x64x128xbf16, #tpu.memory_space<vmem>>, vector<1x64x128xbf16>
    %13 = vector.shape_cast %12 : vector<1x64x128xbf16> to vector<64x128xbf16>
    %cst_11 = arith.constant dense<0.000000e+00> : vector<16x128xf32>
    %14 = tpu.matmul %11, %13, %cst_11 {dimension_numbers = #tpu.dot_dimension_numbers<[1], [0], [0], [1], [0, 0, 1, 1], [], []>} : vector<16x64xbf16>, vector<64x128xbf16>, vector<16x128xf32> -> vector<16x128xf32>
    %c0_12 = arith.constant 0 : index
    %c0_13 = arith.constant 0 : index
    %c0_14 = arith.constant 0 : index
    %15 = vector.load %arg5[%c0_12, %c0_13, %c0_14] : memref<6x1x128xf32, #tpu.memory_space<vmem>>, vector<1x1x128xf32>
    %16 = vector.shape_cast %15 : vector<1x1x128xf32> to vector<1x128xf32>
    %17 = vector.broadcast %16 : vector<1x128xf32> to vector<16x128xf32>
    %18 = arith.addf %14, %17 : vector<16x128xf32>
    %cst_15 = arith.constant 0.176776692 : f32
    %19 = vector.broadcast %cst_15 : f32 to vector<16x64xf32>
    %20 = arith.mulf %10, %19 : vector<16x64xf32>
    %21 = vector.extract_strided_slice %18 {offsets = [0, 0], sizes = [16, 64], strides = [1, 1]} : vector<16x128xf32> to vector<16x64xf32>
    %22 = vector.extract_strided_slice %18 {offsets = [0, 64], sizes = [16, 64], strides = [1, 1]} : vector<16x128xf32> to vector<16x64xf32>
    %23 = vector.extract_strided_slice %20 {offsets = [0, 0], sizes = [16, 32], strides = [1, 1]} : vector<16x64xf32> to vector<16x32xf32>
    %24 = arith.truncf %23 : vector<16x32xf32> to vector<16x32xbf16>
    %25 = vector.extract_strided_slice %21 {offsets = [0, 0], sizes = [16, 32], strides = [1, 1]} : vector<16x64xf32> to vector<16x32xf32>
    %26 = arith.truncf %25 : vector<16x32xf32> to vector<16x32xbf16>
    %27 = vector.extract_strided_slice %22 {offsets = [0, 0], sizes = [16, 32], strides = [1, 1]} : vector<16x64xf32> to vector<16x32xf32>
    %28 = arith.truncf %27 : vector<16x32xf32> to vector<16x32xbf16>
    %cst_16 = arith.constant dense<0.000000e+00> : vector<16x16xf32>
    %29 = tpu.matmul %24, %26, %cst_16 {dimension_numbers = #tpu.dot_dimension_numbers<[1], [1], [0], [0], [0, 0, 1, 0], [], []>} : vector<16x32xbf16>, vector<16x32xbf16>, vector<16x16xf32> -> vector<16x16xf32>
    %cst_17 = arith.constant dense<0xFF800000> : vector<16xf32>
    %30 = vector.multi_reduction <maximumf>, %29, %cst_17 [1] : vector<16x16xf32> to vector<16xf32>
    %31 = vector.shape_cast %30 : vector<16xf32> to vector<16x1xf32>
    %32 = vector.broadcast %31 : vector<16x1xf32> to vector<16x16xf32>
    %33 = arith.subf %29, %32 : vector<16x16xf32>
    %34 = math.exp %33 : vector<16x16xf32>
    %cst_18 = arith.constant dense<0.000000e+00> : vector<16xf32>
    %35 = vector.multi_reduction <add>, %34, %cst_18 [1] : vector<16x16xf32> to vector<16xf32>
    %36 = vector.shape_cast %35 : vector<16xf32> to vector<16x1xf32>
    %37 = vector.broadcast %36 : vector<16x1xf32> to vector<16x16xf32>
    %38 = arith.divf %34, %37 : vector<16x16xf32>
    %39 = arith.truncf %38 : vector<16x16xf32> to vector<16x16xbf16>
    %cst_19 = arith.constant dense<0.000000e+00> : vector<16x32xf32>
    %40 = tpu.matmul %39, %28, %cst_19 {dimension_numbers = #tpu.dot_dimension_numbers<[1], [0], [0], [1], [0, 0, 1, 1], [], []>} : vector<16x16xbf16>, vector<16x32xbf16>, vector<16x32xf32> -> vector<16x32xf32>
    %41 = vector.extract_strided_slice %20 {offsets = [0, 32], sizes = [16, 32], strides = [1, 1]} : vector<16x64xf32> to vector<16x32xf32>
    %42 = arith.truncf %41 : vector<16x32xf32> to vector<16x32xbf16>
    %43 = vector.extract_strided_slice %21 {offsets = [0, 32], sizes = [16, 32], strides = [1, 1]} : vector<16x64xf32> to vector<16x32xf32>
    %44 = arith.truncf %43 : vector<16x32xf32> to vector<16x32xbf16>
    %45 = vector.extract_strided_slice %22 {offsets = [0, 32], sizes = [16, 32], strides = [1, 1]} : vector<16x64xf32> to vector<16x32xf32>
    %46 = arith.truncf %45 : vector<16x32xf32> to vector<16x32xbf16>
    %cst_20 = arith.constant dense<0.000000e+00> : vector<16x16xf32>
    %47 = tpu.matmul %42, %44, %cst_20 {dimension_numbers = #tpu.dot_dimension_numbers<[1], [1], [0], [0], [0, 0, 1, 0], [], []>} : vector<16x32xbf16>, vector<16x32xbf16>, vector<16x16xf32> -> vector<16x16xf32>
    %cst_21 = arith.constant dense<0xFF800000> : vector<16xf32>
    %48 = vector.multi_reduction <maximumf>, %47, %cst_21 [1] : vector<16x16xf32> to vector<16xf32>
    %49 = vector.shape_cast %48 : vector<16xf32> to vector<16x1xf32>
    %50 = vector.broadcast %49 : vector<16x1xf32> to vector<16x16xf32>
    %51 = arith.subf %47, %50 : vector<16x16xf32>
    %52 = math.exp %51 : vector<16x16xf32>
    %cst_22 = arith.constant dense<0.000000e+00> : vector<16xf32>
    %53 = vector.multi_reduction <add>, %52, %cst_22 [1] : vector<16x16xf32> to vector<16xf32>
    %54 = vector.shape_cast %53 : vector<16xf32> to vector<16x1xf32>
    %55 = vector.broadcast %54 : vector<16x1xf32> to vector<16x16xf32>
    %56 = arith.divf %52, %55 : vector<16x16xf32>
    %57 = arith.truncf %56 : vector<16x16xf32> to vector<16x16xbf16>
    %cst_23 = arith.constant dense<0.000000e+00> : vector<16x32xf32>
    %58 = tpu.matmul %57, %46, %cst_23 {dimension_numbers = #tpu.dot_dimension_numbers<[1], [0], [0], [1], [0, 0, 1, 1], [], []>} : vector<16x16xbf16>, vector<16x32xbf16>, vector<16x32xf32> -> vector<16x32xf32>
    %59 = tpu.concatenate %40, %58 in 1 : vector<16x32xf32>, vector<16x32xf32> -> vector<16x64xf32>
    %60 = arith.truncf %59 : vector<16x64xf32> to vector<16x64xbf16>
    %c0_24 = arith.constant 0 : index
    %c0_25 = arith.constant 0 : index
    %c0_26 = arith.constant 0 : index
    %61 = vector.load %arg6[%c0_24, %c0_25, %c0_26] : memref<6x64x64xbf16, #tpu.memory_space<vmem>>, vector<1x64x64xbf16>
    %62 = vector.shape_cast %61 : vector<1x64x64xbf16> to vector<64x64xbf16>
    %cst_27 = arith.constant dense<0.000000e+00> : vector<16x64xf32>
    %63 = tpu.matmul %60, %62, %cst_27 {dimension_numbers = #tpu.dot_dimension_numbers<[1], [0], [0], [1], [0, 0, 1, 1], [], []>} : vector<16x64xbf16>, vector<64x64xbf16>, vector<16x64xf32> -> vector<16x64xf32>
    %c0_28 = arith.constant 0 : index
    %c0_29 = arith.constant 0 : index
    %c0_30 = arith.constant 0 : index
    %64 = vector.load %arg7[%c0_28, %c0_29, %c0_30] : memref<6x1x64xf32, #tpu.memory_space<vmem>>, vector<1x1x64xf32>
    %65 = vector.shape_cast %64 : vector<1x1x64xf32> to vector<1x64xf32>
    %66 = vector.broadcast %65 : vector<1x64xf32> to vector<16x64xf32>
    %67 = arith.addf %63, %66 : vector<16x64xf32>
    %68 = arith.addf %2, %67 : vector<16x64xf32>
    %c0_31 = arith.constant 0 : index
    %c0_32 = arith.constant 0 : index
    %c0_33 = arith.constant 0 : index
    %69 = vector.load %arg8[%c0_31, %c0_32, %c0_33] : memref<6x1x64xf32, #tpu.memory_space<vmem>>, vector<1x1x64xf32>
    %70 = vector.shape_cast %69 : vector<1x1x64xf32> to vector<1x64xf32>
    %c0_34 = arith.constant 0 : index
    %c0_35 = arith.constant 0 : index
    %c0_36 = arith.constant 0 : index
    %71 = vector.load %arg9[%c0_34, %c0_35, %c0_36] : memref<6x1x64xf32, #tpu.memory_space<vmem>>, vector<1x1x64xf32>
    %72 = vector.shape_cast %71 : vector<1x1x64xf32> to vector<1x64xf32>
    %cst_37 = arith.constant dense<0.000000e+00> : vector<16xf32>
    %73 = vector.multi_reduction <add>, %68, %cst_37 [1] : vector<16x64xf32> to vector<16xf32>
    %74 = vector.shape_cast %73 : vector<16xf32> to vector<16x1xf32>
    %cst_38 = arith.constant 6.400000e+01 : f32
    %75 = vector.broadcast %cst_38 : f32 to vector<16x1xf32>
    %76 = arith.divf %74, %75 : vector<16x1xf32>
    %77 = vector.broadcast %76 : vector<16x1xf32> to vector<16x64xf32>
    %78 = arith.subf %68, %77 : vector<16x64xf32>
    %79 = arith.mulf %78, %78 : vector<16x64xf32>
    %cst_39 = arith.constant dense<0.000000e+00> : vector<16xf32>
    %80 = vector.multi_reduction <add>, %79, %cst_39 [1] : vector<16x64xf32> to vector<16xf32>
    %81 = vector.shape_cast %80 : vector<16xf32> to vector<16x1xf32>
    %cst_40 = arith.constant 6.400000e+01 : f32
    %82 = vector.broadcast %cst_40 : f32 to vector<16x1xf32>
    %83 = arith.divf %81, %82 : vector<16x1xf32>
    %84 = vector.broadcast %76 : vector<16x1xf32> to vector<16x64xf32>
    %85 = arith.subf %68, %84 : vector<16x64xf32>
    %cst_41 = arith.constant 9.99999997E-7 : f32
    %86 = vector.broadcast %cst_41 : f32 to vector<16x1xf32>
    %87 = arith.addf %83, %86 : vector<16x1xf32>
    %88 = math.rsqrt %87 : vector<16x1xf32>
    %89 = vector.broadcast %88 : vector<16x1xf32> to vector<16x64xf32>
    %90 = arith.mulf %85, %89 : vector<16x64xf32>
    %91 = vector.broadcast %70 : vector<1x64xf32> to vector<16x64xf32>
    %92 = arith.mulf %90, %91 : vector<16x64xf32>
    %93 = vector.broadcast %72 : vector<1x64xf32> to vector<16x64xf32>
    %94 = arith.addf %92, %93 : vector<16x64xf32>
    %95 = arith.truncf %94 : vector<16x64xf32> to vector<16x64xbf16>
    %c0_42 = arith.constant 0 : index
    %c0_43 = arith.constant 0 : index
    %c0_44 = arith.constant 0 : index
    %96 = vector.load %arg10[%c0_42, %c0_43, %c0_44] : memref<6x64x256xbf16, #tpu.memory_space<vmem>>, vector<1x64x256xbf16>
    %97 = vector.shape_cast %96 : vector<1x64x256xbf16> to vector<64x256xbf16>
    %cst_45 = arith.constant dense<0.000000e+00> : vector<16x256xf32>
    %98 = tpu.matmul %95, %97, %cst_45 {dimension_numbers = #tpu.dot_dimension_numbers<[1], [0], [0], [1], [0, 0, 1, 1], [], []>} : vector<16x64xbf16>, vector<64x256xbf16>, vector<16x256xf32> -> vector<16x256xf32>
    %c0_46 = arith.constant 0 : index
    %c0_47 = arith.constant 0 : index
    %c0_48 = arith.constant 0 : index
    %99 = vector.load %arg11[%c0_46, %c0_47, %c0_48] : memref<6x1x256xf32, #tpu.memory_space<vmem>>, vector<1x1x256xf32>
    %100 = vector.shape_cast %99 : vector<1x1x256xf32> to vector<1x256xf32>
    %101 = vector.broadcast %100 : vector<1x256xf32> to vector<16x256xf32>
    %102 = arith.addf %98, %101 : vector<16x256xf32>
    %cst_49 = arith.constant 5.000000e-01 : f32
    %103 = vector.broadcast %cst_49 : f32 to vector<16x256xf32>
    %104 = arith.mulf %103, %102 : vector<16x256xf32>
    %cst_50 = arith.constant 0.707106769 : f32
    %105 = vector.broadcast %cst_50 : f32 to vector<16x256xf32>
    %106 = arith.mulf %102, %105 : vector<16x256xf32>
    %107 = math.erf %106 : vector<16x256xf32>
    %cst_51 = arith.constant 1.000000e+00 : f32
    %108 = vector.broadcast %cst_51 : f32 to vector<16x256xf32>
    %109 = arith.addf %108, %107 : vector<16x256xf32>
    %110 = arith.mulf %104, %109 : vector<16x256xf32>
    %111 = arith.truncf %110 : vector<16x256xf32> to vector<16x256xbf16>
    %c0_52 = arith.constant 0 : index
    %c0_53 = arith.constant 0 : index
    %c0_54 = arith.constant 0 : index
    %112 = vector.load %arg12[%c0_52, %c0_53, %c0_54] : memref<6x256x64xbf16, #tpu.memory_space<vmem>>, vector<1x256x64xbf16>
    %113 = vector.shape_cast %112 : vector<1x256x64xbf16> to vector<256x64xbf16>
    %cst_55 = arith.constant dense<0.000000e+00> : vector<16x64xf32>
    %114 = tpu.matmul %111, %113, %cst_55 {dimension_numbers = #tpu.dot_dimension_numbers<[1], [0], [0], [1], [0, 0, 1, 1], [], []>} : vector<16x256xbf16>, vector<256x64xbf16>, vector<16x64xf32> -> vector<16x64xf32>
    %c0_56 = arith.constant 0 : index
    %c0_57 = arith.constant 0 : index
    %c0_58 = arith.constant 0 : index
    %115 = vector.load %arg13[%c0_56, %c0_57, %c0_58] : memref<6x1x64xf32, #tpu.memory_space<vmem>>, vector<1x1x64xf32>
    %116 = vector.shape_cast %115 : vector<1x1x64xf32> to vector<1x64xf32>
    %117 = vector.broadcast %116 : vector<1x64xf32> to vector<16x64xf32>
    %118 = arith.addf %114, %117 : vector<16x64xf32>
    %119 = arith.addf %94, %118 : vector<16x64xf32>
    %c0_59 = arith.constant 0 : index
    %c0_60 = arith.constant 0 : index
    %c0_61 = arith.constant 0 : index
    %120 = vector.load %arg14[%c0_59, %c0_60, %c0_61] : memref<6x1x64xf32, #tpu.memory_space<vmem>>, vector<1x1x64xf32>
    %121 = vector.shape_cast %120 : vector<1x1x64xf32> to vector<1x64xf32>
    %c0_62 = arith.constant 0 : index
    %c0_63 = arith.constant 0 : index
    %c0_64 = arith.constant 0 : index
    %122 = vector.load %arg15[%c0_62, %c0_63, %c0_64] : memref<6x1x64xf32, #tpu.memory_space<vmem>>, vector<1x1x64xf32>
    %123 = vector.shape_cast %122 : vector<1x1x64xf32> to vector<1x64xf32>
    %cst_65 = arith.constant dense<0.000000e+00> : vector<16xf32>
    %124 = vector.multi_reduction <add>, %119, %cst_65 [1] : vector<16x64xf32> to vector<16xf32>
    %125 = vector.shape_cast %124 : vector<16xf32> to vector<16x1xf32>
    %cst_66 = arith.constant 6.400000e+01 : f32
    %126 = vector.broadcast %cst_66 : f32 to vector<16x1xf32>
    %127 = arith.divf %125, %126 : vector<16x1xf32>
    %128 = vector.broadcast %127 : vector<16x1xf32> to vector<16x64xf32>
    %129 = arith.subf %119, %128 : vector<16x64xf32>
    %130 = arith.mulf %129, %129 : vector<16x64xf32>
    %cst_67 = arith.constant dense<0.000000e+00> : vector<16xf32>
    %131 = vector.multi_reduction <add>, %130, %cst_67 [1] : vector<16x64xf32> to vector<16xf32>
    %132 = vector.shape_cast %131 : vector<16xf32> to vector<16x1xf32>
    %cst_68 = arith.constant 6.400000e+01 : f32
    %133 = vector.broadcast %cst_68 : f32 to vector<16x1xf32>
    %134 = arith.divf %132, %133 : vector<16x1xf32>
    %135 = vector.broadcast %127 : vector<16x1xf32> to vector<16x64xf32>
    %136 = arith.subf %119, %135 : vector<16x64xf32>
    %cst_69 = arith.constant 9.99999997E-7 : f32
    %137 = vector.broadcast %cst_69 : f32 to vector<16x1xf32>
    %138 = arith.addf %134, %137 : vector<16x1xf32>
    %139 = math.rsqrt %138 : vector<16x1xf32>
    %140 = vector.broadcast %139 : vector<16x1xf32> to vector<16x64xf32>
    %141 = arith.mulf %136, %140 : vector<16x64xf32>
    %142 = vector.broadcast %121 : vector<1x64xf32> to vector<16x64xf32>
    %143 = arith.mulf %141, %142 : vector<16x64xf32>
    %144 = vector.broadcast %123 : vector<1x64xf32> to vector<16x64xf32>
    %145 = arith.addf %143, %144 : vector<16x64xf32>
    %146 = vector.extract_strided_slice %1 {offsets = [5, 0], sizes = [16, 64], strides = [1, 1]} : vector<21x64xf32> to vector<16x64xf32>
    %147 = arith.truncf %1 : vector<21x64xf32> to vector<21x64xbf16>
    %c2 = arith.constant 2 : index
    %c0_70 = arith.constant 0 : index
    %c0_71 = arith.constant 0 : index
    %148 = vector.load %arg2[%c2, %c0_70, %c0_71] : memref<6x64x64xbf16, #tpu.memory_space<vmem>>, vector<1x64x64xbf16>
    %149 = vector.shape_cast %148 : vector<1x64x64xbf16> to vector<64x64xbf16>
    %cst_72 = arith.constant dense<0.000000e+00> : vector<21x64xf32>
    %150 = tpu.matmul %147, %149, %cst_72 {dimension_numbers = #tpu.dot_dimension_numbers<[1], [0], [0], [1], [0, 0, 1, 1], [], []>} : vector<21x64xbf16>, vector<64x64xbf16>, vector<21x64xf32> -> vector<21x64xf32>
    %c2_73 = arith.constant 2 : index
    %c0_74 = arith.constant 0 : index
    %c0_75 = arith.constant 0 : index
    %151 = vector.load %arg3[%c2_73, %c0_74, %c0_75] : memref<6x1x64xf32, #tpu.memory_space<vmem>>, vector<1x1x64xf32>
    %152 = vector.shape_cast %151 : vector<1x1x64xf32> to vector<1x64xf32>
    %153 = vector.broadcast %152 : vector<1x64xf32> to vector<21x64xf32>
    %154 = arith.addf %150, %153 : vector<21x64xf32>
    %155 = arith.truncf %146 : vector<16x64xf32> to vector<16x64xbf16>
    %c2_76 = arith.constant 2 : index
    %c0_77 = arith.constant 0 : index
    %c0_78 = arith.constant 0 : index
    %156 = vector.load %arg4[%c2_76, %c0_77, %c0_78] : memref<6x64x128xbf16, #tpu.memory_space<vmem>>, vector<1x64x128xbf16>
    %157 = vector.shape_cast %156 : vector<1x64x128xbf16> to vector<64x128xbf16>
    %cst_79 = arith.constant dense<0.000000e+00> : vector<16x128xf32>
    %158 = tpu.matmul %155, %157, %cst_79 {dimension_numbers = #tpu.dot_dimension_numbers<[1], [0], [0], [1], [0, 0, 1, 1], [], []>} : vector<16x64xbf16>, vector<64x128xbf16>, vector<16x128xf32> -> vector<16x128xf32>
    %c2_80 = arith.constant 2 : index
    %c0_81 = arith.constant 0 : index
    %c0_82 = arith.constant 0 : index
    %159 = vector.load %arg5[%c2_80, %c0_81, %c0_82] : memref<6x1x128xf32, #tpu.memory_space<vmem>>, vector<1x1x128xf32>
    %160 = vector.shape_cast %159 : vector<1x1x128xf32> to vector<1x128xf32>
    %161 = vector.broadcast %160 : vector<1x128xf32> to vector<16x128xf32>
    %162 = arith.addf %158, %161 : vector<16x128xf32>
    %cst_83 = arith.constant 0.176776692 : f32
    %163 = vector.broadcast %cst_83 : f32 to vector<21x64xf32>
    %164 = arith.mulf %154, %163 : vector<21x64xf32>
    %165 = vector.extract_strided_slice %162 {offsets = [0, 0], sizes = [16, 64], strides = [1, 1]} : vector<16x128xf32> to vector<16x64xf32>
    %166 = vector.extract_strided_slice %162 {offsets = [0, 64], sizes = [16, 64], strides = [1, 1]} : vector<16x128xf32> to vector<16x64xf32>
    %167 = vector.extract_strided_slice %164 {offsets = [0, 0], sizes = [21, 32], strides = [1, 1]} : vector<21x64xf32> to vector<21x32xf32>
    %168 = arith.truncf %167 : vector<21x32xf32> to vector<21x32xbf16>
    %169 = vector.extract_strided_slice %165 {offsets = [0, 0], sizes = [16, 32], strides = [1, 1]} : vector<16x64xf32> to vector<16x32xf32>
    %170 = arith.truncf %169 : vector<16x32xf32> to vector<16x32xbf16>
    %171 = vector.extract_strided_slice %166 {offsets = [0, 0], sizes = [16, 32], strides = [1, 1]} : vector<16x64xf32> to vector<16x32xf32>
    %172 = arith.truncf %171 : vector<16x32xf32> to vector<16x32xbf16>
    %cst_84 = arith.constant dense<0.000000e+00> : vector<21x16xf32>
    %173 = tpu.matmul %168, %170, %cst_84 {dimension_numbers = #tpu.dot_dimension_numbers<[1], [1], [0], [0], [0, 0, 1, 0], [], []>} : vector<21x32xbf16>, vector<16x32xbf16>, vector<21x16xf32> -> vector<21x16xf32>
    %cst_85 = arith.constant dense<0xFF800000> : vector<21xf32>
    %174 = vector.multi_reduction <maximumf>, %173, %cst_85 [1] : vector<21x16xf32> to vector<21xf32>
    %175 = vector.shape_cast %174 : vector<21xf32> to vector<21x1xf32>
    %176 = vector.broadcast %175 : vector<21x1xf32> to vector<21x16xf32>
    %177 = arith.subf %173, %176 : vector<21x16xf32>
    %178 = math.exp %177 : vector<21x16xf32>
    %cst_86 = arith.constant dense<0.000000e+00> : vector<21xf32>
    %179 = vector.multi_reduction <add>, %178, %cst_86 [1] : vector<21x16xf32> to vector<21xf32>
    %180 = vector.shape_cast %179 : vector<21xf32> to vector<21x1xf32>
    %181 = vector.broadcast %180 : vector<21x1xf32> to vector<21x16xf32>
    %182 = arith.divf %178, %181 : vector<21x16xf32>
    %183 = arith.truncf %182 : vector<21x16xf32> to vector<21x16xbf16>
    %cst_87 = arith.constant dense<0.000000e+00> : vector<21x32xf32>
    %184 = tpu.matmul %183, %172, %cst_87 {dimension_numbers = #tpu.dot_dimension_numbers<[1], [0], [0], [1], [0, 0, 1, 1], [], []>} : vector<21x16xbf16>, vector<16x32xbf16>, vector<21x32xf32> -> vector<21x32xf32>
    %185 = vector.extract_strided_slice %164 {offsets = [0, 32], sizes = [21, 32], strides = [1, 1]} : vector<21x64xf32> to vector<21x32xf32>
    %186 = arith.truncf %185 : vector<21x32xf32> to vector<21x32xbf16>
    %187 = vector.extract_strided_slice %165 {offsets = [0, 32], sizes = [16, 32], strides = [1, 1]} : vector<16x64xf32> to vector<16x32xf32>
    %188 = arith.truncf %187 : vector<16x32xf32> to vector<16x32xbf16>
    %189 = vector.extract_strided_slice %166 {offsets = [0, 32], sizes = [16, 32], strides = [1, 1]} : vector<16x64xf32> to vector<16x32xf32>
    %190 = arith.truncf %189 : vector<16x32xf32> to vector<16x32xbf16>
    %cst_88 = arith.constant dense<0.000000e+00> : vector<21x16xf32>
    %191 = tpu.matmul %186, %188, %cst_88 {dimension_numbers = #tpu.dot_dimension_numbers<[1], [1], [0], [0], [0, 0, 1, 0], [], []>} : vector<21x32xbf16>, vector<16x32xbf16>, vector<21x16xf32> -> vector<21x16xf32>
    %cst_89 = arith.constant dense<0xFF800000> : vector<21xf32>
    %192 = vector.multi_reduction <maximumf>, %191, %cst_89 [1] : vector<21x16xf32> to vector<21xf32>
    %193 = vector.shape_cast %192 : vector<21xf32> to vector<21x1xf32>
    %194 = vector.broadcast %193 : vector<21x1xf32> to vector<21x16xf32>
    %195 = arith.subf %191, %194 : vector<21x16xf32>
    %196 = math.exp %195 : vector<21x16xf32>
    %cst_90 = arith.constant dense<0.000000e+00> : vector<21xf32>
    %197 = vector.multi_reduction <add>, %196, %cst_90 [1] : vector<21x16xf32> to vector<21xf32>
    %198 = vector.shape_cast %197 : vector<21xf32> to vector<21x1xf32>
    %199 = vector.broadcast %198 : vector<21x1xf32> to vector<21x16xf32>
    %200 = arith.divf %196, %199 : vector<21x16xf32>
    %201 = arith.truncf %200 : vector<21x16xf32> to vector<21x16xbf16>
    %cst_91 = arith.constant dense<0.000000e+00> : vector<21x32xf32>
    %202 = tpu.matmul %201, %190, %cst_91 {dimension_numbers = #tpu.dot_dimension_numbers<[1], [0], [0], [1], [0, 0, 1, 1], [], []>} : vector<21x16xbf16>, vector<16x32xbf16>, vector<21x32xf32> -> vector<21x32xf32>
    %203 = tpu.concatenate %184, %202 in 1 : vector<21x32xf32>, vector<21x32xf32> -> vector<21x64xf32>
    %204 = arith.truncf %203 : vector<21x64xf32> to vector<21x64xbf16>
    %c2_92 = arith.constant 2 : index
    %c0_93 = arith.constant 0 : index
    %c0_94 = arith.constant 0 : index
    %205 = vector.load %arg6[%c2_92, %c0_93, %c0_94] : memref<6x64x64xbf16, #tpu.memory_space<vmem>>, vector<1x64x64xbf16>
    %206 = vector.shape_cast %205 : vector<1x64x64xbf16> to vector<64x64xbf16>
    %cst_95 = arith.constant dense<0.000000e+00> : vector<21x64xf32>
    %207 = tpu.matmul %204, %206, %cst_95 {dimension_numbers = #tpu.dot_dimension_numbers<[1], [0], [0], [1], [0, 0, 1, 1], [], []>} : vector<21x64xbf16>, vector<64x64xbf16>, vector<21x64xf32> -> vector<21x64xf32>
    %c2_96 = arith.constant 2 : index
    %c0_97 = arith.constant 0 : index
    %c0_98 = arith.constant 0 : index
    %208 = vector.load %arg7[%c2_96, %c0_97, %c0_98] : memref<6x1x64xf32, #tpu.memory_space<vmem>>, vector<1x1x64xf32>
    %209 = vector.shape_cast %208 : vector<1x1x64xf32> to vector<1x64xf32>
    %210 = vector.broadcast %209 : vector<1x64xf32> to vector<21x64xf32>
    %211 = arith.addf %207, %210 : vector<21x64xf32>
    %212 = arith.addf %1, %211 : vector<21x64xf32>
    %c2_99 = arith.constant 2 : index
    %c0_100 = arith.constant 0 : index
    %c0_101 = arith.constant 0 : index
    %213 = vector.load %arg8[%c2_99, %c0_100, %c0_101] : memref<6x1x64xf32, #tpu.memory_space<vmem>>, vector<1x1x64xf32>
    %214 = vector.shape_cast %213 : vector<1x1x64xf32> to vector<1x64xf32>
    %c2_102 = arith.constant 2 : index
    %c0_103 = arith.constant 0 : index
    %c0_104 = arith.constant 0 : index
    %215 = vector.load %arg9[%c2_102, %c0_103, %c0_104] : memref<6x1x64xf32, #tpu.memory_space<vmem>>, vector<1x1x64xf32>
    %216 = vector.shape_cast %215 : vector<1x1x64xf32> to vector<1x64xf32>
    %cst_105 = arith.constant dense<0.000000e+00> : vector<21xf32>
    %217 = vector.multi_reduction <add>, %212, %cst_105 [1] : vector<21x64xf32> to vector<21xf32>
    %218 = vector.shape_cast %217 : vector<21xf32> to vector<21x1xf32>
    %cst_106 = arith.constant 6.400000e+01 : f32
    %219 = vector.broadcast %cst_106 : f32 to vector<21x1xf32>
    %220 = arith.divf %218, %219 : vector<21x1xf32>
    %221 = vector.broadcast %220 : vector<21x1xf32> to vector<21x64xf32>
    %222 = arith.subf %212, %221 : vector<21x64xf32>
    %223 = arith.mulf %222, %222 : vector<21x64xf32>
    %cst_107 = arith.constant dense<0.000000e+00> : vector<21xf32>
    %224 = vector.multi_reduction <add>, %223, %cst_107 [1] : vector<21x64xf32> to vector<21xf32>
    %225 = vector.shape_cast %224 : vector<21xf32> to vector<21x1xf32>
    %cst_108 = arith.constant 6.400000e+01 : f32
    %226 = vector.broadcast %cst_108 : f32 to vector<21x1xf32>
    %227 = arith.divf %225, %226 : vector<21x1xf32>
    %228 = vector.broadcast %220 : vector<21x1xf32> to vector<21x64xf32>
    %229 = arith.subf %212, %228 : vector<21x64xf32>
    %cst_109 = arith.constant 9.99999997E-7 : f32
    %230 = vector.broadcast %cst_109 : f32 to vector<21x1xf32>
    %231 = arith.addf %227, %230 : vector<21x1xf32>
    %232 = math.rsqrt %231 : vector<21x1xf32>
    %233 = vector.broadcast %232 : vector<21x1xf32> to vector<21x64xf32>
    %234 = arith.mulf %229, %233 : vector<21x64xf32>
    %235 = vector.broadcast %214 : vector<1x64xf32> to vector<21x64xf32>
    %236 = arith.mulf %234, %235 : vector<21x64xf32>
    %237 = vector.broadcast %216 : vector<1x64xf32> to vector<21x64xf32>
    %238 = arith.addf %236, %237 : vector<21x64xf32>
    %239 = arith.truncf %238 : vector<21x64xf32> to vector<21x64xbf16>
    %c2_110 = arith.constant 2 : index
    %c0_111 = arith.constant 0 : index
    %c0_112 = arith.constant 0 : index
    %240 = vector.load %arg10[%c2_110, %c0_111, %c0_112] : memref<6x64x256xbf16, #tpu.memory_space<vmem>>, vector<1x64x256xbf16>
    %241 = vector.shape_cast %240 : vector<1x64x256xbf16> to vector<64x256xbf16>
    %cst_113 = arith.constant dense<0.000000e+00> : vector<21x256xf32>
    %242 = tpu.matmul %239, %241, %cst_113 {dimension_numbers = #tpu.dot_dimension_numbers<[1], [0], [0], [1], [0, 0, 1, 1], [], []>} : vector<21x64xbf16>, vector<64x256xbf16>, vector<21x256xf32> -> vector<21x256xf32>
    %c2_114 = arith.constant 2 : index
    %c0_115 = arith.constant 0 : index
    %c0_116 = arith.constant 0 : index
    %243 = vector.load %arg11[%c2_114, %c0_115, %c0_116] : memref<6x1x256xf32, #tpu.memory_space<vmem>>, vector<1x1x256xf32>
    %244 = vector.shape_cast %243 : vector<1x1x256xf32> to vector<1x256xf32>
    %245 = vector.broadcast %244 : vector<1x256xf32> to vector<21x256xf32>
    %246 = arith.addf %242, %245 : vector<21x256xf32>
    %cst_117 = arith.constant 5.000000e-01 : f32
    %247 = vector.broadcast %cst_117 : f32 to vector<21x256xf32>
    %248 = arith.mulf %247, %246 : vector<21x256xf32>
    %cst_118 = arith.constant 0.707106769 : f32
    %249 = vector.broadcast %cst_118 : f32 to vector<21x256xf32>
    %250 = arith.mulf %246, %249 : vector<21x256xf32>
    %251 = math.erf %250 : vector<21x256xf32>
    %cst_119 = arith.constant 1.000000e+00 : f32
    %252 = vector.broadcast %cst_119 : f32 to vector<21x256xf32>
    %253 = arith.addf %252, %251 : vector<21x256xf32>
    %254 = arith.mulf %248, %253 : vector<21x256xf32>
    %255 = arith.truncf %254 : vector<21x256xf32> to vector<21x256xbf16>
    %c2_120 = arith.constant 2 : index
    %c0_121 = arith.constant 0 : index
    %c0_122 = arith.constant 0 : index
    %256 = vector.load %arg12[%c2_120, %c0_121, %c0_122] : memref<6x256x64xbf16, #tpu.memory_space<vmem>>, vector<1x256x64xbf16>
    %257 = vector.shape_cast %256 : vector<1x256x64xbf16> to vector<256x64xbf16>
    %cst_123 = arith.constant dense<0.000000e+00> : vector<21x64xf32>
    %258 = tpu.matmul %255, %257, %cst_123 {dimension_numbers = #tpu.dot_dimension_numbers<[1], [0], [0], [1], [0, 0, 1, 1], [], []>} : vector<21x256xbf16>, vector<256x64xbf16>, vector<21x64xf32> -> vector<21x64xf32>
    %c2_124 = arith.constant 2 : index
    %c0_125 = arith.constant 0 : index
    %c0_126 = arith.constant 0 : index
    %259 = vector.load %arg13[%c2_124, %c0_125, %c0_126] : memref<6x1x64xf32, #tpu.memory_space<vmem>>, vector<1x1x64xf32>
    %260 = vector.shape_cast %259 : vector<1x1x64xf32> to vector<1x64xf32>
    %261 = vector.broadcast %260 : vector<1x64xf32> to vector<21x64xf32>
    %262 = arith.addf %258, %261 : vector<21x64xf32>
    %263 = arith.addf %238, %262 : vector<21x64xf32>
    %c2_127 = arith.constant 2 : index
    %c0_128 = arith.constant 0 : index
    %c0_129 = arith.constant 0 : index
    %264 = vector.load %arg14[%c2_127, %c0_128, %c0_129] : memref<6x1x64xf32, #tpu.memory_space<vmem>>, vector<1x1x64xf32>
    %265 = vector.shape_cast %264 : vector<1x1x64xf32> to vector<1x64xf32>
    %c2_130 = arith.constant 2 : index
    %c0_131 = arith.constant 0 : index
    %c0_132 = arith.constant 0 : index
    %266 = vector.load %arg15[%c2_130, %c0_131, %c0_132] : memref<6x1x64xf32, #tpu.memory_space<vmem>>, vector<1x1x64xf32>
    %267 = vector.shape_cast %266 : vector<1x1x64xf32> to vector<1x64xf32>
    %cst_133 = arith.constant dense<0.000000e+00> : vector<21xf32>
    %268 = vector.multi_reduction <add>, %263, %cst_133 [1] : vector<21x64xf32> to vector<21xf32>
    %269 = vector.shape_cast %268 : vector<21xf32> to vector<21x1xf32>
    %cst_134 = arith.constant 6.400000e+01 : f32
    %270 = vector.broadcast %cst_134 : f32 to vector<21x1xf32>
    %271 = arith.divf %269, %270 : vector<21x1xf32>
    %272 = vector.broadcast %271 : vector<21x1xf32> to vector<21x64xf32>
    %273 = arith.subf %263, %272 : vector<21x64xf32>
    %274 = arith.mulf %273, %273 : vector<21x64xf32>
    %cst_135 = arith.constant dense<0.000000e+00> : vector<21xf32>
    %275 = vector.multi_reduction <add>, %274, %cst_135 [1] : vector<21x64xf32> to vector<21xf32>
    %276 = vector.shape_cast %275 : vector<21xf32> to vector<21x1xf32>
    %cst_136 = arith.constant 6.400000e+01 : f32
    %277 = vector.broadcast %cst_136 : f32 to vector<21x1xf32>
    %278 = arith.divf %276, %277 : vector<21x1xf32>
    %279 = vector.broadcast %271 : vector<21x1xf32> to vector<21x64xf32>
    %280 = arith.subf %263, %279 : vector<21x64xf32>
    %cst_137 = arith.constant 9.99999997E-7 : f32
    %281 = vector.broadcast %cst_137 : f32 to vector<21x1xf32>
    %282 = arith.addf %278, %281 : vector<21x1xf32>
    %283 = math.rsqrt %282 : vector<21x1xf32>
    %284 = vector.broadcast %283 : vector<21x1xf32> to vector<21x64xf32>
    %285 = arith.mulf %280, %284 : vector<21x64xf32>
    %286 = vector.broadcast %265 : vector<1x64xf32> to vector<21x64xf32>
    %287 = arith.mulf %285, %286 : vector<21x64xf32>
    %288 = vector.broadcast %267 : vector<1x64xf32> to vector<21x64xf32>
    %289 = arith.addf %287, %288 : vector<21x64xf32>
    %290 = arith.truncf %145 : vector<16x64xf32> to vector<16x64xbf16>
    %c1 = arith.constant 1 : index
    %c0_138 = arith.constant 0 : index
    %c0_139 = arith.constant 0 : index
    %291 = vector.load %arg2[%c1, %c0_138, %c0_139] : memref<6x64x64xbf16, #tpu.memory_space<vmem>>, vector<1x64x64xbf16>
    %292 = vector.shape_cast %291 : vector<1x64x64xbf16> to vector<64x64xbf16>
    %cst_140 = arith.constant dense<0.000000e+00> : vector<16x64xf32>
    %293 = tpu.matmul %290, %292, %cst_140 {dimension_numbers = #tpu.dot_dimension_numbers<[1], [0], [0], [1], [0, 0, 1, 1], [], []>} : vector<16x64xbf16>, vector<64x64xbf16>, vector<16x64xf32> -> vector<16x64xf32>
    %c1_141 = arith.constant 1 : index
    %c0_142 = arith.constant 0 : index
    %c0_143 = arith.constant 0 : index
    %294 = vector.load %arg3[%c1_141, %c0_142, %c0_143] : memref<6x1x64xf32, #tpu.memory_space<vmem>>, vector<1x1x64xf32>
    %295 = vector.shape_cast %294 : vector<1x1x64xf32> to vector<1x64xf32>
    %296 = vector.broadcast %295 : vector<1x64xf32> to vector<16x64xf32>
    %297 = arith.addf %293, %296 : vector<16x64xf32>
    %298 = arith.truncf %145 : vector<16x64xf32> to vector<16x64xbf16>
    %c1_144 = arith.constant 1 : index
    %c0_145 = arith.constant 0 : index
    %c0_146 = arith.constant 0 : index
    %299 = vector.load %arg4[%c1_144, %c0_145, %c0_146] : memref<6x64x128xbf16, #tpu.memory_space<vmem>>, vector<1x64x128xbf16>
    %300 = vector.shape_cast %299 : vector<1x64x128xbf16> to vector<64x128xbf16>
    %cst_147 = arith.constant dense<0.000000e+00> : vector<16x128xf32>
    %301 = tpu.matmul %298, %300, %cst_147 {dimension_numbers = #tpu.dot_dimension_numbers<[1], [0], [0], [1], [0, 0, 1, 1], [], []>} : vector<16x64xbf16>, vector<64x128xbf16>, vector<16x128xf32> -> vector<16x128xf32>
    %c1_148 = arith.constant 1 : index
    %c0_149 = arith.constant 0 : index
    %c0_150 = arith.constant 0 : index
    %302 = vector.load %arg5[%c1_148, %c0_149, %c0_150] : memref<6x1x128xf32, #tpu.memory_space<vmem>>, vector<1x1x128xf32>
    %303 = vector.shape_cast %302 : vector<1x1x128xf32> to vector<1x128xf32>
    %304 = vector.broadcast %303 : vector<1x128xf32> to vector<16x128xf32>
    %305 = arith.addf %301, %304 : vector<16x128xf32>
    %cst_151 = arith.constant 0.176776692 : f32
    %306 = vector.broadcast %cst_151 : f32 to vector<16x64xf32>
    %307 = arith.mulf %297, %306 : vector<16x64xf32>
    %308 = vector.extract_strided_slice %305 {offsets = [0, 0], sizes = [16, 64], strides = [1, 1]} : vector<16x128xf32> to vector<16x64xf32>
    %309 = vector.extract_strided_slice %305 {offsets = [0, 64], sizes = [16, 64], strides = [1, 1]} : vector<16x128xf32> to vector<16x64xf32>
    %310 = vector.extract_strided_slice %307 {offsets = [0, 0], sizes = [16, 32], strides = [1, 1]} : vector<16x64xf32> to vector<16x32xf32>
    %311 = arith.truncf %310 : vector<16x32xf32> to vector<16x32xbf16>
    %312 = vector.extract_strided_slice %308 {offsets = [0, 0], sizes = [16, 32], strides = [1, 1]} : vector<16x64xf32> to vector<16x32xf32>
    %313 = arith.truncf %312 : vector<16x32xf32> to vector<16x32xbf16>
    %314 = vector.extract_strided_slice %309 {offsets = [0, 0], sizes = [16, 32], strides = [1, 1]} : vector<16x64xf32> to vector<16x32xf32>
    %315 = arith.truncf %314 : vector<16x32xf32> to vector<16x32xbf16>
    %cst_152 = arith.constant dense<0.000000e+00> : vector<16x16xf32>
    %316 = tpu.matmul %311, %313, %cst_152 {dimension_numbers = #tpu.dot_dimension_numbers<[1], [1], [0], [0], [0, 0, 1, 0], [], []>} : vector<16x32xbf16>, vector<16x32xbf16>, vector<16x16xf32> -> vector<16x16xf32>
    %cst_153 = arith.constant dense<0xFF800000> : vector<16xf32>
    %317 = vector.multi_reduction <maximumf>, %316, %cst_153 [1] : vector<16x16xf32> to vector<16xf32>
    %318 = vector.shape_cast %317 : vector<16xf32> to vector<16x1xf32>
    %319 = vector.broadcast %318 : vector<16x1xf32> to vector<16x16xf32>
    %320 = arith.subf %316, %319 : vector<16x16xf32>
    %321 = math.exp %320 : vector<16x16xf32>
    %cst_154 = arith.constant dense<0.000000e+00> : vector<16xf32>
    %322 = vector.multi_reduction <add>, %321, %cst_154 [1] : vector<16x16xf32> to vector<16xf32>
    %323 = vector.shape_cast %322 : vector<16xf32> to vector<16x1xf32>
    %324 = vector.broadcast %323 : vector<16x1xf32> to vector<16x16xf32>
    %325 = arith.divf %321, %324 : vector<16x16xf32>
    %326 = arith.truncf %325 : vector<16x16xf32> to vector<16x16xbf16>
    %cst_155 = arith.constant dense<0.000000e+00> : vector<16x32xf32>
    %327 = tpu.matmul %326, %315, %cst_155 {dimension_numbers = #tpu.dot_dimension_numbers<[1], [0], [0], [1], [0, 0, 1, 1], [], []>} : vector<16x16xbf16>, vector<16x32xbf16>, vector<16x32xf32> -> vector<16x32xf32>
    %328 = vector.extract_strided_slice %307 {offsets = [0, 32], sizes = [16, 32], strides = [1, 1]} : vector<16x64xf32> to vector<16x32xf32>
    %329 = arith.truncf %328 : vector<16x32xf32> to vector<16x32xbf16>
    %330 = vector.extract_strided_slice %308 {offsets = [0, 32], sizes = [16, 32], strides = [1, 1]} : vector<16x64xf32> to vector<16x32xf32>
    %331 = arith.truncf %330 : vector<16x32xf32> to vector<16x32xbf16>
    %332 = vector.extract_strided_slice %309 {offsets = [0, 32], sizes = [16, 32], strides = [1, 1]} : vector<16x64xf32> to vector<16x32xf32>
    %333 = arith.truncf %332 : vector<16x32xf32> to vector<16x32xbf16>
    %cst_156 = arith.constant dense<0.000000e+00> : vector<16x16xf32>
    %334 = tpu.matmul %329, %331, %cst_156 {dimension_numbers = #tpu.dot_dimension_numbers<[1], [1], [0], [0], [0, 0, 1, 0], [], []>} : vector<16x32xbf16>, vector<16x32xbf16>, vector<16x16xf32> -> vector<16x16xf32>
    %cst_157 = arith.constant dense<0xFF800000> : vector<16xf32>
    %335 = vector.multi_reduction <maximumf>, %334, %cst_157 [1] : vector<16x16xf32> to vector<16xf32>
    %336 = vector.shape_cast %335 : vector<16xf32> to vector<16x1xf32>
    %337 = vector.broadcast %336 : vector<16x1xf32> to vector<16x16xf32>
    %338 = arith.subf %334, %337 : vector<16x16xf32>
    %339 = math.exp %338 : vector<16x16xf32>
    %cst_158 = arith.constant dense<0.000000e+00> : vector<16xf32>
    %340 = vector.multi_reduction <add>, %339, %cst_158 [1] : vector<16x16xf32> to vector<16xf32>
    %341 = vector.shape_cast %340 : vector<16xf32> to vector<16x1xf32>
    %342 = vector.broadcast %341 : vector<16x1xf32> to vector<16x16xf32>
    %343 = arith.divf %339, %342 : vector<16x16xf32>
    %344 = arith.truncf %343 : vector<16x16xf32> to vector<16x16xbf16>
    %cst_159 = arith.constant dense<0.000000e+00> : vector<16x32xf32>
    %345 = tpu.matmul %344, %333, %cst_159 {dimension_numbers = #tpu.dot_dimension_numbers<[1], [0], [0], [1], [0, 0, 1, 1], [], []>} : vector<16x16xbf16>, vector<16x32xbf16>, vector<16x32xf32> -> vector<16x32xf32>
    %346 = tpu.concatenate %327, %345 in 1 : vector<16x32xf32>, vector<16x32xf32> -> vector<16x64xf32>
    %347 = arith.truncf %346 : vector<16x64xf32> to vector<16x64xbf16>
    %c1_160 = arith.constant 1 : index
    %c0_161 = arith.constant 0 : index
    %c0_162 = arith.constant 0 : index
    %348 = vector.load %arg6[%c1_160, %c0_161, %c0_162] : memref<6x64x64xbf16, #tpu.memory_space<vmem>>, vector<1x64x64xbf16>
    %349 = vector.shape_cast %348 : vector<1x64x64xbf16> to vector<64x64xbf16>
    %cst_163 = arith.constant dense<0.000000e+00> : vector<16x64xf32>
    %350 = tpu.matmul %347, %349, %cst_163 {dimension_numbers = #tpu.dot_dimension_numbers<[1], [0], [0], [1], [0, 0, 1, 1], [], []>} : vector<16x64xbf16>, vector<64x64xbf16>, vector<16x64xf32> -> vector<16x64xf32>
    %c1_164 = arith.constant 1 : index
    %c0_165 = arith.constant 0 : index
    %c0_166 = arith.constant 0 : index
    %351 = vector.load %arg7[%c1_164, %c0_165, %c0_166] : memref<6x1x64xf32, #tpu.memory_space<vmem>>, vector<1x1x64xf32>
    %352 = vector.shape_cast %351 : vector<1x1x64xf32> to vector<1x64xf32>
    %353 = vector.broadcast %352 : vector<1x64xf32> to vector<16x64xf32>
    %354 = arith.addf %350, %353 : vector<16x64xf32>
    %355 = arith.addf %145, %354 : vector<16x64xf32>
    %c1_167 = arith.constant 1 : index
    %c0_168 = arith.constant 0 : index
    %c0_169 = arith.constant 0 : index
    %356 = vector.load %arg8[%c1_167, %c0_168, %c0_169] : memref<6x1x64xf32, #tpu.memory_space<vmem>>, vector<1x1x64xf32>
    %357 = vector.shape_cast %356 : vector<1x1x64xf32> to vector<1x64xf32>
    %c1_170 = arith.constant 1 : index
    %c0_171 = arith.constant 0 : index
    %c0_172 = arith.constant 0 : index
    %358 = vector.load %arg9[%c1_170, %c0_171, %c0_172] : memref<6x1x64xf32, #tpu.memory_space<vmem>>, vector<1x1x64xf32>
    %359 = vector.shape_cast %358 : vector<1x1x64xf32> to vector<1x64xf32>
    %cst_173 = arith.constant dense<0.000000e+00> : vector<16xf32>
    %360 = vector.multi_reduction <add>, %355, %cst_173 [1] : vector<16x64xf32> to vector<16xf32>
    %361 = vector.shape_cast %360 : vector<16xf32> to vector<16x1xf32>
    %cst_174 = arith.constant 6.400000e+01 : f32
    %362 = vector.broadcast %cst_174 : f32 to vector<16x1xf32>
    %363 = arith.divf %361, %362 : vector<16x1xf32>
    %364 = vector.broadcast %363 : vector<16x1xf32> to vector<16x64xf32>
    %365 = arith.subf %355, %364 : vector<16x64xf32>
    %366 = arith.mulf %365, %365 : vector<16x64xf32>
    %cst_175 = arith.constant dense<0.000000e+00> : vector<16xf32>
    %367 = vector.multi_reduction <add>, %366, %cst_175 [1] : vector<16x64xf32> to vector<16xf32>
    %368 = vector.shape_cast %367 : vector<16xf32> to vector<16x1xf32>
    %cst_176 = arith.constant 6.400000e+01 : f32
    %369 = vector.broadcast %cst_176 : f32 to vector<16x1xf32>
    %370 = arith.divf %368, %369 : vector<16x1xf32>
    %371 = vector.broadcast %363 : vector<16x1xf32> to vector<16x64xf32>
    %372 = arith.subf %355, %371 : vector<16x64xf32>
    %cst_177 = arith.constant 9.99999997E-7 : f32
    %373 = vector.broadcast %cst_177 : f32 to vector<16x1xf32>
    %374 = arith.addf %370, %373 : vector<16x1xf32>
    %375 = math.rsqrt %374 : vector<16x1xf32>
    %376 = vector.broadcast %375 : vector<16x1xf32> to vector<16x64xf32>
    %377 = arith.mulf %372, %376 : vector<16x64xf32>
    %378 = vector.broadcast %357 : vector<1x64xf32> to vector<16x64xf32>
    %379 = arith.mulf %377, %378 : vector<16x64xf32>
    %380 = vector.broadcast %359 : vector<1x64xf32> to vector<16x64xf32>
    %381 = arith.addf %379, %380 : vector<16x64xf32>
    %382 = arith.truncf %381 : vector<16x64xf32> to vector<16x64xbf16>
    %c1_178 = arith.constant 1 : index
    %c0_179 = arith.constant 0 : index
    %c0_180 = arith.constant 0 : index
    %383 = vector.load %arg10[%c1_178, %c0_179, %c0_180] : memref<6x64x256xbf16, #tpu.memory_space<vmem>>, vector<1x64x256xbf16>
    %384 = vector.shape_cast %383 : vector<1x64x256xbf16> to vector<64x256xbf16>
    %cst_181 = arith.constant dense<0.000000e+00> : vector<16x256xf32>
    %385 = tpu.matmul %382, %384, %cst_181 {dimension_numbers = #tpu.dot_dimension_numbers<[1], [0], [0], [1], [0, 0, 1, 1], [], []>} : vector<16x64xbf16>, vector<64x256xbf16>, vector<16x256xf32> -> vector<16x256xf32>
    %c1_182 = arith.constant 1 : index
    %c0_183 = arith.constant 0 : index
    %c0_184 = arith.constant 0 : index
    %386 = vector.load %arg11[%c1_182, %c0_183, %c0_184] : memref<6x1x256xf32, #tpu.memory_space<vmem>>, vector<1x1x256xf32>
    %387 = vector.shape_cast %386 : vector<1x1x256xf32> to vector<1x256xf32>
    %388 = vector.broadcast %387 : vector<1x256xf32> to vector<16x256xf32>
    %389 = arith.addf %385, %388 : vector<16x256xf32>
    %cst_185 = arith.constant 5.000000e-01 : f32
    %390 = vector.broadcast %cst_185 : f32 to vector<16x256xf32>
    %391 = arith.mulf %390, %389 : vector<16x256xf32>
    %cst_186 = arith.constant 0.707106769 : f32
    %392 = vector.broadcast %cst_186 : f32 to vector<16x256xf32>
    %393 = arith.mulf %389, %392 : vector<16x256xf32>
    %394 = math.erf %393 : vector<16x256xf32>
    %cst_187 = arith.constant 1.000000e+00 : f32
    %395 = vector.broadcast %cst_187 : f32 to vector<16x256xf32>
    %396 = arith.addf %395, %394 : vector<16x256xf32>
    %397 = arith.mulf %391, %396 : vector<16x256xf32>
    %398 = arith.truncf %397 : vector<16x256xf32> to vector<16x256xbf16>
    %c1_188 = arith.constant 1 : index
    %c0_189 = arith.constant 0 : index
    %c0_190 = arith.constant 0 : index
    %399 = vector.load %arg12[%c1_188, %c0_189, %c0_190] : memref<6x256x64xbf16, #tpu.memory_space<vmem>>, vector<1x256x64xbf16>
    %400 = vector.shape_cast %399 : vector<1x256x64xbf16> to vector<256x64xbf16>
    %cst_191 = arith.constant dense<0.000000e+00> : vector<16x64xf32>
    %401 = tpu.matmul %398, %400, %cst_191 {dimension_numbers = #tpu.dot_dimension_numbers<[1], [0], [0], [1], [0, 0, 1, 1], [], []>} : vector<16x256xbf16>, vector<256x64xbf16>, vector<16x64xf32> -> vector<16x64xf32>
    %c1_192 = arith.constant 1 : index
    %c0_193 = arith.constant 0 : index
    %c0_194 = arith.constant 0 : index
    %402 = vector.load %arg13[%c1_192, %c0_193, %c0_194] : memref<6x1x64xf32, #tpu.memory_space<vmem>>, vector<1x1x64xf32>
    %403 = vector.shape_cast %402 : vector<1x1x64xf32> to vector<1x64xf32>
    %404 = vector.broadcast %403 : vector<1x64xf32> to vector<16x64xf32>
    %405 = arith.addf %401, %404 : vector<16x64xf32>
    %406 = arith.addf %381, %405 : vector<16x64xf32>
    %c1_195 = arith.constant 1 : index
    %c0_196 = arith.constant 0 : index
    %c0_197 = arith.constant 0 : index
    %407 = vector.load %arg14[%c1_195, %c0_196, %c0_197] : memref<6x1x64xf32, #tpu.memory_space<vmem>>, vector<1x1x64xf32>
    %408 = vector.shape_cast %407 : vector<1x1x64xf32> to vector<1x64xf32>
    %c1_198 = arith.constant 1 : index
    %c0_199 = arith.constant 0 : index
    %c0_200 = arith.constant 0 : index
    %409 = vector.load %arg15[%c1_198, %c0_199, %c0_200] : memref<6x1x64xf32, #tpu.memory_space<vmem>>, vector<1x1x64xf32>
    %410 = vector.shape_cast %409 : vector<1x1x64xf32> to vector<1x64xf32>
    %cst_201 = arith.constant dense<0.000000e+00> : vector<16xf32>
    %411 = vector.multi_reduction <add>, %406, %cst_201 [1] : vector<16x64xf32> to vector<16xf32>
    %412 = vector.shape_cast %411 : vector<16xf32> to vector<16x1xf32>
    %cst_202 = arith.constant 6.400000e+01 : f32
    %413 = vector.broadcast %cst_202 : f32 to vector<16x1xf32>
    %414 = arith.divf %412, %413 : vector<16x1xf32>
    %415 = vector.broadcast %414 : vector<16x1xf32> to vector<16x64xf32>
    %416 = arith.subf %406, %415 : vector<16x64xf32>
    %417 = arith.mulf %416, %416 : vector<16x64xf32>
    %cst_203 = arith.constant dense<0.000000e+00> : vector<16xf32>
    %418 = vector.multi_reduction <add>, %417, %cst_203 [1] : vector<16x64xf32> to vector<16xf32>
    %419 = vector.shape_cast %418 : vector<16xf32> to vector<16x1xf32>
    %cst_204 = arith.constant 6.400000e+01 : f32
    %420 = vector.broadcast %cst_204 : f32 to vector<16x1xf32>
    %421 = arith.divf %419, %420 : vector<16x1xf32>
    %422 = vector.broadcast %414 : vector<16x1xf32> to vector<16x64xf32>
    %423 = arith.subf %406, %422 : vector<16x64xf32>
    %cst_205 = arith.constant 9.99999997E-7 : f32
    %424 = vector.broadcast %cst_205 : f32 to vector<16x1xf32>
    %425 = arith.addf %421, %424 : vector<16x1xf32>
    %426 = math.rsqrt %425 : vector<16x1xf32>
    %427 = vector.broadcast %426 : vector<16x1xf32> to vector<16x64xf32>
    %428 = arith.mulf %423, %427 : vector<16x64xf32>
    %429 = vector.broadcast %408 : vector<1x64xf32> to vector<16x64xf32>
    %430 = arith.mulf %428, %429 : vector<16x64xf32>
    %431 = vector.broadcast %410 : vector<1x64xf32> to vector<16x64xf32>
    %432 = arith.addf %430, %431 : vector<16x64xf32>
    %433 = vector.extract_strided_slice %289 {offsets = [5, 0], sizes = [16, 64], strides = [1, 1]} : vector<21x64xf32> to vector<16x64xf32>
    %434 = arith.truncf %289 : vector<21x64xf32> to vector<21x64xbf16>
    %c3 = arith.constant 3 : index
    %c0_206 = arith.constant 0 : index
    %c0_207 = arith.constant 0 : index
    %435 = vector.load %arg2[%c3, %c0_206, %c0_207] : memref<6x64x64xbf16, #tpu.memory_space<vmem>>, vector<1x64x64xbf16>
    %436 = vector.shape_cast %435 : vector<1x64x64xbf16> to vector<64x64xbf16>
    %cst_208 = arith.constant dense<0.000000e+00> : vector<21x64xf32>
    %437 = tpu.matmul %434, %436, %cst_208 {dimension_numbers = #tpu.dot_dimension_numbers<[1], [0], [0], [1], [0, 0, 1, 1], [], []>} : vector<21x64xbf16>, vector<64x64xbf16>, vector<21x64xf32> -> vector<21x64xf32>
    %c3_209 = arith.constant 3 : index
    %c0_210 = arith.constant 0 : index
    %c0_211 = arith.constant 0 : index
    %438 = vector.load %arg3[%c3_209, %c0_210, %c0_211] : memref<6x1x64xf32, #tpu.memory_space<vmem>>, vector<1x1x64xf32>
    %439 = vector.shape_cast %438 : vector<1x1x64xf32> to vector<1x64xf32>
    %440 = vector.broadcast %439 : vector<1x64xf32> to vector<21x64xf32>
    %441 = arith.addf %437, %440 : vector<21x64xf32>
    %442 = arith.truncf %433 : vector<16x64xf32> to vector<16x64xbf16>
    %c3_212 = arith.constant 3 : index
    %c0_213 = arith.constant 0 : index
    %c0_214 = arith.constant 0 : index
    %443 = vector.load %arg4[%c3_212, %c0_213, %c0_214] : memref<6x64x128xbf16, #tpu.memory_space<vmem>>, vector<1x64x128xbf16>
    %444 = vector.shape_cast %443 : vector<1x64x128xbf16> to vector<64x128xbf16>
    %cst_215 = arith.constant dense<0.000000e+00> : vector<16x128xf32>
    %445 = tpu.matmul %442, %444, %cst_215 {dimension_numbers = #tpu.dot_dimension_numbers<[1], [0], [0], [1], [0, 0, 1, 1], [], []>} : vector<16x64xbf16>, vector<64x128xbf16>, vector<16x128xf32> -> vector<16x128xf32>
    %c3_216 = arith.constant 3 : index
    %c0_217 = arith.constant 0 : index
    %c0_218 = arith.constant 0 : index
    %446 = vector.load %arg5[%c3_216, %c0_217, %c0_218] : memref<6x1x128xf32, #tpu.memory_space<vmem>>, vector<1x1x128xf32>
    %447 = vector.shape_cast %446 : vector<1x1x128xf32> to vector<1x128xf32>
    %448 = vector.broadcast %447 : vector<1x128xf32> to vector<16x128xf32>
    %449 = arith.addf %445, %448 : vector<16x128xf32>
    %cst_219 = arith.constant 0.176776692 : f32
    %450 = vector.broadcast %cst_219 : f32 to vector<21x64xf32>
    %451 = arith.mulf %441, %450 : vector<21x64xf32>
    %452 = vector.extract_strided_slice %449 {offsets = [0, 0], sizes = [16, 64], strides = [1, 1]} : vector<16x128xf32> to vector<16x64xf32>
    %453 = vector.extract_strided_slice %449 {offsets = [0, 64], sizes = [16, 64], strides = [1, 1]} : vector<16x128xf32> to vector<16x64xf32>
    %454 = vector.extract_strided_slice %451 {offsets = [0, 0], sizes = [21, 32], strides = [1, 1]} : vector<21x64xf32> to vector<21x32xf32>
    %455 = arith.truncf %454 : vector<21x32xf32> to vector<21x32xbf16>
    %456 = vector.extract_strided_slice %452 {offsets = [0, 0], sizes = [16, 32], strides = [1, 1]} : vector<16x64xf32> to vector<16x32xf32>
    %457 = arith.truncf %456 : vector<16x32xf32> to vector<16x32xbf16>
    %458 = vector.extract_strided_slice %453 {offsets = [0, 0], sizes = [16, 32], strides = [1, 1]} : vector<16x64xf32> to vector<16x32xf32>
    %459 = arith.truncf %458 : vector<16x32xf32> to vector<16x32xbf16>
    %cst_220 = arith.constant dense<0.000000e+00> : vector<21x16xf32>
    %460 = tpu.matmul %455, %457, %cst_220 {dimension_numbers = #tpu.dot_dimension_numbers<[1], [1], [0], [0], [0, 0, 1, 0], [], []>} : vector<21x32xbf16>, vector<16x32xbf16>, vector<21x16xf32> -> vector<21x16xf32>
    %cst_221 = arith.constant dense<0xFF800000> : vector<21xf32>
    %461 = vector.multi_reduction <maximumf>, %460, %cst_221 [1] : vector<21x16xf32> to vector<21xf32>
    %462 = vector.shape_cast %461 : vector<21xf32> to vector<21x1xf32>
    %463 = vector.broadcast %462 : vector<21x1xf32> to vector<21x16xf32>
    %464 = arith.subf %460, %463 : vector<21x16xf32>
    %465 = math.exp %464 : vector<21x16xf32>
    %cst_222 = arith.constant dense<0.000000e+00> : vector<21xf32>
    %466 = vector.multi_reduction <add>, %465, %cst_222 [1] : vector<21x16xf32> to vector<21xf32>
    %467 = vector.shape_cast %466 : vector<21xf32> to vector<21x1xf32>
    %468 = vector.broadcast %467 : vector<21x1xf32> to vector<21x16xf32>
    %469 = arith.divf %465, %468 : vector<21x16xf32>
    %470 = arith.truncf %469 : vector<21x16xf32> to vector<21x16xbf16>
    %cst_223 = arith.constant dense<0.000000e+00> : vector<21x32xf32>
    %471 = tpu.matmul %470, %459, %cst_223 {dimension_numbers = #tpu.dot_dimension_numbers<[1], [0], [0], [1], [0, 0, 1, 1], [], []>} : vector<21x16xbf16>, vector<16x32xbf16>, vector<21x32xf32> -> vector<21x32xf32>
    %472 = vector.extract_strided_slice %451 {offsets = [0, 32], sizes = [21, 32], strides = [1, 1]} : vector<21x64xf32> to vector<21x32xf32>
    %473 = arith.truncf %472 : vector<21x32xf32> to vector<21x32xbf16>
    %474 = vector.extract_strided_slice %452 {offsets = [0, 32], sizes = [16, 32], strides = [1, 1]} : vector<16x64xf32> to vector<16x32xf32>
    %475 = arith.truncf %474 : vector<16x32xf32> to vector<16x32xbf16>
    %476 = vector.extract_strided_slice %453 {offsets = [0, 32], sizes = [16, 32], strides = [1, 1]} : vector<16x64xf32> to vector<16x32xf32>
    %477 = arith.truncf %476 : vector<16x32xf32> to vector<16x32xbf16>
    %cst_224 = arith.constant dense<0.000000e+00> : vector<21x16xf32>
    %478 = tpu.matmul %473, %475, %cst_224 {dimension_numbers = #tpu.dot_dimension_numbers<[1], [1], [0], [0], [0, 0, 1, 0], [], []>} : vector<21x32xbf16>, vector<16x32xbf16>, vector<21x16xf32> -> vector<21x16xf32>
    %cst_225 = arith.constant dense<0xFF800000> : vector<21xf32>
    %479 = vector.multi_reduction <maximumf>, %478, %cst_225 [1] : vector<21x16xf32> to vector<21xf32>
    %480 = vector.shape_cast %479 : vector<21xf32> to vector<21x1xf32>
    %481 = vector.broadcast %480 : vector<21x1xf32> to vector<21x16xf32>
    %482 = arith.subf %478, %481 : vector<21x16xf32>
    %483 = math.exp %482 : vector<21x16xf32>
    %cst_226 = arith.constant dense<0.000000e+00> : vector<21xf32>
    %484 = vector.multi_reduction <add>, %483, %cst_226 [1] : vector<21x16xf32> to vector<21xf32>
    %485 = vector.shape_cast %484 : vector<21xf32> to vector<21x1xf32>
    %486 = vector.broadcast %485 : vector<21x1xf32> to vector<21x16xf32>
    %487 = arith.divf %483, %486 : vector<21x16xf32>
    %488 = arith.truncf %487 : vector<21x16xf32> to vector<21x16xbf16>
    %cst_227 = arith.constant dense<0.000000e+00> : vector<21x32xf32>
    %489 = tpu.matmul %488, %477, %cst_227 {dimension_numbers = #tpu.dot_dimension_numbers<[1], [0], [0], [1], [0, 0, 1, 1], [], []>} : vector<21x16xbf16>, vector<16x32xbf16>, vector<21x32xf32> -> vector<21x32xf32>
    %490 = tpu.concatenate %471, %489 in 1 : vector<21x32xf32>, vector<21x32xf32> -> vector<21x64xf32>
    %491 = arith.truncf %490 : vector<21x64xf32> to vector<21x64xbf16>
    %c3_228 = arith.constant 3 : index
    %c0_229 = arith.constant 0 : index
    %c0_230 = arith.constant 0 : index
    %492 = vector.load %arg6[%c3_228, %c0_229, %c0_230] : memref<6x64x64xbf16, #tpu.memory_space<vmem>>, vector<1x64x64xbf16>
    %493 = vector.shape_cast %492 : vector<1x64x64xbf16> to vector<64x64xbf16>
    %cst_231 = arith.constant dense<0.000000e+00> : vector<21x64xf32>
    %494 = tpu.matmul %491, %493, %cst_231 {dimension_numbers = #tpu.dot_dimension_numbers<[1], [0], [0], [1], [0, 0, 1, 1], [], []>} : vector<21x64xbf16>, vector<64x64xbf16>, vector<21x64xf32> -> vector<21x64xf32>
    %c3_232 = arith.constant 3 : index
    %c0_233 = arith.constant 0 : index
    %c0_234 = arith.constant 0 : index
    %495 = vector.load %arg7[%c3_232, %c0_233, %c0_234] : memref<6x1x64xf32, #tpu.memory_space<vmem>>, vector<1x1x64xf32>
    %496 = vector.shape_cast %495 : vector<1x1x64xf32> to vector<1x64xf32>
    %497 = vector.broadcast %496 : vector<1x64xf32> to vector<21x64xf32>
    %498 = arith.addf %494, %497 : vector<21x64xf32>
    %499 = arith.addf %289, %498 : vector<21x64xf32>
    %c3_235 = arith.constant 3 : index
    %c0_236 = arith.constant 0 : index
    %c0_237 = arith.constant 0 : index
    %500 = vector.load %arg8[%c3_235, %c0_236, %c0_237] : memref<6x1x64xf32, #tpu.memory_space<vmem>>, vector<1x1x64xf32>
    %501 = vector.shape_cast %500 : vector<1x1x64xf32> to vector<1x64xf32>
    %c3_238 = arith.constant 3 : index
    %c0_239 = arith.constant 0 : index
    %c0_240 = arith.constant 0 : index
    %502 = vector.load %arg9[%c3_238, %c0_239, %c0_240] : memref<6x1x64xf32, #tpu.memory_space<vmem>>, vector<1x1x64xf32>
    %503 = vector.shape_cast %502 : vector<1x1x64xf32> to vector<1x64xf32>
    %cst_241 = arith.constant dense<0.000000e+00> : vector<21xf32>
    %504 = vector.multi_reduction <add>, %499, %cst_241 [1] : vector<21x64xf32> to vector<21xf32>
    %505 = vector.shape_cast %504 : vector<21xf32> to vector<21x1xf32>
    %cst_242 = arith.constant 6.400000e+01 : f32
    %506 = vector.broadcast %cst_242 : f32 to vector<21x1xf32>
    %507 = arith.divf %505, %506 : vector<21x1xf32>
    %508 = vector.broadcast %507 : vector<21x1xf32> to vector<21x64xf32>
    %509 = arith.subf %499, %508 : vector<21x64xf32>
    %510 = arith.mulf %509, %509 : vector<21x64xf32>
    %cst_243 = arith.constant dense<0.000000e+00> : vector<21xf32>
    %511 = vector.multi_reduction <add>, %510, %cst_243 [1] : vector<21x64xf32> to vector<21xf32>
    %512 = vector.shape_cast %511 : vector<21xf32> to vector<21x1xf32>
    %cst_244 = arith.constant 6.400000e+01 : f32
    %513 = vector.broadcast %cst_244 : f32 to vector<21x1xf32>
    %514 = arith.divf %512, %513 : vector<21x1xf32>
    %515 = vector.broadcast %507 : vector<21x1xf32> to vector<21x64xf32>
    %516 = arith.subf %499, %515 : vector<21x64xf32>
    %cst_245 = arith.constant 9.99999997E-7 : f32
    %517 = vector.broadcast %cst_245 : f32 to vector<21x1xf32>
    %518 = arith.addf %514, %517 : vector<21x1xf32>
    %519 = math.rsqrt %518 : vector<21x1xf32>
    %520 = vector.broadcast %519 : vector<21x1xf32> to vector<21x64xf32>
    %521 = arith.mulf %516, %520 : vector<21x64xf32>
    %522 = vector.broadcast %501 : vector<1x64xf32> to vector<21x64xf32>
    %523 = arith.mulf %521, %522 : vector<21x64xf32>
    %524 = vector.broadcast %503 : vector<1x64xf32> to vector<21x64xf32>
    %525 = arith.addf %523, %524 : vector<21x64xf32>
    %526 = arith.truncf %525 : vector<21x64xf32> to vector<21x64xbf16>
    %c3_246 = arith.constant 3 : index
    %c0_247 = arith.constant 0 : index
    %c0_248 = arith.constant 0 : index
    %527 = vector.load %arg10[%c3_246, %c0_247, %c0_248] : memref<6x64x256xbf16, #tpu.memory_space<vmem>>, vector<1x64x256xbf16>
    %528 = vector.shape_cast %527 : vector<1x64x256xbf16> to vector<64x256xbf16>
    %cst_249 = arith.constant dense<0.000000e+00> : vector<21x256xf32>
    %529 = tpu.matmul %526, %528, %cst_249 {dimension_numbers = #tpu.dot_dimension_numbers<[1], [0], [0], [1], [0, 0, 1, 1], [], []>} : vector<21x64xbf16>, vector<64x256xbf16>, vector<21x256xf32> -> vector<21x256xf32>
    %c3_250 = arith.constant 3 : index
    %c0_251 = arith.constant 0 : index
    %c0_252 = arith.constant 0 : index
    %530 = vector.load %arg11[%c3_250, %c0_251, %c0_252] : memref<6x1x256xf32, #tpu.memory_space<vmem>>, vector<1x1x256xf32>
    %531 = vector.shape_cast %530 : vector<1x1x256xf32> to vector<1x256xf32>
    %532 = vector.broadcast %531 : vector<1x256xf32> to vector<21x256xf32>
    %533 = arith.addf %529, %532 : vector<21x256xf32>
    %cst_253 = arith.constant 5.000000e-01 : f32
    %534 = vector.broadcast %cst_253 : f32 to vector<21x256xf32>
    %535 = arith.mulf %534, %533 : vector<21x256xf32>
    %cst_254 = arith.constant 0.707106769 : f32
    %536 = vector.broadcast %cst_254 : f32 to vector<21x256xf32>
    %537 = arith.mulf %533, %536 : vector<21x256xf32>
    %538 = math.erf %537 : vector<21x256xf32>
    %cst_255 = arith.constant 1.000000e+00 : f32
    %539 = vector.broadcast %cst_255 : f32 to vector<21x256xf32>
    %540 = arith.addf %539, %538 : vector<21x256xf32>
    %541 = arith.mulf %535, %540 : vector<21x256xf32>
    %542 = arith.truncf %541 : vector<21x256xf32> to vector<21x256xbf16>
    %c3_256 = arith.constant 3 : index
    %c0_257 = arith.constant 0 : index
    %c0_258 = arith.constant 0 : index
    %543 = vector.load %arg12[%c3_256, %c0_257, %c0_258] : memref<6x256x64xbf16, #tpu.memory_space<vmem>>, vector<1x256x64xbf16>
    %544 = vector.shape_cast %543 : vector<1x256x64xbf16> to vector<256x64xbf16>
    %cst_259 = arith.constant dense<0.000000e+00> : vector<21x64xf32>
    %545 = tpu.matmul %542, %544, %cst_259 {dimension_numbers = #tpu.dot_dimension_numbers<[1], [0], [0], [1], [0, 0, 1, 1], [], []>} : vector<21x256xbf16>, vector<256x64xbf16>, vector<21x64xf32> -> vector<21x64xf32>
    %c3_260 = arith.constant 3 : index
    %c0_261 = arith.constant 0 : index
    %c0_262 = arith.constant 0 : index
    %546 = vector.load %arg13[%c3_260, %c0_261, %c0_262] : memref<6x1x64xf32, #tpu.memory_space<vmem>>, vector<1x1x64xf32>
    %547 = vector.shape_cast %546 : vector<1x1x64xf32> to vector<1x64xf32>
    %548 = vector.broadcast %547 : vector<1x64xf32> to vector<21x64xf32>
    %549 = arith.addf %545, %548 : vector<21x64xf32>
    %550 = arith.addf %525, %549 : vector<21x64xf32>
    %c3_263 = arith.constant 3 : index
    %c0_264 = arith.constant 0 : index
    %c0_265 = arith.constant 0 : index
    %551 = vector.load %arg14[%c3_263, %c0_264, %c0_265] : memref<6x1x64xf32, #tpu.memory_space<vmem>>, vector<1x1x64xf32>
    %552 = vector.shape_cast %551 : vector<1x1x64xf32> to vector<1x64xf32>
    %c3_266 = arith.constant 3 : index
    %c0_267 = arith.constant 0 : index
    %c0_268 = arith.constant 0 : index
    %553 = vector.load %arg15[%c3_266, %c0_267, %c0_268] : memref<6x1x64xf32, #tpu.memory_space<vmem>>, vector<1x1x64xf32>
    %554 = vector.shape_cast %553 : vector<1x1x64xf32> to vector<1x64xf32>
    %cst_269 = arith.constant dense<0.000000e+00> : vector<21xf32>
    %555 = vector.multi_reduction <add>, %550, %cst_269 [1] : vector<21x64xf32> to vector<21xf32>
    %556 = vector.shape_cast %555 : vector<21xf32> to vector<21x1xf32>
    %cst_270 = arith.constant 6.400000e+01 : f32
    %557 = vector.broadcast %cst_270 : f32 to vector<21x1xf32>
    %558 = arith.divf %556, %557 : vector<21x1xf32>
    %559 = vector.broadcast %558 : vector<21x1xf32> to vector<21x64xf32>
    %560 = arith.subf %550, %559 : vector<21x64xf32>
    %561 = arith.mulf %560, %560 : vector<21x64xf32>
    %cst_271 = arith.constant dense<0.000000e+00> : vector<21xf32>
    %562 = vector.multi_reduction <add>, %561, %cst_271 [1] : vector<21x64xf32> to vector<21xf32>
    %563 = vector.shape_cast %562 : vector<21xf32> to vector<21x1xf32>
    %cst_272 = arith.constant 6.400000e+01 : f32
    %564 = vector.broadcast %cst_272 : f32 to vector<21x1xf32>
    %565 = arith.divf %563, %564 : vector<21x1xf32>
    %566 = vector.broadcast %558 : vector<21x1xf32> to vector<21x64xf32>
    %567 = arith.subf %550, %566 : vector<21x64xf32>
    %cst_273 = arith.constant 9.99999997E-7 : f32
    %568 = vector.broadcast %cst_273 : f32 to vector<21x1xf32>
    %569 = arith.addf %565, %568 : vector<21x1xf32>
    %570 = math.rsqrt %569 : vector<21x1xf32>
    %571 = vector.broadcast %570 : vector<21x1xf32> to vector<21x64xf32>
    %572 = arith.mulf %567, %571 : vector<21x64xf32>
    %573 = vector.broadcast %552 : vector<1x64xf32> to vector<21x64xf32>
    %574 = arith.mulf %572, %573 : vector<21x64xf32>
    %575 = vector.broadcast %554 : vector<1x64xf32> to vector<21x64xf32>
    %576 = arith.addf %574, %575 : vector<21x64xf32>
    %577 = vector.extract_strided_slice %576 {offsets = [0, 0], sizes = [5, 64], strides = [1, 1]} : vector<21x64xf32> to vector<5x64xf32>
    %578 = arith.truncf %577 : vector<5x64xf32> to vector<5x64xbf16>
    %c4 = arith.constant 4 : index
    %c0_274 = arith.constant 0 : index
    %c0_275 = arith.constant 0 : index
    %579 = vector.load %arg2[%c4, %c0_274, %c0_275] : memref<6x64x64xbf16, #tpu.memory_space<vmem>>, vector<1x64x64xbf16>
    %580 = vector.shape_cast %579 : vector<1x64x64xbf16> to vector<64x64xbf16>
    %cst_276 = arith.constant dense<0.000000e+00> : vector<5x64xf32>
    %581 = tpu.matmul %578, %580, %cst_276 {dimension_numbers = #tpu.dot_dimension_numbers<[1], [0], [0], [1], [0, 0, 1, 1], [], []>} : vector<5x64xbf16>, vector<64x64xbf16>, vector<5x64xf32> -> vector<5x64xf32>
    %c4_277 = arith.constant 4 : index
    %c0_278 = arith.constant 0 : index
    %c0_279 = arith.constant 0 : index
    %582 = vector.load %arg3[%c4_277, %c0_278, %c0_279] : memref<6x1x64xf32, #tpu.memory_space<vmem>>, vector<1x1x64xf32>
    %583 = vector.shape_cast %582 : vector<1x1x64xf32> to vector<1x64xf32>
    %584 = vector.broadcast %583 : vector<1x64xf32> to vector<5x64xf32>
    %585 = arith.addf %581, %584 : vector<5x64xf32>
    %586 = arith.truncf %577 : vector<5x64xf32> to vector<5x64xbf16>
    %c4_280 = arith.constant 4 : index
    %c0_281 = arith.constant 0 : index
    %c0_282 = arith.constant 0 : index
    %587 = vector.load %arg4[%c4_280, %c0_281, %c0_282] : memref<6x64x128xbf16, #tpu.memory_space<vmem>>, vector<1x64x128xbf16>
    %588 = vector.shape_cast %587 : vector<1x64x128xbf16> to vector<64x128xbf16>
    %cst_283 = arith.constant dense<0.000000e+00> : vector<5x128xf32>
    %589 = tpu.matmul %586, %588, %cst_283 {dimension_numbers = #tpu.dot_dimension_numbers<[1], [0], [0], [1], [0, 0, 1, 1], [], []>} : vector<5x64xbf16>, vector<64x128xbf16>, vector<5x128xf32> -> vector<5x128xf32>
    %c4_284 = arith.constant 4 : index
    %c0_285 = arith.constant 0 : index
    %c0_286 = arith.constant 0 : index
    %590 = vector.load %arg5[%c4_284, %c0_285, %c0_286] : memref<6x1x128xf32, #tpu.memory_space<vmem>>, vector<1x1x128xf32>
    %591 = vector.shape_cast %590 : vector<1x1x128xf32> to vector<1x128xf32>
    %592 = vector.broadcast %591 : vector<1x128xf32> to vector<5x128xf32>
    %593 = arith.addf %589, %592 : vector<5x128xf32>
    %cst_287 = arith.constant 0.176776692 : f32
    %594 = vector.broadcast %cst_287 : f32 to vector<5x64xf32>
    %595 = arith.mulf %585, %594 : vector<5x64xf32>
    %596 = vector.extract_strided_slice %593 {offsets = [0, 0], sizes = [5, 64], strides = [1, 1]} : vector<5x128xf32> to vector<5x64xf32>
    %597 = vector.extract_strided_slice %593 {offsets = [0, 64], sizes = [5, 64], strides = [1, 1]} : vector<5x128xf32> to vector<5x64xf32>
    %598 = tpu.iota {dimensions = array<i32: 0>} : vector<5x5xi32>
    %599 = tpu.iota {dimensions = array<i32: 1>} : vector<5x5xi32>
    %600 = arith.cmpi sle, %599, %598 : vector<5x5xi32>
    %cst_288 = arith.constant 0.000000e+00 : f32
    %cst_289 = arith.constant -1.000000e+30 : f32
    %601 = vector.broadcast %cst_288 : f32 to vector<5x5xf32>
    %602 = vector.broadcast %cst_289 : f32 to vector<5x5xf32>
    %603 = arith.select %600, %601, %602 : vector<5x5xi1>, vector<5x5xf32>
    %604 = vector.extract_strided_slice %595 {offsets = [0, 0], sizes = [5, 32], strides = [1, 1]} : vector<5x64xf32> to vector<5x32xf32>
    %605 = arith.truncf %604 : vector<5x32xf32> to vector<5x32xbf16>
    %606 = vector.extract_strided_slice %596 {offsets = [0, 0], sizes = [5, 32], strides = [1, 1]} : vector<5x64xf32> to vector<5x32xf32>
    %607 = arith.truncf %606 : vector<5x32xf32> to vector<5x32xbf16>
    %608 = vector.extract_strided_slice %597 {offsets = [0, 0], sizes = [5, 32], strides = [1, 1]} : vector<5x64xf32> to vector<5x32xf32>
    %609 = arith.truncf %608 : vector<5x32xf32> to vector<5x32xbf16>
    %cst_290 = arith.constant dense<0.000000e+00> : vector<5x5xf32>
    %610 = tpu.matmul %605, %607, %cst_290 {dimension_numbers = #tpu.dot_dimension_numbers<[1], [1], [0], [0], [0, 0, 1, 0], [], []>} : vector<5x32xbf16>, vector<5x32xbf16>, vector<5x5xf32> -> vector<5x5xf32>
    %611 = arith.addf %610, %603 : vector<5x5xf32>
    %cst_291 = arith.constant dense<0xFF800000> : vector<5xf32>
    %612 = vector.multi_reduction <maximumf>, %611, %cst_291 [1] : vector<5x5xf32> to vector<5xf32>
    %613 = vector.shape_cast %612 : vector<5xf32> to vector<5x1xf32>
    %614 = vector.broadcast %613 : vector<5x1xf32> to vector<5x5xf32>
    %615 = arith.subf %611, %614 : vector<5x5xf32>
    %616 = math.exp %615 : vector<5x5xf32>
    %cst_292 = arith.constant dense<0.000000e+00> : vector<5xf32>
    %617 = vector.multi_reduction <add>, %616, %cst_292 [1] : vector<5x5xf32> to vector<5xf32>
    %618 = vector.shape_cast %617 : vector<5xf32> to vector<5x1xf32>
    %619 = vector.broadcast %618 : vector<5x1xf32> to vector<5x5xf32>
    %620 = arith.divf %616, %619 : vector<5x5xf32>
    %621 = arith.truncf %620 : vector<5x5xf32> to vector<5x5xbf16>
    %cst_293 = arith.constant dense<0.000000e+00> : vector<5x32xf32>
    %622 = tpu.matmul %621, %609, %cst_293 {dimension_numbers = #tpu.dot_dimension_numbers<[1], [0], [0], [1], [0, 0, 1, 1], [], []>} : vector<5x5xbf16>, vector<5x32xbf16>, vector<5x32xf32> -> vector<5x32xf32>
    %623 = vector.extract_strided_slice %595 {offsets = [0, 32], sizes = [5, 32], strides = [1, 1]} : vector<5x64xf32> to vector<5x32xf32>
    %624 = arith.truncf %623 : vector<5x32xf32> to vector<5x32xbf16>
    %625 = vector.extract_strided_slice %596 {offsets = [0, 32], sizes = [5, 32], strides = [1, 1]} : vector<5x64xf32> to vector<5x32xf32>
    %626 = arith.truncf %625 : vector<5x32xf32> to vector<5x32xbf16>
    %627 = vector.extract_strided_slice %597 {offsets = [0, 32], sizes = [5, 32], strides = [1, 1]} : vector<5x64xf32> to vector<5x32xf32>
    %628 = arith.truncf %627 : vector<5x32xf32> to vector<5x32xbf16>
    %cst_294 = arith.constant dense<0.000000e+00> : vector<5x5xf32>
    %629 = tpu.matmul %624, %626, %cst_294 {dimension_numbers = #tpu.dot_dimension_numbers<[1], [1], [0], [0], [0, 0, 1, 0], [], []>} : vector<5x32xbf16>, vector<5x32xbf16>, vector<5x5xf32> -> vector<5x5xf32>
    %630 = arith.addf %629, %603 : vector<5x5xf32>
    %cst_295 = arith.constant dense<0xFF800000> : vector<5xf32>
    %631 = vector.multi_reduction <maximumf>, %630, %cst_295 [1] : vector<5x5xf32> to vector<5xf32>
    %632 = vector.shape_cast %631 : vector<5xf32> to vector<5x1xf32>
    %633 = vector.broadcast %632 : vector<5x1xf32> to vector<5x5xf32>
    %634 = arith.subf %630, %633 : vector<5x5xf32>
    %635 = math.exp %634 : vector<5x5xf32>
    %cst_296 = arith.constant dense<0.000000e+00> : vector<5xf32>
    %636 = vector.multi_reduction <add>, %635, %cst_296 [1] : vector<5x5xf32> to vector<5xf32>
    %637 = vector.shape_cast %636 : vector<5xf32> to vector<5x1xf32>
    %638 = vector.broadcast %637 : vector<5x1xf32> to vector<5x5xf32>
    %639 = arith.divf %635, %638 : vector<5x5xf32>
    %640 = arith.truncf %639 : vector<5x5xf32> to vector<5x5xbf16>
    %cst_297 = arith.constant dense<0.000000e+00> : vector<5x32xf32>
    %641 = tpu.matmul %640, %628, %cst_297 {dimension_numbers = #tpu.dot_dimension_numbers<[1], [0], [0], [1], [0, 0, 1, 1], [], []>} : vector<5x5xbf16>, vector<5x32xbf16>, vector<5x32xf32> -> vector<5x32xf32>
    %642 = tpu.concatenate %622, %641 in 1 : vector<5x32xf32>, vector<5x32xf32> -> vector<5x64xf32>
    %643 = arith.truncf %642 : vector<5x64xf32> to vector<5x64xbf16>
    %c4_298 = arith.constant 4 : index
    %c0_299 = arith.constant 0 : index
    %c0_300 = arith.constant 0 : index
    %644 = vector.load %arg6[%c4_298, %c0_299, %c0_300] : memref<6x64x64xbf16, #tpu.memory_space<vmem>>, vector<1x64x64xbf16>
    %645 = vector.shape_cast %644 : vector<1x64x64xbf16> to vector<64x64xbf16>
    %cst_301 = arith.constant dense<0.000000e+00> : vector<5x64xf32>
    %646 = tpu.matmul %643, %645, %cst_301 {dimension_numbers = #tpu.dot_dimension_numbers<[1], [0], [0], [1], [0, 0, 1, 1], [], []>} : vector<5x64xbf16>, vector<64x64xbf16>, vector<5x64xf32> -> vector<5x64xf32>
    %c4_302 = arith.constant 4 : index
    %c0_303 = arith.constant 0 : index
    %c0_304 = arith.constant 0 : index
    %647 = vector.load %arg7[%c4_302, %c0_303, %c0_304] : memref<6x1x64xf32, #tpu.memory_space<vmem>>, vector<1x1x64xf32>
    %648 = vector.shape_cast %647 : vector<1x1x64xf32> to vector<1x64xf32>
    %649 = vector.broadcast %648 : vector<1x64xf32> to vector<5x64xf32>
    %650 = arith.addf %646, %649 : vector<5x64xf32>
    %651 = arith.addf %577, %650 : vector<5x64xf32>
    %c4_305 = arith.constant 4 : index
    %c0_306 = arith.constant 0 : index
    %c0_307 = arith.constant 0 : index
    %652 = vector.load %arg8[%c4_305, %c0_306, %c0_307] : memref<6x1x64xf32, #tpu.memory_space<vmem>>, vector<1x1x64xf32>
    %653 = vector.shape_cast %652 : vector<1x1x64xf32> to vector<1x64xf32>
    %c4_308 = arith.constant 4 : index
    %c0_309 = arith.constant 0 : index
    %c0_310 = arith.constant 0 : index
    %654 = vector.load %arg9[%c4_308, %c0_309, %c0_310] : memref<6x1x64xf32, #tpu.memory_space<vmem>>, vector<1x1x64xf32>
    %655 = vector.shape_cast %654 : vector<1x1x64xf32> to vector<1x64xf32>
    %cst_311 = arith.constant dense<0.000000e+00> : vector<5xf32>
    %656 = vector.multi_reduction <add>, %651, %cst_311 [1] : vector<5x64xf32> to vector<5xf32>
    %657 = vector.shape_cast %656 : vector<5xf32> to vector<5x1xf32>
    %cst_312 = arith.constant 6.400000e+01 : f32
    %658 = vector.broadcast %cst_312 : f32 to vector<5x1xf32>
    %659 = arith.divf %657, %658 : vector<5x1xf32>
    %660 = vector.broadcast %659 : vector<5x1xf32> to vector<5x64xf32>
    %661 = arith.subf %651, %660 : vector<5x64xf32>
    %662 = arith.mulf %661, %661 : vector<5x64xf32>
    %cst_313 = arith.constant dense<0.000000e+00> : vector<5xf32>
    %663 = vector.multi_reduction <add>, %662, %cst_313 [1] : vector<5x64xf32> to vector<5xf32>
    %664 = vector.shape_cast %663 : vector<5xf32> to vector<5x1xf32>
    %cst_314 = arith.constant 6.400000e+01 : f32
    %665 = vector.broadcast %cst_314 : f32 to vector<5x1xf32>
    %666 = arith.divf %664, %665 : vector<5x1xf32>
    %667 = vector.broadcast %659 : vector<5x1xf32> to vector<5x64xf32>
    %668 = arith.subf %651, %667 : vector<5x64xf32>
    %cst_315 = arith.constant 9.99999997E-7 : f32
    %669 = vector.broadcast %cst_315 : f32 to vector<5x1xf32>
    %670 = arith.addf %666, %669 : vector<5x1xf32>
    %671 = math.rsqrt %670 : vector<5x1xf32>
    %672 = vector.broadcast %671 : vector<5x1xf32> to vector<5x64xf32>
    %673 = arith.mulf %668, %672 : vector<5x64xf32>
    %674 = vector.broadcast %653 : vector<1x64xf32> to vector<5x64xf32>
    %675 = arith.mulf %673, %674 : vector<5x64xf32>
    %676 = vector.broadcast %655 : vector<1x64xf32> to vector<5x64xf32>
    %677 = arith.addf %675, %676 : vector<5x64xf32>
    %678 = arith.truncf %677 : vector<5x64xf32> to vector<5x64xbf16>
    %c4_316 = arith.constant 4 : index
    %c0_317 = arith.constant 0 : index
    %c0_318 = arith.constant 0 : index
    %679 = vector.load %arg10[%c4_316, %c0_317, %c0_318] : memref<6x64x256xbf16, #tpu.memory_space<vmem>>, vector<1x64x256xbf16>
    %680 = vector.shape_cast %679 : vector<1x64x256xbf16> to vector<64x256xbf16>
    %cst_319 = arith.constant dense<0.000000e+00> : vector<5x256xf32>
    %681 = tpu.matmul %678, %680, %cst_319 {dimension_numbers = #tpu.dot_dimension_numbers<[1], [0], [0], [1], [0, 0, 1, 1], [], []>} : vector<5x64xbf16>, vector<64x256xbf16>, vector<5x256xf32> -> vector<5x256xf32>
    %c4_320 = arith.constant 4 : index
    %c0_321 = arith.constant 0 : index
    %c0_322 = arith.constant 0 : index
    %682 = vector.load %arg11[%c4_320, %c0_321, %c0_322] : memref<6x1x256xf32, #tpu.memory_space<vmem>>, vector<1x1x256xf32>
    %683 = vector.shape_cast %682 : vector<1x1x256xf32> to vector<1x256xf32>
    %684 = vector.broadcast %683 : vector<1x256xf32> to vector<5x256xf32>
    %685 = arith.addf %681, %684 : vector<5x256xf32>
    %cst_323 = arith.constant 5.000000e-01 : f32
    %686 = vector.broadcast %cst_323 : f32 to vector<5x256xf32>
    %687 = arith.mulf %686, %685 : vector<5x256xf32>
    %cst_324 = arith.constant 0.707106769 : f32
    %688 = vector.broadcast %cst_324 : f32 to vector<5x256xf32>
    %689 = arith.mulf %685, %688 : vector<5x256xf32>
    %690 = math.erf %689 : vector<5x256xf32>
    %cst_325 = arith.constant 1.000000e+00 : f32
    %691 = vector.broadcast %cst_325 : f32 to vector<5x256xf32>
    %692 = arith.addf %691, %690 : vector<5x256xf32>
    %693 = arith.mulf %687, %692 : vector<5x256xf32>
    %694 = arith.truncf %693 : vector<5x256xf32> to vector<5x256xbf16>
    %c4_326 = arith.constant 4 : index
    %c0_327 = arith.constant 0 : index
    %c0_328 = arith.constant 0 : index
    %695 = vector.load %arg12[%c4_326, %c0_327, %c0_328] : memref<6x256x64xbf16, #tpu.memory_space<vmem>>, vector<1x256x64xbf16>
    %696 = vector.shape_cast %695 : vector<1x256x64xbf16> to vector<256x64xbf16>
    %cst_329 = arith.constant dense<0.000000e+00> : vector<5x64xf32>
    %697 = tpu.matmul %694, %696, %cst_329 {dimension_numbers = #tpu.dot_dimension_numbers<[1], [0], [0], [1], [0, 0, 1, 1], [], []>} : vector<5x256xbf16>, vector<256x64xbf16>, vector<5x64xf32> -> vector<5x64xf32>
    %c4_330 = arith.constant 4 : index
    %c0_331 = arith.constant 0 : index
    %c0_332 = arith.constant 0 : index
    %698 = vector.load %arg13[%c4_330, %c0_331, %c0_332] : memref<6x1x64xf32, #tpu.memory_space<vmem>>, vector<1x1x64xf32>
    %699 = vector.shape_cast %698 : vector<1x1x64xf32> to vector<1x64xf32>
    %700 = vector.broadcast %699 : vector<1x64xf32> to vector<5x64xf32>
    %701 = arith.addf %697, %700 : vector<5x64xf32>
    %702 = arith.addf %677, %701 : vector<5x64xf32>
    %c4_333 = arith.constant 4 : index
    %c0_334 = arith.constant 0 : index
    %c0_335 = arith.constant 0 : index
    %703 = vector.load %arg14[%c4_333, %c0_334, %c0_335] : memref<6x1x64xf32, #tpu.memory_space<vmem>>, vector<1x1x64xf32>
    %704 = vector.shape_cast %703 : vector<1x1x64xf32> to vector<1x64xf32>
    %c4_336 = arith.constant 4 : index
    %c0_337 = arith.constant 0 : index
    %c0_338 = arith.constant 0 : index
    %705 = vector.load %arg15[%c4_336, %c0_337, %c0_338] : memref<6x1x64xf32, #tpu.memory_space<vmem>>, vector<1x1x64xf32>
    %706 = vector.shape_cast %705 : vector<1x1x64xf32> to vector<1x64xf32>
    %cst_339 = arith.constant dense<0.000000e+00> : vector<5xf32>
    %707 = vector.multi_reduction <add>, %702, %cst_339 [1] : vector<5x64xf32> to vector<5xf32>
    %708 = vector.shape_cast %707 : vector<5xf32> to vector<5x1xf32>
    %cst_340 = arith.constant 6.400000e+01 : f32
    %709 = vector.broadcast %cst_340 : f32 to vector<5x1xf32>
    %710 = arith.divf %708, %709 : vector<5x1xf32>
    %711 = vector.broadcast %710 : vector<5x1xf32> to vector<5x64xf32>
    %712 = arith.subf %702, %711 : vector<5x64xf32>
    %713 = arith.mulf %712, %712 : vector<5x64xf32>
    %cst_341 = arith.constant dense<0.000000e+00> : vector<5xf32>
    %714 = vector.multi_reduction <add>, %713, %cst_341 [1] : vector<5x64xf32> to vector<5xf32>
    %715 = vector.shape_cast %714 : vector<5xf32> to vector<5x1xf32>
    %cst_342 = arith.constant 6.400000e+01 : f32
    %716 = vector.broadcast %cst_342 : f32 to vector<5x1xf32>
    %717 = arith.divf %715, %716 : vector<5x1xf32>
    %718 = vector.broadcast %710 : vector<5x1xf32> to vector<5x64xf32>
    %719 = arith.subf %702, %718 : vector<5x64xf32>
    %cst_343 = arith.constant 9.99999997E-7 : f32
    %720 = vector.broadcast %cst_343 : f32 to vector<5x1xf32>
    %721 = arith.addf %717, %720 : vector<5x1xf32>
    %722 = math.rsqrt %721 : vector<5x1xf32>
    %723 = vector.broadcast %722 : vector<5x1xf32> to vector<5x64xf32>
    %724 = arith.mulf %719, %723 : vector<5x64xf32>
    %725 = vector.broadcast %704 : vector<1x64xf32> to vector<5x64xf32>
    %726 = arith.mulf %724, %725 : vector<5x64xf32>
    %727 = vector.broadcast %706 : vector<1x64xf32> to vector<5x64xf32>
    %728 = arith.addf %726, %727 : vector<5x64xf32>
    %729 = arith.truncf %728 : vector<5x64xf32> to vector<5x64xbf16>
    %c5 = arith.constant 5 : index
    %c0_344 = arith.constant 0 : index
    %c0_345 = arith.constant 0 : index
    %730 = vector.load %arg2[%c5, %c0_344, %c0_345] : memref<6x64x64xbf16, #tpu.memory_space<vmem>>, vector<1x64x64xbf16>
    %731 = vector.shape_cast %730 : vector<1x64x64xbf16> to vector<64x64xbf16>
    %cst_346 = arith.constant dense<0.000000e+00> : vector<5x64xf32>
    %732 = tpu.matmul %729, %731, %cst_346 {dimension_numbers = #tpu.dot_dimension_numbers<[1], [0], [0], [1], [0, 0, 1, 1], [], []>} : vector<5x64xbf16>, vector<64x64xbf16>, vector<5x64xf32> -> vector<5x64xf32>
    %c5_347 = arith.constant 5 : index
    %c0_348 = arith.constant 0 : index
    %c0_349 = arith.constant 0 : index
    %733 = vector.load %arg3[%c5_347, %c0_348, %c0_349] : memref<6x1x64xf32, #tpu.memory_space<vmem>>, vector<1x1x64xf32>
    %734 = vector.shape_cast %733 : vector<1x1x64xf32> to vector<1x64xf32>
    %735 = vector.broadcast %734 : vector<1x64xf32> to vector<5x64xf32>
    %736 = arith.addf %732, %735 : vector<5x64xf32>
    %737 = arith.truncf %432 : vector<16x64xf32> to vector<16x64xbf16>
    %c5_350 = arith.constant 5 : index
    %c0_351 = arith.constant 0 : index
    %c0_352 = arith.constant 0 : index
    %738 = vector.load %arg4[%c5_350, %c0_351, %c0_352] : memref<6x64x128xbf16, #tpu.memory_space<vmem>>, vector<1x64x128xbf16>
    %739 = vector.shape_cast %738 : vector<1x64x128xbf16> to vector<64x128xbf16>
    %cst_353 = arith.constant dense<0.000000e+00> : vector<16x128xf32>
    %740 = tpu.matmul %737, %739, %cst_353 {dimension_numbers = #tpu.dot_dimension_numbers<[1], [0], [0], [1], [0, 0, 1, 1], [], []>} : vector<16x64xbf16>, vector<64x128xbf16>, vector<16x128xf32> -> vector<16x128xf32>
    %c5_354 = arith.constant 5 : index
    %c0_355 = arith.constant 0 : index
    %c0_356 = arith.constant 0 : index
    %741 = vector.load %arg5[%c5_354, %c0_355, %c0_356] : memref<6x1x128xf32, #tpu.memory_space<vmem>>, vector<1x1x128xf32>
    %742 = vector.shape_cast %741 : vector<1x1x128xf32> to vector<1x128xf32>
    %743 = vector.broadcast %742 : vector<1x128xf32> to vector<16x128xf32>
    %744 = arith.addf %740, %743 : vector<16x128xf32>
    %cst_357 = arith.constant 1.000000e+00 : f32
    %745 = vector.broadcast %cst_357 : f32 to vector<5x64xf32>
    %746 = arith.mulf %736, %745 : vector<5x64xf32>
    %747 = vector.extract_strided_slice %744 {offsets = [0, 0], sizes = [16, 64], strides = [1, 1]} : vector<16x128xf32> to vector<16x64xf32>
    %748 = vector.extract_strided_slice %744 {offsets = [0, 64], sizes = [16, 64], strides = [1, 1]} : vector<16x128xf32> to vector<16x64xf32>
    %749 = vector.extract_strided_slice %746 {offsets = [0, 0], sizes = [5, 32], strides = [1, 1]} : vector<5x64xf32> to vector<5x32xf32>
    %750 = arith.truncf %749 : vector<5x32xf32> to vector<5x32xbf16>
    %751 = vector.extract_strided_slice %747 {offsets = [0, 0], sizes = [16, 32], strides = [1, 1]} : vector<16x64xf32> to vector<16x32xf32>
    %752 = arith.truncf %751 : vector<16x32xf32> to vector<16x32xbf16>
    %753 = vector.extract_strided_slice %748 {offsets = [0, 0], sizes = [16, 32], strides = [1, 1]} : vector<16x64xf32> to vector<16x32xf32>
    %754 = arith.truncf %753 : vector<16x32xf32> to vector<16x32xbf16>
    %cst_358 = arith.constant dense<0.000000e+00> : vector<5x16xf32>
    %755 = tpu.matmul %750, %752, %cst_358 {dimension_numbers = #tpu.dot_dimension_numbers<[1], [1], [0], [0], [0, 0, 1, 0], [], []>} : vector<5x32xbf16>, vector<16x32xbf16>, vector<5x16xf32> -> vector<5x16xf32>
    %cst_359 = arith.constant dense<0xFF800000> : vector<5xf32>
    %756 = vector.multi_reduction <maximumf>, %755, %cst_359 [1] : vector<5x16xf32> to vector<5xf32>
    %757 = vector.shape_cast %756 : vector<5xf32> to vector<5x1xf32>
    %758 = vector.broadcast %757 : vector<5x1xf32> to vector<5x16xf32>
    %759 = arith.subf %755, %758 : vector<5x16xf32>
    %760 = math.exp %759 : vector<5x16xf32>
    %cst_360 = arith.constant dense<0.000000e+00> : vector<5xf32>
    %761 = vector.multi_reduction <add>, %760, %cst_360 [1] : vector<5x16xf32> to vector<5xf32>
    %762 = vector.shape_cast %761 : vector<5xf32> to vector<5x1xf32>
    %763 = vector.broadcast %762 : vector<5x1xf32> to vector<5x16xf32>
    %764 = arith.divf %760, %763 : vector<5x16xf32>
    %765 = arith.truncf %764 : vector<5x16xf32> to vector<5x16xbf16>
    %cst_361 = arith.constant dense<0.000000e+00> : vector<5x32xf32>
    %766 = tpu.matmul %765, %754, %cst_361 {dimension_numbers = #tpu.dot_dimension_numbers<[1], [0], [0], [1], [0, 0, 1, 1], [], []>} : vector<5x16xbf16>, vector<16x32xbf16>, vector<5x32xf32> -> vector<5x32xf32>
    %767 = vector.extract_strided_slice %746 {offsets = [0, 32], sizes = [5, 32], strides = [1, 1]} : vector<5x64xf32> to vector<5x32xf32>
    %768 = arith.truncf %767 : vector<5x32xf32> to vector<5x32xbf16>
    %769 = vector.extract_strided_slice %747 {offsets = [0, 32], sizes = [16, 32], strides = [1, 1]} : vector<16x64xf32> to vector<16x32xf32>
    %770 = arith.truncf %769 : vector<16x32xf32> to vector<16x32xbf16>
    %771 = vector.extract_strided_slice %748 {offsets = [0, 32], sizes = [16, 32], strides = [1, 1]} : vector<16x64xf32> to vector<16x32xf32>
    %772 = arith.truncf %771 : vector<16x32xf32> to vector<16x32xbf16>
    %cst_362 = arith.constant dense<0.000000e+00> : vector<5x16xf32>
    %773 = tpu.matmul %768, %770, %cst_362 {dimension_numbers = #tpu.dot_dimension_numbers<[1], [1], [0], [0], [0, 0, 1, 0], [], []>} : vector<5x32xbf16>, vector<16x32xbf16>, vector<5x16xf32> -> vector<5x16xf32>
    %cst_363 = arith.constant dense<0xFF800000> : vector<5xf32>
    %774 = vector.multi_reduction <maximumf>, %773, %cst_363 [1] : vector<5x16xf32> to vector<5xf32>
    %775 = vector.shape_cast %774 : vector<5xf32> to vector<5x1xf32>
    %776 = vector.broadcast %775 : vector<5x1xf32> to vector<5x16xf32>
    %777 = arith.subf %773, %776 : vector<5x16xf32>
    %778 = math.exp %777 : vector<5x16xf32>
    %cst_364 = arith.constant dense<0.000000e+00> : vector<5xf32>
    %779 = vector.multi_reduction <add>, %778, %cst_364 [1] : vector<5x16xf32> to vector<5xf32>
    %780 = vector.shape_cast %779 : vector<5xf32> to vector<5x1xf32>
    %781 = vector.broadcast %780 : vector<5x1xf32> to vector<5x16xf32>
    %782 = arith.divf %778, %781 : vector<5x16xf32>
    %783 = arith.truncf %782 : vector<5x16xf32> to vector<5x16xbf16>
    %cst_365 = arith.constant dense<0.000000e+00> : vector<5x32xf32>
    %784 = tpu.matmul %783, %772, %cst_365 {dimension_numbers = #tpu.dot_dimension_numbers<[1], [0], [0], [1], [0, 0, 1, 1], [], []>} : vector<5x16xbf16>, vector<16x32xbf16>, vector<5x32xf32> -> vector<5x32xf32>
    %785 = tpu.concatenate %766, %784 in 1 : vector<5x32xf32>, vector<5x32xf32> -> vector<5x64xf32>
    %786 = arith.truncf %785 : vector<5x64xf32> to vector<5x64xbf16>
    %c5_366 = arith.constant 5 : index
    %c0_367 = arith.constant 0 : index
    %c0_368 = arith.constant 0 : index
    %787 = vector.load %arg6[%c5_366, %c0_367, %c0_368] : memref<6x64x64xbf16, #tpu.memory_space<vmem>>, vector<1x64x64xbf16>
    %788 = vector.shape_cast %787 : vector<1x64x64xbf16> to vector<64x64xbf16>
    %cst_369 = arith.constant dense<0.000000e+00> : vector<5x64xf32>
    %789 = tpu.matmul %786, %788, %cst_369 {dimension_numbers = #tpu.dot_dimension_numbers<[1], [0], [0], [1], [0, 0, 1, 1], [], []>} : vector<5x64xbf16>, vector<64x64xbf16>, vector<5x64xf32> -> vector<5x64xf32>
    %c5_370 = arith.constant 5 : index
    %c0_371 = arith.constant 0 : index
    %c0_372 = arith.constant 0 : index
    %790 = vector.load %arg7[%c5_370, %c0_371, %c0_372] : memref<6x1x64xf32, #tpu.memory_space<vmem>>, vector<1x1x64xf32>
    %791 = vector.shape_cast %790 : vector<1x1x64xf32> to vector<1x64xf32>
    %792 = vector.broadcast %791 : vector<1x64xf32> to vector<5x64xf32>
    %793 = arith.addf %789, %792 : vector<5x64xf32>
    %794 = arith.addf %728, %793 : vector<5x64xf32>
    %c5_373 = arith.constant 5 : index
    %c0_374 = arith.constant 0 : index
    %c0_375 = arith.constant 0 : index
    %795 = vector.load %arg8[%c5_373, %c0_374, %c0_375] : memref<6x1x64xf32, #tpu.memory_space<vmem>>, vector<1x1x64xf32>
    %796 = vector.shape_cast %795 : vector<1x1x64xf32> to vector<1x64xf32>
    %c5_376 = arith.constant 5 : index
    %c0_377 = arith.constant 0 : index
    %c0_378 = arith.constant 0 : index
    %797 = vector.load %arg9[%c5_376, %c0_377, %c0_378] : memref<6x1x64xf32, #tpu.memory_space<vmem>>, vector<1x1x64xf32>
    %798 = vector.shape_cast %797 : vector<1x1x64xf32> to vector<1x64xf32>
    %cst_379 = arith.constant dense<0.000000e+00> : vector<5xf32>
    %799 = vector.multi_reduction <add>, %794, %cst_379 [1] : vector<5x64xf32> to vector<5xf32>
    %800 = vector.shape_cast %799 : vector<5xf32> to vector<5x1xf32>
    %cst_380 = arith.constant 6.400000e+01 : f32
    %801 = vector.broadcast %cst_380 : f32 to vector<5x1xf32>
    %802 = arith.divf %800, %801 : vector<5x1xf32>
    %803 = vector.broadcast %802 : vector<5x1xf32> to vector<5x64xf32>
    %804 = arith.subf %794, %803 : vector<5x64xf32>
    %805 = arith.mulf %804, %804 : vector<5x64xf32>
    %cst_381 = arith.constant dense<0.000000e+00> : vector<5xf32>
    %806 = vector.multi_reduction <add>, %805, %cst_381 [1] : vector<5x64xf32> to vector<5xf32>
    %807 = vector.shape_cast %806 : vector<5xf32> to vector<5x1xf32>
    %cst_382 = arith.constant 6.400000e+01 : f32
    %808 = vector.broadcast %cst_382 : f32 to vector<5x1xf32>
    %809 = arith.divf %807, %808 : vector<5x1xf32>
    %810 = vector.broadcast %802 : vector<5x1xf32> to vector<5x64xf32>
    %811 = arith.subf %794, %810 : vector<5x64xf32>
    %cst_383 = arith.constant 9.99999997E-7 : f32
    %812 = vector.broadcast %cst_383 : f32 to vector<5x1xf32>
    %813 = arith.addf %809, %812 : vector<5x1xf32>
    %814 = math.rsqrt %813 : vector<5x1xf32>
    %815 = vector.broadcast %814 : vector<5x1xf32> to vector<5x64xf32>
    %816 = arith.mulf %811, %815 : vector<5x64xf32>
    %817 = vector.broadcast %796 : vector<1x64xf32> to vector<5x64xf32>
    %818 = arith.mulf %816, %817 : vector<5x64xf32>
    %819 = vector.broadcast %798 : vector<1x64xf32> to vector<5x64xf32>
    %820 = arith.addf %818, %819 : vector<5x64xf32>
    %821 = arith.truncf %820 : vector<5x64xf32> to vector<5x64xbf16>
    %c5_384 = arith.constant 5 : index
    %c0_385 = arith.constant 0 : index
    %c0_386 = arith.constant 0 : index
    %822 = vector.load %arg10[%c5_384, %c0_385, %c0_386] : memref<6x64x256xbf16, #tpu.memory_space<vmem>>, vector<1x64x256xbf16>
    %823 = vector.shape_cast %822 : vector<1x64x256xbf16> to vector<64x256xbf16>
    %cst_387 = arith.constant dense<0.000000e+00> : vector<5x256xf32>
    %824 = tpu.matmul %821, %823, %cst_387 {dimension_numbers = #tpu.dot_dimension_numbers<[1], [0], [0], [1], [0, 0, 1, 1], [], []>} : vector<5x64xbf16>, vector<64x256xbf16>, vector<5x256xf32> -> vector<5x256xf32>
    %c5_388 = arith.constant 5 : index
    %c0_389 = arith.constant 0 : index
    %c0_390 = arith.constant 0 : index
    %825 = vector.load %arg11[%c5_388, %c0_389, %c0_390] : memref<6x1x256xf32, #tpu.memory_space<vmem>>, vector<1x1x256xf32>
    %826 = vector.shape_cast %825 : vector<1x1x256xf32> to vector<1x256xf32>
    %827 = vector.broadcast %826 : vector<1x256xf32> to vector<5x256xf32>
    %828 = arith.addf %824, %827 : vector<5x256xf32>
    %cst_391 = arith.constant 5.000000e-01 : f32
    %829 = vector.broadcast %cst_391 : f32 to vector<5x256xf32>
    %830 = arith.mulf %829, %828 : vector<5x256xf32>
    %cst_392 = arith.constant 0.707106769 : f32
    %831 = vector.broadcast %cst_392 : f32 to vector<5x256xf32>
    %832 = arith.mulf %828, %831 : vector<5x256xf32>
    %833 = math.erf %832 : vector<5x256xf32>
    %cst_393 = arith.constant 1.000000e+00 : f32
    %834 = vector.broadcast %cst_393 : f32 to vector<5x256xf32>
    %835 = arith.addf %834, %833 : vector<5x256xf32>
    %836 = arith.mulf %830, %835 : vector<5x256xf32>
    %837 = arith.truncf %836 : vector<5x256xf32> to vector<5x256xbf16>
    %c5_394 = arith.constant 5 : index
    %c0_395 = arith.constant 0 : index
    %c0_396 = arith.constant 0 : index
    %838 = vector.load %arg12[%c5_394, %c0_395, %c0_396] : memref<6x256x64xbf16, #tpu.memory_space<vmem>>, vector<1x256x64xbf16>
    %839 = vector.shape_cast %838 : vector<1x256x64xbf16> to vector<256x64xbf16>
    %cst_397 = arith.constant dense<0.000000e+00> : vector<5x64xf32>
    %840 = tpu.matmul %837, %839, %cst_397 {dimension_numbers = #tpu.dot_dimension_numbers<[1], [0], [0], [1], [0, 0, 1, 1], [], []>} : vector<5x256xbf16>, vector<256x64xbf16>, vector<5x64xf32> -> vector<5x64xf32>
    %c5_398 = arith.constant 5 : index
    %c0_399 = arith.constant 0 : index
    %c0_400 = arith.constant 0 : index
    %841 = vector.load %arg13[%c5_398, %c0_399, %c0_400] : memref<6x1x64xf32, #tpu.memory_space<vmem>>, vector<1x1x64xf32>
    %842 = vector.shape_cast %841 : vector<1x1x64xf32> to vector<1x64xf32>
    %843 = vector.broadcast %842 : vector<1x64xf32> to vector<5x64xf32>
    %844 = arith.addf %840, %843 : vector<5x64xf32>
    %845 = arith.addf %820, %844 : vector<5x64xf32>
    %c5_401 = arith.constant 5 : index
    %c0_402 = arith.constant 0 : index
    %c0_403 = arith.constant 0 : index
    %846 = vector.load %arg14[%c5_401, %c0_402, %c0_403] : memref<6x1x64xf32, #tpu.memory_space<vmem>>, vector<1x1x64xf32>
    %847 = vector.shape_cast %846 : vector<1x1x64xf32> to vector<1x64xf32>
    %c5_404 = arith.constant 5 : index
    %c0_405 = arith.constant 0 : index
    %c0_406 = arith.constant 0 : index
    %848 = vector.load %arg15[%c5_404, %c0_405, %c0_406] : memref<6x1x64xf32, #tpu.memory_space<vmem>>, vector<1x1x64xf32>
    %849 = vector.shape_cast %848 : vector<1x1x64xf32> to vector<1x64xf32>
    %cst_407 = arith.constant dense<0.000000e+00> : vector<5xf32>
    %850 = vector.multi_reduction <add>, %845, %cst_407 [1] : vector<5x64xf32> to vector<5xf32>
    %851 = vector.shape_cast %850 : vector<5xf32> to vector<5x1xf32>
    %cst_408 = arith.constant 6.400000e+01 : f32
    %852 = vector.broadcast %cst_408 : f32 to vector<5x1xf32>
    %853 = arith.divf %851, %852 : vector<5x1xf32>
    %854 = vector.broadcast %853 : vector<5x1xf32> to vector<5x64xf32>
    %855 = arith.subf %845, %854 : vector<5x64xf32>
    %856 = arith.mulf %855, %855 : vector<5x64xf32>
    %cst_409 = arith.constant dense<0.000000e+00> : vector<5xf32>
    %857 = vector.multi_reduction <add>, %856, %cst_409 [1] : vector<5x64xf32> to vector<5xf32>
    %858 = vector.shape_cast %857 : vector<5xf32> to vector<5x1xf32>
    %cst_410 = arith.constant 6.400000e+01 : f32
    %859 = vector.broadcast %cst_410 : f32 to vector<5x1xf32>
    %860 = arith.divf %858, %859 : vector<5x1xf32>
    %861 = vector.broadcast %853 : vector<5x1xf32> to vector<5x64xf32>
    %862 = arith.subf %845, %861 : vector<5x64xf32>
    %cst_411 = arith.constant 9.99999997E-7 : f32
    %863 = vector.broadcast %cst_411 : f32 to vector<5x1xf32>
    %864 = arith.addf %860, %863 : vector<5x1xf32>
    %865 = math.rsqrt %864 : vector<5x1xf32>
    %866 = vector.broadcast %865 : vector<5x1xf32> to vector<5x64xf32>
    %867 = arith.mulf %862, %866 : vector<5x64xf32>
    %868 = vector.broadcast %847 : vector<1x64xf32> to vector<5x64xf32>
    %869 = arith.mulf %867, %868 : vector<5x64xf32>
    %870 = vector.broadcast %849 : vector<1x64xf32> to vector<5x64xf32>
    %871 = arith.addf %869, %870 : vector<5x64xf32>
    %872 = arith.truncf %871 : vector<5x64xf32> to vector<5x64xbf16>
    %c0_412 = arith.constant 0 : index
    %c0_413 = arith.constant 0 : index
    %873 = vector.load %arg16[%c0_412, %c0_413] : memref<64x128xbf16, #tpu.memory_space<vmem>>, vector<64x128xbf16>
    %cst_414 = arith.constant dense<0.000000e+00> : vector<5x128xf32>
    %874 = tpu.matmul %872, %873, %cst_414 {dimension_numbers = #tpu.dot_dimension_numbers<[1], [0], [0], [1], [0, 0, 1, 1], [], []>} : vector<5x64xbf16>, vector<64x128xbf16>, vector<5x128xf32> -> vector<5x128xf32>
    %c0_415 = arith.constant 0 : index
    %c0_416 = arith.constant 0 : index
    %875 = vector.load %arg17[%c0_415, %c0_416] : memref<1x128xf32, #tpu.memory_space<vmem>>, vector<1x128xf32>
    %876 = vector.broadcast %875 : vector<1x128xf32> to vector<5x128xf32>
    %877 = arith.addf %874, %876 : vector<5x128xf32>
    %cst_417 = arith.constant dense<0xFF800000> : vector<5xf32>
    %878 = vector.multi_reduction <maximumf>, %877, %cst_417 [1] : vector<5x128xf32> to vector<5xf32>
    %879 = vector.shape_cast %878 : vector<5xf32> to vector<5x1xf32>
    %880 = vector.broadcast %879 : vector<5x1xf32> to vector<5x128xf32>
    %881 = arith.subf %877, %880 : vector<5x128xf32>
    %882 = math.exp %881 : vector<5x128xf32>
    %cst_418 = arith.constant dense<0.000000e+00> : vector<5xf32>
    %883 = vector.multi_reduction <add>, %882, %cst_418 [1] : vector<5x128xf32> to vector<5xf32>
    %884 = vector.shape_cast %883 : vector<5xf32> to vector<5x1xf32>
    %885 = vector.broadcast %884 : vector<5x1xf32> to vector<5x128xf32>
    %886 = arith.divf %882, %885 : vector<5x128xf32>
    %c0_419 = arith.constant 0 : index
    %c0_420 = arith.constant 0 : index
    %c0_421 = arith.constant 0 : index
    %887 = vector.load %arg18[%c0_419, %c0_420, %c0_421] : memref<1x5x128xf32, #tpu.memory_space<vmem>>, vector<1x5x128xf32>
    %888 = vector.shape_cast %887 : vector<1x5x128xf32> to vector<5x128xf32>
    %889 = vector.shape_cast %886 : vector<5x128xf32> to vector<1x5x128xf32>
    tpu.vector_store %arg18[%c0_419, %c0_420, %c0_421], %889 {strides = array<i32>} : memref<1x5x128xf32, #tpu.memory_space<vmem>>, vector<1x5x128xf32>,
    return
  }
  func.func @transform_0(%arg0: i32) -> (i32, i32, i32) {
    %c0_i32 = arith.constant 0 : i32
    %c0_i32_0 = arith.constant 0 : i32
    %c0_i32_1 = arith.constant 0 : i32
    return %arg0, %c0_i32, %c0_i32_0 : i32, i32, i32
  }
  func.func @transform_1(%arg0: i32) -> (i32, i32, i32) {
    %c0_i32 = arith.constant 0 : i32
    %c0_i32_0 = arith.constant 0 : i32
    %c0_i32_1 = arith.constant 0 : i32
    %c0_i32_2 = arith.constant 0 : i32
    return %c0_i32, %c0_i32_0, %c0_i32_1 : i32, i32, i32
  }
  func.func @transform_2(%arg0: i32) -> (i32, i32, i32) {
    %c0_i32 = arith.constant 0 : i32
    %c0_i32_0 = arith.constant 0 : i32
    %c0_i32_1 = arith.constant 0 : i32
    %c0_i32_2 = arith.constant 0 : i32
    return %c0_i32, %c0_i32_0, %c0_i32_1 : i32, i32, i32
  }
  func.func @transform_3(%arg0: i32) -> (i32, i32, i32) {
    %c0_i32 = arith.constant 0 : i32
    %c0_i32_0 = arith.constant 0 : i32
    %c0_i32_1 = arith.constant 0 : i32
    %c0_i32_2 = arith.constant 0 : i32
    return %c0_i32, %c0_i32_0, %c0_i32_1 : i32, i32, i32
  }
  func.func @transform_4(%arg0: i32) -> (i32, i32, i32) {
    %c0_i32 = arith.constant 0 : i32
    %c0_i32_0 = arith.constant 0 : i32
    %c0_i32_1 = arith.constant 0 : i32
    %c0_i32_2 = arith.constant 0 : i32
    return %c0_i32, %c0_i32_0, %c0_i32_1 : i32, i32, i32
  }
  func.func @transform_5(%arg0: i32) -> (i32, i32, i32) {
    %c0_i32 = arith.constant 0 : i32
    %c0_i32_0 = arith.constant 0 : i32
    %c0_i32_1 = arith.constant 0 : i32
    %c0_i32_2 = arith.constant 0 : i32
    return %c0_i32, %c0_i32_0, %c0_i32_1 : i32, i32, i32
  }
  func.func @transform_6(%arg0: i32) -> (i32, i32, i32) {
    %c0_i32 = arith.constant 0 : i32
    %c0_i32_0 = arith.constant 0 : i32
    %c0_i32_1 = arith.constant 0 : i32
    %c0_i32_2 = arith.constant 0 : i32
    return %c0_i32, %c0_i32_0, %c0_i32_1 : i32, i32, i32
  }
  func.func @transform_7(%arg0: i32) -> (i32, i32, i32) {
    %c0_i32 = arith.constant 0 : i32
    %c0_i32_0 = arith.constant 0 : i32
    %c0_i32_1 = arith.constant 0 : i32
    %c0_i32_2 = arith.constant 0 : i32
    return %c0_i32, %c0_i32_0, %c0_i32_1 : i32, i32, i32
  }
  func.func @transform_8(%arg0: i32) -> (i32, i32, i32) {
    %c0_i32 = arith.constant 0 : i32
    %c0_i32_0 = arith.constant 0 : i32
    %c0_i32_1 = arith.constant 0 : i32
    %c0_i32_2 = arith.constant 0 : i32
    return %c0_i32, %c0_i32_0, %c0_i32_1 : i32, i32, i32
  }
  func.func @transform_9(%arg0: i32) -> (i32, i32, i32) {
    %c0_i32 = arith.constant 0 : i32
    %c0_i32_0 = arith.constant 0 : i32
    %c0_i32_1 = arith.constant 0 : i32
    %c0_i32_2 = arith.constant 0 : i32
    return %c0_i32, %c0_i32_0, %c0_i32_1 : i32, i32, i32
  }
  func.func @transform_10(%arg0: i32) -> (i32, i32, i32) {
    %c0_i32 = arith.constant 0 : i32
    %c0_i32_0 = arith.constant 0 : i32
    %c0_i32_1 = arith.constant 0 : i32
    %c0_i32_2 = arith.constant 0 : i32
    return %c0_i32, %c0_i32_0, %c0_i32_1 : i32, i32, i32
  }
  func.func @transform_11(%arg0: i32) -> (i32, i32, i32) {
    %c0_i32 = arith.constant 0 : i32
    %c0_i32_0 = arith.constant 0 : i32
    %c0_i32_1 = arith.constant 0 : i32
    %c0_i32_2 = arith.constant 0 : i32
    return %c0_i32, %c0_i32_0, %c0_i32_1 : i32, i32, i32
  }
  func.func @transform_12(%arg0: i32) -> (i32, i32, i32) {
    %c0_i32 = arith.constant 0 : i32
    %c0_i32_0 = arith.constant 0 : i32
    %c0_i32_1 = arith.constant 0 : i32
    %c0_i32_2 = arith.constant 0 : i32
    return %c0_i32, %c0_i32_0, %c0_i32_1 : i32, i32, i32
  }
  func.func @transform_13(%arg0: i32) -> (i32, i32, i32) {
    %c0_i32 = arith.constant 0 : i32
    %c0_i32_0 = arith.constant 0 : i32
    %c0_i32_1 = arith.constant 0 : i32
    %c0_i32_2 = arith.constant 0 : i32
    return %c0_i32, %c0_i32_0, %c0_i32_1 : i32, i32, i32
  }
  func.func @transform_14(%arg0: i32) -> (i32, i32, i32) {
    %c0_i32 = arith.constant 0 : i32
    %c0_i32_0 = arith.constant 0 : i32
    %c0_i32_1 = arith.constant 0 : i32
    %c0_i32_2 = arith.constant 0 : i32
    return %c0_i32, %c0_i32_0, %c0_i32_1 : i32, i32, i32
  }
  func.func @transform_15(%arg0: i32) -> (i32, i32) {
    %c0_i32 = arith.constant 0 : i32
    %c0_i32_0 = arith.constant 0 : i32
    %c0_i32_1 = arith.constant 0 : i32
    return %c0_i32, %c0_i32_0 : i32, i32
  }
  func.func @transform_16(%arg0: i32) -> (i32, i32) {
    %c0_i32 = arith.constant 0 : i32
    %c0_i32_0 = arith.constant 0 : i32
    %c0_i32_1 = arith.constant 0 : i32
    return %c0_i32, %c0_i32_0 : i32, i32
  }
  func.func @transform_17(%arg0: i32) -> (i32, i32, i32) {
    %c0_i32 = arith.constant 0 : i32
    %c0_i32_0 = arith.constant 0 : i32
    %c0_i32_1 = arith.constant 0 : i32
    return %arg0, %c0_i32, %c0_i32_0 : i32, i32, i32
  }
}

</mosaic_0001>

<llo_original>
// kernel: cppd_forward_test.1
$region0: #{cppd_forward_test.1}
  #allocation0 [shape = 'u32[]', space=smem, size = 0x4, offset = 0x4, fixed_abs, tag = 'smem constant byte address 0x4 - core index']
  #allocation1 [shape = 'u32[144,128]{1,0:T(1,128)}', space=vmem, size = 0x12000, scoped, tag = 'internal scratch']
  %s0 = inlined_call_operand.vmem [shape: f32[2,21,64], index: 0, kind: input, shape index: {}]
  %s1 = inlined_call_operand.vmem [shape: bf16[6,64,64], index: 1, kind: input, shape index: {}]
  %s2 = inlined_call_operand.vmem [shape: f32[6,1,64], index: 2, kind: input, shape index: {}]
  %s3 = inlined_call_operand.vmem [shape: bf16[6,64,128], index: 3, kind: input, shape index: {}]
  %s4 = inlined_call_operand.vmem [shape: f32[6,1,128], index: 4, kind: input, shape index: {}]
  %s5 = inlined_call_operand.vmem [shape: bf16[6,64,64], index: 5, kind: input, shape index: {}]
  %s6 = inlined_call_operand.vmem [shape: f32[6,1,64], index: 6, kind: input, shape index: {}]
  %s7 = inlined_call_operand.vmem [shape: f32[6,1,64], index: 7, kind: input, shape index: {}]
  %s8 = inlined_call_operand.vmem [shape: f32[6,1,64], index: 8, kind: input, shape index: {}]
  %s9 = inlined_call_operand.vmem [shape: bf16[6,64,256], index: 9, kind: input, shape index: {}]
  %s10 = inlined_call_operand.vmem [shape: f32[6,1,256], index: 10, kind: input, shape index: {}]
  %s11 = inlined_call_operand.vmem [shape: bf16[6,256,64], index: 11, kind: input, shape index: {}]
  %s12 = inlined_call_operand.vmem [shape: f32[6,1,64], index: 12, kind: input, shape index: {}]
  %s13 = inlined_call_operand.vmem [shape: f32[6,1,64], index: 13, kind: input, shape index: {}]
  %s14 = inlined_call_operand.vmem [shape: f32[6,1,64], index: 14, kind: input, shape index: {}]
  %s15 = inlined_call_operand.vmem [shape: bf16[64,128], index: 15, kind: input, shape index: {}]
  %s16 = inlined_call_operand.vmem [shape: f32[1,128], index: 16, kind: input, shape index: {}]
  %s17 = inlined_call_operand.vmem [shape: f32[2,5,128], index: 17, kind: output, shape index: {}]
  %s18 = sld [smem:[#allocation0]]
  $region101: #{cppd_forward_test.1} parent=0
    _
  %s20 = ssub.s32 1, %s18
  %s21 = scalar_select 0, %s20, %s18
  loop: start=0, step=1, limit=4
  $region2: #{cppd_forward_test.1} parent=0 // loop_pre_header
    _
  $region3: #{cppd_forward_test.1} parent=0 // loop_header
    %s23 = sphi 0, %s27
    %p24 = scmp.ge.s32.totalorder %s23, 4
    %s33 = sphi 0, %s35
    %s36 = sphi 0, %s33
    %s37 = sphi 0, %s36
    %s53 = sphi 0, %s37
    %s57 = sphi 0, %s57
    %s59 = sphi 0, %s57
    %s60 = sphi 0, %s59
    %s74 = sphi 0, %s60
    %s78 = sphi 0, %s78
    %s80 = sphi 0, %s78
    %s81 = sphi 0, %s80
    %s95 = sphi 0, %s81
    %s99 = sphi 0, %s99
    %s101 = sphi 0, %s99
    %s102 = sphi 0, %s101
    %s116 = sphi 0, %s102
    %s120 = sphi 0, %s120
    %s122 = sphi 0, %s120
    %s123 = sphi 0, %s122
    %s137 = sphi 0, %s123
    %s141 = sphi 0, %s141
    %s143 = sphi 0, %s141
    %s144 = sphi 0, %s143
    %s158 = sphi 0, %s144
    %s162 = sphi 0, %s162
    %s164 = sphi 0, %s162
    %s165 = sphi 0, %s164
    %s179 = sphi 0, %s165
    %s183 = sphi 0, %s183
    %s185 = sphi 0, %s183
    %s186 = sphi 0, %s185
    %s200 = sphi 0, %s186
    %s204 = sphi 0, %s204
    %s206 = sphi 0, %s204
    %s207 = sphi 0, %s206
    %s221 = sphi 0, %s207
    %s225 = sphi 0, %s225
    %s227 = sphi 0, %s225
    %s228 = sphi 0, %s227
    %s242 = sphi 0, %s228
    %s246 = sphi 0, %s246
    %s248 = sphi 0, %s246
    %s249 = sphi 0, %s248
    %s263 = sphi 0, %s249
    %s267 = sphi 0, %s267
    %s269 = sphi 0, %s267
    %s270 = sphi 0, %s269
    %s284 = sphi 0, %s270
    %s288 = sphi 0, %s288
    %s290 = sphi 0, %s288
    %s291 = sphi 0, %s290
    %s305 = sphi 0, %s291
    %s309 = sphi 0, %s309
    %s311 = sphi 0, %s309
    %s312 = sphi 0, %s311
    %s326 = sphi 0, %s312
    %s330 = sphi 0, %s330
    %s332 = sphi 0, %s330
    %s333 = sphi 0, %s332
    %s347 = sphi 0, %s333
    %s351 = sphi 0, %s351
    %s353 = sphi 0, %s351
    %s354 = sphi 0, %s353
    %s368 = sphi 0, %s354
    %s372 = sphi 0, %s372
    %s374 = sphi 0, %s372
    %s375 = sphi 0, %s374
    %s389 = sphi 0, %s375
    %s395 = sphi 0, %s397
    %s398 = sphi 0, %s395
    %s399 = sphi 0, %s398
    %s415 = sphi 0, %s399
  $region4: #{cppd_forward_test.1} parent=0 // loop_header_branch
    %26 = sbr.rel (%p24) target = $region8
  $region5: #{cppd_forward_test.1} parent=0 // loop_body
    %s28 = ssub.s32 %s23, 1
    %s29 = ssub.s32 %s23, 2
    %s30 = sadd.s32 %s23, 1
    %s31 = ssub.s32 %s23, %s30
    %p32 = scmp.eq.s32.totalorder %s31, 0
    %s34 = sadd.s32 %s33, 1
    %s35 = scalar_select %p32, %s33, %s34
    %p38 = pneg %p32
    %p39 = scmp.eq.s32.totalorder %s23, 1
    %p40 = por %p38, %p39
    %p41 = scmp.ne.s32.totalorder %s33, %s36
    %p42 = scmp.eq.s32.totalorder %s23, 0
    %p43 = por %p41, %p42
    %p44 = scmp.ne.s32.totalorder %s33, %s36
    %p45 = scmp.eq.s32.totalorder %s28, 1
    %p46 = por %p44, %p45
    %p47 = scmp.ne.s32.totalorder %s36, %s37
    %p48 = scmp.eq.s32.totalorder %s28, 0
    %p49 = por %p47, %p48
    %p50 = scmp.ne.s32.totalorder %s36, %s37
    %p51 = scmp.eq.s32.totalorder %s29, 1
    %p52 = por %p50, %p51
    %p54 = scmp.ne.s32.totalorder %s37, %s53
    %p55 = scmp.eq.s32.totalorder %s29, 0
    %p56 = por %p54, %p55
    %s58 = sadd.s32 %s57, 1
    %p61 = scmp.eq.s32.totalorder %s23, 1
    %p62 = scmp.ne.s32.totalorder %s57, %s59
    %p63 = scmp.eq.s32.totalorder %s23, 0
    %p64 = por %p62, %p63
    %p65 = scmp.ne.s32.totalorder %s57, %s59
    %p66 = scmp.eq.s32.totalorder %s28, 1
    %p67 = por %p65, %p66
    %p68 = scmp.ne.s32.totalorder %s59, %s60
    %p69 = scmp.eq.s32.totalorder %s28, 0
    %p70 = por %p68, %p69
    %p71 = scmp.ne.s32.totalorder %s59, %s60
    %p72 = scmp.eq.s32.totalorder %s29, 1
    %p73 = por %p71, %p72
    %p75 = scmp.ne.s32.totalorder %s60, %s74
    %p76 = scmp.eq.s32.totalorder %s29, 0
    %p77 = por %p75, %p76
    %s79 = sadd.s32 %s78, 1
    %p82 = scmp.eq.s32.totalorder %s23, 1
    %p83 = scmp.ne.s32.totalorder %s78, %s80
    %p84 = scmp.eq.s32.totalorder %s23, 0
    %p85 = por %p83, %p84
    %p86 = scmp.ne.s32.totalorder %s78, %s80
    %p87 = scmp.eq.s32.totalorder %s28, 1
    %p88 = por %p86, %p87
    %p89 = scmp.ne.s32.totalorder %s80, %s81
    %p90 = scmp.eq.s32.totalorder %s28, 0
    %p91 = por %p89, %p90
    %p92 = scmp.ne.s32.totalorder %s80, %s81
    %p93 = scmp.eq.s32.totalorder %s29, 1
    %p94 = por %p92, %p93
    %p96 = scmp.ne.s32.totalorder %s81, %s95
    %p97 = scmp.eq.s32.totalorder %s29, 0
    %p98 = por %p96, %p97
    %s100 = sadd.s32 %s99, 1
    %p103 = scmp.eq.s32.totalorder %s23, 1
    %p104 = scmp.ne.s32.totalorder %s99, %s101
    %p105 = scmp.eq.s32.totalorder %s23, 0
    %p106 = por %p104, %p105
    %p107 = scmp.ne.s32.totalorder %s99, %s101
    %p108 = scmp.eq.s32.totalorder %s28, 1
    %p109 = por %p107, %p108
    %p110 = scmp.ne.s32.totalorder %s101, %s102
    %p111 = scmp.eq.s32.totalorder %s28, 0
    %p112 = por %p110, %p111
    %p113 = scmp.ne.s32.totalorder %s101, %s102
    %p114 = scmp.eq.s32.totalorder %s29, 1
    %p115 = por %p113, %p114
    %p117 = scmp.ne.s32.totalorder %s102, %s116
    %p118 = scmp.eq.s32.totalorder %s29, 0
    %p119 = por %p117, %p118
    %s121 = sadd.s32 %s120, 1
    %p124 = scmp.eq.s32.totalorder %s23, 1
    %p125 = scmp.ne.s32.totalorder %s120, %s122
    %p126 = scmp.eq.s32.totalorder %s23, 0
    %p127 = por %p125, %p126
    %p128 = scmp.ne.s32.totalorder %s120, %s122
    %p129 = scmp.eq.s32.totalorder %s28, 1
    %p130 = por %p128, %p129
    %p131 = scmp.ne.s32.totalorder %s122, %s123
    %p132 = scmp.eq.s32.totalorder %s28, 0
    %p133 = por %p131, %p132
    %p134 = scmp.ne.s32.totalorder %s122, %s123
    %p135 = scmp.eq.s32.totalorder %s29, 1
    %p136 = por %p134, %p135
    %p138 = scmp.ne.s32.totalorder %s123, %s137
    %p139 = scmp.eq.s32.totalorder %s29, 0
    %p140 = por %p138, %p139
    %s142 = sadd.s32 %s141, 1
    %p145 = scmp.eq.s32.totalorder %s23, 1
    %p146 = scmp.ne.s32.totalorder %s141, %s143
    %p147 = scmp.eq.s32.totalorder %s23, 0
    %p148 = por %p146, %p147
    %p149 = scmp.ne.s32.totalorder %s141, %s143
    %p150 = scmp.eq.s32.totalorder %s28, 1
    %p151 = por %p149, %p150
    %p152 = scmp.ne.s32.totalorder %s143, %s144
    %p153 = scmp.eq.s32.totalorder %s28, 0
    %p154 = por %p152, %p153
    %p155 = scmp.ne.s32.totalorder %s143, %s144
    %p156 = scmp.eq.s32.totalorder %s29, 1
    %p157 = por %p155, %p156
    %p159 = scmp.ne.s32.totalorder %s144, %s158
    %p160 = scmp.eq.s32.totalorder %s29, 0
    %p161 = por %p159, %p160
    %s163 = sadd.s32 %s162, 1
    %p166 = scmp.eq.s32.totalorder %s23, 1
    %p167 = scmp.ne.s32.totalorder %s162, %s164
    %p168 = scmp.eq.s32.totalorder %s23, 0
    %p169 = por %p167, %p168
    %p170 = scmp.ne.s32.totalorder %s162, %s164
    %p171 = scmp.eq.s32.totalorder %s28, 1
    %p172 = por %p170, %p171
    %p173 = scmp.ne.s32.totalorder %s164, %s165
    %p174 = scmp.eq.s32.totalorder %s28, 0
    %p175 = por %p173, %p174
    %p176 = scmp.ne.s32.totalorder %s164, %s165
    %p177 = scmp.eq.s32.totalorder %s29, 1
    %p178 = por %p176, %p177
    %p180 = scmp.ne.s32.totalorder %s165, %s179
    %p181 = scmp.eq.s32.totalorder %s29, 0
    %p182 = por %p180, %p181
    %s184 = sadd.s32 %s183, 1
    %p187 = scmp.eq.s32.totalorder %s23, 1
    %p188 = scmp.ne.s32.totalorder %s183, %s185
    %p189 = scmp.eq.s32.totalorder %s23, 0
    %p190 = por %p188, %p189
    %p191 = scmp.ne.s32.totalorder %s183, %s185
    %p192 = scmp.eq.s32.totalorder %s28, 1
    %p193 = por %p191, %p192
    %p194 = scmp.ne.s32.totalorder %s185, %s186
    %p195 = scmp.eq.s32.totalorder %s28, 0
    %p196 = por %p194, %p195
    %p197 = scmp.ne.s32.totalorder %s185, %s186
    %p198 = scmp.eq.s32.totalorder %s29, 1
    %p199 = por %p197, %p198
    %p201 = scmp.ne.s32.totalorder %s186, %s200
    %p202 = scmp.eq.s32.totalorder %s29, 0
    %p203 = por %p201, %p202
    %s205 = sadd.s32 %s204, 1
    %p208 = scmp.eq.s32.totalorder %s23, 1
    %p209 = scmp.ne.s32.totalorder %s204, %s206
    %p210 = scmp.eq.s32.totalorder %s23, 0
    %p211 = por %p209, %p210
    %p212 = scmp.ne.s32.totalorder %s204, %s206
    %p213 = scmp.eq.s32.totalorder %s28, 1
    %p214 = por %p212, %p213
    %p215 = scmp.ne.s32.totalorder %s206, %s207
    %p216 = scmp.eq.s32.totalorder %s28, 0
    %p217 = por %p215, %p216
    %p218 = scmp.ne.s32.totalorder %s206, %s207
    %p219 = scmp.eq.s32.totalorder %s29, 1
    %p220 = por %p218, %p219
    %p222 = scmp.ne.s32.totalorder %s207, %s221
    %p223 = scmp.eq.s32.totalorder %s29, 0
    %p224 = por %p222, %p223
    %s226 = sadd.s32 %s225, 1
    %p229 = scmp.eq.s32.totalorder %s23, 1
    %p230 = scmp.ne.s32.totalorder %s225, %s227
    %p231 = scmp.eq.s32.totalorder %s23, 0
    %p232 = por %p230, %p231
    %p233 = scmp.ne.s32.totalorder %s225, %s227
    %p234 = scmp.eq.s32.totalorder %s28, 1
    %p235 = por %p233, %p234
    %p236 = scmp.ne.s32.totalorder %s227, %s228
    %p237 = scmp.eq.s32.totalorder %s28, 0
    %p238 = por %p236, %p237
    %p239 = scmp.ne.s32.totalorder %s227, %s228
    %p240 = scmp.eq.s32.totalorder %s29, 1
    %p241 = por %p239, %p240
    %p243 = scmp.ne.s32.totalorder %s228, %s242
    %p244 = scmp.eq.s32.totalorder %s29, 0
    %p245 = por %p243, %p244
    %s247 = sadd.s32 %s246, 1
    %p250 = scmp.eq.s32.totalorder %s23, 1
    %p251 = scmp.ne.s32.totalorder %s246, %s248
    %p252 = scmp.eq.s32.totalorder %s23, 0
    %p253 = por %p251, %p252
    %p254 = scmp.ne.s32.totalorder %s246, %s248
    %p255 = scmp.eq.s32.totalorder %s28, 1
    %p256 = por %p254, %p255
    %p257 = scmp.ne.s32.totalorder %s248, %s249
    %p258 = scmp.eq.s32.totalorder %s28, 0
    %p259 = por %p257, %p258
    %p260 = scmp.ne.s32.totalorder %s248, %s249
    %p261 = scmp.eq.s32.totalorder %s29, 1
    %p262 = por %p260, %p261
    %p264 = scmp.ne.s32.totalorder %s249, %s263
    %p265 = scmp.eq.s32.totalorder %s29, 0
    %p266 = por %p264, %p265
    %s268 = sadd.s32 %s267, 1
    %p271 = scmp.eq.s32.totalorder %s23, 1
    %p272 = scmp.ne.s32.totalorder %s267, %s269
    %p273 = scmp.eq.s32.totalorder %s23, 0
    %p274 = por %p272, %p273
    %p275 = scmp.ne.s32.totalorder %s267, %s269
    %p276 = scmp.eq.s32.totalorder %s28, 1
    %p277 = por %p275, %p276
    %p278 = scmp.ne.s32.totalorder %s269, %s270
    %p279 = scmp.eq.s32.totalorder %s28, 0
    %p280 = por %p278, %p279
    %p281 = scmp.ne.s32.totalorder %s269, %s270
    %p282 = scmp.eq.s32.totalorder %s29, 1
    %p283 = por %p281, %p282
    %p285 = scmp.ne.s32.totalorder %s270, %s284
    %p286 = scmp.eq.s32.totalorder %s29, 0
    %p287 = por %p285, %p286
    %s289 = sadd.s32 %s288, 1
    %p292 = scmp.eq.s32.totalorder %s23, 1
    %p293 = scmp.ne.s32.totalorder %s288, %s290
    %p294 = scmp.eq.s32.totalorder %s23, 0
    %p295 = por %p293, %p294
    %p296 = scmp.ne.s32.totalorder %s288, %s290
    %p297 = scmp.eq.s32.totalorder %s28, 1
    %p298 = por %p296, %p297
    %p299 = scmp.ne.s32.totalorder %s290, %s291
    %p300 = scmp.eq.s32.totalorder %s28, 0
    %p301 = por %p299, %p300
    %p302 = scmp.ne.s32.totalorder %s290, %s291
    %p303 = scmp.eq.s32.totalorder %s29, 1
    %p304 = por %p302, %p303
    %p306 = scmp.ne.s32.totalorder %s291, %s305
    %p307 = scmp.eq.s32.totalorder %s29, 0
    %p308 = por %p306, %p307
    %s310 = sadd.s32 %s309, 1
    %p313 = scmp.eq.s32.totalorder %s23, 1
    %p314 = scmp.ne.s32.totalorder %s309, %s311
    %p315 = scmp.eq.s32.totalorder %s23, 0
    %p316 = por %p314, %p315
    %p317 = scmp.ne.s32.totalorder %s309, %s311
    %p318 = scmp.eq.s32.totalorder %s28, 1
    %p319 = por %p317, %p318
    %p320 = scmp.ne.s32.totalorder %s311, %s312
    %p321 = scmp.eq.s32.totalorder %s28, 0
    %p322 = por %p320, %p321
    %p323 = scmp.ne.s32.totalorder %s311, %s312
    %p324 = scmp.eq.s32.totalorder %s29, 1
    %p325 = por %p323, %p324
    %p327 = scmp.ne.s32.totalorder %s312, %s326
    %p328 = scmp.eq.s32.totalorder %s29, 0
    %p329 = por %p327, %p328
    %s331 = sadd.s32 %s330, 1
    %p334 = scmp.eq.s32.totalorder %s23, 1
    %p335 = scmp.ne.s32.totalorder %s330, %s332
    %p336 = scmp.eq.s32.totalorder %s23, 0
    %p337 = por %p335, %p336
    %p338 = scmp.ne.s32.totalorder %s330, %s332
    %p339 = scmp.eq.s32.totalorder %s28, 1
    %p340 = por %p338, %p339
    %p341 = scmp.ne.s32.totalorder %s332, %s333
    %p342 = scmp.eq.s32.totalorder %s28, 0
    %p343 = por %p341, %p342
    %p344 = scmp.ne.s32.totalorder %s332, %s333
    %p345 = scmp.eq.s32.totalorder %s29, 1
    %p346 = por %p344, %p345
    %p348 = scmp.ne.s32.totalorder %s333, %s347
    %p349 = scmp.eq.s32.totalorder %s29, 0
    %p350 = por %p348, %p349
    %s352 = sadd.s32 %s351, 1
    %p355 = scmp.eq.s32.totalorder %s23, 1
    %p356 = scmp.ne.s32.totalorder %s351, %s353
    %p357 = scmp.eq.s32.totalorder %s23, 0
    %p358 = por %p356, %p357
    %p359 = scmp.ne.s32.totalorder %s351, %s353
    %p360 = scmp.eq.s32.totalorder %s28, 1
    %p361 = por %p359, %p360
    %p362 = scmp.ne.s32.totalorder %s353, %s354
    %p363 = scmp.eq.s32.totalorder %s28, 0
    %p364 = por %p362, %p363
    %p365 = scmp.ne.s32.totalorder %s353, %s354
    %p366 = scmp.eq.s32.totalorder %s29, 1
    %p367 = por %p365, %p366
    %p369 = scmp.ne.s32.totalorder %s354, %s368
    %p370 = scmp.eq.s32.totalorder %s29, 0
    %p371 = por %p369, %p370
    %s373 = sadd.s32 %s372, 1
    %p376 = scmp.eq.s32.totalorder %s23, 1
    %p377 = scmp.ne.s32.totalorder %s372, %s374
    %p378 = scmp.eq.s32.totalorder %s23, 0
    %p379 = por %p377, %p378
    %p380 = scmp.ne.s32.totalorder %s372, %s374
    %p381 = scmp.eq.s32.totalorder %s28, 1
    %p382 = por %p380, %p381
    %p383 = scmp.ne.s32.totalorder %s374, %s375
    %p384 = scmp.eq.s32.totalorder %s28, 0
    %p385 = por %p383, %p384
    %p386 = scmp.ne.s32.totalorder %s374, %s375
    %p387 = scmp.eq.s32.totalorder %s29, 1
    %p388 = por %p386, %p387
    %p390 = scmp.ne.s32.totalorder %s375, %s389
    %p391 = scmp.eq.s32.totalorder %s29, 0
    %p392 = por %p390, %p391
    %s393 = ssub.s32 %s23, %s30
    %p394 = scmp.eq.s32.totalorder %s393, 0
    %s396 = sadd.s32 %s395, 1
    %s397 = scalar_select %p394, %s395, %s396
    %p400 = pneg %p394
    %p401 = scmp.eq.s32.totalorder %s23, 1
    %p402 = por %p400, %p401
    %p403 = scmp.ne.s32.totalorder %s395, %s398
    %p404 = scmp.eq.s32.totalorder %s23, 0
    %p405 = por %p403, %p404
    %p406 = scmp.ne.s32.totalorder %s395, %s398
    %p407 = scmp.eq.s32.totalorder %s28, 1
    %p408 = por %p406, %p407
    %p409 = scmp.ne.s32.totalorder %s398, %s399
    %p410 = scmp.eq.s32.totalorder %s28, 0
    %p411 = por %p409, %p410
    %p412 = scmp.ne.s32.totalorder %s398, %s399
    %p413 = scmp.eq.s32.totalorder %s29, 1
    %p414 = por %p412, %p413
    %p416 = scmp.ne.s32.totalorder %s399, %s415
    %p417 = scmp.eq.s32.totalorder %s29, 0
    %p418 = por %p416, %p417
    %p419 = scmp.le.s32.totalorder 1, %s23
    %p420 = scmp.lt.s32.totalorder %s23, 3
    %p421 = pnand %p419, %p420
    %p422 = pneg %p421
    // Predicated region
    $region9: #{cppd_forward_test.1} parent=5 // pred_check
      _
    $region10: #{cppd_forward_test.1} parent=5 // pred_check_branch
      %424 = sbr.rel (%p421) target = $region12
    $region11: #{cppd_forward_test.1} parent=5 // pred_region
      %s425 = ssub.s32 %s23, 1
      // Predicated region
      $region13: #{cppd_forward_test.1} parent=11 // pred_check
        %p426 = pneg %p70
      $region14: #{cppd_forward_test.1} parent=11 // pred_check_branch
        %428 = sbr.rel (%p426) target = $region16
      $region15: #{cppd_forward_test.1} parent=11 // pred_region
        _
      $region16: #{cppd_forward_test.1} parent=11 // pred_fallthru
        _
      // Predicated region
      $region17: #{cppd_forward_test.1} parent=11 // pred_check
        %p429 = pneg %p91
      $region18: #{cppd_forward_test.1} parent=11 // pred_check_branch
        %431 = sbr.rel (%p429) target = $region20
      $region19: #{cppd_forward_test.1} parent=11 // pred_region
        _
      $region20: #{cppd_forward_test.1} parent=11 // pred_fallthru
        _
      // Predicated region
      $region21: #{cppd_forward_test.1} parent=11 // pred_check
        %p432 = pneg %p112
      $region22: #{cppd_forward_test.1} parent=11 // pred_check_branch
        %434 = sbr.rel (%p432) target = $region24
      $region23: #{cppd_forward_test.1} parent=11 // pred_region
        _
      $region24: #{cppd_forward_test.1} parent=11 // pred_fallthru
        _
      // Predicated region
      $region25: #{cppd_forward_test.1} parent=11 // pred_check
        %p435 = pneg %p133
      $region26: #{cppd_forward_test.1} parent=11 // pred_check_branch
        %437 = sbr.rel (%p435) target = $region28
      $region27: #{cppd_forward_test.1} parent=11 // pred_region
        _
      $region28: #{cppd_forward_test.1} parent=11 // pred_fallthru
        _
      // Predicated region
      $region29: #{cppd_forward_test.1} parent=11 // pred_check
        %p438 = pneg %p154
      $region30: #{cppd_forward_test.1} parent=11 // pred_check_branch
        %440 = sbr.rel (%p438) target = $region32
      $region31: #{cppd_forward_test.1} parent=11 // pred_region
        _
      $region32: #{cppd_forward_test.1} parent=11 // pred_fallthru
        _
      // Predicated region
      $region33: #{cppd_forward_test.1} parent=11 // pred_check
        %p441 = pneg %p175
      $region34: #{cppd_forward_test.1} parent=11 // pred_check_branch
        %443 = sbr.rel (%p441) target = $region36
      $region35: #{cppd_forward_test.1} parent=11 // pred_region
        _
      $region36: #{cppd_forward_test.1} parent=11 // pred_fallthru
        _
      // Predicated region
      $region37: #{cppd_forward_test.1} parent=11 // pred_check
        %p444 = pneg %p196
      $region38: #{cppd_forward_test.1} parent=11 // pred_check_branch
        %446 = sbr.rel (%p444) target = $region40
      $region39: #{cppd_forward_test.1} parent=11 // pred_region
        _
      $region40: #{cppd_forward_test.1} parent=11 // pred_fallthru
        _
      // Predicated region
      $region41: #{cppd_forward_test.1} parent=11 // pred_check
        %p447 = pneg %p217
      $region42: #{cppd_forward_test.1} parent=11 // pred_check_branch
        %449 = sbr.rel (%p447) target = $region44
      $region43: #{cppd_forward_test.1} parent=11 // pred_region
        _
      $region44: #{cppd_forward_test.1} parent=11 // pred_fallthru
        _
      // Predicated region
      $region45: #{cppd_forward_test.1} parent=11 // pred_check
        %p450 = pneg %p238
      $region46: #{cppd_forward_test.1} parent=11 // pred_check_branch
        %452 = sbr.rel (%p450) target = $region48
      $region47: #{cppd_forward_test.1} parent=11 // pred_region
        _
      $region48: #{cppd_forward_test.1} parent=11 // pred_fallthru
        _
      // Predicated region
      $region49: #{cppd_forward_test.1} parent=11 // pred_check
        %p453 = pneg %p259
      $region50: #{cppd_forward_test.1} parent=11 // pred_check_branch
        %455 = sbr.rel (%p453) target = $region52
      $region51: #{cppd_forward_test.1} parent=11 // pred_region
        _
      $region52: #{cppd_forward_test.1} parent=11 // pred_fallthru
        _
      // Predicated region
      $region53: #{cppd_forward_test.1} parent=11 // pred_check
        %p456 = pneg %p280
      $region54: #{cppd_forward_test.1} parent=11 // pred_check_branch
        %458 = sbr.rel (%p456) target = $region56
      $region55: #{cppd_forward_test.1} parent=11 // pred_region
        _
      $region56: #{cppd_forward_test.1} parent=11 // pred_fallthru
        _
      // Predicated region
      $region57: #{cppd_forward_test.1} parent=11 // pred_check
        %p459 = pneg %p301
      $region58: #{cppd_forward_test.1} parent=11 // pred_check_branch
        %461 = sbr.rel (%p459) target = $region60
      $region59: #{cppd_forward_test.1} parent=11 // pred_region
        _
      $region60: #{cppd_forward_test.1} parent=11 // pred_fallthru
        _
      // Predicated region
      $region61: #{cppd_forward_test.1} parent=11 // pred_check
        %p462 = pneg %p322
      $region62: #{cppd_forward_test.1} parent=11 // pred_check_branch
        %464 = sbr.rel (%p462) target = $region64
      $region63: #{cppd_forward_test.1} parent=11 // pred_region
        _
      $region64: #{cppd_forward_test.1} parent=11 // pred_fallthru
        _
      // Predicated region
      $region65: #{cppd_forward_test.1} parent=11 // pred_check
        %p465 = pneg %p343
      $region66: #{cppd_forward_test.1} parent=11 // pred_check_branch
        %467 = sbr.rel (%p465) target = $region68
      $region67: #{cppd_forward_test.1} parent=11 // pred_region
        _
      $region68: #{cppd_forward_test.1} parent=11 // pred_fallthru
        _
      // Predicated region
      $region69: #{cppd_forward_test.1} parent=11 // pred_check
        %p468 = pneg %p364
      $region70: #{cppd_forward_test.1} parent=11 // pred_check_branch
        %470 = sbr.rel (%p468) target = $region72
      $region71: #{cppd_forward_test.1} parent=11 // pred_region
        _
      $region72: #{cppd_forward_test.1} parent=11 // pred_fallthru
        _
      // Predicated region
      $region73: #{cppd_forward_test.1} parent=11 // pred_check
        %p471 = pneg %p385
      $region74: #{cppd_forward_test.1} parent=11 // pred_check_branch
        %473 = sbr.rel (%p471) target = $region76
      $region75: #{cppd_forward_test.1} parent=11 // pred_region
        _
      $region76: #{cppd_forward_test.1} parent=11 // pred_fallthru
        _
    $region12: #{cppd_forward_test.1} parent=5 // pred_fallthru
      _
    %p474 = scmp.lt.s32.totalorder %s23, 2
    // Predicated region
    $region77: #{cppd_forward_test.1} parent=5 // pred_check
      %p475 = pneg %p474
    $region78: #{cppd_forward_test.1} parent=5 // pred_check_branch
      %477 = sbr.rel (%p475) target = $region80
    $region79: #{cppd_forward_test.1} parent=5 // pred_region
      // Predicated region
      $region81: #{cppd_forward_test.1} parent=79 // pred_check
        %p478 = pneg %p43
      $region82: #{cppd_forward_test.1} parent=79 // pred_check_branch
        %480 = sbr.rel (%p478) target = $region84
      $region83: #{cppd_forward_test.1} parent=79 // pred_region
        %p481 = scmp.lt.s32.totalorder %s23, 1
        %s482 = scalar_select %p481, %s23, 1
        %s483 = smul.addr %s482, 3
        %s484 = smul.addr %s483, 8
        %s485 = scalar_lea.vmem %s0, %s484
      $region84: #{cppd_forward_test.1} parent=79 // pred_fallthru
        _
    $region80: #{cppd_forward_test.1} parent=5 // pred_fallthru
      _
    %p486 = scmp.le.s32.totalorder 1, %s23
    %p487 = scmp.lt.s32.totalorder %s23, 3
    %p488 = pnand %p486, %p487
    %p489 = pneg %p488
    // Predicated region
    $region85: #{cppd_forward_test.1} parent=5 // pred_check
      _
    $region86: #{cppd_forward_test.1} parent=5 // pred_check_branch
      %491 = sbr.rel (%p488) target = $region88
    $region87: #{cppd_forward_test.1} parent=5 // pred_region
      %s492 = ssub.s32 %s23, 1
      %p493 = scmp.lt.s32.totalorder %s28, 1
      %s494 = scalar_select %p493, %s28, 1
      %s495 = smul.addr %s494, 3
      %s496 = smul.addr %s495, 8
      %s497 = scalar_lea.vmem %s0, %s496
      %p498 = pneg %p49
      %p499 = pneg %p46
      %p500 = pneg %p70
      %p501 = pneg %p67
      %p502 = pneg %p91
      %p503 = pneg %p88
      %p504 = pneg %p112
      %p505 = pneg %p109
      %p506 = pneg %p133
      %p507 = pneg %p130
      %p508 = pneg %p154
      %p509 = pneg %p151
      %p510 = pneg %p175
      %p511 = pneg %p172
      %p512 = pneg %p196
      %p513 = pneg %p193
      %p514 = pneg %p217
      %p515 = pneg %p214
      %p516 = pneg %p238
      %p517 = pneg %p235
      %p518 = pneg %p259
      %p519 = pneg %p256
      %p520 = pneg %p280
      %p521 = pneg %p277
      %p522 = pneg %p301
      %p523 = pneg %p298
      %p524 = pneg %p322
      %p525 = pneg %p319
      %p526 = pneg %p343
      %p527 = pneg %p340
      %p528 = pneg %p364
      %p529 = pneg %p361
      %p530 = pneg %p385
      %p531 = pneg %p382
      %p532 = pneg %p411
      %p533 = pneg %p408
      %p534 = scmp.lt.s32.totalorder %s28, 1
      %s535 = scalar_select %p534, %s28, 1
      %s536 = smul.addr %s535, 8
      %s537 = scalar_lea.vmem %s17, %s536
      %p538 = scmp.lt.s32.totalorder %s28, 1
      %s539 = scalar_select %p538, %s28, 1
      %s540 = smul.addr %s539, 3
      %s541 = smul.addr %s540, 8
      %s542 = scalar_lea.vmem %s0, %s541
      %p543 = scmp.lt.s32.totalorder %s28, 1
      %s544 = scalar_select %p543, %s28, 1
      %s545 = smul.addr %s544, 8
      %s546 = scalar_lea.vmem %s17, %s545
      %v548 = vld [vmem:[%s542] sm:$0xff]
      %v549 = vld [vmem:[%s542 + $0x8] sm:$0xff]
      %v550 = vld [vmem:[%s542 + $0x10] sm:$0x1f]
      %v551 = vpack.c.bf16 %v549, %v548
      %v552 = vpack.c.bf16 %v550, %v550
      %v553 = vld [vmem:[%s1] sm:$0xf]
      %v554 = vld [vmem:[%s1 + $0x4] sm:$0xf]
      %v555 = vld [vmem:[%s1 + $0x8] sm:$0xf]
      %v556 = vld [vmem:[%s1 + $0xc] sm:$0xf]
      %v557 = vld [vmem:[%s1 + $0x10] sm:$0xf]
      %v558 = vld [vmem:[%s1 + $0x14] sm:$0xf]
      %v559 = vld [vmem:[%s1 + $0x18] sm:$0xf]
      %v560 = vld [vmem:[%s1 + $0x1c] sm:$0xf]
      %v561 = vld [vmem:[%s2] sm:$0x1]
      %v563 = vlaneseq
      %v564 = vshrl.u32 %v563, 7
      %v565 = vsub.s32 0, %v564
      %v566 = vrot.slane %v561, %v565
      %vm568 = vsmask.f32 5376
      %v570 = vshrl.u32 %v551, 16
      %v572 = vrot.slane %v570, 2
      %v573 = vshll.u32 %v551, 16
      %v575 = vrot.slane %v573, 3
      %v576 = vor.u32 %v572, %v575
      %v578 = vshrl.u32 %v552, 16
      %v580 = vrot.slane %v578, 2
      %v581 = vshll.u32 %v552, 16
      %v583 = vrot.slane %v581, 3
      %v584 = vor.u32 %v580, %v583
      %v585 = vsel %vm568, %v576, %v584
      %v594 = vunpack.c.l.b16 %v553
      %v595 = vunpack.c.l.b16 %v554
      %v596 = vunpack.c.l.b16 %v555
      %v597 = vunpack.c.l.b16 %v556
      %v598 = vunpack.c.l.b16 %v557
      %v599 = vunpack.c.l.b16 %v558
      %v600 = vunpack.c.l.b16 %v559
      %v601 = vunpack.c.l.b16 %v560
      %v602 = vpack.c.b16 %v595, %v594
      %v603 = vpack.c.b16 %v597, %v596
      %v604 = vpack.c.b16 %v599, %v598
      %v605 = vpack.c.b16 %v601, %v600
      %vm610 = vcmask 523264
      %v612 = vsel %vm610, %v585, 0
      %614 = vmatprep.subr.bf16.mxu0 0
      %615 = vmatpush1.bf16.msra.mxu0 %v602
      %616 = vmatprep.subr.bf16.mxu0 0
      %617 = vmatpush1.bf16.msra.mxu0 %v603
      %618 = vmatprep.subr.bf16.mxu0 0
      %619 = vmatpush1.bf16.msra.mxu0 %v604
      %620 = vmatprep.subr.bf16.mxu0 0
      %621 = vmatpush1.bf16.msra.mxu0 %v605
      %622 = vmatprep.subr.bf16.mxu0 0
      %623 = vmatpush1.bf16.msra.mxu0 0
      %624 = vmatprep.subr.bf16.mxu0 0
      %625 = vmatpush1.bf16.msra.mxu0 0
      %626 = vmatprep.subr.bf16.mxu0 0
      %627 = vmatpush1.bf16.msra.mxu0 0
      %628 = vmatprep.subr.bf16.mxu0 0
      %629 = vmatpush1.bf16.msra.mxu0 0
      %630 = vmatprep.subr.bf16.mxu0 0
      %631 = vmatpush1.bf16.msra.mxu0 0
      %632 = vmatprep.subr.bf16.mxu0 0
      %633 = vmatpush1.bf16.msra.mxu0 0
      %634 = vmatprep.subr.bf16.mxu0 0
      %635 = vmatpush1.bf16.msra.mxu0 0
      %636 = vmatprep.subr.bf16.mxu0 0
      %637 = vmatpush1.bf16.msra.mxu0 0
      %638 = vmatprep.subr.bf16.mxu0 0
      %639 = vmatpush1.bf16.msra.mxu0 0
      %640 = vmatprep.subr.bf16.mxu0 0
      %641 = vmatpush1.bf16.msra.mxu0 0
      %642 = vmatprep.subr.bf16.mxu0 0
      %643 = vmatpush1.bf16.msra.mxu0 0
      %644 = vmatprep.subr.bf16.mxu0 0
      %645 = vmatpush1.bf16.msra.mxu0 0
      %646 = vmatprep.mubr.bf16.mxu0 0
      %647 = vmatmul.mubr.bf16.gmra.mrb[0].mxu0 %v612
      %v648 = vpop.f32.mrb[0].mxu0
      %v649 = vadd.f32 %v566, %v648
      %v650 = vpop.f32.mrb[0].mxu0
      %v651 = vpop.f32.mrb[0].mxu0
      %v652 = vadd.f32 %v566, %v651
      %v653 = vpop.f32.mrb[0].mxu0
      %654 = vdwg.mxu0
      %v655 = vld [vmem:[%s3] sm:$0xf]
      %v656 = vld [vmem:[%s3 + $0x4] sm:$0xf]
      %v657 = vld [vmem:[%s3 + $0x8] sm:$0xf]
      %v658 = vld [vmem:[%s3 + $0xc] sm:$0xf]
      %v659 = vld [vmem:[%s3 + $0x10] sm:$0xf]
      %v660 = vld [vmem:[%s3 + $0x14] sm:$0xf]
      %v661 = vld [vmem:[%s3 + $0x18] sm:$0xf]
      %v662 = vld [vmem:[%s3 + $0x1c] sm:$0xf]
      %v663 = vld [vmem:[%s4] sm:$0x1]
      %v665 = vlaneseq
      %v666 = vshrl.u32 %v665, 7
      %v667 = vsub.s32 0, %v666
      %v668 = vrot.slane %v663, %v667
      %v678 = vunpack.c.l.b16 %v655
      %v679 = vunpack.c.l.b16 %v656
      %v680 = vunpack.c.l.b16 %v657
      %v681 = vunpack.c.l.b16 %v658
      %v682 = vunpack.c.l.b16 %v659
      %v683 = vunpack.c.l.b16 %v660
      %v684 = vunpack.c.l.b16 %v661
      %v685 = vunpack.c.l.b16 %v662
      %v686 = vpack.c.b16 %v679, %v678
      %v687 = vpack.c.b16 %v681, %v680
      %v688 = vpack.c.b16 %v683, %v682
      %v689 = vpack.c.b16 %v685, %v684
      %694 = vmatprep.subr.bf16.mxu0 0
      %695 = vmatpush1.bf16.msra.mxu0 %v686
      %696 = vmatprep.subr.bf16.mxu0 0
      %697 = vmatpush1.bf16.msra.mxu0 %v687
      %698 = vmatprep.subr.bf16.mxu0 0
      %699 = vmatpush1.bf16.msra.mxu0 %v688
      %700 = vmatprep.subr.bf16.mxu0 0
      %701 = vmatpush1.bf16.msra.mxu0 %v689
      %702 = vmatprep.subr.bf16.mxu0 0
      %703 = vmatpush1.bf16.msra.mxu0 0
      %704 = vmatprep.subr.bf16.mxu0 0
      %705 = vmatpush1.bf16.msra.mxu0 0
      %706 = vmatprep.subr.bf16.mxu0 0
      %707 = vmatpush1.bf16.msra.mxu0 0
      %708 = vmatprep.subr.bf16.mxu0 0
      %709 = vmatpush1.bf16.msra.mxu0 0
      %710 = vmatprep.subr.bf16.mxu0 0
      %711 = vmatpush1.bf16.msra.mxu0 0
      %712 = vmatprep.subr.bf16.mxu0 0
      %713 = vmatpush1.bf16.msra.mxu0 0
      %714 = vmatprep.subr.bf16.mxu0 0
      %715 = vmatpush1.bf16.msra.mxu0 0
      %716 = vmatprep.subr.bf16.mxu0 0
      %717 = vmatpush1.bf16.msra.mxu0 0
      %718 = vmatprep.subr.bf16.mxu0 0
      %719 = vmatpush1.bf16.msra.mxu0 0
      %720 = vmatprep.subr.bf16.mxu0 0
      %721 = vmatpush1.bf16.msra.mxu0 0
      %722 = vmatprep.subr.bf16.mxu0 0
      %723 = vmatpush1.bf16.msra.mxu0 0
      %724 = vmatprep.subr.bf16.mxu0 0
      %725 = vmatpush1.bf16.msra.mxu0 0
      %726 = vmatprep.mubr.bf16.mxu0 0
      %727 = vmatmul.mubr.bf16.gmra.mrb[0].mxu0 %v612
      %v728 = vpop.f32.mrb[0].mxu0
      %v729 = vadd.f32 %v668, %v728
      %v730 = vpop.f32.mrb[0].mxu0
      %v731 = vpop.f32.mrb[0].mxu0
      %v732 = vadd.f32 %v668, %v731
      %v733 = vpop.f32.mrb[0].mxu0
      %734 = vdwg.mxu0
      %v735 = vmul.f32 %v649, 0.17677669
      %v736 = vmul.f32 %v652, 0.17677669
      %v737 = vpack.c.bf16 %v736, %v735
      %v738 = vpack.c.bf16 %v732, %v729
      %vm739 = vcmask 261120
      %v741 = vsel %vm739, %v737, 0
      %v744 = vsel %vm739, %v738, 0
      %746 = vmatprep.subr.bf16.mxu0 0
      %747 = vmatpush1.bf16.xpose.msra.mxu0 %v744
      %748 = vmatprep.subr.bf16.mxu0 0
      %749 = vmatpush1.bf16.xpose.msra.mxu0 0
      %750 = vmatprep.subr.bf16.mxu0 0
      %751 = vmatpush1.bf16.xpose.msra.mxu0 0
      %752 = vmatprep.subr.bf16.mxu0 0
      %753 = vmatpush1.bf16.xpose.msra.mxu0 0
      %754 = vmatprep.subr.bf16.mxu0 0
      %755 = vmatpush1.bf16.xpose.msra.mxu0 0
      %756 = vmatprep.subr.bf16.mxu0 0
      %757 = vmatpush1.bf16.xpose.msra.mxu0 0
      %758 = vmatprep.subr.bf16.mxu0 0
      %759 = vmatpush1.bf16.xpose.msra.mxu0 0
      %760 = vmatprep.subr.bf16.mxu0 0
      %761 = vmatpush1.bf16.xpose.msra.mxu0 0
      %762 = vmatprep.subr.bf16.mxu0 0
      %763 = vmatpush1.bf16.xpose.msra.mxu0 0
      %764 = vmatprep.subr.bf16.mxu0 0
      %765 = vmatpush1.bf16.xpose.msra.mxu0 0
      %766 = vmatprep.subr.bf16.mxu0 0
      %767 = vmatpush1.bf16.xpose.msra.mxu0 0
      %768 = vmatprep.subr.bf16.mxu0 0
      %769 = vmatpush1.bf16.xpose.msra.mxu0 0
      %770 = vmatprep.subr.bf16.mxu0 0
      %771 = vmatpush1.bf16.xpose.msra.mxu0 0
      %772 = vmatprep.subr.bf16.mxu0 0
      %773 = vmatpush1.bf16.xpose.msra.mxu0 0
      %774 = vmatprep.subr.bf16.mxu0 0
      %775 = vmatpush1.bf16.xpose.msra.mxu0 0
      %776 = vmatprep.subr.bf16.mxu0 0
      %777 = vmatpush1.bf16.xpose.msra.mxu0 0
      %778 = vmatprep.mubr.bf16.mxu0 0
      %779 = vmatmul.mubr.bf16.gmra.mrb[0].mxu0 %v741
      %v780 = vpop.f32.mrb[0].mxu0
      %v781 = vadd.f32 0.0, %v780
      %v782 = vpop.f32.mrb[0].mxu0
      %v783 = vpop.f32.mrb[0].mxu0
      %v784 = vadd.f32 0.0, %v783
      %v785 = vpop.f32.mrb[0].mxu0
      %786 = vdwg.mxu0
      %vm787 = vcmask 130048
      %v788 = vsel %vm787, %v781, -inf
      %789 = vmax.xlane.f32.xlu0 %v788
      %v790 = vpop.xlane.xlu0 %789
      %v791 = vsel %vm787, %v784, -inf
      %792 = vmax.xlane.f32.xlu0 %v791
      %v793 = vpop.xlane.xlu0 %792
      %v794 = vsub.f32 %v781, %v790
      %v795 = vsub.f32 %v784, %v793
      %v796 = vmul.f32 %v794, 1.442695
      %v797 = vpow.pop %v796
      %v798 = vmul.f32 %v795, 1.442695
      %v799 = vpow.pop %v798
      %v800 = vsel %vm787, %v797, 0.0
      %801 = vadd.xlane.f32.xlu0 %v800
      %v802 = vpop.xlane.xlu0 %801
      %v803 = vsel %vm787, %v799, 0.0
      %804 = vadd.xlane.f32.xlu0 %v803
      %v805 = vpop.xlane.xlu0 %804
      %v806 = vrcp.pop %v802
      %v807 = vmul.f32 %v797, %v806
      %v808 = vrcp.pop %v805
      %v809 = vmul.f32 %v799, %v808
      %v810 = vpack.c.bf16 %v809, %v807
      %812 = vrot.lane.b32.xlu0 %v738, 64
      %v813 = vpop.permute.xlu0 %812
      %v816 = vsel %vm787, %v810, 0
      %818 = vmatprep.subr.bf16.mxu0 0
      %819 = vmatpush1.bf16.msra.mxu0 %v813
      %820 = vmatprep.subr.bf16.mxu0 0
      %821 = vmatpush1.bf16.msra.mxu0 0
      %822 = vmatprep.subr.bf16.mxu0 0
      %823 = vmatpush1.bf16.msra.mxu0 0
      %824 = vmatprep.subr.bf16.mxu0 0
      %825 = vmatpush1.bf16.msra.mxu0 0
      %826 = vmatprep.subr.bf16.mxu0 0
      %827 = vmatpush1.bf16.msra.mxu0 0
      %828 = vmatprep.subr.bf16.mxu0 0
      %829 = vmatpush1.bf16.msra.mxu0 0
      %830 = vmatprep.subr.bf16.mxu0 0
      %831 = vmatpush1.bf16.msra.mxu0 0
      %832 = vmatprep.subr.bf16.mxu0 0
      %833 = vmatpush1.bf16.msra.mxu0 0
      %834 = vmatprep.subr.bf16.mxu0 0
      %835 = vmatpush1.bf16.msra.mxu0 0
      %836 = vmatprep.subr.bf16.mxu0 0
      %837 = vmatpush1.bf16.msra.mxu0 0
      %838 = vmatprep.subr.bf16.mxu0 0
      %839 = vmatpush1.bf16.msra.mxu0 0
      %840 = vmatprep.subr.bf16.mxu0 0
      %841 = vmatpush1.bf16.msra.mxu0 0
      %842 = vmatprep.subr.bf16.mxu0 0
      %843 = vmatpush1.bf16.msra.mxu0 0
      %844 = vmatprep.subr.bf16.mxu0 0
      %845 = vmatpush1.bf16.msra.mxu0 0
      %846 = vmatprep.subr.bf16.mxu0 0
      %847 = vmatpush1.bf16.msra.mxu0 0
      %848 = vmatprep.subr.bf16.mxu0 0
      %849 = vmatpush1.bf16.msra.mxu0 0
      %850 = vmatprep.mubr.bf16.mxu0 0
      %851 = vmatmul.mubr.bf16.gmra.mrb[0].mxu0 %v816
      %v852 = vpop.f32.mrb[0].mxu0
      %v853 = vadd.f32 0.0, %v852
      %v854 = vpop.f32.mrb[0].mxu0
      %v855 = vpop.f32.mrb[0].mxu0
      %v856 = vadd.f32 0.0, %v855
      %v857 = vpop.f32.mrb[0].mxu0
      %858 = vdwg.mxu0
      %860 = vrot.lane.b32.xlu0 %v737, 96
      %v861 = vpop.permute.xlu0 %860
      %862 = vrot.lane.b32.xlu0 %v738, 96
      %v863 = vpop.permute.xlu0 %862
      %v865 = vsel %vm739, %v861, 0
      %v868 = vsel %vm739, %v863, 0
      %870 = vmatprep.subr.bf16.mxu0 0
      %871 = vmatpush1.bf16.xpose.msra.mxu0 %v868
      %872 = vmatprep.subr.bf16.mxu0 0
      %873 = vmatpush1.bf16.xpose.msra.mxu0 0
      %874 = vmatprep.subr.bf16.mxu0 0
      %875 = vmatpush1.bf16.xpose.msra.mxu0 0
      %876 = vmatprep.subr.bf16.mxu0 0
      %877 = vmatpush1.bf16.xpose.msra.mxu0 0
      %878 = vmatprep.subr.bf16.mxu0 0
      %879 = vmatpush1.bf16.xpose.msra.mxu0 0
      %880 = vmatprep.subr.bf16.mxu0 0
      %881 = vmatpush1.bf16.xpose.msra.mxu0 0
      %882 = vmatprep.subr.bf16.mxu0 0
      %883 = vmatpush1.bf16.xpose.msra.mxu0 0
      %884 = vmatprep.subr.bf16.mxu0 0
      %885 = vmatpush1.bf16.xpose.msra.mxu0 0
      %886 = vmatprep.subr.bf16.mxu0 0
      %887 = vmatpush1.bf16.xpose.msra.mxu0 0
      %888 = vmatprep.subr.bf16.mxu0 0
      %889 = vmatpush1.bf16.xpose.msra.mxu0 0
      %890 = vmatprep.subr.bf16.mxu0 0
      %891 = vmatpush1.bf16.xpose.msra.mxu0 0
      %892 = vmatprep.subr.bf16.mxu0 0
      %893 = vmatpush1.bf16.xpose.msra.mxu0 0
      %894 = vmatprep.subr.bf16.mxu0 0
      %895 = vmatpush1.bf16.xpose.msra.mxu0 0
      %896 = vmatprep.subr.bf16.mxu0 0
      %897 = vmatpush1.bf16.xpose.msra.mxu0 0
      %898 = vmatprep.subr.bf16.mxu0 0
      %899 = vmatpush1.bf16.xpose.msra.mxu0 0
      %900 = vmatprep.subr.bf16.mxu0 0
      %901 = vmatpush1.bf16.xpose.msra.mxu0 0
      %902 = vmatprep.mubr.bf16.mxu0 0
      %903 = vmatmul.mubr.bf16.gmra.mrb[0].mxu0 %v865
      %v904 = vpop.f32.mrb[0].mxu0
      %v905 = vadd.f32 0.0, %v904
      %v906 = vpop.f32.mrb[0].mxu0
      %v907 = vpop.f32.mrb[0].mxu0
      %v908 = vadd.f32 0.0, %v907
      %v909 = vpop.f32.mrb[0].mxu0
      %910 = vdwg.mxu0
      %v911 = vsel %vm787, %v905, -inf
      %912 = vmax.xlane.f32.xlu0 %v911
      %v913 = vpop.xlane.xlu0 %912
      %v914 = vsel %vm787, %v908, -inf
      %915 = vmax.xlane.f32.xlu0 %v914
      %v916 = vpop.xlane.xlu0 %915
      %v917 = vsub.f32 %v905, %v913
      %v918 = vsub.f32 %v908, %v916
      %v919 = vmul.f32 %v917, 1.442695
      %v920 = vpow.pop %v919
      %v921 = vmul.f32 %v918, 1.442695
      %v922 = vpow.pop %v921
      %v923 = vsel %vm787, %v920, 0.0
      %924 = vadd.xlane.f32.xlu0 %v923
      %v925 = vpop.xlane.xlu0 %924
      %v926 = vsel %vm787, %v922, 0.0
      %927 = vadd.xlane.f32.xlu0 %v926
      %v928 = vpop.xlane.xlu0 %927
      %v929 = vrcp.pop %v925
      %v930 = vmul.f32 %v920, %v929
      %v931 = vrcp.pop %v928
      %v932 = vmul.f32 %v922, %v931
      %v933 = vpack.c.bf16 %v932, %v930
      %934 = vrot.lane.b32.xlu0 %v738, 32
      %v935 = vpop.permute.xlu0 %934
      %v938 = vsel %vm787, %v933, 0
      %940 = vmatprep.subr.bf16.mxu0 0
      %941 = vmatpush1.bf16.msra.mxu0 %v935
      %942 = vmatprep.subr.bf16.mxu0 0
      %943 = vmatpush1.bf16.msra.mxu0 0
      %944 = vmatprep.subr.bf16.mxu0 0
      %945 = vmatpush1.bf16.msra.mxu0 0
      %946 = vmatprep.subr.bf16.mxu0 0
      %947 = vmatpush1.bf16.msra.mxu0 0
      %948 = vmatprep.subr.bf16.mxu0 0
      %949 = vmatpush1.bf16.msra.mxu0 0
      %950 = vmatprep.subr.bf16.mxu0 0
      %951 = vmatpush1.bf16.msra.mxu0 0
      %952 = vmatprep.subr.bf16.mxu0 0
      %953 = vmatpush1.bf16.msra.mxu0 0
      %954 = vmatprep.subr.bf16.mxu0 0
      %955 = vmatpush1.bf16.msra.mxu0 0
      %956 = vmatprep.subr.bf16.mxu0 0
      %957 = vmatpush1.bf16.msra.mxu0 0
      %958 = vmatprep.subr.bf16.mxu0 0
      %959 = vmatpush1.bf16.msra.mxu0 0
      %960 = vmatprep.subr.bf16.mxu0 0
      %961 = vmatpush1.bf16.msra.mxu0 0
      %962 = vmatprep.subr.bf16.mxu0 0
      %963 = vmatpush1.bf16.msra.mxu0 0
      %964 = vmatprep.subr.bf16.mxu0 0
      %965 = vmatpush1.bf16.msra.mxu0 0
      %966 = vmatprep.subr.bf16.mxu0 0
      %967 = vmatpush1.bf16.msra.mxu0 0
      %968 = vmatprep.subr.bf16.mxu0 0
      %969 = vmatpush1.bf16.msra.mxu0 0
      %970 = vmatprep.subr.bf16.mxu0 0
      %971 = vmatpush1.bf16.msra.mxu0 0
      %972 = vmatprep.mubr.bf16.mxu0 0
      %973 = vmatmul.mubr.bf16.gmra.mrb[0].mxu0 %v938
      %v974 = vpop.f32.mrb[0].mxu0
      %v975 = vadd.f32 0.0, %v974
      %v976 = vpop.f32.mrb[0].mxu0
      %v977 = vpop.f32.mrb[0].mxu0
      %v978 = vadd.f32 0.0, %v977
      %v979 = vpop.f32.mrb[0].mxu0
      %980 = vdwg.mxu0
      %983 = vrot.lane.b32.xlu0 %v975, 32
      %v984 = vpop.permute.xlu0 %983
      %985 = vrot.lane.b32.xlu0 %v978, 32
      %v986 = vpop.permute.xlu0 %985
      %v989 = vsel %vm739, %v853, %v984
      %v990 = vsel %vm739, %v856, %v986
      %v991 = vpack.c.bf16 %v990, %v989
      %v992 = vld [vmem:[%s5] sm:$0xf]
      %v993 = vld [vmem:[%s5 + $0x4] sm:$0xf]
      %v994 = vld [vmem:[%s5 + $0x8] sm:$0xf]
      %v995 = vld [vmem:[%s5 + $0xc] sm:$0xf]
      %v996 = vld [vmem:[%s5 + $0x10] sm:$0xf]
      %v997 = vld [vmem:[%s5 + $0x14] sm:$0xf]
      %v998 = vld [vmem:[%s5 + $0x18] sm:$0xf]
      %v999 = vld [vmem:[%s5 + $0x1c] sm:$0xf]
      %v1000 = vld [vmem:[%s6] sm:$0x1]
      %v1002 = vlaneseq
      %v1003 = vshrl.u32 %v1002, 7
      %v1004 = vsub.s32 0, %v1003
      %v1005 = vrot.slane %v1000, %v1004
      %v1015 = vunpack.c.l.b16 %v992
      %v1016 = vunpack.c.l.b16 %v993
      %v1017 = vunpack.c.l.b16 %v994
      %v1018 = vunpack.c.l.b16 %v995
      %v1019 = vunpack.c.l.b16 %v996
      %v1020 = vunpack.c.l.b16 %v997
      %v1021 = vunpack.c.l.b16 %v998
      %v1022 = vunpack.c.l.b16 %v999
      %v1023 = vpack.c.b16 %v1016, %v1015
      %v1024 = vpack.c.b16 %v1018, %v1017
      %v1025 = vpack.c.b16 %v1020, %v1019
      %v1026 = vpack.c.b16 %v1022, %v1021
      %v1032 = vsel %vm610, %v991, 0
      %1034 = vmatprep.subr.bf16.mxu0 0
      %1035 = vmatpush1.bf16.msra.mxu0 %v1023
      %1036 = vmatprep.subr.bf16.mxu0 0
      %1037 = vmatpush1.bf16.msra.mxu0 %v1024
      %1038 = vmatprep.subr.bf16.mxu0 0
      %1039 = vmatpush1.bf16.msra.mxu0 %v1025
      %1040 = vmatprep.subr.bf16.mxu0 0
      %1041 = vmatpush1.bf16.msra.mxu0 %v1026
      %1042 = vmatprep.subr.bf16.mxu0 0
      %1043 = vmatpush1.bf16.msra.mxu0 0
      %1044 = vmatprep.subr.bf16.mxu0 0
      %1045 = vmatpush1.bf16.msra.mxu0 0
      %1046 = vmatprep.subr.bf16.mxu0 0
      %1047 = vmatpush1.bf16.msra.mxu0 0
      %1048 = vmatprep.subr.bf16.mxu0 0
      %1049 = vmatpush1.bf16.msra.mxu0 0
      %1050 = vmatprep.subr.bf16.mxu0 0
      %1051 = vmatpush1.bf16.msra.mxu0 0
      %1052 = vmatprep.subr.bf16.mxu0 0
      %1053 = vmatpush1.bf16.msra.mxu0 0
      %1054 = vmatprep.subr.bf16.mxu0 0
      %1055 = vmatpush1.bf16.msra.mxu0 0
      %1056 = vmatprep.subr.bf16.mxu0 0
      %1057 = vmatpush1.bf16.msra.mxu0 0
      %1058 = vmatprep.subr.bf16.mxu0 0
      %1059 = vmatpush1.bf16.msra.mxu0 0
      %1060 = vmatprep.subr.bf16.mxu0 0
      %1061 = vmatpush1.bf16.msra.mxu0 0
      %1062 = vmatprep.subr.bf16.mxu0 0
      %1063 = vmatpush1.bf16.msra.mxu0 0
      %1064 = vmatprep.subr.bf16.mxu0 0
      %1065 = vmatpush1.bf16.msra.mxu0 0
      %1066 = vmatprep.mubr.bf16.mxu0 0
      %1067 = vmatmul.mubr.bf16.gmra.mrb[0].mxu0 %v1032
      %v1068 = vpop.f32.mrb[0].mxu0
      %v1069 = vadd.f32 %v1005, %v1068
      %v1070 = vpop.f32.mrb[0].mxu0
      %v1071 = vpop.f32.mrb[0].mxu0
      %v1072 = vadd.f32 %v1005, %v1071
      %v1073 = vpop.f32.mrb[0].mxu0
      %1074 = vdwg.mxu0
      %vm1077 = vcmask 1044480
      %v1078 = vrot.slane %v1069, 3
      %v1079 = vrot.slane %v1072, 3
      %v1080 = vsel %vm1077, %v1078, %v1079
      %v1084 = vadd.f32 %v548, %v1078
      %v1085 = vadd.f32 %v549, %v1080
      %v1086 = vadd.f32 %v550, %v1079
      %v1087 = vld [vmem:[%s7] sm:$0x1]
      %v1088 = vld [vmem:[%s8] sm:$0x1]
      %vm1089 = vcmask 523269
      %v1090 = vsel %vm1089, %v1084, 0.0
      %1091 = vadd.xlane.f32.xlu0 %v1090
      %v1092 = vpop.xlane.xlu0 %1091
      %v1093 = vsel %vm610, %v1085, 0.0
      %1094 = vadd.xlane.f32.xlu0 %v1093
      %v1095 = vpop.xlane.xlu0 %1094
      %vm1096 = vcmask 520192
      %v1097 = vsel %vm1096, %v1086, 0.0
      %1098 = vadd.xlane.f32.xlu0 %v1097
      %v1099 = vpop.xlane.xlu0 %1098
      %v1100 = vrcp.pop 64.0
      %v1101 = vmul.f32 %v1092, %v1100
      %v1102 = vmul.f32 %v1095, %v1100
      %v1103 = vmul.f32 %v1099, %v1100
      %v1104 = vsub.f32 %v1084, %v1101
      %v1105 = vsub.f32 %v1085, %v1102
      %v1106 = vsub.f32 %v1086, %v1103
      %v1107 = vmul.f32 %v1104, %v1104
      %v1108 = vmul.f32 %v1105, %v1105
      %v1109 = vmul.f32 %v1106, %v1106
      %v1110 = vsel %vm1089, %v1107, 0.0
      %1111 = vadd.xlane.f32.xlu0 %v1110
      %v1112 = vpop.xlane.xlu0 %1111
      %v1113 = vsel %vm610, %v1108, 0.0
      %1114 = vadd.xlane.f32.xlu0 %v1113
      %v1115 = vpop.xlane.xlu0 %1114
      %v1116 = vsel %vm1096, %v1109, 0.0
      %1117 = vadd.xlane.f32.xlu0 %v1116
      %v1118 = vpop.xlane.xlu0 %1117
      %v1119 = vmul.f32 %v1112, %v1100
      %v1120 = vmul.f32 %v1115, %v1100
      %v1121 = vmul.f32 %v1118, %v1100
      %v1122 = vadd.f32 %v1119, 1e-06
      %v1123 = vadd.f32 %v1120, 1e-06
      %v1124 = vadd.f32 %v1121, 1e-06
      %v1125 = vrsqrt.pop %v1122
      %v1126 = vrsqrt.pop %v1123
      %v1127 = vrsqrt.pop %v1124
      %v1128 = vmul.f32 %v1104, %v1125
      %v1129 = vmul.f32 %v1105, %v1126
      %v1130 = vmul.f32 %v1106, %v1127
      %v1132 = vlaneseq
      %v1133 = vshrl.u32 %v1132, 7
      %v1134 = vsub.s32 0, %v1133
      %v1135 = vrot.slane %v1087, %v1134
      %v1137 = vmul.f32 %v1128, %v1135
      %v1138 = vmul.f32 %v1129, %v1135
      %v1139 = vmul.f32 %v1130, %v1135
      %v1141 = vlaneseq
      %v1142 = vshrl.u32 %v1141, 7
      %v1143 = vsub.s32 0, %v1142
      %v1144 = vrot.slane %v1088, %v1143
      %v1146 = vadd.f32 %v1137, %v1144
      %v1147 = vadd.f32 %v1138, %v1144
      %v1148 = vadd.f32 %v1139, %v1144
      %v1149 = vpack.c.bf16 %v1147, %v1146
      %v1150 = vpack.c.bf16 %v1148, %v1148
      %v1151 = vld [vmem:[%s9] sm:$0xff]
      %v1152 = vld [vmem:[%s9 + $0x8] sm:$0xff]
      %v1153 = vld [vmem:[%s9 + $0x10] sm:$0xff]
      %v1154 = vld [vmem:[%s9 + $0x18] sm:$0xff]
      %v1155 = vld [vmem:[%s9 + $0x20] sm:$0xff]
      %v1156 = vld [vmem:[%s9 + $0x28] sm:$0xff]
      %v1157 = vld [vmem:[%s9 + $0x30] sm:$0xff]
      %v1158 = vld [vmem:[%s9 + $0x38] sm:$0xff]
      %v1159 = vld [vmem:[%s10] sm:$0x3]
      %v1161 = vlaneseq
      %v1162 = vshrl.u32 %v1161, 7
      %v1163 = vsub.s32 0, %v1162
      %v1164 = vrot.slane %v1159, %v1163
      %v1165 = vlaneseq
      %v1166 = vshrl.u32 %v1165, 7
      %v1167 = vsub.s32 1, %v1166
      %v1168 = vrot.slane %v1159, %v1167
      %v1172 = vshrl.u32 %v1149, 16
      %v1174 = vrot.slane %v1172, 2
      %v1175 = vshll.u32 %v1149, 16
      %v1177 = vrot.slane %v1175, 3
      %v1178 = vor.u32 %v1174, %v1177
      %v1180 = vshrl.u32 %v1150, 16
      %v1182 = vrot.slane %v1180, 2
      %v1183 = vshll.u32 %v1150, 16
      %v1185 = vrot.slane %v1183, 3
      %v1186 = vor.u32 %v1182, %v1185
      %v1187 = vsel %vm568, %v1178, %v1186
      %v1196 = vunpack.c.l.b16 %v1151
      %v1197 = vunpack.c.h.b16 %v1151
      %v1198 = vunpack.c.l.b16 %v1152
      %v1199 = vunpack.c.h.b16 %v1152
      %v1200 = vunpack.c.l.b16 %v1153
      %v1201 = vunpack.c.h.b16 %v1153
      %v1202 = vunpack.c.l.b16 %v1154
      %v1203 = vunpack.c.h.b16 %v1154
      %v1204 = vunpack.c.l.b16 %v1155
      %v1205 = vunpack.c.h.b16 %v1155
      %v1206 = vunpack.c.l.b16 %v1156
      %v1207 = vunpack.c.h.b16 %v1156
      %v1208 = vunpack.c.l.b16 %v1157
      %v1209 = vunpack.c.h.b16 %v1157
      %v1210 = vunpack.c.l.b16 %v1158
      %v1211 = vunpack.c.h.b16 %v1158
      %v1212 = vpack.c.b16 %v1198, %v1196
      %v1213 = vpack.c.b16 %v1199, %v1197
      %v1214 = vpack.c.b16 %v1202, %v1200
      %v1215 = vpack.c.b16 %v1203, %v1201
      %v1216 = vpack.c.b16 %v1206, %v1204
      %v1217 = vpack.c.b16 %v1207, %v1205
      %v1218 = vpack.c.b16 %v1210, %v1208
      %v1219 = vpack.c.b16 %v1211, %v1209
      %v1229 = vsel %vm610, %v1187, 0
      %1231 = vmatprep.subr.bf16.mxu0 %v1213
      %1232 = vmatpush1.bf16.msra.mxu0 %v1212
      %1233 = vmatprep.subr.bf16.mxu0 %v1215
      %1234 = vmatpush1.bf16.msra.mxu0 %v1214
      %1235 = vmatprep.subr.bf16.mxu0 %v1217
      %1236 = vmatpush1.bf16.msra.mxu0 %v1216
      %1237 = vmatprep.subr.bf16.mxu0 %v1219
      %1238 = vmatpush1.bf16.msra.mxu0 %v1218
      %1239 = vmatprep.subr.bf16.mxu0 0
      %1240 = vmatpush1.bf16.msra.mxu0 0
      %1241 = vmatprep.subr.bf16.mxu0 0
      %1242 = vmatpush1.bf16.msra.mxu0 0
      %1243 = vmatprep.subr.bf16.mxu0 0
      %1244 = vmatpush1.bf16.msra.mxu0 0
      %1245 = vmatprep.subr.bf16.mxu0 0
      %1246 = vmatpush1.bf16.msra.mxu0 0
      %1247 = vmatprep.subr.bf16.mxu0 0
      %1248 = vmatpush1.bf16.msra.mxu0 0
      %1249 = vmatprep.subr.bf16.mxu0 0
      %1250 = vmatpush1.bf16.msra.mxu0 0
      %1251 = vmatprep.subr.bf16.mxu0 0
      %1252 = vmatpush1.bf16.msra.mxu0 0
      %1253 = vmatprep.subr.bf16.mxu0 0
      %1254 = vmatpush1.bf16.msra.mxu0 0
      %1255 = vmatprep.subr.bf16.mxu0 0
      %1256 = vmatpush1.bf16.msra.mxu0 0
      %1257 = vmatprep.subr.bf16.mxu0 0
      %1258 = vmatpush1.bf16.msra.mxu0 0
      %1259 = vmatprep.subr.bf16.mxu0 0
      %1260 = vmatpush1.bf16.msra.mxu0 0
      %1261 = vmatprep.subr.bf16.mxu0 0
      %1262 = vmatpush1.bf16.msra.mxu0 0
      %1263 = vmatprep.mubr.bf16.mxu0 0
      %1264 = vmatmul.mubr.bf16.gmra.mrb[0].mxu0 %v1229
      %v1265 = vpop.f32.mrb[0].mxu0
      %v1266 = vadd.f32 %v1164, %v1265
      %v1267 = vpop.f32.mrb[0].mxu0
      %v1268 = vadd.f32 %v1168, %v1267
      %v1269 = vpop.f32.mrb[0].mxu0
      %v1270 = vadd.f32 %v1164, %v1269
      %v1271 = vpop.f32.mrb[0].mxu0
      %v1272 = vadd.f32 %v1168, %v1271
      %1273 = vdwg.mxu0
      %v1274 = vmul.f32 %v1266, 0.5
      %v1275 = vmul.f32 %v1268, 0.5
      %v1276 = vmul.f32 %v1270, 0.5
      %v1277 = vmul.f32 %v1272, 0.5
      %v1278 = vmul.f32 %v1266, 0.70710677
      %v1279 = vmul.f32 %v1268, 0.70710677
      %v1280 = vmul.f32 %v1270, 0.70710677
      %v1281 = vmul.f32 %v1272, 0.70710677
      %v1282 = verf.f32.pop %v1278
      %v1283 = verf.f32.pop %v1279
      %v1284 = verf.f32.pop %v1280
      %v1285 = verf.f32.pop %v1281
      %v1286 = vadd.f32 %v1282, 1.0
      %v1287 = vadd.f32 %v1283, 1.0
      %v1288 = vadd.f32 %v1284, 1.0
      %v1289 = vadd.f32 %v1285, 1.0
      %v1290 = vmul.f32 %v1274, %v1286
      %v1291 = vmul.f32 %v1275, %v1287
      %v1292 = vmul.f32 %v1276, %v1288
      %v1293 = vmul.f32 %v1277, %v1289
      %v1294 = vpack.c.bf16 %v1292, %v1290
      %v1295 = vpack.c.bf16 %v1293, %v1291
      %v1296 = vld [vmem:[%s11] sm:$0xf]
      %v1297 = vld [vmem:[%s11 + $0x4] sm:$0xf]
      %v1298 = vld [vmem:[%s11 + $0x8] sm:$0xf]
      %v1299 = vld [vmem:[%s11 + $0xc] sm:$0xf]
      %v1300 = vld [vmem:[%s11 + $0x10] sm:$0xf]
      %v1301 = vld [vmem:[%s11 + $0x14] sm:$0xf]
      %v1302 = vld [vmem:[%s11 + $0x18] sm:$0xf]
      %v1303 = vld [vmem:[%s11 + $0x1c] sm:$0xf]
      %v1304 = vld [vmem:[%s11 + $0x20] sm:$0xf]
      %v1305 = vld [vmem:[%s11 + $0x24] sm:$0xf]
      %v1306 = vld [vmem:[%s11 + $0x28] sm:$0xf]
      %v1307 = vld [vmem:[%s11 + $0x2c] sm:$0xf]
      %v1308 = vld [vmem:[%s11 + $0x30] sm:$0xf]
      %v1309 = vld [vmem:[%s11 + $0x34] sm:$0xf]
      %v1310 = vld [vmem:[%s11 + $0x38] sm:$0xf]
      %v1311 = vld [vmem:[%s11 + $0x3c] sm:$0xf]
      %v1312 = vld [vmem:[%s11 + $0x40] sm:$0xf]
      %v1313 = vld [vmem:[%s11 + $0x44] sm:$0xf]
      %v1314 = vld [vmem:[%s11 + $0x48] sm:$0xf]
      %v1315 = vld [vmem:[%s11 + $0x4c] sm:$0xf]
      %v1316 = vld [vmem:[%s11 + $0x50] sm:$0xf]
      %v1317 = vld [vmem:[%s11 + $0x54] sm:$0xf]
      %v1318 = vld [vmem:[%s11 + $0x58] sm:$0xf]
      %v1319 = vld [vmem:[%s11 + $0x5c] sm:$0xf]
      %v1320 = vld [vmem:[%s11 + $0x60] sm:$0xf]
      %v1321 = vld [vmem:[%s11 + $0x64] sm:$0xf]
      %v1322 = vld [vmem:[%s11 + $0x68] sm:$0xf]
      %v1323 = vld [vmem:[%s11 + $0x6c] sm:$0xf]
      %v1324 = vld [vmem:[%s11 + $0x70] sm:$0xf]
      %v1325 = vld [vmem:[%s11 + $0x74] sm:$0xf]
      %v1326 = vld [vmem:[%s11 + $0x78] sm:$0xf]
      %v1327 = vld [vmem:[%s11 + $0x7c] sm:$0xf]
      %v1328 = vld [vmem:[%s12] sm:$0x1]
      %v1330 = vlaneseq
      %v1331 = vshrl.u32 %v1330, 7
      %v1332 = vsub.s32 0, %v1331
      %v1333 = vrot.slane %v1328, %v1332
      %v1367 = vunpack.c.l.b16 %v1296
      %v1368 = vunpack.c.l.b16 %v1297
      %v1369 = vunpack.c.l.b16 %v1298
      %v1370 = vunpack.c.l.b16 %v1299
      %v1371 = vunpack.c.l.b16 %v1300
      %v1372 = vunpack.c.l.b16 %v1301
      %v1373 = vunpack.c.l.b16 %v1302
      %v1374 = vunpack.c.l.b16 %v1303
      %v1375 = vunpack.c.l.b16 %v1304
      %v1376 = vunpack.c.l.b16 %v1305
      %v1377 = vunpack.c.l.b16 %v1306
      %v1378 = vunpack.c.l.b16 %v1307
      %v1379 = vunpack.c.l.b16 %v1308
      %v1380 = vunpack.c.l.b16 %v1309
      %v1381 = vunpack.c.l.b16 %v1310
      %v1382 = vunpack.c.l.b16 %v1311
      %v1383 = vunpack.c.l.b16 %v1312
      %v1384 = vunpack.c.l.b16 %v1313
      %v1385 = vunpack.c.l.b16 %v1314
      %v1386 = vunpack.c.l.b16 %v1315
      %v1387 = vunpack.c.l.b16 %v1316
      %v1388 = vunpack.c.l.b16 %v1317
      %v1389 = vunpack.c.l.b16 %v1318
      %v1390 = vunpack.c.l.b16 %v1319
      %v1391 = vunpack.c.l.b16 %v1320
      %v1392 = vunpack.c.l.b16 %v1321
      %v1393 = vunpack.c.l.b16 %v1322
      %v1394 = vunpack.c.l.b16 %v1323
      %v1395 = vunpack.c.l.b16 %v1324
      %v1396 = vunpack.c.l.b16 %v1325
      %v1397 = vunpack.c.l.b16 %v1326
      %v1398 = vunpack.c.l.b16 %v1327
      %v1399 = vpack.c.b16 %v1368, %v1367
      %v1400 = vpack.c.b16 %v1370, %v1369
      %v1401 = vpack.c.b16 %v1372, %v1371
      %v1402 = vpack.c.b16 %v1374, %v1373
      %v1403 = vpack.c.b16 %v1376, %v1375
      %v1404 = vpack.c.b16 %v1378, %v1377
      %v1405 = vpack.c.b16 %v1380, %v1379
      %v1406 = vpack.c.b16 %v1382, %v1381
      %v1407 = vpack.c.b16 %v1384, %v1383
      %v1408 = vpack.c.b16 %v1386, %v1385
      %v1409 = vpack.c.b16 %v1388, %v1387
      %v1410 = vpack.c.b16 %v1390, %v1389
      %v1411 = vpack.c.b16 %v1392, %v1391
      %v1412 = vpack.c.b16 %v1394, %v1393
      %v1413 = vpack.c.b16 %v1396, %v1395
      %v1414 = vpack.c.b16 %v1398, %v1397
      %1431 = vmatprep.subr.bf16.mxu0 0
      %1432 = vmatpush1.bf16.msra.mxu0 %v1399
      %1433 = vmatprep.subr.bf16.mxu0 0
      %1434 = vmatpush1.bf16.msra.mxu0 %v1400
      %1435 = vmatprep.subr.bf16.mxu0 0
      %1436 = vmatpush1.bf16.msra.mxu0 %v1401
      %1437 = vmatprep.subr.bf16.mxu0 0
      %1438 = vmatpush1.bf16.msra.mxu0 %v1402
      %1439 = vmatprep.subr.bf16.mxu0 0
      %1440 = vmatpush1.bf16.msra.mxu0 %v1403
      %1441 = vmatprep.subr.bf16.mxu0 0
      %1442 = vmatpush1.bf16.msra.mxu0 %v1404
      %1443 = vmatprep.subr.bf16.mxu0 0
      %1444 = vmatpush1.bf16.msra.mxu0 %v1405
      %1445 = vmatprep.subr.bf16.mxu0 0
      %1446 = vmatpush1.bf16.msra.mxu0 %v1406
      %1447 = vmatprep.subr.bf16.mxu0 0
      %1448 = vmatpush1.bf16.msra.mxu0 %v1407
      %1449 = vmatprep.subr.bf16.mxu0 0
      %1450 = vmatpush1.bf16.msra.mxu0 %v1408
      %1451 = vmatprep.subr.bf16.mxu0 0
      %1452 = vmatpush1.bf16.msra.mxu0 %v1409
      %1453 = vmatprep.subr.bf16.mxu0 0
      %1454 = vmatpush1.bf16.msra.mxu0 %v1410
      %1455 = vmatprep.subr.bf16.mxu0 0
      %1456 = vmatpush1.bf16.msra.mxu0 %v1411
      %1457 = vmatprep.subr.bf16.mxu0 0
      %1458 = vmatpush1.bf16.msra.mxu0 %v1412
      %1459 = vmatprep.subr.bf16.mxu0 0
      %1460 = vmatpush1.bf16.msra.mxu0 %v1413
      %1461 = vmatprep.subr.bf16.mxu0 0
      %1462 = vmatpush1.bf16.msra.mxu0 %v1414
      %1463 = vmatprep.mubr.bf16.mxu0 %v1295
      %1464 = vmatmul.mubr.bf16.gmra.mrb[0].mxu0 %v1294
      %v1465 = vpop.f32.mrb[0].mxu0
      %v1466 = vadd.f32 %v1333, %v1465
      %v1467 = vpop.f32.mrb[0].mxu0
      %v1468 = vpop.f32.mrb[0].mxu0
      %v1469 = vadd.f32 %v1333, %v1468
      %v1470 = vpop.f32.mrb[0].mxu0
      %1471 = vdwg.mxu0
      %v1474 = vrot.slane %v1466, 3
      %v1475 = vrot.slane %v1469, 3
      %v1476 = vsel %vm1077, %v1474, %v1475
      %v1480 = vadd.f32 %v1146, %v1474
      %v1481 = vadd.f32 %v1147, %v1476
      %v1482 = vadd.f32 %v1148, %v1475
      %v1483 = vld [vmem:[%s13] sm:$0x1]
      %v1484 = vld [vmem:[%s14] sm:$0x1]
      %v1485 = vsel %vm1089, %v1480, 0.0
      %1486 = vadd.xlane.f32.xlu0 %v1485
      %v1487 = vpop.xlane.xlu0 %1486
      %v1488 = vsel %vm610, %v1481, 0.0
      %1489 = vadd.xlane.f32.xlu0 %v1488
      %v1490 = vpop.xlane.xlu0 %1489
      %v1491 = vsel %vm1096, %v1482, 0.0
      %1492 = vadd.xlane.f32.xlu0 %v1491
      %v1493 = vpop.xlane.xlu0 %1492
      %v1494 = vmul.f32 %v1487, %v1100
      %v1495 = vmul.f32 %v1490, %v1100
      %v1496 = vmul.f32 %v1493, %v1100
      %v1497 = vsub.f32 %v1480, %v1494
      %v1498 = vsub.f32 %v1481, %v1495
      %v1499 = vsub.f32 %v1482, %v1496
      %v1500 = vmul.f32 %v1497, %v1497
      %v1501 = vmul.f32 %v1498, %v1498
      %v1502 = vmul.f32 %v1499, %v1499
      %v1503 = vsel %vm1089, %v1500, 0.0
      %1504 = vadd.xlane.f32.xlu0 %v1503
      %v1505 = vpop.xlane.xlu0 %1504
      %v1506 = vsel %vm610, %v1501, 0.0
      %1507 = vadd.xlane.f32.xlu0 %v1506
      %v1508 = vpop.xlane.xlu0 %1507
      %v1509 = vsel %vm1096, %v1502, 0.0
      %1510 = vadd.xlane.f32.xlu0 %v1509
      %v1511 = vpop.xlane.xlu0 %1510
      %v1512 = vmul.f32 %v1505, %v1100
      %v1513 = vmul.f32 %v1508, %v1100
      %v1514 = vmul.f32 %v1511, %v1100
      %v1515 = vadd.f32 %v1512, 1e-06
      %v1516 = vadd.f32 %v1513, 1e-06
      %v1517 = vadd.f32 %v1514, 1e-06
      %v1518 = vrsqrt.pop %v1515
      %v1519 = vrsqrt.pop %v1516
      %v1520 = vrsqrt.pop %v1517
      %v1521 = vmul.f32 %v1497, %v1518
      %v1522 = vmul.f32 %v1498, %v1519
      %v1523 = vmul.f32 %v1499, %v1520
      %v1525 = vlaneseq
      %v1526 = vshrl.u32 %v1525, 7
      %v1527 = vsub.s32 0, %v1526
      %v1528 = vrot.slane %v1483, %v1527
      %v1530 = vmul.f32 %v1521, %v1528
      %v1531 = vmul.f32 %v1522, %v1528
      %v1532 = vmul.f32 %v1523, %v1528
      %v1534 = vlaneseq
      %v1535 = vshrl.u32 %v1534, 7
      %v1536 = vsub.s32 0, %v1535
      %v1537 = vrot.slane %v1484, %v1536
      %v1539 = vadd.f32 %v1530, %v1537
      %v1540 = vadd.f32 %v1531, %v1537
      %v1541 = vadd.f32 %v1532, %v1537
      %s1542 = scalar_lea.vmem %s1, 64
      %v1543 = vld [vmem:[%s1542] sm:$0xf]
      %v1544 = vld [vmem:[%s1542 + $0x4] sm:$0xf]
      %v1545 = vld [vmem:[%s1542 + $0x8] sm:$0xf]
      %v1546 = vld [vmem:[%s1542 + $0xc] sm:$0xf]
      %v1547 = vld [vmem:[%s1542 + $0x10] sm:$0xf]
      %v1548 = vld [vmem:[%s1542 + $0x14] sm:$0xf]
      %v1549 = vld [vmem:[%s1542 + $0x18] sm:$0xf]
      %v1550 = vld [vmem:[%s1542 + $0x1c] sm:$0xf]
      %s1551 = scalar_lea.vmem %s2, 2
      %v1552 = vld [vmem:[%s1551] sm:$0x1]
      %v1554 = vlaneseq
      %v1555 = vshrl.u32 %v1554, 7
      %v1556 = vsub.s32 0, %v1555
      %v1557 = vrot.slane %v1552, %v1556
      %v1567 = vunpack.c.l.b16 %v1543
      %v1568 = vunpack.c.l.b16 %v1544
      %v1569 = vunpack.c.l.b16 %v1545
      %v1570 = vunpack.c.l.b16 %v1546
      %v1571 = vunpack.c.l.b16 %v1547
      %v1572 = vunpack.c.l.b16 %v1548
      %v1573 = vunpack.c.l.b16 %v1549
      %v1574 = vunpack.c.l.b16 %v1550
      %v1575 = vpack.c.b16 %v1568, %v1567
      %v1576 = vpack.c.b16 %v1570, %v1569
      %v1577 = vpack.c.b16 %v1572, %v1571
      %v1578 = vpack.c.b16 %v1574, %v1573
      %v1583 = vsel %vm610, %v551, 0
      %v1585 = vsel %vm610, %v552, 0
      %1587 = vmatprep.subr.bf16.mxu0 0
      %1588 = vmatpush1.bf16.msra.mxu0 %v1575
      %1589 = vmatprep.subr.bf16.mxu0 0
      %1590 = vmatpush1.bf16.msra.mxu0 %v1576
      %1591 = vmatprep.subr.bf16.mxu0 0
      %1592 = vmatpush1.bf16.msra.mxu0 %v1577
      %1593 = vmatprep.subr.bf16.mxu0 0
      %1594 = vmatpush1.bf16.msra.mxu0 %v1578
      %1595 = vmatprep.subr.bf16.mxu0 0
      %1596 = vmatpush1.bf16.msra.mxu0 0
      %1597 = vmatprep.subr.bf16.mxu0 0
      %1598 = vmatpush1.bf16.msra.mxu0 0
      %1599 = vmatprep.subr.bf16.mxu0 0
      %1600 = vmatpush1.bf16.msra.mxu0 0
      %1601 = vmatprep.subr.bf16.mxu0 0
      %1602 = vmatpush1.bf16.msra.mxu0 0
      %1603 = vmatprep.subr.bf16.mxu0 0
      %1604 = vmatpush1.bf16.msra.mxu0 0
      %1605 = vmatprep.subr.bf16.mxu0 0
      %1606 = vmatpush1.bf16.msra.mxu0 0
      %1607 = vmatprep.subr.bf16.mxu0 0
      %1608 = vmatpush1.bf16.msra.mxu0 0
      %1609 = vmatprep.subr.bf16.mxu0 0
      %1610 = vmatpush1.bf16.msra.mxu0 0
      %1611 = vmatprep.subr.bf16.mxu0 0
      %1612 = vmatpush1.bf16.msra.mxu0 0
      %1613 = vmatprep.subr.bf16.mxu0 0
      %1614 = vmatpush1.bf16.msra.mxu0 0
      %1615 = vmatprep.subr.bf16.mxu0 0
      %1616 = vmatpush1.bf16.msra.mxu0 0
      %1617 = vmatprep.subr.bf16.mxu0 0
      %1618 = vmatpush1.bf16.msra.mxu0 0
      %1619 = vmatprep.mubr.bf16.mxu0 0
      %1620 = vmatmul.mubr.bf16.gmra.mrb[0].mxu0 %v1583
      %v1621 = vpop.f32.mrb[0].mxu0
      %v1622 = vadd.f32 %v1557, %v1621
      %v1623 = vpop.f32.mrb[0].mxu0
      %v1624 = vpop.f32.mrb[0].mxu0
      %v1625 = vadd.f32 %v1557, %v1624
      %v1626 = vpop.f32.mrb[0].mxu0
      %1627 = vmatprep.mubr.bf16.mxu0 0
      %1628 = vmatmul.mubr.bf16.gmra.mrb[0].mxu0 %v1585
      %v1629 = vpop.f32.mrb[0].mxu0
      %v1630 = vadd.f32 %v1557, %v1629
      %v1631 = vpop.f32.mrb[0].mxu0
      %v1632 = vpop.f32.mrb[0].mxu0
      %v1633 = vpop.f32.mrb[0].mxu0
      %1634 = vdwg.mxu0
      %s1635 = scalar_lea.vmem %s3, 64
      %v1636 = vld [vmem:[%s1635] sm:$0xf]
      %v1637 = vld [vmem:[%s1635 + $0x4] sm:$0xf]
      %v1638 = vld [vmem:[%s1635 + $0x8] sm:$0xf]
      %v1639 = vld [vmem:[%s1635 + $0xc] sm:$0xf]
      %v1640 = vld [vmem:[%s1635 + $0x10] sm:$0xf]
      %v1641 = vld [vmem:[%s1635 + $0x14] sm:$0xf]
      %v1642 = vld [vmem:[%s1635 + $0x18] sm:$0xf]
      %v1643 = vld [vmem:[%s1635 + $0x1c] sm:$0xf]
      %s1644 = scalar_lea.vmem %s4, 2
      %v1645 = vld [vmem:[%s1644] sm:$0x1]
      %v1647 = vlaneseq
      %v1648 = vshrl.u32 %v1647, 7
      %v1649 = vsub.s32 0, %v1648
      %v1650 = vrot.slane %v1645, %v1649
      %v1660 = vunpack.c.l.b16 %v1636
      %v1661 = vunpack.c.l.b16 %v1637
      %v1662 = vunpack.c.l.b16 %v1638
      %v1663 = vunpack.c.l.b16 %v1639
      %v1664 = vunpack.c.l.b16 %v1640
      %v1665 = vunpack.c.l.b16 %v1641
      %v1666 = vunpack.c.l.b16 %v1642
      %v1667 = vunpack.c.l.b16 %v1643
      %v1668 = vpack.c.b16 %v1661, %v1660
      %v1669 = vpack.c.b16 %v1663, %v1662
      %v1670 = vpack.c.b16 %v1665, %v1664
      %v1671 = vpack.c.b16 %v1667, %v1666
      %1676 = vmatprep.subr.bf16.mxu0 0
      %1677 = vmatpush1.bf16.msra.mxu0 %v1668
      %1678 = vmatprep.subr.bf16.mxu0 0
      %1679 = vmatpush1.bf16.msra.mxu0 %v1669
      %1680 = vmatprep.subr.bf16.mxu0 0
      %1681 = vmatpush1.bf16.msra.mxu0 %v1670
      %1682 = vmatprep.subr.bf16.mxu0 0
      %1683 = vmatpush1.bf16.msra.mxu0 %v1671
      %1684 = vmatprep.subr.bf16.mxu0 0
      %1685 = vmatpush1.bf16.msra.mxu0 0
      %1686 = vmatprep.subr.bf16.mxu0 0
      %1687 = vmatpush1.bf16.msra.mxu0 0
      %1688 = vmatprep.subr.bf16.mxu0 0
      %1689 = vmatpush1.bf16.msra.mxu0 0
      %1690 = vmatprep.subr.bf16.mxu0 0
      %1691 = vmatpush1.bf16.msra.mxu0 0
      %1692 = vmatprep.subr.bf16.mxu0 0
      %1693 = vmatpush1.bf16.msra.mxu0 0
      %1694 = vmatprep.subr.bf16.mxu0 0
      %1695 = vmatpush1.bf16.msra.mxu0 0
      %1696 = vmatprep.subr.bf16.mxu0 0
      %1697 = vmatpush1.bf16.msra.mxu0 0
      %1698 = vmatprep.subr.bf16.mxu0 0
      %1699 = vmatpush1.bf16.msra.mxu0 0
      %1700 = vmatprep.subr.bf16.mxu0 0
      %1701 = vmatpush1.bf16.msra.mxu0 0
      %1702 = vmatprep.subr.bf16.mxu0 0
      %1703 = vmatpush1.bf16.msra.mxu0 0
      %1704 = vmatprep.subr.bf16.mxu0 0
      %1705 = vmatpush1.bf16.msra.mxu0 0
      %1706 = vmatprep.subr.bf16.mxu0 0
      %1707 = vmatpush1.bf16.msra.mxu0 0
      %1708 = vmatprep.mubr.bf16.mxu0 0
      %1709 = vmatmul.mubr.bf16.gmra.mrb[0].mxu0 %v612
      %v1710 = vpop.f32.mrb[0].mxu0
      %v1711 = vadd.f32 %v1650, %v1710
      %v1712 = vpop.f32.mrb[0].mxu0
      %v1713 = vpop.f32.mrb[0].mxu0
      %v1714 = vadd.f32 %v1650, %v1713
      %v1715 = vpop.f32.mrb[0].mxu0
      %1716 = vdwg.mxu0
      %v1717 = vmul.f32 %v1622, 0.17677669
      %v1718 = vmul.f32 %v1625, 0.17677669
      %v1719 = vmul.f32 %v1630, 0.17677669
      %v1720 = vpack.c.bf16 %v1718, %v1717
      %v1721 = vpack.c.bf16 %v1719, %v1719
      %v1722 = vpack.c.bf16 %v1714, %v1711
      %v1724 = vsel %vm739, %v1720, 0
      %v1727 = vsel %vm739, %v1721, 0
      %v1730 = vsel %vm739, %v1722, 0
      %1732 = vmatprep.subr.bf16.mxu0 0
      %1733 = vmatpush1.bf16.xpose.msra.mxu0 %v1730
      %1734 = vmatprep.subr.bf16.mxu0 0
      %1735 = vmatpush1.bf16.xpose.msra.mxu0 0
      %1736 = vmatprep.subr.bf16.mxu0 0
      %1737 = vmatpush1.bf16.xpose.msra.mxu0 0
      %1738 = vmatprep.subr.bf16.mxu0 0
      %1739 = vmatpush1.bf16.xpose.msra.mxu0 0
      %1740 = vmatprep.subr.bf16.mxu0 0
      %1741 = vmatpush1.bf16.xpose.msra.mxu0 0
      %1742 = vmatprep.subr.bf16.mxu0 0
      %1743 = vmatpush1.bf16.xpose.msra.mxu0 0
      %1744 = vmatprep.subr.bf16.mxu0 0
      %1745 = vmatpush1.bf16.xpose.msra.mxu0 0
      %1746 = vmatprep.subr.bf16.mxu0 0
      %1747 = vmatpush1.bf16.xpose.msra.mxu0 0
      %1748 = vmatprep.subr.bf16.mxu0 0
      %1749 = vmatpush1.bf16.xpose.msra.mxu0 0
      %1750 = vmatprep.subr.bf16.mxu0 0
      %1751 = vmatpush1.bf16.xpose.msra.mxu0 0
      %1752 = vmatprep.subr.bf16.mxu0 0
      %1753 = vmatpush1.bf16.xpose.msra.mxu0 0
      %1754 = vmatprep.subr.bf16.mxu0 0
      %1755 = vmatpush1.bf16.xpose.msra.mxu0 0
      %1756 = vmatprep.subr.bf16.mxu0 0
      %1757 = vmatpush1.bf16.xpose.msra.mxu0 0
      %1758 = vmatprep.subr.bf16.mxu0 0
      %1759 = vmatpush1.bf16.xpose.msra.mxu0 0
      %1760 = vmatprep.subr.bf16.mxu0 0
      %1761 = vmatpush1.bf16.xpose.msra.mxu0 0
      %1762 = vmatprep.subr.bf16.mxu0 0
      %1763 = vmatpush1.bf16.xpose.msra.mxu0 0
      %1764 = vmatprep.mubr.bf16.mxu0 0
      %1765 = vmatmul.mubr.bf16.gmra.mrb[0].mxu0 %v1724
      %v1766 = vpop.f32.mrb[0].mxu0
      %v1767 = vadd.f32 0.0, %v1766
      %v1768 = vpop.f32.mrb[0].mxu0
      %v1769 = vpop.f32.mrb[0].mxu0
      %v1770 = vadd.f32 0.0, %v1769
      %v1771 = vpop.f32.mrb[0].mxu0
      %1772 = vmatprep.mubr.bf16.mxu0 0
      %1773 = vmatmul.mubr.bf16.gmra.mrb[0].mxu0 %v1727
      %v1774 = vpop.f32.mrb[0].mxu0
      %v1775 = vadd.f32 0.0, %v1774
      %v1776 = vpop.f32.mrb[0].mxu0
      %v1777 = vpop.f32.mrb[0].mxu0
      %v1778 = vpop.f32.mrb[0].mxu0
      %1779 = vdwg.mxu0
      %v1780 = vsel %vm787, %v1767, -inf
      %1781 = vmax.xlane.f32.xlu0 %v1780
      %v1782 = vpop.xlane.xlu0 %1781
      %v1783 = vsel %vm787, %v1770, -inf
      %1784 = vmax.xlane.f32.xlu0 %v1783
      %v1785 = vpop.xlane.xlu0 %1784
      %vm1786 = vcmask 126976
      %v1787 = vsel %vm1786, %v1775, -inf
      %1788 = vmax.xlane.f32.xlu0 %v1787
      %v1789 = vpop.xlane.xlu0 %1788
      %v1790 = vsub.f32 %v1767, %v1782
      %v1791 = vsub.f32 %v1770, %v1785
      %v1792 = vsub.f32 %v1775, %v1789
      %v1793 = vmul.f32 %v1790, 1.442695
      %v1794 = vpow.pop %v1793
      %v1795 = vmul.f32 %v1791, 1.442695
      %v1796 = vpow.pop %v1795
      %v1797 = vmul.f32 %v1792, 1.442695
      %v1798 = vpow.pop %v1797
      %v1799 = vsel %vm787, %v1794, 0.0
      %1800 = vadd.xlane.f32.xlu0 %v1799
      %v1801 = vpop.xlane.xlu0 %1800
      %v1802 = vsel %vm787, %v1796, 0.0
      %1803 = vadd.xlane.f32.xlu0 %v1802
      %v1804 = vpop.xlane.xlu0 %1803
      %v1805 = vsel %vm1786, %v1798, 0.0
      %1806 = vadd.xlane.f32.xlu0 %v1805
      %v1807 = vpop.xlane.xlu0 %1806
      %v1808 = vrcp.pop %v1801
      %v1809 = vmul.f32 %v1794, %v1808
      %v1810 = vrcp.pop %v1804
      %v1811 = vmul.f32 %v1796, %v1810
      %v1812 = vrcp.pop %v1807
      %v1813 = vmul.f32 %v1798, %v1812
      %v1814 = vpack.c.bf16 %v1811, %v1809
      %v1815 = vpack.c.bf16 %v1813, %v1813
      %1817 = vrot.lane.b32.xlu0 %v1722, 64
      %v1818 = vpop.permute.xlu0 %1817
      %v1821 = vsel %vm787, %v1814, 0
      %v1824 = vsel %vm787, %v1815, 0
      %1826 = vmatprep.subr.bf16.mxu0 0
      %1827 = vmatpush1.bf16.msra.mxu0 %v1818
      %1828 = vmatprep.subr.bf16.mxu0 0
      %1829 = vmatpush1.bf16.msra.mxu0 0
      %1830 = vmatprep.subr.bf16.mxu0 0
      %1831 = vmatpush1.bf16.msra.mxu0 0
      %1832 = vmatprep.subr.bf16.mxu0 0
      %1833 = vmatpush1.bf16.msra.mxu0 0
      %1834 = vmatprep.subr.bf16.mxu0 0
      %1835 = vmatpush1.bf16.msra.mxu0 0
      %1836 = vmatprep.subr.bf16.mxu0 0
      %1837 = vmatpush1.bf16.msra.mxu0 0
      %1838 = vmatprep.subr.bf16.mxu0 0
      %1839 = vmatpush1.bf16.msra.mxu0 0
      %1840 = vmatprep.subr.bf16.mxu0 0
      %1841 = vmatpush1.bf16.msra.mxu0 0
      %1842 = vmatprep.subr.bf16.mxu0 0
      %1843 = vmatpush1.bf16.msra.mxu0 0
      %1844 = vmatprep.subr.bf16.mxu0 0
      %1845 = vmatpush1.bf16.msra.mxu0 0
      %1846 = vmatprep.subr.bf16.mxu0 0
      %1847 = vmatpush1.bf16.msra.mxu0 0
      %1848 = vmatprep.subr.bf16.mxu0 0
      %1849 = vmatpush1.bf16.msra.mxu0 0
      %1850 = vmatprep.subr.bf16.mxu0 0
      %1851 = vmatpush1.bf16.msra.mxu0 0
      %1852 = vmatprep.subr.bf16.mxu0 0
      %1853 = vmatpush1.bf16.msra.mxu0 0
      %1854 = vmatprep.subr.bf16.mxu0 0
      %1855 = vmatpush1.bf16.msra.mxu0 0
      %1856 = vmatprep.subr.bf16.mxu0 0
      %1857 = vmatpush1.bf16.msra.mxu0 0
      %1858 = vmatprep.mubr.bf16.mxu0 0
      %1859 = vmatmul.mubr.bf16.gmra.mrb[0].mxu0 %v1821
      %v1860 = vpop.f32.mrb[0].mxu0
      %v1861 = vadd.f32 0.0, %v1860
      %v1862 = vpop.f32.mrb[0].mxu0
      %v1863 = vpop.f32.mrb[0].mxu0
      %v1864 = vadd.f32 0.0, %v1863
      %v1865 = vpop.f32.mrb[0].mxu0
      %1866 = vmatprep.mubr.bf16.mxu0 0
      %1867 = vmatmul.mubr.bf16.gmra.mrb[0].mxu0 %v1824
      %v1868 = vpop.f32.mrb[0].mxu0
      %v1869 = vadd.f32 0.0, %v1868
      %v1870 = vpop.f32.mrb[0].mxu0
      %v1871 = vpop.f32.mrb[0].mxu0
      %v1872 = vpop.f32.mrb[0].mxu0
      %1873 = vdwg.mxu0
      %1876 = vrot.lane.b32.xlu0 %v1720, 96
      %v1877 = vpop.permute.xlu0 %1876
      %1878 = vrot.lane.b32.xlu0 %v1721, 96
      %v1879 = vpop.permute.xlu0 %1878
      %1880 = vrot.lane.b32.xlu0 %v1722, 96
      %v1881 = vpop.permute.xlu0 %1880
      %v1883 = vsel %vm739, %v1877, 0
      %v1886 = vsel %vm739, %v1879, 0
      %v1889 = vsel %vm739, %v1881, 0
      %1891 = vmatprep.subr.bf16.mxu0 0
      %1892 = vmatpush1.bf16.xpose.msra.mxu0 %v1889
      %1893 = vmatprep.subr.bf16.mxu0 0
      %1894 = vmatpush1.bf16.xpose.msra.mxu0 0
      %1895 = vmatprep.subr.bf16.mxu0 0
      %1896 = vmatpush1.bf16.xpose.msra.mxu0 0
      %1897 = vmatprep.subr.bf16.mxu0 0
      %1898 = vmatpush1.bf16.xpose.msra.mxu0 0
      %1899 = vmatprep.subr.bf16.mxu0 0
      %1900 = vmatpush1.bf16.xpose.msra.mxu0 0
      %1901 = vmatprep.subr.bf16.mxu0 0
      %1902 = vmatpush1.bf16.xpose.msra.mxu0 0
      %1903 = vmatprep.subr.bf16.mxu0 0
      %1904 = vmatpush1.bf16.xpose.msra.mxu0 0
      %1905 = vmatprep.subr.bf16.mxu0 0
      %1906 = vmatpush1.bf16.xpose.msra.mxu0 0
      %1907 = vmatprep.subr.bf16.mxu0 0
      %1908 = vmatpush1.bf16.xpose.msra.mxu0 0
      %1909 = vmatprep.subr.bf16.mxu0 0
      %1910 = vmatpush1.bf16.xpose.msra.mxu0 0
      %1911 = vmatprep.subr.bf16.mxu0 0
      %1912 = vmatpush1.bf16.xpose.msra.mxu0 0
      %1913 = vmatprep.subr.bf16.mxu0 0
      %1914 = vmatpush1.bf16.xpose.msra.mxu0 0
      %1915 = vmatprep.subr.bf16.mxu0 0
      %1916 = vmatpush1.bf16.xpose.msra.mxu0 0
      %1917 = vmatprep.subr.bf16.mxu0 0
      %1918 = vmatpush1.bf16.xpose.msra.mxu0 0
      %1919 = vmatprep.subr.bf16.mxu0 0
      %1920 = vmatpush1.bf16.xpose.msra.mxu0 0
      %1921 = vmatprep.subr.bf16.mxu0 0
      %1922 = vmatpush1.bf16.xpose.msra.mxu0 0
      %1923 = vmatprep.mubr.bf16.mxu0 0
      %1924 = vmatmul.mubr.bf16.gmra.mrb[0].mxu0 %v1883
      %v1925 = vpop.f32.mrb[0].mxu0
      %v1926 = vadd.f32 0.0, %v1925
      %v1927 = vpop.f32.mrb[0].mxu0
      %v1928 = vpop.f32.mrb[0].mxu0
      %v1929 = vadd.f32 0.0, %v1928
      %v1930 = vpop.f32.mrb[0].mxu0
      %1931 = vmatprep.mubr.bf16.mxu0 0
      %1932 = vmatmul.mubr.bf16.gmra.mrb[0].mxu0 %v1886
      %v1933 = vpop.f32.mrb[0].mxu0
      %v1934 = vadd.f32 0.0, %v1933
      %v1935 = vpop.f32.mrb[0].mxu0
      %v1936 = vpop.f32.mrb[0].mxu0
      %v1937 = vpop.f32.mrb[0].mxu0
      %1938 = vdwg.mxu0
      %v1939 = vsel %vm787, %v1926, -inf
      %1940 = vmax.xlane.f32.xlu0 %v1939
      %v1941 = vpop.xlane.xlu0 %1940
      %v1942 = vsel %vm787, %v1929, -inf
      %1943 = vmax.xlane.f32.xlu0 %v1942
      %v1944 = vpop.xlane.xlu0 %1943
      %v1945 = vsel %vm1786, %v1934, -inf
      %1946 = vmax.xlane.f32.xlu0 %v1945
      %v1947 = vpop.xlane.xlu0 %1946
      %v1948 = vsub.f32 %v1926, %v1941
      %v1949 = vsub.f32 %v1929, %v1944
      %v1950 = vsub.f32 %v1934, %v1947
      %v1951 = vmul.f32 %v1948, 1.442695
      %v1952 = vpow.pop %v1951
      %v1953 = vmul.f32 %v1949, 1.442695
      %v1954 = vpow.pop %v1953
      %v1955 = vmul.f32 %v1950, 1.442695
      %v1956 = vpow.pop %v1955
      %v1957 = vsel %vm787, %v1952, 0.0
      %1958 = vadd.xlane.f32.xlu0 %v1957
      %v1959 = vpop.xlane.xlu0 %1958
      %v1960 = vsel %vm787, %v1954, 0.0
      %1961 = vadd.xlane.f32.xlu0 %v1960
      %v1962 = vpop.xlane.xlu0 %1961
      %v1963 = vsel %vm1786, %v1956, 0.0
      %1964 = vadd.xlane.f32.xlu0 %v1963
      %v1965 = vpop.xlane.xlu0 %1964
      %v1966 = vrcp.pop %v1959
      %v1967 = vmul.f32 %v1952, %v1966
      %v1968 = vrcp.pop %v1962
      %v1969 = vmul.f32 %v1954, %v1968
      %v1970 = vrcp.pop %v1965
      %v1971 = vmul.f32 %v1956, %v1970
      %v1972 = vpack.c.bf16 %v1969, %v1967
      %v1973 = vpack.c.bf16 %v1971, %v1971
      %1974 = vrot.lane.b32.xlu0 %v1722, 32
      %v1975 = vpop.permute.xlu0 %1974
      %v1978 = vsel %vm787, %v1972, 0
      %v1981 = vsel %vm787, %v1973, 0
      %1983 = vmatprep.subr.bf16.mxu0 0
      %1984 = vmatpush1.bf16.msra.mxu0 %v1975
      %1985 = vmatprep.subr.bf16.mxu0 0
      %1986 = vmatpush1.bf16.msra.mxu0 0
      %1987 = vmatprep.subr.bf16.mxu0 0
      %1988 = vmatpush1.bf16.msra.mxu0 0
      %1989 = vmatprep.subr.bf16.mxu0 0
      %1990 = vmatpush1.bf16.msra.mxu0 0
      %1991 = vmatprep.subr.bf16.mxu0 0
      %1992 = vmatpush1.bf16.msra.mxu0 0
      %1993 = vmatprep.subr.bf16.mxu0 0
      %1994 = vmatpush1.bf16.msra.mxu0 0
      %1995 = vmatprep.subr.bf16.mxu0 0
      %1996 = vmatpush1.bf16.msra.mxu0 0
      %1997 = vmatprep.subr.bf16.mxu0 0
      %1998 = vmatpush1.bf16.msra.mxu0 0
      %1999 = vmatprep.subr.bf16.mxu0 0
      %2000 = vmatpush1.bf16.msra.mxu0 0
      %2001 = vmatprep.subr.bf16.mxu0 0
      %2002 = vmatpush1.bf16.msra.mxu0 0
      %2003 = vmatprep.subr.bf16.mxu0 0
      %2004 = vmatpush1.bf16.msra.mxu0 0
      %2005 = vmatprep.subr.bf16.mxu0 0
      %2006 = vmatpush1.bf16.msra.mxu0 0
      %2007 = vmatprep.subr.bf16.mxu0 0
      %2008 = vmatpush1.bf16.msra.mxu0 0
      %2009 = vmatprep.subr.bf16.mxu0 0
      %2010 = vmatpush1.bf16.msra.mxu0 0
      %2011 = vmatprep.subr.bf16.mxu0 0
      %2012 = vmatpush1.bf16.msra.mxu0 0
      %2013 = vmatprep.subr.bf16.mxu0 0
      %2014 = vmatpush1.bf16.msra.mxu0 0
      %2015 = vmatprep.mubr.bf16.mxu0 0
      %2016 = vmatmul.mubr.bf16.gmra.mrb[0].mxu0 %v1978
      %v2017 = vpop.f32.mrb[0].mxu0
      %v2018 = vadd.f32 0.0, %v2017
      %v2019 = vpop.f32.mrb[0].mxu0
      %v2020 = vpop.f32.mrb[0].mxu0
      %v2021 = vadd.f32 0.0, %v2020
      %v2022 = vpop.f32.mrb[0].mxu0
      %2023 = vmatprep.mubr.bf16.mxu0 0
      %2024 = vmatmul.mubr.bf16.gmra.mrb[0].mxu0 %v1981
      %v2025 = vpop.f32.mrb[0].mxu0
      %v2026 = vadd.f32 0.0, %v2025
      %v2027 = vpop.f32.mrb[0].mxu0
      %v2028 = vpop.f32.mrb[0].mxu0
      %v2029 = vpop.f32.mrb[0].mxu0
      %2030 = vdwg.mxu0
      %2034 = vrot.lane.b32.xlu0 %v2018, 32
      %v2035 = vpop.permute.xlu0 %2034
      %2036 = vrot.lane.b32.xlu0 %v2021, 32
      %v2037 = vpop.permute.xlu0 %2036
      %2038 = vrot.lane.b32.xlu0 %v2026, 32
      %v2039 = vpop.permute.xlu0 %2038
      %v2043 = vsel %vm739, %v1861, %v2035
      %v2044 = vsel %vm739, %v1864, %v2037
      %v2045 = vsel %vm739, %v1869, %v2039
      %v2046 = vpack.c.bf16 %v2044, %v2043
      %v2047 = vpack.c.bf16 %v2045, %v2045
      %s2048 = scalar_lea.vmem %s5, 64
      %v2049 = vld [vmem:[%s2048] sm:$0xf]
      %v2050 = vld [vmem:[%s2048 + $0x4] sm:$0xf]
      %v2051 = vld [vmem:[%s2048 + $0x8] sm:$0xf]
      %v2052 = vld [vmem:[%s2048 + $0xc] sm:$0xf]
      %v2053 = vld [vmem:[%s2048 + $0x10] sm:$0xf]
      %v2054 = vld [vmem:[%s2048 + $0x14] sm:$0xf]
      %v2055 = vld [vmem:[%s2048 + $0x18] sm:$0xf]
      %v2056 = vld [vmem:[%s2048 + $0x1c] sm:$0xf]
      %s2057 = scalar_lea.vmem %s6, 2
      %v2058 = vld [vmem:[%s2057] sm:$0x1]
      %v2060 = vlaneseq
      %v2061 = vshrl.u32 %v2060, 7
      %v2062 = vsub.s32 0, %v2061
      %v2063 = vrot.slane %v2058, %v2062
      %v2073 = vunpack.c.l.b16 %v2049
      %v2074 = vunpack.c.l.b16 %v2050
      %v2075 = vunpack.c.l.b16 %v2051
      %v2076 = vunpack.c.l.b16 %v2052
      %v2077 = vunpack.c.l.b16 %v2053
      %v2078 = vunpack.c.l.b16 %v2054
      %v2079 = vunpack.c.l.b16 %v2055
      %v2080 = vunpack.c.l.b16 %v2056
      %v2081 = vpack.c.b16 %v2074, %v2073
      %v2082 = vpack.c.b16 %v2076, %v2075
      %v2083 = vpack.c.b16 %v2078, %v2077
      %v2084 = vpack.c.b16 %v2080, %v2079
      %v2090 = vsel %vm610, %v2046, 0
      %v2093 = vsel %vm610, %v2047, 0
      %2095 = vmatprep.subr.bf16.mxu0 0
      %2096 = vmatpush1.bf16.msra.mxu0 %v2081
      %2097 = vmatprep.subr.bf16.mxu0 0
      %2098 = vmatpush1.bf16.msra.mxu0 %v2082
      %2099 = vmatprep.subr.bf16.mxu0 0
      %2100 = vmatpush1.bf16.msra.mxu0 %v2083
      %2101 = vmatprep.subr.bf16.mxu0 0
      %2102 = vmatpush1.bf16.msra.mxu0 %v2084
      %2103 = vmatprep.subr.bf16.mxu0 0
      %2104 = vmatpush1.bf16.msra.mxu0 0
      %2105 = vmatprep.subr.bf16.mxu0 0
      %2106 = vmatpush1.bf16.msra.mxu0 0
      %2107 = vmatprep.subr.bf16.mxu0 0
      %2108 = vmatpush1.bf16.msra.mxu0 0
      %2109 = vmatprep.subr.bf16.mxu0 0
      %2110 = vmatpush1.bf16.msra.mxu0 0
      %2111 = vmatprep.subr.bf16.mxu0 0
      %2112 = vmatpush1.bf16.msra.mxu0 0
      %2113 = vmatprep.subr.bf16.mxu0 0
      %2114 = vmatpush1.bf16.msra.mxu0 0
      %2115 = vmatprep.subr.bf16.mxu0 0
      %2116 = vmatpush1.bf16.msra.mxu0 0
      %2117 = vmatprep.subr.bf16.mxu0 0
      %2118 = vmatpush1.bf16.msra.mxu0 0
      %2119 = vmatprep.subr.bf16.mxu0 0
      %2120 = vmatpush1.bf16.msra.mxu0 0
      %2121 = vmatprep.subr.bf16.mxu0 0
      %2122 = vmatpush1.bf16.msra.mxu0 0
      %2123 = vmatprep.subr.bf16.mxu0 0
      %2124 = vmatpush1.bf16.msra.mxu0 0
      %2125 = vmatprep.subr.bf16.mxu0 0
      %2126 = vmatpush1.bf16.msra.mxu0 0
      %2127 = vmatprep.mubr.bf16.mxu0 0
      %2128 = vmatmul.mubr.bf16.gmra.mrb[0].mxu0 %v2090
      %v2129 = vpop.f32.mrb[0].mxu0
      %v2130 = vadd.f32 %v2063, %v2129
      %v2131 = vpop.f32.mrb[0].mxu0
      %v2132 = vpop.f32.mrb[0].mxu0
      %v2133 = vadd.f32 %v2063, %v2132
      %v2134 = vpop.f32.mrb[0].mxu0
      %2135 = vmatprep.mubr.bf16.mxu0 0
      %2136 = vmatmul.mubr.bf16.gmra.mrb[0].mxu0 %v2093
      %v2137 = vpop.f32.mrb[0].mxu0
      %v2138 = vadd.f32 %v2063, %v2137
      %v2139 = vpop.f32.mrb[0].mxu0
      %v2140 = vpop.f32.mrb[0].mxu0
      %v2141 = vpop.f32.mrb[0].mxu0
      %2142 = vdwg.mxu0
      %v2143 = vadd.f32 %v548, %v2130
      %v2144 = vadd.f32 %v549, %v2133
      %v2145 = vadd.f32 %v550, %v2138
      %s2146 = scalar_lea.vmem %s7, 2
      %v2147 = vld [vmem:[%s2146] sm:$0x1]
      %s2148 = scalar_lea.vmem %s8, 2
      %v2149 = vld [vmem:[%s2148] sm:$0x1]
      %v2150 = vsel %vm610, %v2143, 0.0
      %2151 = vadd.xlane.f32.xlu0 %v2150
      %v2152 = vpop.xlane.xlu0 %2151
      %v2153 = vsel %vm610, %v2144, 0.0
      %2154 = vadd.xlane.f32.xlu0 %v2153
      %v2155 = vpop.xlane.xlu0 %2154
      %v2156 = vsel %vm1096, %v2145, 0.0
      %2157 = vadd.xlane.f32.xlu0 %v2156
      %v2158 = vpop.xlane.xlu0 %2157
      %v2159 = vmul.f32 %v2152, %v1100
      %v2160 = vmul.f32 %v2155, %v1100
      %v2161 = vmul.f32 %v2158, %v1100
      %v2162 = vsub.f32 %v2143, %v2159
      %v2163 = vsub.f32 %v2144, %v2160
      %v2164 = vsub.f32 %v2145, %v2161
      %v2165 = vmul.f32 %v2162, %v2162
      %v2166 = vmul.f32 %v2163, %v2163
      %v2167 = vmul.f32 %v2164, %v2164
      %v2168 = vsel %vm610, %v2165, 0.0
      %2169 = vadd.xlane.f32.xlu0 %v2168
      %v2170 = vpop.xlane.xlu0 %2169
      %v2171 = vsel %vm610, %v2166, 0.0
      %2172 = vadd.xlane.f32.xlu0 %v2171
      %v2173 = vpop.xlane.xlu0 %2172
      %v2174 = vsel %vm1096, %v2167, 0.0
      %2175 = vadd.xlane.f32.xlu0 %v2174
      %v2176 = vpop.xlane.xlu0 %2175
      %v2177 = vmul.f32 %v2170, %v1100
      %v2178 = vmul.f32 %v2173, %v1100
      %v2179 = vmul.f32 %v2176, %v1100
      %v2180 = vadd.f32 %v2177, 1e-06
      %v2181 = vadd.f32 %v2178, 1e-06
      %v2182 = vadd.f32 %v2179, 1e-06
      %v2183 = vrsqrt.pop %v2180
      %v2184 = vrsqrt.pop %v2181
      %v2185 = vrsqrt.pop %v2182
      %v2186 = vmul.f32 %v2162, %v2183
      %v2187 = vmul.f32 %v2163, %v2184
      %v2188 = vmul.f32 %v2164, %v2185
      %v2190 = vlaneseq
      %v2191 = vshrl.u32 %v2190, 7
      %v2192 = vsub.s32 0, %v2191
      %v2193 = vrot.slane %v2147, %v2192
      %v2195 = vmul.f32 %v2186, %v2193
      %v2196 = vmul.f32 %v2187, %v2193
      %v2197 = vmul.f32 %v2188, %v2193
      %v2199 = vlaneseq
      %v2200 = vshrl.u32 %v2199, 7
      %v2201 = vsub.s32 0, %v2200
      %v2202 = vrot.slane %v2149, %v2201
      %v2204 = vadd.f32 %v2195, %v2202
      %v2205 = vadd.f32 %v2196, %v2202
      %v2206 = vadd.f32 %v2197, %v2202
      %v2207 = vpack.c.bf16 %v2205, %v2204
      %v2208 = vpack.c.bf16 %v2206, %v2206
      %s2209 = scalar_lea.vmem %s9, 128
      %v2210 = vld [vmem:[%s2209] sm:$0xff]
      %v2211 = vld [vmem:[%s2209 + $0x8] sm:$0xff]
      %v2212 = vld [vmem:[%s2209 + $0x10] sm:$0xff]
      %v2213 = vld [vmem:[%s2209 + $0x18] sm:$0xff]
      %v2214 = vld [vmem:[%s2209 + $0x20] sm:$0xff]
      %v2215 = vld [vmem:[%s2209 + $0x28] sm:$0xff]
      %v2216 = vld [vmem:[%s2209 + $0x30] sm:$0xff]
      %v2217 = vld [vmem:[%s2209 + $0x38] sm:$0xff]
      %s2218 = scalar_lea.vmem %s10, 4
      %v2219 = vld [vmem:[%s2218] sm:$0x3]
      %v2221 = vlaneseq
      %v2222 = vshrl.u32 %v2221, 7
      %v2223 = vsub.s32 0, %v2222
      %v2224 = vrot.slane %v2219, %v2223
      %v2225 = vlaneseq
      %v2226 = vshrl.u32 %v2225, 7
      %v2227 = vsub.s32 1, %v2226
      %v2228 = vrot.slane %v2219, %v2227
      %v2239 = vunpack.c.l.b16 %v2210
      %v2240 = vunpack.c.h.b16 %v2210
      %v2241 = vunpack.c.l.b16 %v2211
      %v2242 = vunpack.c.h.b16 %v2211
      %v2243 = vunpack.c.l.b16 %v2212
      %v2244 = vunpack.c.h.b16 %v2212
      %v2245 = vunpack.c.l.b16 %v2213
      %v2246 = vunpack.c.h.b16 %v2213
      %v2247 = vunpack.c.l.b16 %v2214
      %v2248 = vunpack.c.h.b16 %v2214
      %v2249 = vunpack.c.l.b16 %v2215
      %v2250 = vunpack.c.h.b16 %v2215
      %v2251 = vunpack.c.l.b16 %v2216
      %v2252 = vunpack.c.h.b16 %v2216
      %v2253 = vunpack.c.l.b16 %v2217
      %v2254 = vunpack.c.h.b16 %v2217
      %v2255 = vpack.c.b16 %v2241, %v2239
      %v2256 = vpack.c.b16 %v2242, %v2240
      %v2257 = vpack.c.b16 %v2245, %v2243
      %v2258 = vpack.c.b16 %v2246, %v2244
      %v2259 = vpack.c.b16 %v2249, %v2247
      %v2260 = vpack.c.b16 %v2250, %v2248
      %v2261 = vpack.c.b16 %v2253, %v2251
      %v2262 = vpack.c.b16 %v2254, %v2252
      %v2272 = vsel %vm610, %v2207, 0
      %v2275 = vsel %vm610, %v2208, 0
      %2277 = vmatprep.subr.bf16.mxu0 %v2256
      %2278 = vmatpush1.bf16.msra.mxu0 %v2255
      %2279 = vmatprep.subr.bf16.mxu0 %v2258
      %2280 = vmatpush1.bf16.msra.mxu0 %v2257
      %2281 = vmatprep.subr.bf16.mxu0 %v2260
      %2282 = vmatpush1.bf16.msra.mxu0 %v2259
      %2283 = vmatprep.subr.bf16.mxu0 %v2262
      %2284 = vmatpush1.bf16.msra.mxu0 %v2261
      %2285 = vmatprep.subr.bf16.mxu0 0
      %2286 = vmatpush1.bf16.msra.mxu0 0
      %2287 = vmatprep.subr.bf16.mxu0 0
      %2288 = vmatpush1.bf16.msra.mxu0 0
      %2289 = vmatprep.subr.bf16.mxu0 0
      %2290 = vmatpush1.bf16.msra.mxu0 0
      %2291 = vmatprep.subr.bf16.mxu0 0
      %2292 = vmatpush1.bf16.msra.mxu0 0
      %2293 = vmatprep.subr.bf16.mxu0 0
      %2294 = vmatpush1.bf16.msra.mxu0 0
      %2295 = vmatprep.subr.bf16.mxu0 0
      %2296 = vmatpush1.bf16.msra.mxu0 0
      %2297 = vmatprep.subr.bf16.mxu0 0
      %2298 = vmatpush1.bf16.msra.mxu0 0
      %2299 = vmatprep.subr.bf16.mxu0 0
      %2300 = vmatpush1.bf16.msra.mxu0 0
      %2301 = vmatprep.subr.bf16.mxu0 0
      %2302 = vmatpush1.bf16.msra.mxu0 0
      %2303 = vmatprep.subr.bf16.mxu0 0
      %2304 = vmatpush1.bf16.msra.mxu0 0
      %2305 = vmatprep.subr.bf16.mxu0 0
      %2306 = vmatpush1.bf16.msra.mxu0 0
      %2307 = vmatprep.subr.bf16.mxu0 0
      %2308 = vmatpush1.bf16.msra.mxu0 0
      %2309 = vmatprep.mubr.bf16.mxu0 0
      %2310 = vmatmul.mubr.bf16.gmra.mrb[0].mxu0 %v2272
      %v2311 = vpop.f32.mrb[0].mxu0
      %v2312 = vadd.f32 %v2224, %v2311
      %v2313 = vpop.f32.mrb[0].mxu0
      %v2314 = vadd.f32 %v2228, %v2313
      %v2315 = vpop.f32.mrb[0].mxu0
      %v2316 = vadd.f32 %v2224, %v2315
      %v2317 = vpop.f32.mrb[0].mxu0
      %v2318 = vadd.f32 %v2228, %v2317
      %2319 = vmatprep.mubr.bf16.mxu0 0
      %2320 = vmatmul.mubr.bf16.gmra.mrb[0].mxu0 %v2275
      %v2321 = vpop.f32.mrb[0].mxu0
      %v2322 = vadd.f32 %v2224, %v2321
      %v2323 = vpop.f32.mrb[0].mxu0
      %v2324 = vadd.f32 %v2228, %v2323
      %v2325 = vpop.f32.mrb[0].mxu0
      %v2326 = vpop.f32.mrb[0].mxu0
      %2327 = vdwg.mxu0
      %v2328 = vmul.f32 %v2312, 0.5
      %v2329 = vmul.f32 %v2314, 0.5
      %v2330 = vmul.f32 %v2316, 0.5
      %v2331 = vmul.f32 %v2318, 0.5
      %v2332 = vmul.f32 %v2322, 0.5
      %v2333 = vmul.f32 %v2324, 0.5
      %v2334 = vmul.f32 %v2312, 0.70710677
      %v2335 = vmul.f32 %v2314, 0.70710677
      %v2336 = vmul.f32 %v2316, 0.70710677
      %v2337 = vmul.f32 %v2318, 0.70710677
      %v2338 = vmul.f32 %v2322, 0.70710677
      %v2339 = vmul.f32 %v2324, 0.70710677
      %v2340 = verf.f32.pop %v2334
      %v2341 = verf.f32.pop %v2335
      %v2342 = verf.f32.pop %v2336
      %v2343 = verf.f32.pop %v2337
      %v2344 = verf.f32.pop %v2338
      %v2345 = verf.f32.pop %v2339
      %v2346 = vadd.f32 %v2340, 1.0
      %v2347 = vadd.f32 %v2341, 1.0
      %v2348 = vadd.f32 %v2342, 1.0
      %v2349 = vadd.f32 %v2343, 1.0
      %v2350 = vadd.f32 %v2344, 1.0
      %v2351 = vadd.f32 %v2345, 1.0
      %v2352 = vmul.f32 %v2328, %v2346
      %v2353 = vmul.f32 %v2329, %v2347
      %v2354 = vmul.f32 %v2330, %v2348
      %v2355 = vmul.f32 %v2331, %v2349
      %v2356 = vmul.f32 %v2332, %v2350
      %v2357 = vmul.f32 %v2333, %v2351
      %v2358 = vpack.c.bf16 %v2354, %v2352
      %v2359 = vpack.c.bf16 %v2355, %v2353
      %v2360 = vpack.c.bf16 %v2356, %v2356
      %v2361 = vpack.c.bf16 %v2357, %v2357
      %s2362 = scalar_lea.vmem %s11, 256
      %v2363 = vld [vmem:[%s2362] sm:$0xf]
      %v2364 = vld [vmem:[%s2362 + $0x4] sm:$0xf]
      %v2365 = vld [vmem:[%s2362 + $0x8] sm:$0xf]
      %v2366 = vld [vmem:[%s2362 + $0xc] sm:$0xf]
      %v2367 = vld [vmem:[%s2362 + $0x10] sm:$0xf]
      %v2368 = vld [vmem:[%s2362 + $0x14] sm:$0xf]
      %v2369 = vld [vmem:[%s2362 + $0x18] sm:$0xf]
      %v2370 = vld [vmem:[%s2362 + $0x1c] sm:$0xf]
      %v2371 = vld [vmem:[%s2362 + $0x20] sm:$0xf]
      %v2372 = vld [vmem:[%s2362 + $0x24] sm:$0xf]
      %v2373 = vld [vmem:[%s2362 + $0x28] sm:$0xf]
      %v2374 = vld [vmem:[%s2362 + $0x2c] sm:$0xf]
      %v2375 = vld [vmem:[%s2362 + $0x30] sm:$0xf]
      %v2376 = vld [vmem:[%s2362 + $0x34] sm:$0xf]
      %v2377 = vld [vmem:[%s2362 + $0x38] sm:$0xf]
      %v2378 = vld [vmem:[%s2362 + $0x3c] sm:$0xf]
      %v2379 = vld [vmem:[%s2362 + $0x40] sm:$0xf]
      %v2380 = vld [vmem:[%s2362 + $0x44] sm:$0xf]
      %v2381 = vld [vmem:[%s2362 + $0x48] sm:$0xf]
      %v2382 = vld [vmem:[%s2362 + $0x4c] sm:$0xf]
      %v2383 = vld [vmem:[%s2362 + $0x50] sm:$0xf]
      %v2384 = vld [vmem:[%s2362 + $0x54] sm:$0xf]
      %v2385 = vld [vmem:[%s2362 + $0x58] sm:$0xf]
      %v2386 = vld [vmem:[%s2362 + $0x5c] sm:$0xf]
      %v2387 = vld [vmem:[%s2362 + $0x60] sm:$0xf]
      %v2388 = vld [vmem:[%s2362 + $0x64] sm:$0xf]
      %v2389 = vld [vmem:[%s2362 + $0x68] sm:$0xf]
      %v2390 = vld [vmem:[%s2362 + $0x6c] sm:$0xf]
      %v2391 = vld [vmem:[%s2362 + $0x70] sm:$0xf]
      %v2392 = vld [vmem:[%s2362 + $0x74] sm:$0xf]
      %v2393 = vld [vmem:[%s2362 + $0x78] sm:$0xf]
      %v2394 = vld [vmem:[%s2362 + $0x7c] sm:$0xf]
      %s2395 = scalar_lea.vmem %s12, 2
      %v2396 = vld [vmem:[%s2395] sm:$0x1]
      %v2398 = vlaneseq
      %v2399 = vshrl.u32 %v2398, 7
      %v2400 = vsub.s32 0, %v2399
      %v2401 = vrot.slane %v2396, %v2400
      %v2435 = vunpack.c.l.b16 %v2363
      %v2436 = vunpack.c.l.b16 %v2364
      %v2437 = vunpack.c.l.b16 %v2365
      %v2438 = vunpack.c.l.b16 %v2366
      %v2439 = vunpack.c.l.b16 %v2367
      %v2440 = vunpack.c.l.b16 %v2368
      %v2441 = vunpack.c.l.b16 %v2369
      %v2442 = vunpack.c.l.b16 %v2370
      %v2443 = vunpack.c.l.b16 %v2371
      %v2444 = vunpack.c.l.b16 %v2372
      %v2445 = vunpack.c.l.b16 %v2373
      %v2446 = vunpack.c.l.b16 %v2374
      %v2447 = vunpack.c.l.b16 %v2375
      %v2448 = vunpack.c.l.b16 %v2376
      %v2449 = vunpack.c.l.b16 %v2377
      %v2450 = vunpack.c.l.b16 %v2378
      %v2451 = vunpack.c.l.b16 %v2379
      %v2452 = vunpack.c.l.b16 %v2380
      %v2453 = vunpack.c.l.b16 %v2381
      %v2454 = vunpack.c.l.b16 %v2382
      %v2455 = vunpack.c.l.b16 %v2383
      %v2456 = vunpack.c.l.b16 %v2384
      %v2457 = vunpack.c.l.b16 %v2385
      %v2458 = vunpack.c.l.b16 %v2386
      %v2459 = vunpack.c.l.b16 %v2387
      %v2460 = vunpack.c.l.b16 %v2388
      %v2461 = vunpack.c.l.b16 %v2389
      %v2462 = vunpack.c.l.b16 %v2390
      %v2463 = vunpack.c.l.b16 %v2391
      %v2464 = vunpack.c.l.b16 %v2392
      %v2465 = vunpack.c.l.b16 %v2393
      %v2466 = vunpack.c.l.b16 %v2394
      %v2467 = vpack.c.b16 %v2436, %v2435
      %v2468 = vpack.c.b16 %v2438, %v2437
      %v2469 = vpack.c.b16 %v2440, %v2439
      %v2470 = vpack.c.b16 %v2442, %v2441
      %v2471 = vpack.c.b16 %v2444, %v2443
      %v2472 = vpack.c.b16 %v2446, %v2445
      %v2473 = vpack.c.b16 %v2448, %v2447
      %v2474 = vpack.c.b16 %v2450, %v2449
      %v2475 = vpack.c.b16 %v2452, %v2451
      %v2476 = vpack.c.b16 %v2454, %v2453
      %v2477 = vpack.c.b16 %v2456, %v2455
      %v2478 = vpack.c.b16 %v2458, %v2457
      %v2479 = vpack.c.b16 %v2460, %v2459
      %v2480 = vpack.c.b16 %v2462, %v2461
      %v2481 = vpack.c.b16 %v2464, %v2463
      %v2482 = vpack.c.b16 %v2466, %v2465
      %2499 = vmatprep.subr.bf16.mxu0 0
      %2500 = vmatpush1.bf16.msra.mxu0 %v2467
      %2501 = vmatprep.subr.bf16.mxu0 0
      %2502 = vmatpush1.bf16.msra.mxu0 %v2468
      %2503 = vmatprep.subr.bf16.mxu0 0
      %2504 = vmatpush1.bf16.msra.mxu0 %v2469
      %2505 = vmatprep.subr.bf16.mxu0 0
      %2506 = vmatpush1.bf16.msra.mxu0 %v2470
      %2507 = vmatprep.subr.bf16.mxu0 0
      %2508 = vmatpush1.bf16.msra.mxu0 %v2471
      %2509 = vmatprep.subr.bf16.mxu0 0
      %2510 = vmatpush1.bf16.msra.mxu0 %v2472
      %2511 = vmatprep.subr.bf16.mxu0 0
      %2512 = vmatpush1.bf16.msra.mxu0 %v2473
      %2513 = vmatprep.subr.bf16.mxu0 0
      %2514 = vmatpush1.bf16.msra.mxu0 %v2474
      %2515 = vmatprep.subr.bf16.mxu0 0
      %2516 = vmatpush1.bf16.msra.mxu0 %v2475
      %2517 = vmatprep.subr.bf16.mxu0 0
      %2518 = vmatpush1.bf16.msra.mxu0 %v2476
      %2519 = vmatprep.subr.bf16.mxu0 0
      %2520 = vmatpush1.bf16.msra.mxu0 %v2477
      %2521 = vmatprep.subr.bf16.mxu0 0
      %2522 = vmatpush1.bf16.msra.mxu0 %v2478
      %2523 = vmatprep.subr.bf16.mxu0 0
      %2524 = vmatpush1.bf16.msra.mxu0 %v2479
      %2525 = vmatprep.subr.bf16.mxu0 0
      %2526 = vmatpush1.bf16.msra.mxu0 %v2480
      %2527 = vmatprep.subr.bf16.mxu0 0
      %2528 = vmatpush1.bf16.msra.mxu0 %v2481
      %2529 = vmatprep.subr.bf16.mxu0 0
      %2530 = vmatpush1.bf16.msra.mxu0 %v2482
      %2531 = vmatprep.mubr.bf16.mxu0 %v2359
      %2532 = vmatmul.mubr.bf16.gmra.mrb[0].mxu0 %v2358
      %v2533 = vpop.f32.mrb[0].mxu0
      %v2534 = vadd.f32 %v2401, %v2533
      %v2535 = vpop.f32.mrb[0].mxu0
      %v2536 = vpop.f32.mrb[0].mxu0
      %v2537 = vadd.f32 %v2401, %v2536
      %v2538 = vpop.f32.mrb[0].mxu0
      %2539 = vmatprep.mubr.bf16.mxu0 %v2361
      %2540 = vmatmul.mubr.bf16.gmra.mrb[0].mxu0 %v2360
      %v2541 = vpop.f32.mrb[0].mxu0
      %v2542 = vadd.f32 %v2401, %v2541
      %v2543 = vpop.f32.mrb[0].mxu0
      %v2544 = vpop.f32.mrb[0].mxu0
      %v2545 = vpop.f32.mrb[0].mxu0
      %2546 = vdwg.mxu0
      %v2547 = vadd.f32 %v2204, %v2534
      %v2548 = vadd.f32 %v2205, %v2537
      %v2549 = vadd.f32 %v2206, %v2542
      %s2550 = scalar_lea.vmem %s13, 2
      %v2551 = vld [vmem:[%s2550] sm:$0x1]
      %s2552 = scalar_lea.vmem %s14, 2
      %v2553 = vld [vmem:[%s2552] sm:$0x1]
      %v2554 = vsel %vm610, %v2547, 0.0
      %2555 = vadd.xlane.f32.xlu0 %v2554
      %v2556 = vpop.xlane.xlu0 %2555
      %v2557 = vsel %vm610, %v2548, 0.0
      %2558 = vadd.xlane.f32.xlu0 %v2557
      %v2559 = vpop.xlane.xlu0 %2558
      %v2560 = vsel %vm1096, %v2549, 0.0
      %2561 = vadd.xlane.f32.xlu0 %v2560
      %v2562 = vpop.xlane.xlu0 %2561
      %v2563 = vmul.f32 %v2556, %v1100
      %v2564 = vmul.f32 %v2559, %v1100
      %v2565 = vmul.f32 %v2562, %v1100
      %v2566 = vsub.f32 %v2547, %v2563
      %v2567 = vsub.f32 %v2548, %v2564
      %v2568 = vsub.f32 %v2549, %v2565
      %v2569 = vmul.f32 %v2566, %v2566
      %v2570 = vmul.f32 %v2567, %v2567
      %v2571 = vmul.f32 %v2568, %v2568
      %v2572 = vsel %vm610, %v2569, 0.0
      %2573 = vadd.xlane.f32.xlu0 %v2572
      %v2574 = vpop.xlane.xlu0 %2573
      %v2575 = vsel %vm610, %v2570, 0.0
      %2576 = vadd.xlane.f32.xlu0 %v2575
      %v2577 = vpop.xlane.xlu0 %2576
      %v2578 = vsel %vm1096, %v2571, 0.0
      %2579 = vadd.xlane.f32.xlu0 %v2578
      %v2580 = vpop.xlane.xlu0 %2579
      %v2581 = vmul.f32 %v2574, %v1100
      %v2582 = vmul.f32 %v2577, %v1100
      %v2583 = vmul.f32 %v2580, %v1100
      %v2584 = vadd.f32 %v2581, 1e-06
      %v2585 = vadd.f32 %v2582, 1e-06
      %v2586 = vadd.f32 %v2583, 1e-06
      %v2587 = vrsqrt.pop %v2584
      %v2588 = vrsqrt.pop %v2585
      %v2589 = vrsqrt.pop %v2586
      %v2590 = vmul.f32 %v2566, %v2587
      %v2591 = vmul.f32 %v2567, %v2588
      %v2592 = vmul.f32 %v2568, %v2589
      %v2594 = vlaneseq
      %v2595 = vshrl.u32 %v2594, 7
      %v2596 = vsub.s32 0, %v2595
      %v2597 = vrot.slane %v2551, %v2596
      %v2599 = vmul.f32 %v2590, %v2597
      %v2600 = vmul.f32 %v2591, %v2597
      %v2601 = vmul.f32 %v2592, %v2597
      %v2603 = vlaneseq
      %v2604 = vshrl.u32 %v2603, 7
      %v2605 = vsub.s32 0, %v2604
      %v2606 = vrot.slane %v2553, %v2605
      %v2608 = vadd.f32 %v2599, %v2606
      %v2609 = vadd.f32 %v2600, %v2606
      %v2610 = vadd.f32 %v2601, %v2606
      %v2611 = vpack.c.bf16 %v1540, %v1539
      %v2612 = vpack.c.bf16 %v1541, %v1541
      %s2613 = scalar_lea.vmem %s1, 32
      %v2614 = vld [vmem:[%s2613] sm:$0xf]
      %v2615 = vld [vmem:[%s2613 + $0x4] sm:$0xf]
      %v2616 = vld [vmem:[%s2613 + $0x8] sm:$0xf]
      %v2617 = vld [vmem:[%s2613 + $0xc] sm:$0xf]
      %v2618 = vld [vmem:[%s2613 + $0x10] sm:$0xf]
      %v2619 = vld [vmem:[%s2613 + $0x14] sm:$0xf]
      %v2620 = vld [vmem:[%s2613 + $0x18] sm:$0xf]
      %v2621 = vld [vmem:[%s2613 + $0x1c] sm:$0xf]
      %s2622 = scalar_lea.vmem %s2, 1
      %v2623 = vld [vmem:[%s2622] sm:$0x1]
      %v2625 = vlaneseq
      %v2626 = vshrl.u32 %v2625, 7
      %v2627 = vsub.s32 0, %v2626
      %v2628 = vrot.slane %v2623, %v2627
      %v2631 = vshrl.u32 %v2611, 16
      %v2633 = vrot.slane %v2631, 2
      %v2634 = vshll.u32 %v2611, 16
      %v2636 = vrot.slane %v2634, 3
      %v2637 = vor.u32 %v2633, %v2636
      %v2639 = vshrl.u32 %v2612, 16
      %v2641 = vrot.slane %v2639, 2
      %v2642 = vshll.u32 %v2612, 16
      %v2644 = vrot.slane %v2642, 3
      %v2645 = vor.u32 %v2641, %v2644
      %v2646 = vsel %vm568, %v2637, %v2645
      %v2655 = vunpack.c.l.b16 %v2614
      %v2656 = vunpack.c.l.b16 %v2615
      %v2657 = vunpack.c.l.b16 %v2616
      %v2658 = vunpack.c.l.b16 %v2617
      %v2659 = vunpack.c.l.b16 %v2618
      %v2660 = vunpack.c.l.b16 %v2619
      %v2661 = vunpack.c.l.b16 %v2620
      %v2662 = vunpack.c.l.b16 %v2621
      %v2663 = vpack.c.b16 %v2656, %v2655
      %v2664 = vpack.c.b16 %v2658, %v2657
      %v2665 = vpack.c.b16 %v2660, %v2659
      %v2666 = vpack.c.b16 %v2662, %v2661
      %v2672 = vsel %vm610, %v2646, 0
      %2674 = vmatprep.subr.bf16.mxu0 0
      %2675 = vmatpush1.bf16.msra.mxu0 %v2663
      %2676 = vmatprep.subr.bf16.mxu0 0
      %2677 = vmatpush1.bf16.msra.mxu0 %v2664
      %2678 = vmatprep.subr.bf16.mxu0 0
      %2679 = vmatpush1.bf16.msra.mxu0 %v2665
      %2680 = vmatprep.subr.bf16.mxu0 0
      %2681 = vmatpush1.bf16.msra.mxu0 %v2666
      %2682 = vmatprep.subr.bf16.mxu0 0
      %2683 = vmatpush1.bf16.msra.mxu0 0
      %2684 = vmatprep.subr.bf16.mxu0 0
      %2685 = vmatpush1.bf16.msra.mxu0 0
      %2686 = vmatprep.subr.bf16.mxu0 0
      %2687 = vmatpush1.bf16.msra.mxu0 0
      %2688 = vmatprep.subr.bf16.mxu0 0
      %2689 = vmatpush1.bf16.msra.mxu0 0
      %2690 = vmatprep.subr.bf16.mxu0 0
      %2691 = vmatpush1.bf16.msra.mxu0 0
      %2692 = vmatprep.subr.bf16.mxu0 0
      %2693 = vmatpush1.bf16.msra.mxu0 0
      %2694 = vmatprep.subr.bf16.mxu0 0
      %2695 = vmatpush1.bf16.msra.mxu0 0
      %2696 = vmatprep.subr.bf16.mxu0 0
      %2697 = vmatpush1.bf16.msra.mxu0 0
      %2698 = vmatprep.subr.bf16.mxu0 0
      %2699 = vmatpush1.bf16.msra.mxu0 0
      %2700 = vmatprep.subr.bf16.mxu0 0
      %2701 = vmatpush1.bf16.msra.mxu0 0
      %2702 = vmatprep.subr.bf16.mxu0 0
      %2703 = vmatpush1.bf16.msra.mxu0 0
      %2704 = vmatprep.subr.bf16.mxu0 0
      %2705 = vmatpush1.bf16.msra.mxu0 0
      %2706 = vmatprep.mubr.bf16.mxu0 0
      %2707 = vmatmul.mubr.bf16.gmra.mrb[0].mxu0 %v2672
      %v2708 = vpop.f32.mrb[0].mxu0
      %v2709 = vadd.f32 %v2628, %v2708
      %v2710 = vpop.f32.mrb[0].mxu0
      %v2711 = vpop.f32.mrb[0].mxu0
      %v2712 = vadd.f32 %v2628, %v2711
      %v2713 = vpop.f32.mrb[0].mxu0
      %2714 = vdwg.mxu0
      %s2715 = scalar_lea.vmem %s3, 32
      %v2716 = vld [vmem:[%s2715] sm:$0xf]
      %v2717 = vld [vmem:[%s2715 + $0x4] sm:$0xf]
      %v2718 = vld [vmem:[%s2715 + $0x8] sm:$0xf]
      %v2719 = vld [vmem:[%s2715 + $0xc] sm:$0xf]
      %v2720 = vld [vmem:[%s2715 + $0x10] sm:$0xf]
      %v2721 = vld [vmem:[%s2715 + $0x14] sm:$0xf]
      %v2722 = vld [vmem:[%s2715 + $0x18] sm:$0xf]
      %v2723 = vld [vmem:[%s2715 + $0x1c] sm:$0xf]
      %s2724 = scalar_lea.vmem %s4, 1
      %v2725 = vld [vmem:[%s2724] sm:$0x1]
      %v2727 = vlaneseq
      %v2728 = vshrl.u32 %v2727, 7
      %v2729 = vsub.s32 0, %v2728
      %v2730 = vrot.slane %v2725, %v2729
      %v2740 = vunpack.c.l.b16 %v2716
      %v2741 = vunpack.c.l.b16 %v2717
      %v2742 = vunpack.c.l.b16 %v2718
      %v2743 = vunpack.c.l.b16 %v2719
      %v2744 = vunpack.c.l.b16 %v2720
      %v2745 = vunpack.c.l.b16 %v2721
      %v2746 = vunpack.c.l.b16 %v2722
      %v2747 = vunpack.c.l.b16 %v2723
      %v2748 = vpack.c.b16 %v2741, %v2740
      %v2749 = vpack.c.b16 %v2743, %v2742
      %v2750 = vpack.c.b16 %v2745, %v2744
      %v2751 = vpack.c.b16 %v2747, %v2746
      %2756 = vmatprep.subr.bf16.mxu0 0
      %2757 = vmatpush1.bf16.msra.mxu0 %v2748
      %2758 = vmatprep.subr.bf16.mxu0 0
      %2759 = vmatpush1.bf16.msra.mxu0 %v2749
      %2760 = vmatprep.subr.bf16.mxu0 0
      %2761 = vmatpush1.bf16.msra.mxu0 %v2750
      %2762 = vmatprep.subr.bf16.mxu0 0
      %2763 = vmatpush1.bf16.msra.mxu0 %v2751
      %2764 = vmatprep.subr.bf16.mxu0 0
      %2765 = vmatpush1.bf16.msra.mxu0 0
      %2766 = vmatprep.subr.bf16.mxu0 0
      %2767 = vmatpush1.bf16.msra.mxu0 0
      %2768 = vmatprep.subr.bf16.mxu0 0
      %2769 = vmatpush1.bf16.msra.mxu0 0
      %2770 = vmatprep.subr.bf16.mxu0 0
      %2771 = vmatpush1.bf16.msra.mxu0 0
      %2772 = vmatprep.subr.bf16.mxu0 0
      %2773 = vmatpush1.bf16.msra.mxu0 0
      %2774 = vmatprep.subr.bf16.mxu0 0
      %2775 = vmatpush1.bf16.msra.mxu0 0
      %2776 = vmatprep.subr.bf16.mxu0 0
      %2777 = vmatpush1.bf16.msra.mxu0 0
      %2778 = vmatprep.subr.bf16.mxu0 0
      %2779 = vmatpush1.bf16.msra.mxu0 0
      %2780 = vmatprep.subr.bf16.mxu0 0
      %2781 = vmatpush1.bf16.msra.mxu0 0
      %2782 = vmatprep.subr.bf16.mxu0 0
      %2783 = vmatpush1.bf16.msra.mxu0 0
      %2784 = vmatprep.subr.bf16.mxu0 0
      %2785 = vmatpush1.bf16.msra.mxu0 0
      %2786 = vmatprep.subr.bf16.mxu0 0
      %2787 = vmatpush1.bf16.msra.mxu0 0
      %2788 = vmatprep.mubr.bf16.mxu0 0
      %2789 = vmatmul.mubr.bf16.gmra.mrb[0].mxu0 %v2672
      %v2790 = vpop.f32.mrb[0].mxu0
      %v2791 = vadd.f32 %v2730, %v2790
      %v2792 = vpop.f32.mrb[0].mxu0
      %v2793 = vpop.f32.mrb[0].mxu0
      %v2794 = vadd.f32 %v2730, %v2793
      %v2795 = vpop.f32.mrb[0].mxu0
      %2796 = vdwg.mxu0
      %v2797 = vmul.f32 %v2709, 0.17677669
      %v2798 = vmul.f32 %v2712, 0.17677669
      %v2799 = vpack.c.bf16 %v2798, %v2797
      %v2800 = vpack.c.bf16 %v2794, %v2791
      %v2802 = vsel %vm739, %v2799, 0
      %v2805 = vsel %vm739, %v2800, 0
      %2807 = vmatprep.subr.bf16.mxu0 0
      %2808 = vmatpush1.bf16.xpose.msra.mxu0 %v2805
      %2809 = vmatprep.subr.bf16.mxu0 0
      %2810 = vmatpush1.bf16.xpose.msra.mxu0 0
      %2811 = vmatprep.subr.bf16.mxu0 0
      %2812 = vmatpush1.bf16.xpose.msra.mxu0 0
      %2813 = vmatprep.subr.bf16.mxu0 0
      %2814 = vmatpush1.bf16.xpose.msra.mxu0 0
      %2815 = vmatprep.subr.bf16.mxu0 0
      %2816 = vmatpush1.bf16.xpose.msra.mxu0 0
      %2817 = vmatprep.subr.bf16.mxu0 0
      %2818 = vmatpush1.bf16.xpose.msra.mxu0 0
      %2819 = vmatprep.subr.bf16.mxu0 0
      %2820 = vmatpush1.bf16.xpose.msra.mxu0 0
      %2821 = vmatprep.subr.bf16.mxu0 0
      %2822 = vmatpush1.bf16.xpose.msra.mxu0 0
      %2823 = vmatprep.subr.bf16.mxu0 0
      %2824 = vmatpush1.bf16.xpose.msra.mxu0 0
      %2825 = vmatprep.subr.bf16.mxu0 0
      %2826 = vmatpush1.bf16.xpose.msra.mxu0 0
      %2827 = vmatprep.subr.bf16.mxu0 0
      %2828 = vmatpush1.bf16.xpose.msra.mxu0 0
      %2829 = vmatprep.subr.bf16.mxu0 0
      %2830 = vmatpush1.bf16.xpose.msra.mxu0 0
      %2831 = vmatprep.subr.bf16.mxu0 0
      %2832 = vmatpush1.bf16.xpose.msra.mxu0 0
      %2833 = vmatprep.subr.bf16.mxu0 0
      %2834 = vmatpush1.bf16.xpose.msra.mxu0 0
      %2835 = vmatprep.subr.bf16.mxu0 0
      %2836 = vmatpush1.bf16.xpose.msra.mxu0 0
      %2837 = vmatprep.subr.bf16.mxu0 0
      %2838 = vmatpush1.bf16.xpose.msra.mxu0 0
      %2839 = vmatprep.mubr.bf16.mxu0 0
      %2840 = vmatmul.mubr.bf16.gmra.mrb[0].mxu0 %v2802
      %v2841 = vpop.f32.mrb[0].mxu0
      %v2842 = vadd.f32 0.0, %v2841
      %v2843 = vpop.f32.mrb[0].mxu0
      %v2844 = vpop.f32.mrb[0].mxu0
      %v2845 = vadd.f32 0.0, %v2844
      %v2846 = vpop.f32.mrb[0].mxu0
      %2847 = vdwg.mxu0
      %v2848 = vsel %vm787, %v2842, -inf
      %2849 = vmax.xlane.f32.xlu0 %v2848
      %v2850 = vpop.xlane.xlu0 %2849
      %v2851 = vsel %vm787, %v2845, -inf
      %2852 = vmax.xlane.f32.xlu0 %v2851
      %v2853 = vpop.xlane.xlu0 %2852
      %v2854 = vsub.f32 %v2842, %v2850
      %v2855 = vsub.f32 %v2845, %v2853
      %v2856 = vmul.f32 %v2854, 1.442695
      %v2857 = vpow.pop %v2856
      %v2858 = vmul.f32 %v2855, 1.442695
      %v2859 = vpow.pop %v2858
      %v2860 = vsel %vm787, %v2857, 0.0
      %2861 = vadd.xlane.f32.xlu0 %v2860
      %v2862 = vpop.xlane.xlu0 %2861
      %v2863 = vsel %vm787, %v2859, 0.0
      %2864 = vadd.xlane.f32.xlu0 %v2863
      %v2865 = vpop.xlane.xlu0 %2864
      %v2866 = vrcp.pop %v2862
      %v2867 = vmul.f32 %v2857, %v2866
      %v2868 = vrcp.pop %v2865
      %v2869 = vmul.f32 %v2859, %v2868
      %v2870 = vpack.c.bf16 %v2869, %v2867
      %2872 = vrot.lane.b32.xlu0 %v2800, 64
      %v2873 = vpop.permute.xlu0 %2872
      %v2876 = vsel %vm787, %v2870, 0
      %2878 = vmatprep.subr.bf16.mxu0 0
      %2879 = vmatpush1.bf16.msra.mxu0 %v2873
      %2880 = vmatprep.subr.bf16.mxu0 0
      %2881 = vmatpush1.bf16.msra.mxu0 0
      %2882 = vmatprep.subr.bf16.mxu0 0
      %2883 = vmatpush1.bf16.msra.mxu0 0
      %2884 = vmatprep.subr.bf16.mxu0 0
      %2885 = vmatpush1.bf16.msra.mxu0 0
      %2886 = vmatprep.subr.bf16.mxu0 0
      %2887 = vmatpush1.bf16.msra.mxu0 0
      %2888 = vmatprep.subr.bf16.mxu0 0
      %2889 = vmatpush1.bf16.msra.mxu0 0
      %2890 = vmatprep.subr.bf16.mxu0 0
      %2891 = vmatpush1.bf16.msra.mxu0 0
      %2892 = vmatprep.subr.bf16.mxu0 0
      %2893 = vmatpush1.bf16.msra.mxu0 0
      %2894 = vmatprep.subr.bf16.mxu0 0
      %2895 = vmatpush1.bf16.msra.mxu0 0
      %2896 = vmatprep.subr.bf16.mxu0 0
      %2897 = vmatpush1.bf16.msra.mxu0 0
      %2898 = vmatprep.subr.bf16.mxu0 0
      %2899 = vmatpush1.bf16.msra.mxu0 0
      %2900 = vmatprep.subr.bf16.mxu0 0
      %2901 = vmatpush1.bf16.msra.mxu0 0
      %2902 = vmatprep.subr.bf16.mxu0 0
      %2903 = vmatpush1.bf16.msra.mxu0 0
      %2904 = vmatprep.subr.bf16.mxu0 0
      %2905 = vmatpush1.bf16.msra.mxu0 0
      %2906 = vmatprep.subr.bf16.mxu0 0
      %2907 = vmatpush1.bf16.msra.mxu0 0
      %2908 = vmatprep.subr.bf16.mxu0 0
      %2909 = vmatpush1.bf16.msra.mxu0 0
      %2910 = vmatprep.mubr.bf16.mxu0 0
      %2911 = vmatmul.mubr.bf16.gmra.mrb[0].mxu0 %v2876
      %v2912 = vpop.f32.mrb[0].mxu0
      %v2913 = vadd.f32 0.0, %v2912
      %v2914 = vpop.f32.mrb[0].mxu0
      %v2915 = vpop.f32.mrb[0].mxu0
      %v2916 = vadd.f32 0.0, %v2915
      %v2917 = vpop.f32.mrb[0].mxu0
      %2918 = vdwg.mxu0
      %2920 = vrot.lane.b32.xlu0 %v2799, 96
      %v2921 = vpop.permute.xlu0 %2920
      %2922 = vrot.lane.b32.xlu0 %v2800, 96
      %v2923 = vpop.permute.xlu0 %2922
      %v2925 = vsel %vm739, %v2921, 0
      %v2928 = vsel %vm739, %v2923, 0
      %2930 = vmatprep.subr.bf16.mxu0 0
      %2931 = vmatpush1.bf16.xpose.msra.mxu0 %v2928
      %2932 = vmatprep.subr.bf16.mxu0 0
      %2933 = vmatpush1.bf16.xpose.msra.mxu0 0
      %2934 = vmatprep.subr.bf16.mxu0 0
      %2935 = vmatpush1.bf16.xpose.msra.mxu0 0
      %2936 = vmatprep.subr.bf16.mxu0 0
      %2937 = vmatpush1.bf16.xpose.msra.mxu0 0
      %2938 = vmatprep.subr.bf16.mxu0 0
      %2939 = vmatpush1.bf16.xpose.msra.mxu0 0
      %2940 = vmatprep.subr.bf16.mxu0 0
      %2941 = vmatpush1.bf16.xpose.msra.mxu0 0
      %2942 = vmatprep.subr.bf16.mxu0 0
      %2943 = vmatpush1.bf16.xpose.msra.mxu0 0
      %2944 = vmatprep.subr.bf16.mxu0 0
      %2945 = vmatpush1.bf16.xpose.msra.mxu0 0
      %2946 = vmatprep.subr.bf16.mxu0 0
      %2947 = vmatpush1.bf16.xpose.msra.mxu0 0
      %2948 = vmatprep.subr.bf16.mxu0 0
      %2949 = vmatpush1.bf16.xpose.msra.mxu0 0
      %2950 = vmatprep.subr.bf16.mxu0 0
      %2951 = vmatpush1.bf16.xpose.msra.mxu0 0
      %2952 = vmatprep.subr.bf16.mxu0 0
      %2953 = vmatpush1.bf16.xpose.msra.mxu0 0
      %2954 = vmatprep.subr.bf16.mxu0 0
      %2955 = vmatpush1.bf16.xpose.msra.mxu0 0
      %2956 = vmatprep.subr.bf16.mxu0 0
      %2957 = vmatpush1.bf16.xpose.msra.mxu0 0
      %2958 = vmatprep.subr.bf16.mxu0 0
      %2959 = vmatpush1.bf16.xpose.msra.mxu0 0
      %2960 = vmatprep.subr.bf16.mxu0 0
      %2961 = vmatpush1.bf16.xpose.msra.mxu0 0
      %2962 = vmatprep.mubr.bf16.mxu0 0
      %2963 = vmatmul.mubr.bf16.gmra.mrb[0].mxu0 %v2925
      %v2964 = vpop.f32.mrb[0].mxu0
      %v2965 = vadd.f32 0.0, %v2964
      %v2966 = vpop.f32.mrb[0].mxu0
      %v2967 = vpop.f32.mrb[0].mxu0
      %v2968 = vadd.f32 0.0, %v2967
      %v2969 = vpop.f32.mrb[0].mxu0
      %2970 = vdwg.mxu0
      %v2971 = vsel %vm787, %v2965, -inf
      %2972 = vmax.xlane.f32.xlu0 %v2971
      %v2973 = vpop.xlane.xlu0 %2972
      %v2974 = vsel %vm787, %v2968, -inf
      %2975 = vmax.xlane.f32.xlu0 %v2974
      %v2976 = vpop.xlane.xlu0 %2975
      %v2977 = vsub.f32 %v2965, %v2973
      %v2978 = vsub.f32 %v2968, %v2976
      %v2979 = vmul.f32 %v2977, 1.442695
      %v2980 = vpow.pop %v2979
      %v2981 = vmul.f32 %v2978, 1.442695
      %v2982 = vpow.pop %v2981
      %v2983 = vsel %vm787, %v2980, 0.0
      %2984 = vadd.xlane.f32.xlu0 %v2983
      %v2985 = vpop.xlane.xlu0 %2984
      %v2986 = vsel %vm787, %v2982, 0.0
      %2987 = vadd.xlane.f32.xlu0 %v2986
      %v2988 = vpop.xlane.xlu0 %2987
      %v2989 = vrcp.pop %v2985
      %v2990 = vmul.f32 %v2980, %v2989
      %v2991 = vrcp.pop %v2988
      %v2992 = vmul.f32 %v2982, %v2991
      %v2993 = vpack.c.bf16 %v2992, %v2990
      %2994 = vrot.lane.b32.xlu0 %v2800, 32
      %v2995 = vpop.permute.xlu0 %2994
      %v2998 = vsel %vm787, %v2993, 0
      %3000 = vmatprep.subr.bf16.mxu0 0
      %3001 = vmatpush1.bf16.msra.mxu0 %v2995
      %3002 = vmatprep.subr.bf16.mxu0 0
      %3003 = vmatpush1.bf16.msra.mxu0 0
      %3004 = vmatprep.subr.bf16.mxu0 0
      %3005 = vmatpush1.bf16.msra.mxu0 0
      %3006 = vmatprep.subr.bf16.mxu0 0
      %3007 = vmatpush1.bf16.msra.mxu0 0
      %3008 = vmatprep.subr.bf16.mxu0 0
      %3009 = vmatpush1.bf16.msra.mxu0 0
      %3010 = vmatprep.subr.bf16.mxu0 0
      %3011 = vmatpush1.bf16.msra.mxu0 0
      %3012 = vmatprep.subr.bf16.mxu0 0
      %3013 = vmatpush1.bf16.msra.mxu0 0
      %3014 = vmatprep.subr.bf16.mxu0 0
      %3015 = vmatpush1.bf16.msra.mxu0 0
      %3016 = vmatprep.subr.bf16.mxu0 0
      %3017 = vmatpush1.bf16.msra.mxu0 0
      %3018 = vmatprep.subr.bf16.mxu0 0
      %3019 = vmatpush1.bf16.msra.mxu0 0
      %3020 = vmatprep.subr.bf16.mxu0 0
      %3021 = vmatpush1.bf16.msra.mxu0 0
      %3022 = vmatprep.subr.bf16.mxu0 0
      %3023 = vmatpush1.bf16.msra.mxu0 0
      %3024 = vmatprep.subr.bf16.mxu0 0
      %3025 = vmatpush1.bf16.msra.mxu0 0
      %3026 = vmatprep.subr.bf16.mxu0 0
      %3027 = vmatpush1.bf16.msra.mxu0 0
      %3028 = vmatprep.subr.bf16.mxu0 0
      %3029 = vmatpush1.bf16.msra.mxu0 0
      %3030 = vmatprep.subr.bf16.mxu0 0
      %3031 = vmatpush1.bf16.msra.mxu0 0
      %3032 = vmatprep.mubr.bf16.mxu0 0
      %3033 = vmatmul.mubr.bf16.gmra.mrb[0].mxu0 %v2998
      %v3034 = vpop.f32.mrb[0].mxu0
      %v3035 = vadd.f32 0.0, %v3034
      %v3036 = vpop.f32.mrb[0].mxu0
      %v3037 = vpop.f32.mrb[0].mxu0
      %v3038 = vadd.f32 0.0, %v3037
      %v3039 = vpop.f32.mrb[0].mxu0
      %3040 = vdwg.mxu0
      %3043 = vrot.lane.b32.xlu0 %v3035, 32
      %v3044 = vpop.permute.xlu0 %3043
      %3045 = vrot.lane.b32.xlu0 %v3038, 32
      %v3046 = vpop.permute.xlu0 %3045
      %v3049 = vsel %vm739, %v2913, %v3044
      %v3050 = vsel %vm739, %v2916, %v3046
      %v3051 = vpack.c.bf16 %v3050, %v3049
      %s3052 = scalar_lea.vmem %s5, 32
      %v3053 = vld [vmem:[%s3052] sm:$0xf]
      %v3054 = vld [vmem:[%s3052 + $0x4] sm:$0xf]
      %v3055 = vld [vmem:[%s3052 + $0x8] sm:$0xf]
      %v3056 = vld [vmem:[%s3052 + $0xc] sm:$0xf]
      %v3057 = vld [vmem:[%s3052 + $0x10] sm:$0xf]
      %v3058 = vld [vmem:[%s3052 + $0x14] sm:$0xf]
      %v3059 = vld [vmem:[%s3052 + $0x18] sm:$0xf]
      %v3060 = vld [vmem:[%s3052 + $0x1c] sm:$0xf]
      %s3061 = scalar_lea.vmem %s6, 1
      %v3062 = vld [vmem:[%s3061] sm:$0x1]
      %v3064 = vlaneseq
      %v3065 = vshrl.u32 %v3064, 7
      %v3066 = vsub.s32 0, %v3065
      %v3067 = vrot.slane %v3062, %v3066
      %v3077 = vunpack.c.l.b16 %v3053
      %v3078 = vunpack.c.l.b16 %v3054
      %v3079 = vunpack.c.l.b16 %v3055
      %v3080 = vunpack.c.l.b16 %v3056
      %v3081 = vunpack.c.l.b16 %v3057
      %v3082 = vunpack.c.l.b16 %v3058
      %v3083 = vunpack.c.l.b16 %v3059
      %v3084 = vunpack.c.l.b16 %v3060
      %v3085 = vpack.c.b16 %v3078, %v3077
      %v3086 = vpack.c.b16 %v3080, %v3079
      %v3087 = vpack.c.b16 %v3082, %v3081
      %v3088 = vpack.c.b16 %v3084, %v3083
      %v3094 = vsel %vm610, %v3051, 0
      %3096 = vmatprep.subr.bf16.mxu0 0
      %3097 = vmatpush1.bf16.msra.mxu0 %v3085
      %3098 = vmatprep.subr.bf16.mxu0 0
      %3099 = vmatpush1.bf16.msra.mxu0 %v3086
      %3100 = vmatprep.subr.bf16.mxu0 0
      %3101 = vmatpush1.bf16.msra.mxu0 %v3087
      %3102 = vmatprep.subr.bf16.mxu0 0
      %3103 = vmatpush1.bf16.msra.mxu0 %v3088
      %3104 = vmatprep.subr.bf16.mxu0 0
      %3105 = vmatpush1.bf16.msra.mxu0 0
      %3106 = vmatprep.subr.bf16.mxu0 0
      %3107 = vmatpush1.bf16.msra.mxu0 0
      %3108 = vmatprep.subr.bf16.mxu0 0
      %3109 = vmatpush1.bf16.msra.mxu0 0
      %3110 = vmatprep.subr.bf16.mxu0 0
      %3111 = vmatpush1.bf16.msra.mxu0 0
      %3112 = vmatprep.subr.bf16.mxu0 0
      %3113 = vmatpush1.bf16.msra.mxu0 0
      %3114 = vmatprep.subr.bf16.mxu0 0
      %3115 = vmatpush1.bf16.msra.mxu0 0
      %3116 = vmatprep.subr.bf16.mxu0 0
      %3117 = vmatpush1.bf16.msra.mxu0 0
      %3118 = vmatprep.subr.bf16.mxu0 0
      %3119 = vmatpush1.bf16.msra.mxu0 0
      %3120 = vmatprep.subr.bf16.mxu0 0
      %3121 = vmatpush1.bf16.msra.mxu0 0
      %3122 = vmatprep.subr.bf16.mxu0 0
      %3123 = vmatpush1.bf16.msra.mxu0 0
      %3124 = vmatprep.subr.bf16.mxu0 0
      %3125 = vmatpush1.bf16.msra.mxu0 0
      %3126 = vmatprep.subr.bf16.mxu0 0
      %3127 = vmatpush1.bf16.msra.mxu0 0
      %3128 = vmatprep.mubr.bf16.mxu0 0
      %3129 = vmatmul.mubr.bf16.gmra.mrb[0].mxu0 %v3094
      %v3130 = vpop.f32.mrb[0].mxu0
      %v3131 = vadd.f32 %v3067, %v3130
      %v3132 = vpop.f32.mrb[0].mxu0
      %v3133 = vpop.f32.mrb[0].mxu0
      %v3134 = vadd.f32 %v3067, %v3133
      %v3135 = vpop.f32.mrb[0].mxu0
      %3136 = vdwg.mxu0
      %v3139 = vrot.slane %v3131, 3
      %v3140 = vrot.slane %v3134, 3
      %v3141 = vsel %vm1077, %v3139, %v3140
      %v3145 = vadd.f32 %v1539, %v3139
      %v3146 = vadd.f32 %v1540, %v3141
      %v3147 = vadd.f32 %v1541, %v3140
      %s3148 = scalar_lea.vmem %s7, 1
      %v3149 = vld [vmem:[%s3148] sm:$0x1]
      %s3150 = scalar_lea.vmem %s8, 1
      %v3151 = vld [vmem:[%s3150] sm:$0x1]
      %v3152 = vsel %vm1089, %v3145, 0.0
      %3153 = vadd.xlane.f32.xlu0 %v3152
      %v3154 = vpop.xlane.xlu0 %3153
      %v3155 = vsel %vm610, %v3146, 0.0
      %3156 = vadd.xlane.f32.xlu0 %v3155
      %v3157 = vpop.xlane.xlu0 %3156
      %v3158 = vsel %vm1096, %v3147, 0.0
      %3159 = vadd.xlane.f32.xlu0 %v3158
      %v3160 = vpop.xlane.xlu0 %3159
      %v3161 = vmul.f32 %v3154, %v1100
      %v3162 = vmul.f32 %v3157, %v1100
      %v3163 = vmul.f32 %v3160, %v1100
      %v3164 = vsub.f32 %v3145, %v3161
      %v3165 = vsub.f32 %v3146, %v3162
      %v3166 = vsub.f32 %v3147, %v3163
      %v3167 = vmul.f32 %v3164, %v3164
      %v3168 = vmul.f32 %v3165, %v3165
      %v3169 = vmul.f32 %v3166, %v3166
      %v3170 = vsel %vm1089, %v3167, 0.0
      %3171 = vadd.xlane.f32.xlu0 %v3170
      %v3172 = vpop.xlane.xlu0 %3171
      %v3173 = vsel %vm610, %v3168, 0.0
      %3174 = vadd.xlane.f32.xlu0 %v3173
      %v3175 = vpop.xlane.xlu0 %3174
      %v3176 = vsel %vm1096, %v3169, 0.0
      %3177 = vadd.xlane.f32.xlu0 %v3176
      %v3178 = vpop.xlane.xlu0 %3177
      %v3179 = vmul.f32 %v3172, %v1100
      %v3180 = vmul.f32 %v3175, %v1100
      %v3181 = vmul.f32 %v3178, %v1100
      %v3182 = vadd.f32 %v3179, 1e-06
      %v3183 = vadd.f32 %v3180, 1e-06
      %v3184 = vadd.f32 %v3181, 1e-06
      %v3185 = vrsqrt.pop %v3182
      %v3186 = vrsqrt.pop %v3183
      %v3187 = vrsqrt.pop %v3184
      %v3188 = vmul.f32 %v3164, %v3185
      %v3189 = vmul.f32 %v3165, %v3186
      %v3190 = vmul.f32 %v3166, %v3187
      %v3192 = vlaneseq
      %v3193 = vshrl.u32 %v3192, 7
      %v3194 = vsub.s32 0, %v3193
      %v3195 = vrot.slane %v3149, %v3194
      %v3197 = vmul.f32 %v3188, %v3195
      %v3198 = vmul.f32 %v3189, %v3195
      %v3199 = vmul.f32 %v3190, %v3195
      %v3201 = vlaneseq
      %v3202 = vshrl.u32 %v3201, 7
      %v3203 = vsub.s32 0, %v3202
      %v3204 = vrot.slane %v3151, %v3203
      %v3206 = vadd.f32 %v3197, %v3204
      %v3207 = vadd.f32 %v3198, %v3204
      %v3208 = vadd.f32 %v3199, %v3204
      %v3209 = vpack.c.bf16 %v3207, %v3206
      %v3210 = vpack.c.bf16 %v3208, %v3208
      %s3211 = scalar_lea.vmem %s9, 64
      %v3212 = vld [vmem:[%s3211] sm:$0xff]
      %v3213 = vld [vmem:[%s3211 + $0x8] sm:$0xff]
      %v3214 = vld [vmem:[%s3211 + $0x10] sm:$0xff]
      %v3215 = vld [vmem:[%s3211 + $0x18] sm:$0xff]
      %v3216 = vld [vmem:[%s3211 + $0x20] sm:$0xff]
      %v3217 = vld [vmem:[%s3211 + $0x28] sm:$0xff]
      %v3218 = vld [vmem:[%s3211 + $0x30] sm:$0xff]
      %v3219 = vld [vmem:[%s3211 + $0x38] sm:$0xff]
      %s3220 = scalar_lea.vmem %s10, 2
      %v3221 = vld [vmem:[%s3220] sm:$0x3]
      %v3223 = vlaneseq
      %v3224 = vshrl.u32 %v3223, 7
      %v3225 = vsub.s32 0, %v3224
      %v3226 = vrot.slane %v3221, %v3225
      %v3227 = vlaneseq
      %v3228 = vshrl.u32 %v3227, 7
      %v3229 = vsub.s32 1, %v3228
      %v3230 = vrot.slane %v3221, %v3229
      %v3234 = vshrl.u32 %v3209, 16
      %v3236 = vrot.slane %v3234, 2
      %v3237 = vshll.u32 %v3209, 16
      %v3239 = vrot.slane %v3237, 3
      %v3240 = vor.u32 %v3236, %v3239
      %v3242 = vshrl.u32 %v3210, 16
      %v3244 = vrot.slane %v3242, 2
      %v3245 = vshll.u32 %v3210, 16
      %v3247 = vrot.slane %v3245, 3
      %v3248 = vor.u32 %v3244, %v3247
      %v3249 = vsel %vm568, %v3240, %v3248
      %v3258 = vunpack.c.l.b16 %v3212
      %v3259 = vunpack.c.h.b16 %v3212
      %v3260 = vunpack.c.l.b16 %v3213
      %v3261 = vunpack.c.h.b16 %v3213
      %v3262 = vunpack.c.l.b16 %v3214
      %v3263 = vunpack.c.h.b16 %v3214
      %v3264 = vunpack.c.l.b16 %v3215
      %v3265 = vunpack.c.h.b16 %v3215
      %v3266 = vunpack.c.l.b16 %v3216
      %v3267 = vunpack.c.h.b16 %v3216
      %v3268 = vunpack.c.l.b16 %v3217
      %v3269 = vunpack.c.h.b16 %v3217
      %v3270 = vunpack.c.l.b16 %v3218
      %v3271 = vunpack.c.h.b16 %v3218
      %v3272 = vunpack.c.l.b16 %v3219
      %v3273 = vunpack.c.h.b16 %v3219
      %v3274 = vpack.c.b16 %v3260, %v3258
      %v3275 = vpack.c.b16 %v3261, %v3259
      %v3276 = vpack.c.b16 %v3264, %v3262
      %v3277 = vpack.c.b16 %v3265, %v3263
      %v3278 = vpack.c.b16 %v3268, %v3266
      %v3279 = vpack.c.b16 %v3269, %v3267
      %v3280 = vpack.c.b16 %v3272, %v3270
      %v3281 = vpack.c.b16 %v3273, %v3271
      %v3291 = vsel %vm610, %v3249, 0
      %3293 = vmatprep.subr.bf16.mxu0 %v3275
      %3294 = vmatpush1.bf16.msra.mxu0 %v3274
      %3295 = vmatprep.subr.bf16.mxu0 %v3277
      %3296 = vmatpush1.bf16.msra.mxu0 %v3276
      %3297 = vmatprep.subr.bf16.mxu0 %v3279
      %3298 = vmatpush1.bf16.msra.mxu0 %v3278
      %3299 = vmatprep.subr.bf16.mxu0 %v3281
      %3300 = vmatpush1.bf16.msra.mxu0 %v3280
      %3301 = vmatprep.subr.bf16.mxu0 0
      %3302 = vmatpush1.bf16.msra.mxu0 0
      %3303 = vmatprep.subr.bf16.mxu0 0
      %3304 = vmatpush1.bf16.msra.mxu0 0
      %3305 = vmatprep.subr.bf16.mxu0 0
      %3306 = vmatpush1.bf16.msra.mxu0 0
      %3307 = vmatprep.subr.bf16.mxu0 0
      %3308 = vmatpush1.bf16.msra.mxu0 0
      %3309 = vmatprep.subr.bf16.mxu0 0
      %3310 = vmatpush1.bf16.msra.mxu0 0
      %3311 = vmatprep.subr.bf16.mxu0 0
      %3312 = vmatpush1.bf16.msra.mxu0 0
      %3313 = vmatprep.subr.bf16.mxu0 0
      %3314 = vmatpush1.bf16.msra.mxu0 0
      %3315 = vmatprep.subr.bf16.mxu0 0
      %3316 = vmatpush1.bf16.msra.mxu0 0
      %3317 = vmatprep.subr.bf16.mxu0 0
      %3318 = vmatpush1.bf16.msra.mxu0 0
      %3319 = vmatprep.subr.bf16.mxu0 0
      %3320 = vmatpush1.bf16.msra.mxu0 0
      %3321 = vmatprep.subr.bf16.mxu0 0
      %3322 = vmatpush1.bf16.msra.mxu0 0
      %3323 = vmatprep.subr.bf16.mxu0 0
      %3324 = vmatpush1.bf16.msra.mxu0 0
      %3325 = vmatprep.mubr.bf16.mxu0 0
      %3326 = vmatmul.mubr.bf16.gmra.mrb[0].mxu0 %v3291
      %v3327 = vpop.f32.mrb[0].mxu0
      %v3328 = vadd.f32 %v3226, %v3327
      %v3329 = vpop.f32.mrb[0].mxu0
      %v3330 = vadd.f32 %v3230, %v3329
      %v3331 = vpop.f32.mrb[0].mxu0
      %v3332 = vadd.f32 %v3226, %v3331
      %v3333 = vpop.f32.mrb[0].mxu0
      %v3334 = vadd.f32 %v3230, %v3333
      %3335 = vdwg.mxu0
      %v3336 = vmul.f32 %v3328, 0.5
      %v3337 = vmul.f32 %v3330, 0.5
      %v3338 = vmul.f32 %v3332, 0.5
      %v3339 = vmul.f32 %v3334, 0.5
      %v3340 = vmul.f32 %v3328, 0.70710677
      %v3341 = vmul.f32 %v3330, 0.70710677
      %v3342 = vmul.f32 %v3332, 0.70710677
      %v3343 = vmul.f32 %v3334, 0.70710677
      %v3344 = verf.f32.pop %v3340
      %v3345 = verf.f32.pop %v3341
      %v3346 = verf.f32.pop %v3342
      %v3347 = verf.f32.pop %v3343
      %v3348 = vadd.f32 %v3344, 1.0
      %v3349 = vadd.f32 %v3345, 1.0
      %v3350 = vadd.f32 %v3346, 1.0
      %v3351 = vadd.f32 %v3347, 1.0
      %v3352 = vmul.f32 %v3336, %v3348
      %v3353 = vmul.f32 %v3337, %v3349
      %v3354 = vmul.f32 %v3338, %v3350
      %v3355 = vmul.f32 %v3339, %v3351
      %v3356 = vpack.c.bf16 %v3354, %v3352
      %v3357 = vpack.c.bf16 %v3355, %v3353
      %s3358 = scalar_lea.vmem %s11, 128
      %v3359 = vld [vmem:[%s3358] sm:$0xf]
      %v3360 = vld [vmem:[%s3358 + $0x4] sm:$0xf]
      %v3361 = vld [vmem:[%s3358 + $0x8] sm:$0xf]
      %v3362 = vld [vmem:[%s3358 + $0xc] sm:$0xf]
      %v3363 = vld [vmem:[%s3358 + $0x10] sm:$0xf]
      %v3364 = vld [vmem:[%s3358 + $0x14] sm:$0xf]
      %v3365 = vld [vmem:[%s3358 + $0x18] sm:$0xf]
      %v3366 = vld [vmem:[%s3358 + $0x1c] sm:$0xf]
      %v3367 = vld [vmem:[%s3358 + $0x20] sm:$0xf]
      %v3368 = vld [vmem:[%s3358 + $0x24] sm:$0xf]
      %v3369 = vld [vmem:[%s3358 + $0x28] sm:$0xf]
      %v3370 = vld [vmem:[%s3358 + $0x2c] sm:$0xf]
      %v3371 = vld [vmem:[%s3358 + $0x30] sm:$0xf]
      %v3372 = vld [vmem:[%s3358 + $0x34] sm:$0xf]
      %v3373 = vld [vmem:[%s3358 + $0x38] sm:$0xf]
      %v3374 = vld [vmem:[%s3358 + $0x3c] sm:$0xf]
      %v3375 = vld [vmem:[%s3358 + $0x40] sm:$0xf]
      %v3376 = vld [vmem:[%s3358 + $0x44] sm:$0xf]
      %v3377 = vld [vmem:[%s3358 + $0x48] sm:$0xf]
      %v3378 = vld [vmem:[%s3358 + $0x4c] sm:$0xf]
      %v3379 = vld [vmem:[%s3358 + $0x50] sm:$0xf]
      %v3380 = vld [vmem:[%s3358 + $0x54] sm:$0xf]
      %v3381 = vld [vmem:[%s3358 + $0x58] sm:$0xf]
      %v3382 = vld [vmem:[%s3358 + $0x5c] sm:$0xf]
      %v3383 = vld [vmem:[%s3358 + $0x60] sm:$0xf]
      %v3384 = vld [vmem:[%s3358 + $0x64] sm:$0xf]
      %v3385 = vld [vmem:[%s3358 + $0x68] sm:$0xf]
      %v3386 = vld [vmem:[%s3358 + $0x6c] sm:$0xf]
      %v3387 = vld [vmem:[%s3358 + $0x70] sm:$0xf]
      %v3388 = vld [vmem:[%s3358 + $0x74] sm:$0xf]
      %v3389 = vld [vmem:[%s3358 + $0x78] sm:$0xf]
      %v3390 = vld [vmem:[%s3358 + $0x7c] sm:$0xf]
      %s3391 = scalar_lea.vmem %s12, 1
      %v3392 = vld [vmem:[%s3391] sm:$0x1]
      %v3394 = vlaneseq
      %v3395 = vshrl.u32 %v3394, 7
      %v3396 = vsub.s32 0, %v3395
      %v3397 = vrot.slane %v3392, %v3396
      %v3431 = vunpack.c.l.b16 %v3359
      %v3432 = vunpack.c.l.b16 %v3360
      %v3433 = vunpack.c.l.b16 %v3361
      %v3434 = vunpack.c.l.b16 %v3362
      %v3435 = vunpack.c.l.b16 %v3363
      %v3436 = vunpack.c.l.b16 %v3364
      %v3437 = vunpack.c.l.b16 %v3365
      %v3438 = vunpack.c.l.b16 %v3366
      %v3439 = vunpack.c.l.b16 %v3367
      %v3440 = vunpack.c.l.b16 %v3368
      %v3441 = vunpack.c.l.b16 %v3369
      %v3442 = vunpack.c.l.b16 %v3370
      %v3443 = vunpack.c.l.b16 %v3371
      %v3444 = vunpack.c.l.b16 %v3372
      %v3445 = vunpack.c.l.b16 %v3373
      %v3446 = vunpack.c.l.b16 %v3374
      %v3447 = vunpack.c.l.b16 %v3375
      %v3448 = vunpack.c.l.b16 %v3376
      %v3449 = vunpack.c.l.b16 %v3377
      %v3450 = vunpack.c.l.b16 %v3378
      %v3451 = vunpack.c.l.b16 %v3379
      %v3452 = vunpack.c.l.b16 %v3380
      %v3453 = vunpack.c.l.b16 %v3381
      %v3454 = vunpack.c.l.b16 %v3382
      %v3455 = vunpack.c.l.b16 %v3383
      %v3456 = vunpack.c.l.b16 %v3384
      %v3457 = vunpack.c.l.b16 %v3385
      %v3458 = vunpack.c.l.b16 %v3386
      %v3459 = vunpack.c.l.b16 %v3387
      %v3460 = vunpack.c.l.b16 %v3388
      %v3461 = vunpack.c.l.b16 %v3389
      %v3462 = vunpack.c.l.b16 %v3390
      %v3463 = vpack.c.b16 %v3432, %v3431
      %v3464 = vpack.c.b16 %v3434, %v3433
      %v3465 = vpack.c.b16 %v3436, %v3435
      %v3466 = vpack.c.b16 %v3438, %v3437
      %v3467 = vpack.c.b16 %v3440, %v3439
      %v3468 = vpack.c.b16 %v3442, %v3441
      %v3469 = vpack.c.b16 %v3444, %v3443
      %v3470 = vpack.c.b16 %v3446, %v3445
      %v3471 = vpack.c.b16 %v3448, %v3447
      %v3472 = vpack.c.b16 %v3450, %v3449
      %v3473 = vpack.c.b16 %v3452, %v3451
      %v3474 = vpack.c.b16 %v3454, %v3453
      %v3475 = vpack.c.b16 %v3456, %v3455
      %v3476 = vpack.c.b16 %v3458, %v3457
      %v3477 = vpack.c.b16 %v3460, %v3459
      %v3478 = vpack.c.b16 %v3462, %v3461
      %3495 = vmatprep.subr.bf16.mxu0 0
      %3496 = vmatpush1.bf16.msra.mxu0 %v3463
      %3497 = vmatprep.subr.bf16.mxu0 0
      %3498 = vmatpush1.bf16.msra.mxu0 %v3464
      %3499 = vmatprep.subr.bf16.mxu0 0
      %3500 = vmatpush1.bf16.msra.mxu0 %v3465
      %3501 = vmatprep.subr.bf16.mxu0 0
      %3502 = vmatpush1.bf16.msra.mxu0 %v3466
      %3503 = vmatprep.subr.bf16.mxu0 0
      %3504 = vmatpush1.bf16.msra.mxu0 %v3467
      %3505 = vmatprep.subr.bf16.mxu0 0
      %3506 = vmatpush1.bf16.msra.mxu0 %v3468
      %3507 = vmatprep.subr.bf16.mxu0 0
      %3508 = vmatpush1.bf16.msra.mxu0 %v3469
      %3509 = vmatprep.subr.bf16.mxu0 0
      %3510 = vmatpush1.bf16.msra.mxu0 %v3470
      %3511 = vmatprep.subr.bf16.mxu0 0
      %3512 = vmatpush1.bf16.msra.mxu0 %v3471
      %3513 = vmatprep.subr.bf16.mxu0 0
      %3514 = vmatpush1.bf16.msra.mxu0 %v3472
      %3515 = vmatprep.subr.bf16.mxu0 0
      %3516 = vmatpush1.bf16.msra.mxu0 %v3473
      %3517 = vmatprep.subr.bf16.mxu0 0
      %3518 = vmatpush1.bf16.msra.mxu0 %v3474
      %3519 = vmatprep.subr.bf16.mxu0 0
      %3520 = vmatpush1.bf16.msra.mxu0 %v3475
      %3521 = vmatprep.subr.bf16.mxu0 0
      %3522 = vmatpush1.bf16.msra.mxu0 %v3476
      %3523 = vmatprep.subr.bf16.mxu0 0
      %3524 = vmatpush1.bf16.msra.mxu0 %v3477
      %3525 = vmatprep.subr.bf16.mxu0 0
      %3526 = vmatpush1.bf16.msra.mxu0 %v3478
      %3527 = vmatprep.mubr.bf16.mxu0 %v3357
      %3528 = vmatmul.mubr.bf16.gmra.mrb[0].mxu0 %v3356
      %v3529 = vpop.f32.mrb[0].mxu0
      %v3530 = vadd.f32 %v3397, %v3529
      %v3531 = vpop.f32.mrb[0].mxu0
      %v3532 = vpop.f32.mrb[0].mxu0
      %v3533 = vadd.f32 %v3397, %v3532
      %v3534 = vpop.f32.mrb[0].mxu0
      %3535 = vdwg.mxu0
      %v3538 = vrot.slane %v3530, 3
      %v3539 = vrot.slane %v3533, 3
      %v3540 = vsel %vm1077, %v3538, %v3539
      %v3544 = vadd.f32 %v3206, %v3538
      %v3545 = vadd.f32 %v3207, %v3540
      %v3546 = vadd.f32 %v3208, %v3539
      %s3547 = scalar_lea.vmem %s13, 1
      %v3548 = vld [vmem:[%s3547] sm:$0x1]
      %s3549 = scalar_lea.vmem %s14, 1
      %v3550 = vld [vmem:[%s3549] sm:$0x1]
      %v3551 = vsel %vm1089, %v3544, 0.0
      %3552 = vadd.xlane.f32.xlu0 %v3551
      %v3553 = vpop.xlane.xlu0 %3552
      %v3554 = vsel %vm610, %v3545, 0.0
      %3555 = vadd.xlane.f32.xlu0 %v3554
      %v3556 = vpop.xlane.xlu0 %3555
      %v3557 = vsel %vm1096, %v3546, 0.0
      %3558 = vadd.xlane.f32.xlu0 %v3557
      %v3559 = vpop.xlane.xlu0 %3558
      %v3560 = vmul.f32 %v3553, %v1100
      %v3561 = vmul.f32 %v3556, %v1100
      %v3562 = vmul.f32 %v3559, %v1100
      %v3563 = vsub.f32 %v3544, %v3560
      %v3564 = vsub.f32 %v3545, %v3561
      %v3565 = vsub.f32 %v3546, %v3562
      %v3566 = vmul.f32 %v3563, %v3563
      %v3567 = vmul.f32 %v3564, %v3564
      %v3568 = vmul.f32 %v3565, %v3565
      %v3569 = vsel %vm1089, %v3566, 0.0
      %3570 = vadd.xlane.f32.xlu0 %v3569
      %v3571 = vpop.xlane.xlu0 %3570
      %v3572 = vsel %vm610, %v3567, 0.0
      %3573 = vadd.xlane.f32.xlu0 %v3572
      %v3574 = vpop.xlane.xlu0 %3573
      %v3575 = vsel %vm1096, %v3568, 0.0
      %3576 = vadd.xlane.f32.xlu0 %v3575
      %v3577 = vpop.xlane.xlu0 %3576
      %v3578 = vmul.f32 %v3571, %v1100
      %v3579 = vmul.f32 %v3574, %v1100
      %v3580 = vmul.f32 %v3577, %v1100
      %v3581 = vadd.f32 %v3578, 1e-06
      %v3582 = vadd.f32 %v3579, 1e-06
      %v3583 = vadd.f32 %v3580, 1e-06
      %v3584 = vrsqrt.pop %v3581
      %v3585 = vrsqrt.pop %v3582
      %v3586 = vrsqrt.pop %v3583
      %v3587 = vmul.f32 %v3563, %v3584
      %v3588 = vmul.f32 %v3564, %v3585
      %v3589 = vmul.f32 %v3565, %v3586
      %v3591 = vlaneseq
      %v3592 = vshrl.u32 %v3591, 7
      %v3593 = vsub.s32 0, %v3592
      %v3594 = vrot.slane %v3548, %v3593
      %v3596 = vmul.f32 %v3587, %v3594
      %v3597 = vmul.f32 %v3588, %v3594
      %v3598 = vmul.f32 %v3589, %v3594
      %v3600 = vlaneseq
      %v3601 = vshrl.u32 %v3600, 7
      %v3602 = vsub.s32 0, %v3601
      %v3603 = vrot.slane %v3550, %v3602
      %v3605 = vadd.f32 %v3596, %v3603
      %v3606 = vadd.f32 %v3597, %v3603
      %v3607 = vadd.f32 %v3598, %v3603
      %v3608 = vpack.c.bf16 %v2609, %v2608
      %v3609 = vpack.c.bf16 %v2610, %v2610
      %s3610 = scalar_lea.vmem %s1, 96
      %v3611 = vld [vmem:[%s3610] sm:$0xf]
      %v3612 = vld [vmem:[%s3610 + $0x4] sm:$0xf]
      %v3613 = vld [vmem:[%s3610 + $0x8] sm:$0xf]
      %v3614 = vld [vmem:[%s3610 + $0xc] sm:$0xf]
      %v3615 = vld [vmem:[%s3610 + $0x10] sm:$0xf]
      %v3616 = vld [vmem:[%s3610 + $0x14] sm:$0xf]
      %v3617 = vld [vmem:[%s3610 + $0x18] sm:$0xf]
      %v3618 = vld [vmem:[%s3610 + $0x1c] sm:$0xf]
      %s3619 = scalar_lea.vmem %s2, 3
      %v3620 = vld [vmem:[%s3619] sm:$0x1]
      %v3622 = vlaneseq
      %v3623 = vshrl.u32 %v3622, 7
      %v3624 = vsub.s32 0, %v3623
      %v3625 = vrot.slane %v3620, %v3624
      %v3635 = vunpack.c.l.b16 %v3611
      %v3636 = vunpack.c.l.b16 %v3612
      %v3637 = vunpack.c.l.b16 %v3613
      %v3638 = vunpack.c.l.b16 %v3614
      %v3639 = vunpack.c.l.b16 %v3615
      %v3640 = vunpack.c.l.b16 %v3616
      %v3641 = vunpack.c.l.b16 %v3617
      %v3642 = vunpack.c.l.b16 %v3618
      %v3643 = vpack.c.b16 %v3636, %v3635
      %v3644 = vpack.c.b16 %v3638, %v3637
      %v3645 = vpack.c.b16 %v3640, %v3639
      %v3646 = vpack.c.b16 %v3642, %v3641
      %v3652 = vsel %vm610, %v3608, 0
      %v3655 = vsel %vm610, %v3609, 0
      %3657 = vmatprep.subr.bf16.mxu0 0
      %3658 = vmatpush1.bf16.msra.mxu0 %v3643
      %3659 = vmatprep.subr.bf16.mxu0 0
      %3660 = vmatpush1.bf16.msra.mxu0 %v3644
      %3661 = vmatprep.subr.bf16.mxu0 0
      %3662 = vmatpush1.bf16.msra.mxu0 %v3645
      %3663 = vmatprep.subr.bf16.mxu0 0
      %3664 = vmatpush1.bf16.msra.mxu0 %v3646
      %3665 = vmatprep.subr.bf16.mxu0 0
      %3666 = vmatpush1.bf16.msra.mxu0 0
      %3667 = vmatprep.subr.bf16.mxu0 0
      %3668 = vmatpush1.bf16.msra.mxu0 0
      %3669 = vmatprep.subr.bf16.mxu0 0
      %3670 = vmatpush1.bf16.msra.mxu0 0
      %3671 = vmatprep.subr.bf16.mxu0 0
      %3672 = vmatpush1.bf16.msra.mxu0 0
      %3673 = vmatprep.subr.bf16.mxu0 0
      %3674 = vmatpush1.bf16.msra.mxu0 0
      %3675 = vmatprep.subr.bf16.mxu0 0
      %3676 = vmatpush1.bf16.msra.mxu0 0
      %3677 = vmatprep.subr.bf16.mxu0 0
      %3678 = vmatpush1.bf16.msra.mxu0 0
      %3679 = vmatprep.subr.bf16.mxu0 0
      %3680 = vmatpush1.bf16.msra.mxu0 0
      %3681 = vmatprep.subr.bf16.mxu0 0
      %3682 = vmatpush1.bf16.msra.mxu0 0
      %3683 = vmatprep.subr.bf16.mxu0 0
      %3684 = vmatpush1.bf16.msra.mxu0 0
      %3685 = vmatprep.subr.bf16.mxu0 0
      %3686 = vmatpush1.bf16.msra.mxu0 0
      %3687 = vmatprep.subr.bf16.mxu0 0
      %3688 = vmatpush1.bf16.msra.mxu0 0
      %3689 = vmatprep.mubr.bf16.mxu0 0
      %3690 = vmatmul.mubr.bf16.gmra.mrb[0].mxu0 %v3652
      %v3691 = vpop.f32.mrb[0].mxu0
      %v3692 = vadd.f32 %v3625, %v3691
      %v3693 = vpop.f32.mrb[0].mxu0
      %v3694 = vpop.f32.mrb[0].mxu0
      %v3695 = vadd.f32 %v3625, %v3694
      %v3696 = vpop.f32.mrb[0].mxu0
      %3697 = vmatprep.mubr.bf16.mxu0 0
      %3698 = vmatmul.mubr.bf16.gmra.mrb[0].mxu0 %v3655
      %v3699 = vpop.f32.mrb[0].mxu0
      %v3700 = vadd.f32 %v3625, %v3699
      %v3701 = vpop.f32.mrb[0].mxu0
      %v3702 = vpop.f32.mrb[0].mxu0
      %v3703 = vpop.f32.mrb[0].mxu0
      %3704 = vdwg.mxu0
      %s3705 = scalar_lea.vmem %s3, 96
      %v3706 = vld [vmem:[%s3705] sm:$0xf]
      %v3707 = vld [vmem:[%s3705 + $0x4] sm:$0xf]
      %v3708 = vld [vmem:[%s3705 + $0x8] sm:$0xf]
      %v3709 = vld [vmem:[%s3705 + $0xc] sm:$0xf]
      %v3710 = vld [vmem:[%s3705 + $0x10] sm:$0xf]
      %v3711 = vld [vmem:[%s3705 + $0x14] sm:$0xf]
      %v3712 = vld [vmem:[%s3705 + $0x18] sm:$0xf]
      %v3713 = vld [vmem:[%s3705 + $0x1c] sm:$0xf]
      %s3714 = scalar_lea.vmem %s4, 3
      %v3715 = vld [vmem:[%s3714] sm:$0x1]
      %v3717 = vlaneseq
      %v3718 = vshrl.u32 %v3717, 7
      %v3719 = vsub.s32 0, %v3718
      %v3720 = vrot.slane %v3715, %v3719
      %v3722 = vshrl.u32 %v3608, 16
      %v3724 = vrot.slane %v3722, 2
      %v3725 = vshll.u32 %v3608, 16
      %v3727 = vrot.slane %v3725, 3
      %v3728 = vor.u32 %v3724, %v3727
      %v3729 = vshrl.u32 %v3609, 16
      %v3731 = vrot.slane %v3729, 2
      %v3732 = vshll.u32 %v3609, 16
      %v3734 = vrot.slane %v3732, 3
      %v3735 = vor.u32 %v3731, %v3734
      %v3736 = vsel %vm568, %v3728, %v3735
      %v3745 = vunpack.c.l.b16 %v3706
      %v3746 = vunpack.c.l.b16 %v3707
      %v3747 = vunpack.c.l.b16 %v3708
      %v3748 = vunpack.c.l.b16 %v3709
      %v3749 = vunpack.c.l.b16 %v3710
      %v3750 = vunpack.c.l.b16 %v3711
      %v3751 = vunpack.c.l.b16 %v3712
      %v3752 = vunpack.c.l.b16 %v3713
      %v3753 = vpack.c.b16 %v3746, %v3745
      %v3754 = vpack.c.b16 %v3748, %v3747
      %v3755 = vpack.c.b16 %v3750, %v3749
      %v3756 = vpack.c.b16 %v3752, %v3751
      %v3762 = vsel %vm610, %v3736, 0
      %3764 = vmatprep.subr.bf16.mxu0 0
      %3765 = vmatpush1.bf16.msra.mxu0 %v3753
      %3766 = vmatprep.subr.bf16.mxu0 0
      %3767 = vmatpush1.bf16.msra.mxu0 %v3754
      %3768 = vmatprep.subr.bf16.mxu0 0
      %3769 = vmatpush1.bf16.msra.mxu0 %v3755
      %3770 = vmatprep.subr.bf16.mxu0 0
      %3771 = vmatpush1.bf16.msra.mxu0 %v3756
      %3772 = vmatprep.subr.bf16.mxu0 0
      %3773 = vmatpush1.bf16.msra.mxu0 0
      %3774 = vmatprep.subr.bf16.mxu0 0
      %3775 = vmatpush1.bf16.msra.mxu0 0
      %3776 = vmatprep.subr.bf16.mxu0 0
      %3777 = vmatpush1.bf16.msra.mxu0 0
      %3778 = vmatprep.subr.bf16.mxu0 0
      %3779 = vmatpush1.bf16.msra.mxu0 0
      %3780 = vmatprep.subr.bf16.mxu0 0
      %3781 = vmatpush1.bf16.msra.mxu0 0
      %3782 = vmatprep.subr.bf16.mxu0 0
      %3783 = vmatpush1.bf16.msra.mxu0 0
      %3784 = vmatprep.subr.bf16.mxu0 0
      %3785 = vmatpush1.bf16.msra.mxu0 0
      %3786 = vmatprep.subr.bf16.mxu0 0
      %3787 = vmatpush1.bf16.msra.mxu0 0
      %3788 = vmatprep.subr.bf16.mxu0 0
      %3789 = vmatpush1.bf16.msra.mxu0 0
      %3790 = vmatprep.subr.bf16.mxu0 0
      %3791 = vmatpush1.bf16.msra.mxu0 0
      %3792 = vmatprep.subr.bf16.mxu0 0
      %3793 = vmatpush1.bf16.msra.mxu0 0
      %3794 = vmatprep.subr.bf16.mxu0 0
      %3795 = vmatpush1.bf16.msra.mxu0 0
      %3796 = vmatprep.mubr.bf16.mxu0 0
      %3797 = vmatmul.mubr.bf16.gmra.mrb[0].mxu0 %v3762
      %v3798 = vpop.f32.mrb[0].mxu0
      %v3799 = vadd.f32 %v3720, %v3798
      %v3800 = vpop.f32.mrb[0].mxu0
      %v3801 = vpop.f32.mrb[0].mxu0
      %v3802 = vadd.f32 %v3720, %v3801
      %v3803 = vpop.f32.mrb[0].mxu0
      %3804 = vdwg.mxu0
      %v3805 = vmul.f32 %v3692, 0.17677669
      %v3806 = vmul.f32 %v3695, 0.17677669
      %v3807 = vmul.f32 %v3700, 0.17677669
      %v3808 = vpack.c.bf16 %v3806, %v3805
      %v3809 = vpack.c.bf16 %v3807, %v3807
      %v3810 = vpack.c.bf16 %v3802, %v3799
      %v3812 = vsel %vm739, %v3808, 0
      %v3815 = vsel %vm739, %v3809, 0
      %v3818 = vsel %vm739, %v3810, 0
      %3820 = vmatprep.subr.bf16.mxu0 0
      %3821 = vmatpush1.bf16.xpose.msra.mxu0 %v3818
      %3822 = vmatprep.subr.bf16.mxu0 0
      %3823 = vmatpush1.bf16.xpose.msra.mxu0 0
      %3824 = vmatprep.subr.bf16.mxu0 0
      %3825 = vmatpush1.bf16.xpose.msra.mxu0 0
      %3826 = vmatprep.subr.bf16.mxu0 0
      %3827 = vmatpush1.bf16.xpose.msra.mxu0 0
      %3828 = vmatprep.subr.bf16.mxu0 0
      %3829 = vmatpush1.bf16.xpose.msra.mxu0 0
      %3830 = vmatprep.subr.bf16.mxu0 0
      %3831 = vmatpush1.bf16.xpose.msra.mxu0 0
      %3832 = vmatprep.subr.bf16.mxu0 0
      %3833 = vmatpush1.bf16.xpose.msra.mxu0 0
      %3834 = vmatprep.subr.bf16.mxu0 0
      %3835 = vmatpush1.bf16.xpose.msra.mxu0 0
      %3836 = vmatprep.subr.bf16.mxu0 0
      %3837 = vmatpush1.bf16.xpose.msra.mxu0 0
      %3838 = vmatprep.subr.bf16.mxu0 0
      %3839 = vmatpush1.bf16.xpose.msra.mxu0 0
      %3840 = vmatprep.subr.bf16.mxu0 0
      %3841 = vmatpush1.bf16.xpose.msra.mxu0 0
      %3842 = vmatprep.subr.bf16.mxu0 0
      %3843 = vmatpush1.bf16.xpose.msra.mxu0 0
      %3844 = vmatprep.subr.bf16.mxu0 0
      %3845 = vmatpush1.bf16.xpose.msra.mxu0 0
      %3846 = vmatprep.subr.bf16.mxu0 0
      %3847 = vmatpush1.bf16.xpose.msra.mxu0 0
      %3848 = vmatprep.subr.bf16.mxu0 0
      %3849 = vmatpush1.bf16.xpose.msra.mxu0 0
      %3850 = vmatprep.subr.bf16.mxu0 0
      %3851 = vmatpush1.bf16.xpose.msra.mxu0 0
      %3852 = vmatprep.mubr.bf16.mxu0 0
      %3853 = vmatmul.mubr.bf16.gmra.mrb[0].mxu0 %v3812
      %v3854 = vpop.f32.mrb[0].mxu0
      %v3855 = vadd.f32 0.0, %v3854
      %v3856 = vpop.f32.mrb[0].mxu0
      %v3857 = vpop.f32.mrb[0].mxu0
      %v3858 = vadd.f32 0.0, %v3857
      %v3859 = vpop.f32.mrb[0].mxu0
      %3860 = vmatprep.mubr.bf16.mxu0 0
      %3861 = vmatmul.mubr.bf16.gmra.mrb[0].mxu0 %v3815
      %v3862 = vpop.f32.mrb[0].mxu0
      %v3863 = vadd.f32 0.0, %v3862
      %v3864 = vpop.f32.mrb[0].mxu0
      %v3865 = vpop.f32.mrb[0].mxu0
      %v3866 = vpop.f32.mrb[0].mxu0
      %3867 = vdwg.mxu0
      %v3868 = vsel %vm787, %v3855, -inf
      %3869 = vmax.xlane.f32.xlu0 %v3868
      %v3870 = vpop.xlane.xlu0 %3869
      %v3871 = vsel %vm787, %v3858, -inf
      %3872 = vmax.xlane.f32.xlu0 %v3871
      %v3873 = vpop.xlane.xlu0 %3872
      %v3874 = vsel %vm1786, %v3863, -inf
      %3875 = vmax.xlane.f32.xlu0 %v3874
      %v3876 = vpop.xlane.xlu0 %3875
      %v3877 = vsub.f32 %v3855, %v3870
      %v3878 = vsub.f32 %v3858, %v3873
      %v3879 = vsub.f32 %v3863, %v3876
      %v3880 = vmul.f32 %v3877, 1.442695
      %v3881 = vpow.pop %v3880
      %v3882 = vmul.f32 %v3878, 1.442695
      %v3883 = vpow.pop %v3882
      %v3884 = vmul.f32 %v3879, 1.442695
      %v3885 = vpow.pop %v3884
      %v3886 = vsel %vm787, %v3881, 0.0
      %3887 = vadd.xlane.f32.xlu0 %v3886
      %v3888 = vpop.xlane.xlu0 %3887
      %v3889 = vsel %vm787, %v3883, 0.0
      %3890 = vadd.xlane.f32.xlu0 %v3889
      %v3891 = vpop.xlane.xlu0 %3890
      %v3892 = vsel %vm1786, %v3885, 0.0
      %3893 = vadd.xlane.f32.xlu0 %v3892
      %v3894 = vpop.xlane.xlu0 %3893
      %v3895 = vrcp.pop %v3888
      %v3896 = vmul.f32 %v3881, %v3895
      %v3897 = vrcp.pop %v3891
      %v3898 = vmul.f32 %v3883, %v3897
      %v3899 = vrcp.pop %v3894
      %v3900 = vmul.f32 %v3885, %v3899
      %v3901 = vpack.c.bf16 %v3898, %v3896
      %v3902 = vpack.c.bf16 %v3900, %v3900
      %3904 = vrot.lane.b32.xlu0 %v3810, 64
      %v3905 = vpop.permute.xlu0 %3904
      %v3908 = vsel %vm787, %v3901, 0
      %v3911 = vsel %vm787, %v3902, 0
      %3913 = vmatprep.subr.bf16.mxu0 0
      %3914 = vmatpush1.bf16.msra.mxu0 %v3905
      %3915 = vmatprep.subr.bf16.mxu0 0
      %3916 = vmatpush1.bf16.msra.mxu0 0
      %3917 = vmatprep.subr.bf16.mxu0 0
      %3918 = vmatpush1.bf16.msra.mxu0 0
      %3919 = vmatprep.subr.bf16.mxu0 0
      %3920 = vmatpush1.bf16.msra.mxu0 0
      %3921 = vmatprep.subr.bf16.mxu0 0
      %3922 = vmatpush1.bf16.msra.mxu0 0
      %3923 = vmatprep.subr.bf16.mxu0 0
      %3924 = vmatpush1.bf16.msra.mxu0 0
      %3925 = vmatprep.subr.bf16.mxu0 0
      %3926 = vmatpush1.bf16.msra.mxu0 0
      %3927 = vmatprep.subr.bf16.mxu0 0
      %3928 = vmatpush1.bf16.msra.mxu0 0
      %3929 = vmatprep.subr.bf16.mxu0 0
      %3930 = vmatpush1.bf16.msra.mxu0 0
      %3931 = vmatprep.subr.bf16.mxu0 0
      %3932 = vmatpush1.bf16.msra.mxu0 0
      %3933 = vmatprep.subr.bf16.mxu0 0
      %3934 = vmatpush1.bf16.msra.mxu0 0
      %3935 = vmatprep.subr.bf16.mxu0 0
      %3936 = vmatpush1.bf16.msra.mxu0 0
      %3937 = vmatprep.subr.bf16.mxu0 0
      %3938 = vmatpush1.bf16.msra.mxu0 0
      %3939 = vmatprep.subr.bf16.mxu0 0
      %3940 = vmatpush1.bf16.msra.mxu0 0
      %3941 = vmatprep.subr.bf16.mxu0 0
      %3942 = vmatpush1.bf16.msra.mxu0 0
      %3943 = vmatprep.subr.bf16.mxu0 0
      %3944 = vmatpush1.bf16.msra.mxu0 0
      %3945 = vmatprep.mubr.bf16.mxu0 0
      %3946 = vmatmul.mubr.bf16.gmra.mrb[0].mxu0 %v3908
      %v3947 = vpop.f32.mrb[0].mxu0
      %v3948 = vadd.f32 0.0, %v3947
      %v3949 = vpop.f32.mrb[0].mxu0
      %v3950 = vpop.f32.mrb[0].mxu0
      %v3951 = vadd.f32 0.0, %v3950
      %v3952 = vpop.f32.mrb[0].mxu0
      %3953 = vmatprep.mubr.bf16.mxu0 0
      %3954 = vmatmul.mubr.bf16.gmra.mrb[0].mxu0 %v3911
      %v3955 = vpop.f32.mrb[0].mxu0
      %v3956 = vadd.f32 0.0, %v3955
      %v3957 = vpop.f32.mrb[0].mxu0
      %v3958 = vpop.f32.mrb[0].mxu0
      %v3959 = vpop.f32.mrb[0].mxu0
      %3960 = vdwg.mxu0
      %3963 = vrot.lane.b32.xlu0 %v3808, 96
      %v3964 = vpop.permute.xlu0 %3963
      %3965 = vrot.lane.b32.xlu0 %v3809, 96
      %v3966 = vpop.permute.xlu0 %3965
      %3967 = vrot.lane.b32.xlu0 %v3810, 96
      %v3968 = vpop.permute.xlu0 %3967
      %v3970 = vsel %vm739, %v3964, 0
      %v3973 = vsel %vm739, %v3966, 0
      %v3976 = vsel %vm739, %v3968, 0
      %3978 = vmatprep.subr.bf16.mxu0 0
      %3979 = vmatpush1.bf16.xpose.msra.mxu0 %v3976
      %3980 = vmatprep.subr.bf16.mxu0 0
      %3981 = vmatpush1.bf16.xpose.msra.mxu0 0
      %3982 = vmatprep.subr.bf16.mxu0 0
      %3983 = vmatpush1.bf16.xpose.msra.mxu0 0
      %3984 = vmatprep.subr.bf16.mxu0 0
      %3985 = vmatpush1.bf16.xpose.msra.mxu0 0
      %3986 = vmatprep.subr.bf16.mxu0 0
      %3987 = vmatpush1.bf16.xpose.msra.mxu0 0
      %3988 = vmatprep.subr.bf16.mxu0 0
      %3989 = vmatpush1.bf16.xpose.msra.mxu0 0
      %3990 = vmatprep.subr.bf16.mxu0 0
      %3991 = vmatpush1.bf16.xpose.msra.mxu0 0
      %3992 = vmatprep.subr.bf16.mxu0 0
      %3993 = vmatpush1.bf16.xpose.msra.mxu0 0
      %3994 = vmatprep.subr.bf16.mxu0 0
      %3995 = vmatpush1.bf16.xpose.msra.mxu0 0
      %3996 = vmatprep.subr.bf16.mxu0 0
      %3997 = vmatpush1.bf16.xpose.msra.mxu0 0
      %3998 = vmatprep.subr.bf16.mxu0 0
      %3999 = vmatpush1.bf16.xpose.msra.mxu0 0
      %4000 = vmatprep.subr.bf16.mxu0 0
      %4001 = vmatpush1.bf16.xpose.msra.mxu0 0
      %4002 = vmatprep.subr.bf16.mxu0 0
      %4003 = vmatpush1.bf16.xpose.msra.mxu0 0
      %4004 = vmatprep.subr.bf16.mxu0 0
      %4005 = vmatpush1.bf16.xpose.msra.mxu0 0
      %4006 = vmatprep.subr.bf16.mxu0 0
      %4007 = vmatpush1.bf16.xpose.msra.mxu0 0
      %4008 = vmatprep.subr.bf16.mxu0 0
      %4009 = vmatpush1.bf16.xpose.msra.mxu0 0
      %4010 = vmatprep.mubr.bf16.mxu0 0
      %4011 = vmatmul.mubr.bf16.gmra.mrb[0].mxu0 %v3970
      %v4012 = vpop.f32.mrb[0].mxu0
      %v4013 = vadd.f32 0.0, %v4012
      %v4014 = vpop.f32.mrb[0].mxu0
      %v4015 = vpop.f32.mrb[0].mxu0
      %v4016 = vadd.f32 0.0, %v4015
      %v4017 = vpop.f32.mrb[0].mxu0
      %4018 = vmatprep.mubr.bf16.mxu0 0
      %4019 = vmatmul.mubr.bf16.gmra.mrb[0].mxu0 %v3973
      %v4020 = vpop.f32.mrb[0].mxu0
      %v4021 = vadd.f32 0.0, %v4020
      %v4022 = vpop.f32.mrb[0].mxu0
      %v4023 = vpop.f32.mrb[0].mxu0
      %v4024 = vpop.f32.mrb[0].mxu0
      %4025 = vdwg.mxu0
      %v4026 = vsel %vm787, %v4013, -inf
      %4027 = vmax.xlane.f32.xlu0 %v4026
      %v4028 = vpop.xlane.xlu0 %4027
      %v4029 = vsel %vm787, %v4016, -inf
      %4030 = vmax.xlane.f32.xlu0 %v4029
      %v4031 = vpop.xlane.xlu0 %4030
      %v4032 = vsel %vm1786, %v4021, -inf
      %4033 = vmax.xlane.f32.xlu0 %v4032
      %v4034 = vpop.xlane.xlu0 %4033
      %v4035 = vsub.f32 %v4013, %v4028
      %v4036 = vsub.f32 %v4016, %v4031
      %v4037 = vsub.f32 %v4021, %v4034
      %v4038 = vmul.f32 %v4035, 1.442695
      %v4039 = vpow.pop %v4038
      %v4040 = vmul.f32 %v4036, 1.442695
      %v4041 = vpow.pop %v4040
      %v4042 = vmul.f32 %v4037, 1.442695
      %v4043 = vpow.pop %v4042
      %v4044 = vsel %vm787, %v4039, 0.0
      %4045 = vadd.xlane.f32.xlu0 %v4044
      %v4046 = vpop.xlane.xlu0 %4045
      %v4047 = vsel %vm787, %v4041, 0.0
      %4048 = vadd.xlane.f32.xlu0 %v4047
      %v4049 = vpop.xlane.xlu0 %4048
      %v4050 = vsel %vm1786, %v4043, 0.0
      %4051 = vadd.xlane.f32.xlu0 %v4050
      %v4052 = vpop.xlane.xlu0 %4051
      %v4053 = vrcp.pop %v4046
      %v4054 = vmul.f32 %v4039, %v4053
      %v4055 = vrcp.pop %v4049
      %v4056 = vmul.f32 %v4041, %v4055
      %v4057 = vrcp.pop %v4052
      %v4058 = vmul.f32 %v4043, %v4057
      %v4059 = vpack.c.bf16 %v4056, %v4054
      %v4060 = vpack.c.bf16 %v4058, %v4058
      %4061 = vrot.lane.b32.xlu0 %v3810, 32
      %v4062 = vpop.permute.xlu0 %4061
      %v4065 = vsel %vm787, %v4059, 0
      %v4068 = vsel %vm787, %v4060, 0
      %4070 = vmatprep.subr.bf16.mxu0 0
      %4071 = vmatpush1.bf16.msra.mxu0 %v4062
      %4072 = vmatprep.subr.bf16.mxu0 0
      %4073 = vmatpush1.bf16.msra.mxu0 0
      %4074 = vmatprep.subr.bf16.mxu0 0
      %4075 = vmatpush1.bf16.msra.mxu0 0
      %4076 = vmatprep.subr.bf16.mxu0 0
      %4077 = vmatpush1.bf16.msra.mxu0 0
      %4078 = vmatprep.subr.bf16.mxu0 0
      %4079 = vmatpush1.bf16.msra.mxu0 0
      %4080 = vmatprep.subr.bf16.mxu0 0
      %4081 = vmatpush1.bf16.msra.mxu0 0
      %4082 = vmatprep.subr.bf16.mxu0 0
      %4083 = vmatpush1.bf16.msra.mxu0 0
      %4084 = vmatprep.subr.bf16.mxu0 0
      %4085 = vmatpush1.bf16.msra.mxu0 0
      %4086 = vmatprep.subr.bf16.mxu0 0
      %4087 = vmatpush1.bf16.msra.mxu0 0
      %4088 = vmatprep.subr.bf16.mxu0 0
      %4089 = vmatpush1.bf16.msra.mxu0 0
      %4090 = vmatprep.subr.bf16.mxu0 0
      %4091 = vmatpush1.bf16.msra.mxu0 0
      %4092 = vmatprep.subr.bf16.mxu0 0
      %4093 = vmatpush1.bf16.msra.mxu0 0
      %4094 = vmatprep.subr.bf16.mxu0 0
      %4095 = vmatpush1.bf16.msra.mxu0 0
      %4096 = vmatprep.subr.bf16.mxu0 0
      %4097 = vmatpush1.bf16.msra.mxu0 0
      %4098 = vmatprep.subr.bf16.mxu0 0
      %4099 = vmatpush1.bf16.msra.mxu0 0
      %4100 = vmatprep.subr.bf16.mxu0 0
      %4101 = vmatpush1.bf16.msra.mxu0 0
      %4102 = vmatprep.mubr.bf16.mxu0 0
      %4103 = vmatmul.mubr.bf16.gmra.mrb[0].mxu0 %v4065
      %v4104 = vpop.f32.mrb[0].mxu0
      %v4105 = vadd.f32 0.0, %v4104
      %v4106 = vpop.f32.mrb[0].mxu0
      %v4107 = vpop.f32.mrb[0].mxu0
      %v4108 = vadd.f32 0.0, %v4107
      %v4109 = vpop.f32.mrb[0].mxu0
      %4110 = vmatprep.mubr.bf16.mxu0 0
      %4111 = vmatmul.mubr.bf16.gmra.mrb[0].mxu0 %v4068
      %v4112 = vpop.f32.mrb[0].mxu0
      %v4113 = vadd.f32 0.0, %v4112
      %v4114 = vpop.f32.mrb[0].mxu0
      %v4115 = vpop.f32.mrb[0].mxu0
      %v4116 = vpop.f32.mrb[0].mxu0
      %4117 = vdwg.mxu0
      %4121 = vrot.lane.b32.xlu0 %v4105, 32
      %v4122 = vpop.permute.xlu0 %4121
      %4123 = vrot.lane.b32.xlu0 %v4108, 32
      %v4124 = vpop.permute.xlu0 %4123
      %4125 = vrot.lane.b32.xlu0 %v4113, 32
      %v4126 = vpop.permute.xlu0 %4125
      %v4130 = vsel %vm739, %v3948, %v4122
      %v4131 = vsel %vm739, %v3951, %v4124
      %v4132 = vsel %vm739, %v3956, %v4126
      %v4133 = vpack.c.bf16 %v4131, %v4130
      %v4134 = vpack.c.bf16 %v4132, %v4132
      %s4135 = scalar_lea.vmem %s5, 96
      %v4136 = vld [vmem:[%s4135] sm:$0xf]
      %v4137 = vld [vmem:[%s4135 + $0x4] sm:$0xf]
      %v4138 = vld [vmem:[%s4135 + $0x8] sm:$0xf]
      %v4139 = vld [vmem:[%s4135 + $0xc] sm:$0xf]
      %v4140 = vld [vmem:[%s4135 + $0x10] sm:$0xf]
      %v4141 = vld [vmem:[%s4135 + $0x14] sm:$0xf]
      %v4142 = vld [vmem:[%s4135 + $0x18] sm:$0xf]
      %v4143 = vld [vmem:[%s4135 + $0x1c] sm:$0xf]
      %s4144 = scalar_lea.vmem %s6, 3
      %v4145 = vld [vmem:[%s4144] sm:$0x1]
      %v4147 = vlaneseq
      %v4148 = vshrl.u32 %v4147, 7
      %v4149 = vsub.s32 0, %v4148
      %v4150 = vrot.slane %v4145, %v4149
      %v4160 = vunpack.c.l.b16 %v4136
      %v4161 = vunpack.c.l.b16 %v4137
      %v4162 = vunpack.c.l.b16 %v4138
      %v4163 = vunpack.c.l.b16 %v4139
      %v4164 = vunpack.c.l.b16 %v4140
      %v4165 = vunpack.c.l.b16 %v4141
      %v4166 = vunpack.c.l.b16 %v4142
      %v4167 = vunpack.c.l.b16 %v4143
      %v4168 = vpack.c.b16 %v4161, %v4160
      %v4169 = vpack.c.b16 %v4163, %v4162
      %v4170 = vpack.c.b16 %v4165, %v4164
      %v4171 = vpack.c.b16 %v4167, %v4166
      %v4177 = vsel %vm610, %v4133, 0
      %v4180 = vsel %vm610, %v4134, 0
      %4182 = vmatprep.subr.bf16.mxu0 0
      %4183 = vmatpush1.bf16.msra.mxu0 %v4168
      %4184 = vmatprep.subr.bf16.mxu0 0
      %4185 = vmatpush1.bf16.msra.mxu0 %v4169
      %4186 = vmatprep.subr.bf16.mxu0 0
      %4187 = vmatpush1.bf16.msra.mxu0 %v4170
      %4188 = vmatprep.subr.bf16.mxu0 0
      %4189 = vmatpush1.bf16.msra.mxu0 %v4171
      %4190 = vmatprep.subr.bf16.mxu0 0
      %4191 = vmatpush1.bf16.msra.mxu0 0
      %4192 = vmatprep.subr.bf16.mxu0 0
      %4193 = vmatpush1.bf16.msra.mxu0 0
      %4194 = vmatprep.subr.bf16.mxu0 0
      %4195 = vmatpush1.bf16.msra.mxu0 0
      %4196 = vmatprep.subr.bf16.mxu0 0
      %4197 = vmatpush1.bf16.msra.mxu0 0
      %4198 = vmatprep.subr.bf16.mxu0 0
      %4199 = vmatpush1.bf16.msra.mxu0 0
      %4200 = vmatprep.subr.bf16.mxu0 0
      %4201 = vmatpush1.bf16.msra.mxu0 0
      %4202 = vmatprep.subr.bf16.mxu0 0
      %4203 = vmatpush1.bf16.msra.mxu0 0
      %4204 = vmatprep.subr.bf16.mxu0 0
      %4205 = vmatpush1.bf16.msra.mxu0 0
      %4206 = vmatprep.subr.bf16.mxu0 0
      %4207 = vmatpush1.bf16.msra.mxu0 0
      %4208 = vmatprep.subr.bf16.mxu0 0
      %4209 = vmatpush1.bf16.msra.mxu0 0
      %4210 = vmatprep.subr.bf16.mxu0 0
      %4211 = vmatpush1.bf16.msra.mxu0 0
      %4212 = vmatprep.subr.bf16.mxu0 0
      %4213 = vmatpush1.bf16.msra.mxu0 0
      %4214 = vmatprep.mubr.bf16.mxu0 0
      %4215 = vmatmul.mubr.bf16.gmra.mrb[0].mxu0 %v4177
      %v4216 = vpop.f32.mrb[0].mxu0
      %v4217 = vadd.f32 %v4150, %v4216
      %v4218 = vpop.f32.mrb[0].mxu0
      %v4219 = vpop.f32.mrb[0].mxu0
      %v4220 = vadd.f32 %v4150, %v4219
      %v4221 = vpop.f32.mrb[0].mxu0
      %4222 = vmatprep.mubr.bf16.mxu0 0
      %4223 = vmatmul.mubr.bf16.gmra.mrb[0].mxu0 %v4180
      %v4224 = vpop.f32.mrb[0].mxu0
      %v4225 = vadd.f32 %v4150, %v4224
      %v4226 = vpop.f32.mrb[0].mxu0
      %v4227 = vpop.f32.mrb[0].mxu0
      %v4228 = vpop.f32.mrb[0].mxu0
      %4229 = vdwg.mxu0
      %v4230 = vadd.f32 %v2608, %v4217
      %v4231 = vadd.f32 %v2609, %v4220
      %v4232 = vadd.f32 %v2610, %v4225
      %s4233 = scalar_lea.vmem %s7, 3
      %v4234 = vld [vmem:[%s4233] sm:$0x1]
      %s4235 = scalar_lea.vmem %s8, 3
      %v4236 = vld [vmem:[%s4235] sm:$0x1]
      %v4237 = vsel %vm610, %v4230, 0.0
      %4238 = vadd.xlane.f32.xlu0 %v4237
      %v4239 = vpop.xlane.xlu0 %4238
      %v4240 = vsel %vm610, %v4231, 0.0
      %4241 = vadd.xlane.f32.xlu0 %v4240
      %v4242 = vpop.xlane.xlu0 %4241
      %v4243 = vsel %vm1096, %v4232, 0.0
      %4244 = vadd.xlane.f32.xlu0 %v4243
      %v4245 = vpop.xlane.xlu0 %4244
      %v4246 = vmul.f32 %v4239, %v1100
      %v4247 = vmul.f32 %v4242, %v1100
      %v4248 = vmul.f32 %v4245, %v1100
      %v4249 = vsub.f32 %v4230, %v4246
      %v4250 = vsub.f32 %v4231, %v4247
      %v4251 = vsub.f32 %v4232, %v4248
      %v4252 = vmul.f32 %v4249, %v4249
      %v4253 = vmul.f32 %v4250, %v4250
      %v4254 = vmul.f32 %v4251, %v4251
      %v4255 = vsel %vm610, %v4252, 0.0
      %4256 = vadd.xlane.f32.xlu0 %v4255
      %v4257 = vpop.xlane.xlu0 %4256
      %v4258 = vsel %vm610, %v4253, 0.0
      %4259 = vadd.xlane.f32.xlu0 %v4258
      %v4260 = vpop.xlane.xlu0 %4259
      %v4261 = vsel %vm1096, %v4254, 0.0
      %4262 = vadd.xlane.f32.xlu0 %v4261
      %v4263 = vpop.xlane.xlu0 %4262
      %v4264 = vmul.f32 %v4257, %v1100
      %v4265 = vmul.f32 %v4260, %v1100
      %v4266 = vmul.f32 %v4263, %v1100
      %v4267 = vadd.f32 %v4264, 1e-06
      %v4268 = vadd.f32 %v4265, 1e-06
      %v4269 = vadd.f32 %v4266, 1e-06
      %v4270 = vrsqrt.pop %v4267
      %v4271 = vrsqrt.pop %v4268
      %v4272 = vrsqrt.pop %v4269
      %v4273 = vmul.f32 %v4249, %v4270
      %v4274 = vmul.f32 %v4250, %v4271
      %v4275 = vmul.f32 %v4251, %v4272
      %v4277 = vlaneseq
      %v4278 = vshrl.u32 %v4277, 7
      %v4279 = vsub.s32 0, %v4278
      %v4280 = vrot.slane %v4234, %v4279
      %v4282 = vmul.f32 %v4273, %v4280
      %v4283 = vmul.f32 %v4274, %v4280
      %v4284 = vmul.f32 %v4275, %v4280
      %v4286 = vlaneseq
      %v4287 = vshrl.u32 %v4286, 7
      %v4288 = vsub.s32 0, %v4287
      %v4289 = vrot.slane %v4236, %v4288
      %v4291 = vadd.f32 %v4282, %v4289
      %v4292 = vadd.f32 %v4283, %v4289
      %v4293 = vadd.f32 %v4284, %v4289
      %v4294 = vpack.c.bf16 %v4292, %v4291
      %v4295 = vpack.c.bf16 %v4293, %v4293
      %s4296 = scalar_lea.vmem %s9, 192
      %v4297 = vld [vmem:[%s4296] sm:$0xff]
      %v4298 = vld [vmem:[%s4296 + $0x8] sm:$0xff]
      %v4299 = vld [vmem:[%s4296 + $0x10] sm:$0xff]
      %v4300 = vld [vmem:[%s4296 + $0x18] sm:$0xff]
      %v4301 = vld [vmem:[%s4296 + $0x20] sm:$0xff]
      %v4302 = vld [vmem:[%s4296 + $0x28] sm:$0xff]
      %v4303 = vld [vmem:[%s4296 + $0x30] sm:$0xff]
      %v4304 = vld [vmem:[%s4296 + $0x38] sm:$0xff]
      %s4305 = scalar_lea.vmem %s10, 6
      %v4306 = vld [vmem:[%s4305] sm:$0x3]
      %v4308 = vlaneseq
      %v4309 = vshrl.u32 %v4308, 7
      %v4310 = vsub.s32 0, %v4309
      %v4311 = vrot.slane %v4306, %v4310
      %v4312 = vlaneseq
      %v4313 = vshrl.u32 %v4312, 7
      %v4314 = vsub.s32 1, %v4313
      %v4315 = vrot.slane %v4306, %v4314
      %v4326 = vunpack.c.l.b16 %v4297
      %v4327 = vunpack.c.h.b16 %v4297
      %v4328 = vunpack.c.l.b16 %v4298
      %v4329 = vunpack.c.h.b16 %v4298
      %v4330 = vunpack.c.l.b16 %v4299
      %v4331 = vunpack.c.h.b16 %v4299
      %v4332 = vunpack.c.l.b16 %v4300
      %v4333 = vunpack.c.h.b16 %v4300
      %v4334 = vunpack.c.l.b16 %v4301
      %v4335 = vunpack.c.h.b16 %v4301
      %v4336 = vunpack.c.l.b16 %v4302
      %v4337 = vunpack.c.h.b16 %v4302
      %v4338 = vunpack.c.l.b16 %v4303
      %v4339 = vunpack.c.h.b16 %v4303
      %v4340 = vunpack.c.l.b16 %v4304
      %v4341 = vunpack.c.h.b16 %v4304
      %v4342 = vpack.c.b16 %v4328, %v4326
      %v4343 = vpack.c.b16 %v4329, %v4327
      %v4344 = vpack.c.b16 %v4332, %v4330
      %v4345 = vpack.c.b16 %v4333, %v4331
      %v4346 = vpack.c.b16 %v4336, %v4334
      %v4347 = vpack.c.b16 %v4337, %v4335
      %v4348 = vpack.c.b16 %v4340, %v4338
      %v4349 = vpack.c.b16 %v4341, %v4339
      %v4359 = vsel %vm610, %v4294, 0
      %v4362 = vsel %vm610, %v4295, 0
      %4364 = vmatprep.subr.bf16.mxu0 %v4343
      %4365 = vmatpush1.bf16.msra.mxu0 %v4342
      %4366 = vmatprep.subr.bf16.mxu0 %v4345
      %4367 = vmatpush1.bf16.msra.mxu0 %v4344
      %4368 = vmatprep.subr.bf16.mxu0 %v4347
      %4369 = vmatpush1.bf16.msra.mxu0 %v4346
      %4370 = vmatprep.subr.bf16.mxu0 %v4349
      %4371 = vmatpush1.bf16.msra.mxu0 %v4348
      %4372 = vmatprep.subr.bf16.mxu0 0
      %4373 = vmatpush1.bf16.msra.mxu0 0
      %4374 = vmatprep.subr.bf16.mxu0 0
      %4375 = vmatpush1.bf16.msra.mxu0 0
      %4376 = vmatprep.subr.bf16.mxu0 0
      %4377 = vmatpush1.bf16.msra.mxu0 0
      %4378 = vmatprep.subr.bf16.mxu0 0
      %4379 = vmatpush1.bf16.msra.mxu0 0
      %4380 = vmatprep.subr.bf16.mxu0 0
      %4381 = vmatpush1.bf16.msra.mxu0 0
      %4382 = vmatprep.subr.bf16.mxu0 0
      %4383 = vmatpush1.bf16.msra.mxu0 0
      %4384 = vmatprep.subr.bf16.mxu0 0
      %4385 = vmatpush1.bf16.msra.mxu0 0
      %4386 = vmatprep.subr.bf16.mxu0 0
      %4387 = vmatpush1.bf16.msra.mxu0 0
      %4388 = vmatprep.subr.bf16.mxu0 0
      %4389 = vmatpush1.bf16.msra.mxu0 0
      %4390 = vmatprep.subr.bf16.mxu0 0
      %4391 = vmatpush1.bf16.msra.mxu0 0
      %4392 = vmatprep.subr.bf16.mxu0 0
      %4393 = vmatpush1.bf16.msra.mxu0 0
      %4394 = vmatprep.subr.bf16.mxu0 0
      %4395 = vmatpush1.bf16.msra.mxu0 0
      %4396 = vmatprep.mubr.bf16.mxu0 0
      %4397 = vmatmul.mubr.bf16.gmra.mrb[0].mxu0 %v4359
      %v4398 = vpop.f32.mrb[0].mxu0
      %v4399 = vadd.f32 %v4311, %v4398
      %v4400 = vpop.f32.mrb[0].mxu0
      %v4401 = vadd.f32 %v4315, %v4400
      %v4402 = vpop.f32.mrb[0].mxu0
      %v4403 = vadd.f32 %v4311, %v4402
      %v4404 = vpop.f32.mrb[0].mxu0
      %v4405 = vadd.f32 %v4315, %v4404
      %4406 = vmatprep.mubr.bf16.mxu0 0
      %4407 = vmatmul.mubr.bf16.gmra.mrb[0].mxu0 %v4362
      %v4408 = vpop.f32.mrb[0].mxu0
      %v4409 = vadd.f32 %v4311, %v4408
      %v4410 = vpop.f32.mrb[0].mxu0
      %v4411 = vadd.f32 %v4315, %v4410
      %v4412 = vpop.f32.mrb[0].mxu0
      %v4413 = vpop.f32.mrb[0].mxu0
      %4414 = vdwg.mxu0
      %v4415 = vmul.f32 %v4399, 0.5
      %v4416 = vmul.f32 %v4401, 0.5
      %v4417 = vmul.f32 %v4403, 0.5
      %v4418 = vmul.f32 %v4405, 0.5
      %v4419 = vmul.f32 %v4409, 0.5
      %v4420 = vmul.f32 %v4411, 0.5
      %v4421 = vmul.f32 %v4399, 0.70710677
      %v4422 = vmul.f32 %v4401, 0.70710677
      %v4423 = vmul.f32 %v4403, 0.70710677
      %v4424 = vmul.f32 %v4405, 0.70710677
      %v4425 = vmul.f32 %v4409, 0.70710677
      %v4426 = vmul.f32 %v4411, 0.70710677
      %v4427 = verf.f32.pop %v4421
      %v4428 = verf.f32.pop %v4422
      %v4429 = verf.f32.pop %v4423
      %v4430 = verf.f32.pop %v4424
      %v4431 = verf.f32.pop %v4425
      %v4432 = verf.f32.pop %v4426
      %v4433 = vadd.f32 %v4427, 1.0
      %v4434 = vadd.f32 %v4428, 1.0
      %v4435 = vadd.f32 %v4429, 1.0
      %v4436 = vadd.f32 %v4430, 1.0
      %v4437 = vadd.f32 %v4431, 1.0
      %v4438 = vadd.f32 %v4432, 1.0
      %v4439 = vmul.f32 %v4415, %v4433
      %v4440 = vmul.f32 %v4416, %v4434
      %v4441 = vmul.f32 %v4417, %v4435
      %v4442 = vmul.f32 %v4418, %v4436
      %v4443 = vmul.f32 %v4419, %v4437
      %v4444 = vmul.f32 %v4420, %v4438
      %v4445 = vpack.c.bf16 %v4441, %v4439
      %v4446 = vpack.c.bf16 %v4442, %v4440
      %v4447 = vpack.c.bf16 %v4443, %v4443
      %v4448 = vpack.c.bf16 %v4444, %v4444
      %s4449 = scalar_lea.vmem %s11, 384
      %v4450 = vld [vmem:[%s4449] sm:$0xf]
      %v4451 = vld [vmem:[%s4449 + $0x4] sm:$0xf]
      %v4452 = vld [vmem:[%s4449 + $0x8] sm:$0xf]
      %v4453 = vld [vmem:[%s4449 + $0xc] sm:$0xf]
      %v4454 = vld [vmem:[%s4449 + $0x10] sm:$0xf]
      %v4455 = vld [vmem:[%s4449 + $0x14] sm:$0xf]
      %v4456 = vld [vmem:[%s4449 + $0x18] sm:$0xf]
      %v4457 = vld [vmem:[%s4449 + $0x1c] sm:$0xf]
      %v4458 = vld [vmem:[%s4449 + $0x20] sm:$0xf]
      %v4459 = vld [vmem:[%s4449 + $0x24] sm:$0xf]
      %v4460 = vld [vmem:[%s4449 + $0x28] sm:$0xf]
      %v4461 = vld [vmem:[%s4449 + $0x2c] sm:$0xf]
      %v4462 = vld [vmem:[%s4449 + $0x30] sm:$0xf]
      %v4463 = vld [vmem:[%s4449 + $0x34] sm:$0xf]
      %v4464 = vld [vmem:[%s4449 + $0x38] sm:$0xf]
      %v4465 = vld [vmem:[%s4449 + $0x3c] sm:$0xf]
      %v4466 = vld [vmem:[%s4449 + $0x40] sm:$0xf]
      %v4467 = vld [vmem:[%s4449 + $0x44] sm:$0xf]
      %v4468 = vld [vmem:[%s4449 + $0x48] sm:$0xf]
      %v4469 = vld [vmem:[%s4449 + $0x4c] sm:$0xf]
      %v4470 = vld [vmem:[%s4449 + $0x50] sm:$0xf]
      %v4471 = vld [vmem:[%s4449 + $0x54] sm:$0xf]
      %v4472 = vld [vmem:[%s4449 + $0x58] sm:$0xf]
      %v4473 = vld [vmem:[%s4449 + $0x5c] sm:$0xf]
      %v4474 = vld [vmem:[%s4449 + $0x60] sm:$0xf]
      %v4475 = vld [vmem:[%s4449 + $0x64] sm:$0xf]
      %v4476 = vld [vmem:[%s4449 + $0x68] sm:$0xf]
      %v4477 = vld [vmem:[%s4449 + $0x6c] sm:$0xf]
      %v4478 = vld [vmem:[%s4449 + $0x70] sm:$0xf]
      %v4479 = vld [vmem:[%s4449 + $0x74] sm:$0xf]
      %v4480 = vld [vmem:[%s4449 + $0x78] sm:$0xf]
      %v4481 = vld [vmem:[%s4449 + $0x7c] sm:$0xf]
      %s4482 = scalar_lea.vmem %s12, 3
      %v4483 = vld [vmem:[%s4482] sm:$0x1]
      %v4485 = vlaneseq
      %v4486 = vshrl.u32 %v4485, 7
      %v4487 = vsub.s32 0, %v4486
      %v4488 = vrot.slane %v4483, %v4487
      %v4522 = vunpack.c.l.b16 %v4450
      %v4523 = vunpack.c.l.b16 %v4451
      %v4524 = vunpack.c.l.b16 %v4452
      %v4525 = vunpack.c.l.b16 %v4453
      %v4526 = vunpack.c.l.b16 %v4454
      %v4527 = vunpack.c.l.b16 %v4455
      %v4528 = vunpack.c.l.b16 %v4456
      %v4529 = vunpack.c.l.b16 %v4457
      %v4530 = vunpack.c.l.b16 %v4458
      %v4531 = vunpack.c.l.b16 %v4459
      %v4532 = vunpack.c.l.b16 %v4460
      %v4533 = vunpack.c.l.b16 %v4461
      %v4534 = vunpack.c.l.b16 %v4462
      %v4535 = vunpack.c.l.b16 %v4463
      %v4536 = vunpack.c.l.b16 %v4464
      %v4537 = vunpack.c.l.b16 %v4465
      %v4538 = vunpack.c.l.b16 %v4466
      %v4539 = vunpack.c.l.b16 %v4467
      %v4540 = vunpack.c.l.b16 %v4468
      %v4541 = vunpack.c.l.b16 %v4469
      %v4542 = vunpack.c.l.b16 %v4470
      %v4543 = vunpack.c.l.b16 %v4471
      %v4544 = vunpack.c.l.b16 %v4472
      %v4545 = vunpack.c.l.b16 %v4473
      %v4546 = vunpack.c.l.b16 %v4474
      %v4547 = vunpack.c.l.b16 %v4475
      %v4548 = vunpack.c.l.b16 %v4476
      %v4549 = vunpack.c.l.b16 %v4477
      %v4550 = vunpack.c.l.b16 %v4478
      %v4551 = vunpack.c.l.b16 %v4479
      %v4552 = vunpack.c.l.b16 %v4480
      %v4553 = vunpack.c.l.b16 %v4481
      %v4554 = vpack.c.b16 %v4523, %v4522
      %v4555 = vpack.c.b16 %v4525, %v4524
      %v4556 = vpack.c.b16 %v4527, %v4526
      %v4557 = vpack.c.b16 %v4529, %v4528
      %v4558 = vpack.c.b16 %v4531, %v4530
      %v4559 = vpack.c.b16 %v4533, %v4532
      %v4560 = vpack.c.b16 %v4535, %v4534
      %v4561 = vpack.c.b16 %v4537, %v4536
      %v4562 = vpack.c.b16 %v4539, %v4538
      %v4563 = vpack.c.b16 %v4541, %v4540
      %v4564 = vpack.c.b16 %v4543, %v4542
      %v4565 = vpack.c.b16 %v4545, %v4544
      %v4566 = vpack.c.b16 %v4547, %v4546
      %v4567 = vpack.c.b16 %v4549, %v4548
      %v4568 = vpack.c.b16 %v4551, %v4550
      %v4569 = vpack.c.b16 %v4553, %v4552
      %4586 = vmatprep.subr.bf16.mxu0 0
      %4587 = vmatpush1.bf16.msra.mxu0 %v4554
      %4588 = vmatprep.subr.bf16.mxu0 0
      %4589 = vmatpush1.bf16.msra.mxu0 %v4555
      %4590 = vmatprep.subr.bf16.mxu0 0
      %4591 = vmatpush1.bf16.msra.mxu0 %v4556
      %4592 = vmatprep.subr.bf16.mxu0 0
      %4593 = vmatpush1.bf16.msra.mxu0 %v4557
      %4594 = vmatprep.subr.bf16.mxu0 0
      %4595 = vmatpush1.bf16.msra.mxu0 %v4558
      %4596 = vmatprep.subr.bf16.mxu0 0
      %4597 = vmatpush1.bf16.msra.mxu0 %v4559
      %4598 = vmatprep.subr.bf16.mxu0 0
      %4599 = vmatpush1.bf16.msra.mxu0 %v4560
      %4600 = vmatprep.subr.bf16.mxu0 0
      %4601 = vmatpush1.bf16.msra.mxu0 %v4561
      %4602 = vmatprep.subr.bf16.mxu0 0
      %4603 = vmatpush1.bf16.msra.mxu0 %v4562
      %4604 = vmatprep.subr.bf16.mxu0 0
      %4605 = vmatpush1.bf16.msra.mxu0 %v4563
      %4606 = vmatprep.subr.bf16.mxu0 0
      %4607 = vmatpush1.bf16.msra.mxu0 %v4564
      %4608 = vmatprep.subr.bf16.mxu0 0
      %4609 = vmatpush1.bf16.msra.mxu0 %v4565
      %4610 = vmatprep.subr.bf16.mxu0 0
      %4611 = vmatpush1.bf16.msra.mxu0 %v4566
      %4612 = vmatprep.subr.bf16.mxu0 0
      %4613 = vmatpush1.bf16.msra.mxu0 %v4567
      %4614 = vmatprep.subr.bf16.mxu0 0
      %4615 = vmatpush1.bf16.msra.mxu0 %v4568
      %4616 = vmatprep.subr.bf16.mxu0 0
      %4617 = vmatpush1.bf16.msra.mxu0 %v4569
      %4618 = vmatprep.mubr.bf16.mxu0 %v4446
      %4619 = vmatmul.mubr.bf16.gmra.mrb[0].mxu0 %v4445
      %v4620 = vpop.f32.mrb[0].mxu0
      %v4621 = vadd.f32 %v4488, %v4620
      %v4622 = vpop.f32.mrb[0].mxu0
      %v4623 = vpop.f32.mrb[0].mxu0
      %v4624 = vpop.f32.mrb[0].mxu0
      %4625 = vmatprep.mubr.bf16.mxu0 %v4448
      %4626 = vmatmul.mubr.bf16.gmra.mrb[0].mxu0 %v4447
      %v4627 = vpop.f32.mrb[0].mxu0
      %v4628 = vpop.f32.mrb[0].mxu0
      %v4629 = vpop.f32.mrb[0].mxu0
      %v4630 = vpop.f32.mrb[0].mxu0
      %4631 = vdwg.mxu0
      %v4632 = vadd.f32 %v4291, %v4621
      %s4633 = scalar_lea.vmem %s13, 3
      %v4634 = vld [vmem:[%s4633] sm:$0x1]
      %s4635 = scalar_lea.vmem %s14, 3
      %v4636 = vld [vmem:[%s4635] sm:$0x1]
      %v4637 = vsel %vm610, %v4632, 0.0
      %4638 = vadd.xlane.f32.xlu0 %v4637
      %v4639 = vpop.xlane.xlu0 %4638
      %v4640 = vmul.f32 %v4639, %v1100
      %v4641 = vsub.f32 %v4632, %v4640
      %v4642 = vmul.f32 %v4641, %v4641
      %v4643 = vsel %vm610, %v4642, 0.0
      %4644 = vadd.xlane.f32.xlu0 %v4643
      %v4645 = vpop.xlane.xlu0 %4644
      %v4646 = vmul.f32 %v4645, %v1100
      %v4647 = vadd.f32 %v4646, 1e-06
      %v4648 = vrsqrt.pop %v4647
      %v4649 = vmul.f32 %v4641, %v4648
      %v4651 = vlaneseq
      %v4652 = vshrl.u32 %v4651, 7
      %v4653 = vsub.s32 0, %v4652
      %v4654 = vrot.slane %v4634, %v4653
      %v4656 = vmul.f32 %v4649, %v4654
      %v4658 = vlaneseq
      %v4659 = vshrl.u32 %v4658, 7
      %v4660 = vsub.s32 0, %v4659
      %v4661 = vrot.slane %v4636, %v4660
      %v4663 = vadd.f32 %v4656, %v4661
      %v4664 = vpack.c.bf16 %v4663, %v4663
      %s4665 = scalar_lea.vmem %s1, 128
      %v4666 = vld [vmem:[%s4665] sm:$0xf]
      %v4667 = vld [vmem:[%s4665 + $0x4] sm:$0xf]
      %v4668 = vld [vmem:[%s4665 + $0x8] sm:$0xf]
      %v4669 = vld [vmem:[%s4665 + $0xc] sm:$0xf]
      %v4670 = vld [vmem:[%s4665 + $0x10] sm:$0xf]
      %v4671 = vld [vmem:[%s4665 + $0x14] sm:$0xf]
      %v4672 = vld [vmem:[%s4665 + $0x18] sm:$0xf]
      %v4673 = vld [vmem:[%s4665 + $0x1c] sm:$0xf]
      %s4674 = scalar_lea.vmem %s2, 4
      %v4675 = vld [vmem:[%s4674] sm:$0x1]
      %v4677 = vlaneseq
      %v4678 = vshrl.u32 %v4677, 7
      %v4679 = vsub.s32 0, %v4678
      %v4680 = vrot.slane %v4675, %v4679
      %v4690 = vunpack.c.l.b16 %v4666
      %v4691 = vunpack.c.l.b16 %v4667
      %v4692 = vunpack.c.l.b16 %v4668
      %v4693 = vunpack.c.l.b16 %v4669
      %v4694 = vunpack.c.l.b16 %v4670
      %v4695 = vunpack.c.l.b16 %v4671
      %v4696 = vunpack.c.l.b16 %v4672
      %v4697 = vunpack.c.l.b16 %v4673
      %v4698 = vpack.c.b16 %v4691, %v4690
      %v4699 = vpack.c.b16 %v4693, %v4692
      %v4700 = vpack.c.b16 %v4695, %v4694
      %v4701 = vpack.c.b16 %v4697, %v4696
      %v4707 = vsel %vm610, %v4664, 0
      %4709 = vmatprep.subr.bf16.mxu0 0
      %4710 = vmatpush1.bf16.msra.mxu0 %v4698
      %4711 = vmatprep.subr.bf16.mxu0 0
      %4712 = vmatpush1.bf16.msra.mxu0 %v4699
      %4713 = vmatprep.subr.bf16.mxu0 0
      %4714 = vmatpush1.bf16.msra.mxu0 %v4700
      %4715 = vmatprep.subr.bf16.mxu0 0
      %4716 = vmatpush1.bf16.msra.mxu0 %v4701
      %4717 = vmatprep.subr.bf16.mxu0 0
      %4718 = vmatpush1.bf16.msra.mxu0 0
      %4719 = vmatprep.subr.bf16.mxu0 0
      %4720 = vmatpush1.bf16.msra.mxu0 0
      %4721 = vmatprep.subr.bf16.mxu0 0
      %4722 = vmatpush1.bf16.msra.mxu0 0
      %4723 = vmatprep.subr.bf16.mxu0 0
      %4724 = vmatpush1.bf16.msra.mxu0 0
      %4725 = vmatprep.subr.bf16.mxu0 0
      %4726 = vmatpush1.bf16.msra.mxu0 0
      %4727 = vmatprep.subr.bf16.mxu0 0
      %4728 = vmatpush1.bf16.msra.mxu0 0
      %4729 = vmatprep.subr.bf16.mxu0 0
      %4730 = vmatpush1.bf16.msra.mxu0 0
      %4731 = vmatprep.subr.bf16.mxu0 0
      %4732 = vmatpush1.bf16.msra.mxu0 0
      %4733 = vmatprep.subr.bf16.mxu0 0
      %4734 = vmatpush1.bf16.msra.mxu0 0
      %4735 = vmatprep.subr.bf16.mxu0 0
      %4736 = vmatpush1.bf16.msra.mxu0 0
      %4737 = vmatprep.subr.bf16.mxu0 0
      %4738 = vmatpush1.bf16.msra.mxu0 0
      %4739 = vmatprep.subr.bf16.mxu0 0
      %4740 = vmatpush1.bf16.msra.mxu0 0
      %4741 = vmatprep.mubr.bf16.mxu0 0
      %4742 = vmatmul.mubr.bf16.gmra.mrb[0].mxu0 %v4707
      %v4743 = vpop.f32.mrb[0].mxu0
      %v4744 = vadd.f32 %v4680, %v4743
      %v4745 = vpop.f32.mrb[0].mxu0
      %v4746 = vpop.f32.mrb[0].mxu0
      %v4747 = vpop.f32.mrb[0].mxu0
      %4748 = vdwg.mxu0
      %s4749 = scalar_lea.vmem %s3, 128
      %v4750 = vld [vmem:[%s4749] sm:$0xf]
      %v4751 = vld [vmem:[%s4749 + $0x4] sm:$0xf]
      %v4752 = vld [vmem:[%s4749 + $0x8] sm:$0xf]
      %v4753 = vld [vmem:[%s4749 + $0xc] sm:$0xf]
      %v4754 = vld [vmem:[%s4749 + $0x10] sm:$0xf]
      %v4755 = vld [vmem:[%s4749 + $0x14] sm:$0xf]
      %v4756 = vld [vmem:[%s4749 + $0x18] sm:$0xf]
      %v4757 = vld [vmem:[%s4749 + $0x1c] sm:$0xf]
      %s4758 = scalar_lea.vmem %s4, 4
      %v4759 = vld [vmem:[%s4758] sm:$0x1]
      %v4761 = vlaneseq
      %v4762 = vshrl.u32 %v4761, 7
      %v4763 = vsub.s32 0, %v4762
      %v4764 = vrot.slane %v4759, %v4763
      %v4774 = vunpack.c.l.b16 %v4750
      %v4775 = vunpack.c.l.b16 %v4751
      %v4776 = vunpack.c.l.b16 %v4752
      %v4777 = vunpack.c.l.b16 %v4753
      %v4778 = vunpack.c.l.b16 %v4754
      %v4779 = vunpack.c.l.b16 %v4755
      %v4780 = vunpack.c.l.b16 %v4756
      %v4781 = vunpack.c.l.b16 %v4757
      %v4782 = vpack.c.b16 %v4775, %v4774
      %v4783 = vpack.c.b16 %v4777, %v4776
      %v4784 = vpack.c.b16 %v4779, %v4778
      %v4785 = vpack.c.b16 %v4781, %v4780
      %4790 = vmatprep.subr.bf16.mxu0 0
      %4791 = vmatpush1.bf16.msra.mxu0 %v4782
      %4792 = vmatprep.subr.bf16.mxu0 0
      %4793 = vmatpush1.bf16.msra.mxu0 %v4783
      %4794 = vmatprep.subr.bf16.mxu0 0
      %4795 = vmatpush1.bf16.msra.mxu0 %v4784
      %4796 = vmatprep.subr.bf16.mxu0 0
      %4797 = vmatpush1.bf16.msra.mxu0 %v4785
      %4798 = vmatprep.subr.bf16.mxu0 0
      %4799 = vmatpush1.bf16.msra.mxu0 0
      %4800 = vmatprep.subr.bf16.mxu0 0
      %4801 = vmatpush1.bf16.msra.mxu0 0
      %4802 = vmatprep.subr.bf16.mxu0 0
      %4803 = vmatpush1.bf16.msra.mxu0 0
      %4804 = vmatprep.subr.bf16.mxu0 0
      %4805 = vmatpush1.bf16.msra.mxu0 0
      %4806 = vmatprep.subr.bf16.mxu0 0
      %4807 = vmatpush1.bf16.msra.mxu0 0
      %4808 = vmatprep.subr.bf16.mxu0 0
      %4809 = vmatpush1.bf16.msra.mxu0 0
      %4810 = vmatprep.subr.bf16.mxu0 0
      %4811 = vmatpush1.bf16.msra.mxu0 0
      %4812 = vmatprep.subr.bf16.mxu0 0
      %4813 = vmatpush1.bf16.msra.mxu0 0
      %4814 = vmatprep.subr.bf16.mxu0 0
      %4815 = vmatpush1.bf16.msra.mxu0 0
      %4816 = vmatprep.subr.bf16.mxu0 0
      %4817 = vmatpush1.bf16.msra.mxu0 0
      %4818 = vmatprep.subr.bf16.mxu0 0
      %4819 = vmatpush1.bf16.msra.mxu0 0
      %4820 = vmatprep.subr.bf16.mxu0 0
      %4821 = vmatpush1.bf16.msra.mxu0 0
      %4822 = vmatprep.mubr.bf16.mxu0 0
      %4823 = vmatmul.mubr.bf16.gmra.mrb[0].mxu0 %v4707
      %v4824 = vpop.f32.mrb[0].mxu0
      %v4825 = vadd.f32 %v4764, %v4824
      %v4826 = vpop.f32.mrb[0].mxu0
      %v4827 = vpop.f32.mrb[0].mxu0
      %v4828 = vpop.f32.mrb[0].mxu0
      %4829 = vdwg.mxu0
      %v4830 = vmul.f32 %v4744, 0.17677669
      %v4831 = vlaneseq
      %v4832 = vshrl.u32 %v4831, 7
      %v4833 = vlaneseq
      %v4834 = vand.u32 %v4833, 127
      %vm4835 = vcmp.le.s32.totalorder %v4834, %v4832
      %v4836 = vsel %vm4835, 0.0, -1e+30
      %v4837 = vpack.c.bf16 %v4830, %v4830
      %v4838 = vpack.c.bf16 %v4825, %v4825
      %v4840 = vsel %vm739, %v4837, 0
      %v4843 = vsel %vm739, %v4838, 0
      %4845 = vmatprep.subr.bf16.mxu0 0
      %4846 = vmatpush1.bf16.xpose.msra.mxu0 %v4843
      %4847 = vmatprep.subr.bf16.mxu0 0
      %4848 = vmatpush1.bf16.xpose.msra.mxu0 0
      %4849 = vmatprep.subr.bf16.mxu0 0
      %4850 = vmatpush1.bf16.xpose.msra.mxu0 0
      %4851 = vmatprep.subr.bf16.mxu0 0
      %4852 = vmatpush1.bf16.xpose.msra.mxu0 0
      %4853 = vmatprep.subr.bf16.mxu0 0
      %4854 = vmatpush1.bf16.xpose.msra.mxu0 0
      %4855 = vmatprep.subr.bf16.mxu0 0
      %4856 = vmatpush1.bf16.xpose.msra.mxu0 0
      %4857 = vmatprep.subr.bf16.mxu0 0
      %4858 = vmatpush1.bf16.xpose.msra.mxu0 0
      %4859 = vmatprep.subr.bf16.mxu0 0
      %4860 = vmatpush1.bf16.xpose.msra.mxu0 0
      %4861 = vmatprep.subr.bf16.mxu0 0
      %4862 = vmatpush1.bf16.xpose.msra.mxu0 0
      %4863 = vmatprep.subr.bf16.mxu0 0
      %4864 = vmatpush1.bf16.xpose.msra.mxu0 0
      %4865 = vmatprep.subr.bf16.mxu0 0
      %4866 = vmatpush1.bf16.xpose.msra.mxu0 0
      %4867 = vmatprep.subr.bf16.mxu0 0
      %4868 = vmatpush1.bf16.xpose.msra.mxu0 0
      %4869 = vmatprep.subr.bf16.mxu0 0
      %4870 = vmatpush1.bf16.xpose.msra.mxu0 0
      %4871 = vmatprep.subr.bf16.mxu0 0
      %4872 = vmatpush1.bf16.xpose.msra.mxu0 0
      %4873 = vmatprep.subr.bf16.mxu0 0
      %4874 = vmatpush1.bf16.xpose.msra.mxu0 0
      %4875 = vmatprep.subr.bf16.mxu0 0
      %4876 = vmatpush1.bf16.xpose.msra.mxu0 0
      %4877 = vmatprep.mubr.bf16.mxu0 0
      %4878 = vmatmul.mubr.bf16.gmra.mrb[0].mxu0 %v4840
      %v4879 = vpop.f32.mrb[0].mxu0
      %v4880 = vadd.f32 %v4836, %v4879
      %v4881 = vpop.f32.mrb[0].mxu0
      %v4882 = vpop.f32.mrb[0].mxu0
      %v4883 = vpop.f32.mrb[0].mxu0
      %4884 = vdwg.mxu0
      %vm4885 = vcmask 36864
      %v4886 = vsel %vm4885, %v4880, -inf
      %4887 = vmax.xlane.f32.xlu0 %v4886
      %v4888 = vpop.xlane.xlu0 %4887
      %v4889 = vsub.f32 %v4880, %v4888
      %v4890 = vmul.f32 %v4889, 1.442695
      %v4891 = vpow.pop %v4890
      %v4892 = vsel %vm4885, %v4891, 0.0
      %4893 = vadd.xlane.f32.xlu0 %v4892
      %v4894 = vpop.xlane.xlu0 %4893
      %v4895 = vrcp.pop %v4894
      %v4896 = vmul.f32 %v4891, %v4895
      %v4897 = vpack.c.bf16 %v4896, %v4896
      %4899 = vrot.lane.b32.xlu0 %v4838, 64
      %v4900 = vpop.permute.xlu0 %4899
      %vm4901 = vcmask 39936
      %v4903 = vsel %vm4901, %v4897, 0
      %vm4905 = vcmask 1041408
      %vm4906 = vcmask 1042432
      %v4907 = vsel %vm4905, 4294967295, 65535
      %v4908 = vsel %vm4906, %v4907, 0
      %v4910 = vand.u32 %v4900, %v4908
      %4912 = vmatprep.subr.bf16.mxu0 0
      %4913 = vmatpush1.bf16.msra.mxu0 %v4910
      %4914 = vmatprep.subr.bf16.mxu0 0
      %4915 = vmatpush1.bf16.msra.mxu0 0
      %4916 = vmatprep.subr.bf16.mxu0 0
      %4917 = vmatpush1.bf16.msra.mxu0 0
      %4918 = vmatprep.subr.bf16.mxu0 0
      %4919 = vmatpush1.bf16.msra.mxu0 0
      %4920 = vmatprep.subr.bf16.mxu0 0
      %4921 = vmatpush1.bf16.msra.mxu0 0
      %4922 = vmatprep.subr.bf16.mxu0 0
      %4923 = vmatpush1.bf16.msra.mxu0 0
      %4924 = vmatprep.subr.bf16.mxu0 0
      %4925 = vmatpush1.bf16.msra.mxu0 0
      %4926 = vmatprep.subr.bf16.mxu0 0
      %4927 = vmatpush1.bf16.msra.mxu0 0
      %4928 = vmatprep.subr.bf16.mxu0 0
      %4929 = vmatpush1.bf16.msra.mxu0 0
      %4930 = vmatprep.subr.bf16.mxu0 0
      %4931 = vmatpush1.bf16.msra.mxu0 0
      %4932 = vmatprep.subr.bf16.mxu0 0
      %4933 = vmatpush1.bf16.msra.mxu0 0
      %4934 = vmatprep.subr.bf16.mxu0 0
      %4935 = vmatpush1.bf16.msra.mxu0 0
      %4936 = vmatprep.subr.bf16.mxu0 0
      %4937 = vmatpush1.bf16.msra.mxu0 0
      %4938 = vmatprep.subr.bf16.mxu0 0
      %4939 = vmatpush1.bf16.msra.mxu0 0
      %4940 = vmatprep.subr.bf16.mxu0 0
      %4941 = vmatpush1.bf16.msra.mxu0 0
      %4942 = vmatprep.subr.bf16.mxu0 0
      %4943 = vmatpush1.bf16.msra.mxu0 0
      %4944 = vmatprep.mubr.bf16.mxu0 0
      %4945 = vmatmul.mubr.bf16.gmra.mrb[0].mxu0 %v4903
      %v4946 = vpop.f32.mrb[0].mxu0
      %v4947 = vadd.f32 0.0, %v4946
      %v4948 = vpop.f32.mrb[0].mxu0
      %v4949 = vpop.f32.mrb[0].mxu0
      %v4950 = vpop.f32.mrb[0].mxu0
      %4951 = vdwg.mxu0
      %4953 = vrot.lane.b32.xlu0 %v4837, 96
      %v4954 = vpop.permute.xlu0 %4953
      %4955 = vrot.lane.b32.xlu0 %v4838, 96
      %v4956 = vpop.permute.xlu0 %4955
      %v4958 = vsel %vm739, %v4954, 0
      %v4961 = vsel %vm739, %v4956, 0
      %4963 = vmatprep.subr.bf16.mxu0 0
      %4964 = vmatpush1.bf16.xpose.msra.mxu0 %v4961
      %4965 = vmatprep.subr.bf16.mxu0 0
      %4966 = vmatpush1.bf16.xpose.msra.mxu0 0
      %4967 = vmatprep.subr.bf16.mxu0 0
      %4968 = vmatpush1.bf16.xpose.msra.mxu0 0
      %4969 = vmatprep.subr.bf16.mxu0 0
      %4970 = vmatpush1.bf16.xpose.msra.mxu0 0
      %4971 = vmatprep.subr.bf16.mxu0 0
      %4972 = vmatpush1.bf16.xpose.msra.mxu0 0
      %4973 = vmatprep.subr.bf16.mxu0 0
      %4974 = vmatpush1.bf16.xpose.msra.mxu0 0
      %4975 = vmatprep.subr.bf16.mxu0 0
      %4976 = vmatpush1.bf16.xpose.msra.mxu0 0
      %4977 = vmatprep.subr.bf16.mxu0 0
      %4978 = vmatpush1.bf16.xpose.msra.mxu0 0
      %4979 = vmatprep.subr.bf16.mxu0 0
      %4980 = vmatpush1.bf16.xpose.msra.mxu0 0
      %4981 = vmatprep.subr.bf16.mxu0 0
      %4982 = vmatpush1.bf16.xpose.msra.mxu0 0
      %4983 = vmatprep.subr.bf16.mxu0 0
      %4984 = vmatpush1.bf16.xpose.msra.mxu0 0
      %4985 = vmatprep.subr.bf16.mxu0 0
      %4986 = vmatpush1.bf16.xpose.msra.mxu0 0
      %4987 = vmatprep.subr.bf16.mxu0 0
      %4988 = vmatpush1.bf16.xpose.msra.mxu0 0
      %4989 = vmatprep.subr.bf16.mxu0 0
      %4990 = vmatpush1.bf16.xpose.msra.mxu0 0
      %4991 = vmatprep.subr.bf16.mxu0 0
      %4992 = vmatpush1.bf16.xpose.msra.mxu0 0
      %4993 = vmatprep.subr.bf16.mxu0 0
      %4994 = vmatpush1.bf16.xpose.msra.mxu0 0
      %4995 = vmatprep.mubr.bf16.mxu0 0
      %4996 = vmatmul.mubr.bf16.gmra.mrb[0].mxu0 %v4958
      %v4997 = vpop.f32.mrb[0].mxu0
      %v4998 = vadd.f32 %v4836, %v4997
      %v4999 = vpop.f32.mrb[0].mxu0
      %v5000 = vpop.f32.mrb[0].mxu0
      %v5001 = vpop.f32.mrb[0].mxu0
      %5002 = vdwg.mxu0
      %v5003 = vsel %vm4885, %v4998, -inf
      %5004 = vmax.xlane.f32.xlu0 %v5003
      %v5005 = vpop.xlane.xlu0 %5004
      %v5006 = vsub.f32 %v4998, %v5005
      %v5007 = vmul.f32 %v5006, 1.442695
      %v5008 = vpow.pop %v5007
      %v5009 = vsel %vm4885, %v5008, 0.0
      %5010 = vadd.xlane.f32.xlu0 %v5009
      %v5011 = vpop.xlane.xlu0 %5010
      %v5012 = vrcp.pop %v5011
      %v5013 = vmul.f32 %v5008, %v5012
      %v5014 = vpack.c.bf16 %v5013, %v5013
      %5015 = vrot.lane.b32.xlu0 %v4838, 32
      %v5016 = vpop.permute.xlu0 %5015
      %v5018 = vsel %vm4901, %v5014, 0
      %v5021 = vand.u32 %v5016, %v4908
      %5023 = vmatprep.subr.bf16.mxu0 0
      %5024 = vmatpush1.bf16.msra.mxu0 %v5021
      %5025 = vmatprep.subr.bf16.mxu0 0
      %5026 = vmatpush1.bf16.msra.mxu0 0
      %5027 = vmatprep.subr.bf16.mxu0 0
      %5028 = vmatpush1.bf16.msra.mxu0 0
      %5029 = vmatprep.subr.bf16.mxu0 0
      %5030 = vmatpush1.bf16.msra.mxu0 0
      %5031 = vmatprep.subr.bf16.mxu0 0
      %5032 = vmatpush1.bf16.msra.mxu0 0
      %5033 = vmatprep.subr.bf16.mxu0 0
      %5034 = vmatpush1.bf16.msra.mxu0 0
      %5035 = vmatprep.subr.bf16.mxu0 0
      %5036 = vmatpush1.bf16.msra.mxu0 0
      %5037 = vmatprep.subr.bf16.mxu0 0
      %5038 = vmatpush1.bf16.msra.mxu0 0
      %5039 = vmatprep.subr.bf16.mxu0 0
      %5040 = vmatpush1.bf16.msra.mxu0 0
      %5041 = vmatprep.subr.bf16.mxu0 0
      %5042 = vmatpush1.bf16.msra.mxu0 0
      %5043 = vmatprep.subr.bf16.mxu0 0
      %5044 = vmatpush1.bf16.msra.mxu0 0
      %5045 = vmatprep.subr.bf16.mxu0 0
      %5046 = vmatpush1.bf16.msra.mxu0 0
      %5047 = vmatprep.subr.bf16.mxu0 0
      %5048 = vmatpush1.bf16.msra.mxu0 0
      %5049 = vmatprep.subr.bf16.mxu0 0
      %5050 = vmatpush1.bf16.msra.mxu0 0
      %5051 = vmatprep.subr.bf16.mxu0 0
      %5052 = vmatpush1.bf16.msra.mxu0 0
      %5053 = vmatprep.subr.bf16.mxu0 0
      %5054 = vmatpush1.bf16.msra.mxu0 0
      %5055 = vmatprep.mubr.bf16.mxu0 0
      %5056 = vmatmul.mubr.bf16.gmra.mrb[0].mxu0 %v5018
      %v5057 = vpop.f32.mrb[0].mxu0
      %v5058 = vadd.f32 0.0, %v5057
      %v5059 = vpop.f32.mrb[0].mxu0
      %v5060 = vpop.f32.mrb[0].mxu0
      %v5061 = vpop.f32.mrb[0].mxu0
      %5062 = vdwg.mxu0
      %5064 = vrot.lane.b32.xlu0 %v5058, 32
      %v5065 = vpop.permute.xlu0 %5064
      %v5067 = vsel %vm739, %v4947, %v5065
      %v5068 = vpack.c.bf16 %v5067, %v5067
      %s5069 = scalar_lea.vmem %s5, 128
      %v5070 = vld [vmem:[%s5069] sm:$0xf]
      %v5071 = vld [vmem:[%s5069 + $0x4] sm:$0xf]
      %v5072 = vld [vmem:[%s5069 + $0x8] sm:$0xf]
      %v5073 = vld [vmem:[%s5069 + $0xc] sm:$0xf]
      %v5074 = vld [vmem:[%s5069 + $0x10] sm:$0xf]
      %v5075 = vld [vmem:[%s5069 + $0x14] sm:$0xf]
      %v5076 = vld [vmem:[%s5069 + $0x18] sm:$0xf]
      %v5077 = vld [vmem:[%s5069 + $0x1c] sm:$0xf]
      %s5078 = scalar_lea.vmem %s6, 4
      %v5079 = vld [vmem:[%s5078] sm:$0x1]
      %v5081 = vlaneseq
      %v5082 = vshrl.u32 %v5081, 7
      %v5083 = vsub.s32 0, %v5082
      %v5084 = vrot.slane %v5079, %v5083
      %v5094 = vunpack.c.l.b16 %v5070
      %v5095 = vunpack.c.l.b16 %v5071
      %v5096 = vunpack.c.l.b16 %v5072
      %v5097 = vunpack.c.l.b16 %v5073
      %v5098 = vunpack.c.l.b16 %v5074
      %v5099 = vunpack.c.l.b16 %v5075
      %v5100 = vunpack.c.l.b16 %v5076
      %v5101 = vunpack.c.l.b16 %v5077
      %v5102 = vpack.c.b16 %v5095, %v5094
      %v5103 = vpack.c.b16 %v5097, %v5096
      %v5104 = vpack.c.b16 %v5099, %v5098
      %v5105 = vpack.c.b16 %v5101, %v5100
      %v5111 = vsel %vm610, %v5068, 0
      %5113 = vmatprep.subr.bf16.mxu0 0
      %5114 = vmatpush1.bf16.msra.mxu0 %v5102
      %5115 = vmatprep.subr.bf16.mxu0 0
      %5116 = vmatpush1.bf16.msra.mxu0 %v5103
      %5117 = vmatprep.subr.bf16.mxu0 0
      %5118 = vmatpush1.bf16.msra.mxu0 %v5104
      %5119 = vmatprep.subr.bf16.mxu0 0
      %5120 = vmatpush1.bf16.msra.mxu0 %v5105
      %5121 = vmatprep.subr.bf16.mxu0 0
      %5122 = vmatpush1.bf16.msra.mxu0 0
      %5123 = vmatprep.subr.bf16.mxu0 0
      %5124 = vmatpush1.bf16.msra.mxu0 0
      %5125 = vmatprep.subr.bf16.mxu0 0
      %5126 = vmatpush1.bf16.msra.mxu0 0
      %5127 = vmatprep.subr.bf16.mxu0 0
      %5128 = vmatpush1.bf16.msra.mxu0 0
      %5129 = vmatprep.subr.bf16.mxu0 0
      %5130 = vmatpush1.bf16.msra.mxu0 0
      %5131 = vmatprep.subr.bf16.mxu0 0
      %5132 = vmatpush1.bf16.msra.mxu0 0
      %5133 = vmatprep.subr.bf16.mxu0 0
      %5134 = vmatpush1.bf16.msra.mxu0 0
      %5135 = vmatprep.subr.bf16.mxu0 0
      %5136 = vmatpush1.bf16.msra.mxu0 0
      %5137 = vmatprep.subr.bf16.mxu0 0
      %5138 = vmatpush1.bf16.msra.mxu0 0
      %5139 = vmatprep.subr.bf16.mxu0 0
      %5140 = vmatpush1.bf16.msra.mxu0 0
      %5141 = vmatprep.subr.bf16.mxu0 0
      %5142 = vmatpush1.bf16.msra.mxu0 0
      %5143 = vmatprep.subr.bf16.mxu0 0
      %5144 = vmatpush1.bf16.msra.mxu0 0
      %5145 = vmatprep.mubr.bf16.mxu0 0
      %5146 = vmatmul.mubr.bf16.gmra.mrb[0].mxu0 %v5111
      %v5147 = vpop.f32.mrb[0].mxu0
      %v5148 = vadd.f32 %v5084, %v5147
      %v5149 = vpop.f32.mrb[0].mxu0
      %v5150 = vpop.f32.mrb[0].mxu0
      %v5151 = vpop.f32.mrb[0].mxu0
      %5152 = vdwg.mxu0
      %v5153 = vadd.f32 %v4663, %v5148
      %s5154 = scalar_lea.vmem %s7, 4
      %v5155 = vld [vmem:[%s5154] sm:$0x1]
      %s5156 = scalar_lea.vmem %s8, 4
      %v5157 = vld [vmem:[%s5156] sm:$0x1]
      %v5158 = vsel %vm1096, %v5153, 0.0
      %5159 = vadd.xlane.f32.xlu0 %v5158
      %v5160 = vpop.xlane.xlu0 %5159
      %v5161 = vmul.f32 %v5160, %v1100
      %v5162 = vsub.f32 %v5153, %v5161
      %v5163 = vmul.f32 %v5162, %v5162
      %v5164 = vsel %vm1096, %v5163, 0.0
      %5165 = vadd.xlane.f32.xlu0 %v5164
      %v5166 = vpop.xlane.xlu0 %5165
      %v5167 = vmul.f32 %v5166, %v1100
      %v5168 = vadd.f32 %v5167, 1e-06
      %v5169 = vrsqrt.pop %v5168
      %v5170 = vmul.f32 %v5162, %v5169
      %v5172 = vlaneseq
      %v5173 = vshrl.u32 %v5172, 7
      %v5174 = vsub.s32 0, %v5173
      %v5175 = vrot.slane %v5155, %v5174
      %v5177 = vmul.f32 %v5170, %v5175
      %v5179 = vlaneseq
      %v5180 = vshrl.u32 %v5179, 7
      %v5181 = vsub.s32 0, %v5180
      %v5182 = vrot.slane %v5157, %v5181
      %v5184 = vadd.f32 %v5177, %v5182
      %v5185 = vpack.c.bf16 %v5184, %v5184
      %s5186 = scalar_lea.vmem %s9, 256
      %v5187 = vld [vmem:[%s5186] sm:$0xff]
      %v5188 = vld [vmem:[%s5186 + $0x8] sm:$0xff]
      %v5189 = vld [vmem:[%s5186 + $0x10] sm:$0xff]
      %v5190 = vld [vmem:[%s5186 + $0x18] sm:$0xff]
      %v5191 = vld [vmem:[%s5186 + $0x20] sm:$0xff]
      %v5192 = vld [vmem:[%s5186 + $0x28] sm:$0xff]
      %v5193 = vld [vmem:[%s5186 + $0x30] sm:$0xff]
      %v5194 = vld [vmem:[%s5186 + $0x38] sm:$0xff]
      %s5195 = scalar_lea.vmem %s10, 8
      %v5196 = vld [vmem:[%s5195] sm:$0x3]
      %v5198 = vlaneseq
      %v5199 = vshrl.u32 %v5198, 7
      %v5200 = vsub.s32 0, %v5199
      %v5201 = vrot.slane %v5196, %v5200
      %v5202 = vlaneseq
      %v5203 = vshrl.u32 %v5202, 7
      %v5204 = vsub.s32 1, %v5203
      %v5205 = vrot.slane %v5196, %v5204
      %v5216 = vunpack.c.l.b16 %v5187
      %v5217 = vunpack.c.h.b16 %v5187
      %v5218 = vunpack.c.l.b16 %v5188
      %v5219 = vunpack.c.h.b16 %v5188
      %v5220 = vunpack.c.l.b16 %v5189
      %v5221 = vunpack.c.h.b16 %v5189
      %v5222 = vunpack.c.l.b16 %v5190
      %v5223 = vunpack.c.h.b16 %v5190
      %v5224 = vunpack.c.l.b16 %v5191
      %v5225 = vunpack.c.h.b16 %v5191
      %v5226 = vunpack.c.l.b16 %v5192
      %v5227 = vunpack.c.h.b16 %v5192
      %v5228 = vunpack.c.l.b16 %v5193
      %v5229 = vunpack.c.h.b16 %v5193
      %v5230 = vunpack.c.l.b16 %v5194
      %v5231 = vunpack.c.h.b16 %v5194
      %v5232 = vpack.c.b16 %v5218, %v5216
      %v5233 = vpack.c.b16 %v5219, %v5217
      %v5234 = vpack.c.b16 %v5222, %v5220
      %v5235 = vpack.c.b16 %v5223, %v5221
      %v5236 = vpack.c.b16 %v5226, %v5224
      %v5237 = vpack.c.b16 %v5227, %v5225
      %v5238 = vpack.c.b16 %v5230, %v5228
      %v5239 = vpack.c.b16 %v5231, %v5229
      %v5249 = vsel %vm610, %v5185, 0
      %5251 = vmatprep.subr.bf16.mxu0 %v5233
      %5252 = vmatpush1.bf16.msra.mxu0 %v5232
      %5253 = vmatprep.subr.bf16.mxu0 %v5235
      %5254 = vmatpush1.bf16.msra.mxu0 %v5234
      %5255 = vmatprep.subr.bf16.mxu0 %v5237
      %5256 = vmatpush1.bf16.msra.mxu0 %v5236
      %5257 = vmatprep.subr.bf16.mxu0 %v5239
      %5258 = vmatpush1.bf16.msra.mxu0 %v5238
      %5259 = vmatprep.subr.bf16.mxu0 0
      %5260 = vmatpush1.bf16.msra.mxu0 0
      %5261 = vmatprep.subr.bf16.mxu0 0
      %5262 = vmatpush1.bf16.msra.mxu0 0
      %5263 = vmatprep.subr.bf16.mxu0 0
      %5264 = vmatpush1.bf16.msra.mxu0 0
      %5265 = vmatprep.subr.bf16.mxu0 0
      %5266 = vmatpush1.bf16.msra.mxu0 0
      %5267 = vmatprep.subr.bf16.mxu0 0
      %5268 = vmatpush1.bf16.msra.mxu0 0
      %5269 = vmatprep.subr.bf16.mxu0 0
      %5270 = vmatpush1.bf16.msra.mxu0 0
      %5271 = vmatprep.subr.bf16.mxu0 0
      %5272 = vmatpush1.bf16.msra.mxu0 0
      %5273 = vmatprep.subr.bf16.mxu0 0
      %5274 = vmatpush1.bf16.msra.mxu0 0
      %5275 = vmatprep.subr.bf16.mxu0 0
      %5276 = vmatpush1.bf16.msra.mxu0 0
      %5277 = vmatprep.subr.bf16.mxu0 0
      %5278 = vmatpush1.bf16.msra.mxu0 0
      %5279 = vmatprep.subr.bf16.mxu0 0
      %5280 = vmatpush1.bf16.msra.mxu0 0
      %5281 = vmatprep.subr.bf16.mxu0 0
      %5282 = vmatpush1.bf16.msra.mxu0 0
      %5283 = vmatprep.mubr.bf16.mxu0 0
      %5284 = vmatmul.mubr.bf16.gmra.mrb[0].mxu0 %v5249
      %v5285 = vpop.f32.mrb[0].mxu0
      %v5286 = vadd.f32 %v5201, %v5285
      %v5287 = vpop.f32.mrb[0].mxu0
      %v5288 = vadd.f32 %v5205, %v5287
      %v5289 = vpop.f32.mrb[0].mxu0
      %v5290 = vpop.f32.mrb[0].mxu0
      %5291 = vdwg.mxu0
      %v5292 = vmul.f32 %v5286, 0.5
      %v5293 = vmul.f32 %v5288, 0.5
      %v5294 = vmul.f32 %v5286, 0.70710677
      %v5295 = vmul.f32 %v5288, 0.70710677
      %v5296 = verf.f32.pop %v5294
      %v5297 = verf.f32.pop %v5295
      %v5298 = vadd.f32 %v5296, 1.0
      %v5299 = vadd.f32 %v5297, 1.0
      %v5300 = vmul.f32 %v5292, %v5298
      %v5301 = vmul.f32 %v5293, %v5299
      %v5302 = vpack.c.bf16 %v5300, %v5300
      %v5303 = vpack.c.bf16 %v5301, %v5301
      %s5304 = scalar_lea.vmem %s11, 512
      %v5305 = vld [vmem:[%s5304] sm:$0xf]
      %v5306 = vld [vmem:[%s5304 + $0x4] sm:$0xf]
      %v5307 = vld [vmem:[%s5304 + $0x8] sm:$0xf]
      %v5308 = vld [vmem:[%s5304 + $0xc] sm:$0xf]
      %v5309 = vld [vmem:[%s5304 + $0x10] sm:$0xf]
      %v5310 = vld [vmem:[%s5304 + $0x14] sm:$0xf]
      %v5311 = vld [vmem:[%s5304 + $0x18] sm:$0xf]
      %v5312 = vld [vmem:[%s5304 + $0x1c] sm:$0xf]
      %v5313 = vld [vmem:[%s5304 + $0x20] sm:$0xf]
      %v5314 = vld [vmem:[%s5304 + $0x24] sm:$0xf]
      %v5315 = vld [vmem:[%s5304 + $0x28] sm:$0xf]
      %v5316 = vld [vmem:[%s5304 + $0x2c] sm:$0xf]
      %v5317 = vld [vmem:[%s5304 + $0x30] sm:$0xf]
      %v5318 = vld [vmem:[%s5304 + $0x34] sm:$0xf]
      %v5319 = vld [vmem:[%s5304 + $0x38] sm:$0xf]
      %v5320 = vld [vmem:[%s5304 + $0x3c] sm:$0xf]
      %v5321 = vld [vmem:[%s5304 + $0x40] sm:$0xf]
      %v5322 = vld [vmem:[%s5304 + $0x44] sm:$0xf]
      %v5323 = vld [vmem:[%s5304 + $0x48] sm:$0xf]
      %v5324 = vld [vmem:[%s5304 + $0x4c] sm:$0xf]
      %v5325 = vld [vmem:[%s5304 + $0x50] sm:$0xf]
      %v5326 = vld [vmem:[%s5304 + $0x54] sm:$0xf]
      %v5327 = vld [vmem:[%s5304 + $0x58] sm:$0xf]
      %v5328 = vld [vmem:[%s5304 + $0x5c] sm:$0xf]
      %v5329 = vld [vmem:[%s5304 + $0x60] sm:$0xf]
      %v5330 = vld [vmem:[%s5304 + $0x64] sm:$0xf]
      %v5331 = vld [vmem:[%s5304 + $0x68] sm:$0xf]
      %v5332 = vld [vmem:[%s5304 + $0x6c] sm:$0xf]
      %v5333 = vld [vmem:[%s5304 + $0x70] sm:$0xf]
      %v5334 = vld [vmem:[%s5304 + $0x74] sm:$0xf]
      %v5335 = vld [vmem:[%s5304 + $0x78] sm:$0xf]
      %v5336 = vld [vmem:[%s5304 + $0x7c] sm:$0xf]
      %s5337 = scalar_lea.vmem %s12, 4
      %v5338 = vld [vmem:[%s5337] sm:$0x1]
      %v5340 = vlaneseq
      %v5341 = vshrl.u32 %v5340, 7
      %v5342 = vsub.s32 0, %v5341
      %v5343 = vrot.slane %v5338, %v5342
      %v5377 = vunpack.c.l.b16 %v5305
      %v5378 = vunpack.c.l.b16 %v5306
      %v5379 = vunpack.c.l.b16 %v5307
      %v5380 = vunpack.c.l.b16 %v5308
      %v5381 = vunpack.c.l.b16 %v5309
      %v5382 = vunpack.c.l.b16 %v5310
      %v5383 = vunpack.c.l.b16 %v5311
      %v5384 = vunpack.c.l.b16 %v5312
      %v5385 = vunpack.c.l.b16 %v5313
      %v5386 = vunpack.c.l.b16 %v5314
      %v5387 = vunpack.c.l.b16 %v5315
      %v5388 = vunpack.c.l.b16 %v5316
      %v5389 = vunpack.c.l.b16 %v5317
      %v5390 = vunpack.c.l.b16 %v5318
      %v5391 = vunpack.c.l.b16 %v5319
      %v5392 = vunpack.c.l.b16 %v5320
      %v5393 = vunpack.c.l.b16 %v5321
      %v5394 = vunpack.c.l.b16 %v5322
      %v5395 = vunpack.c.l.b16 %v5323
      %v5396 = vunpack.c.l.b16 %v5324
      %v5397 = vunpack.c.l.b16 %v5325
      %v5398 = vunpack.c.l.b16 %v5326
      %v5399 = vunpack.c.l.b16 %v5327
      %v5400 = vunpack.c.l.b16 %v5328
      %v5401 = vunpack.c.l.b16 %v5329
      %v5402 = vunpack.c.l.b16 %v5330
      %v5403 = vunpack.c.l.b16 %v5331
      %v5404 = vunpack.c.l.b16 %v5332
      %v5405 = vunpack.c.l.b16 %v5333
      %v5406 = vunpack.c.l.b16 %v5334
      %v5407 = vunpack.c.l.b16 %v5335
      %v5408 = vunpack.c.l.b16 %v5336
      %v5409 = vpack.c.b16 %v5378, %v5377
      %v5410 = vpack.c.b16 %v5380, %v5379
      %v5411 = vpack.c.b16 %v5382, %v5381
      %v5412 = vpack.c.b16 %v5384, %v5383
      %v5413 = vpack.c.b16 %v5386, %v5385
      %v5414 = vpack.c.b16 %v5388, %v5387
      %v5415 = vpack.c.b16 %v5390, %v5389
      %v5416 = vpack.c.b16 %v5392, %v5391
      %v5417 = vpack.c.b16 %v5394, %v5393
      %v5418 = vpack.c.b16 %v5396, %v5395
      %v5419 = vpack.c.b16 %v5398, %v5397
      %v5420 = vpack.c.b16 %v5400, %v5399
      %v5421 = vpack.c.b16 %v5402, %v5401
      %v5422 = vpack.c.b16 %v5404, %v5403
      %v5423 = vpack.c.b16 %v5406, %v5405
      %v5424 = vpack.c.b16 %v5408, %v5407
      %5441 = vmatprep.subr.bf16.mxu0 0
      %5442 = vmatpush1.bf16.msra.mxu0 %v5409
      %5443 = vmatprep.subr.bf16.mxu0 0
      %5444 = vmatpush1.bf16.msra.mxu0 %v5410
      %5445 = vmatprep.subr.bf16.mxu0 0
      %5446 = vmatpush1.bf16.msra.mxu0 %v5411
      %5447 = vmatprep.subr.bf16.mxu0 0
      %5448 = vmatpush1.bf16.msra.mxu0 %v5412
      %5449 = vmatprep.subr.bf16.mxu0 0
      %5450 = vmatpush1.bf16.msra.mxu0 %v5413
      %5451 = vmatprep.subr.bf16.mxu0 0
      %5452 = vmatpush1.bf16.msra.mxu0 %v5414
      %5453 = vmatprep.subr.bf16.mxu0 0
      %5454 = vmatpush1.bf16.msra.mxu0 %v5415
      %5455 = vmatprep.subr.bf16.mxu0 0
      %5456 = vmatpush1.bf16.msra.mxu0 %v5416
      %5457 = vmatprep.subr.bf16.mxu0 0
      %5458 = vmatpush1.bf16.msra.mxu0 %v5417
      %5459 = vmatprep.subr.bf16.mxu0 0
      %5460 = vmatpush1.bf16.msra.mxu0 %v5418
      %5461 = vmatprep.subr.bf16.mxu0 0
      %5462 = vmatpush1.bf16.msra.mxu0 %v5419
      %5463 = vmatprep.subr.bf16.mxu0 0
      %5464 = vmatpush1.bf16.msra.mxu0 %v5420
      %5465 = vmatprep.subr.bf16.mxu0 0
      %5466 = vmatpush1.bf16.msra.mxu0 %v5421
      %5467 = vmatprep.subr.bf16.mxu0 0
      %5468 = vmatpush1.bf16.msra.mxu0 %v5422
      %5469 = vmatprep.subr.bf16.mxu0 0
      %5470 = vmatpush1.bf16.msra.mxu0 %v5423
      %5471 = vmatprep.subr.bf16.mxu0 0
      %5472 = vmatpush1.bf16.msra.mxu0 %v5424
      %5473 = vmatprep.mubr.bf16.mxu0 %v5303
      %5474 = vmatmul.mubr.bf16.gmra.mrb[0].mxu0 %v5302
      %v5475 = vpop.f32.mrb[0].mxu0
      %v5476 = vadd.f32 %v5343, %v5475
      %v5477 = vpop.f32.mrb[0].mxu0
      %v5478 = vpop.f32.mrb[0].mxu0
      %v5479 = vpop.f32.mrb[0].mxu0
      %5480 = vdwg.mxu0
      %v5481 = vadd.f32 %v5184, %v5476
      %s5482 = scalar_lea.vmem %s13, 4
      %v5483 = vld [vmem:[%s5482] sm:$0x1]
      %s5484 = scalar_lea.vmem %s14, 4
      %v5485 = vld [vmem:[%s5484] sm:$0x1]
      %v5486 = vsel %vm1096, %v5481, 0.0
      %5487 = vadd.xlane.f32.xlu0 %v5486
      %v5488 = vpop.xlane.xlu0 %5487
      %v5489 = vmul.f32 %v5488, %v1100
      %v5490 = vsub.f32 %v5481, %v5489
      %v5491 = vmul.f32 %v5490, %v5490
      %v5492 = vsel %vm1096, %v5491, 0.0
      %5493 = vadd.xlane.f32.xlu0 %v5492
      %v5494 = vpop.xlane.xlu0 %5493
      %v5495 = vmul.f32 %v5494, %v1100
      %v5496 = vadd.f32 %v5495, 1e-06
      %v5497 = vrsqrt.pop %v5496
      %v5498 = vmul.f32 %v5490, %v5497
      %v5500 = vlaneseq
      %v5501 = vshrl.u32 %v5500, 7
      %v5502 = vsub.s32 0, %v5501
      %v5503 = vrot.slane %v5483, %v5502
      %v5505 = vmul.f32 %v5498, %v5503
      %v5507 = vlaneseq
      %v5508 = vshrl.u32 %v5507, 7
      %v5509 = vsub.s32 0, %v5508
      %v5510 = vrot.slane %v5485, %v5509
      %v5512 = vadd.f32 %v5505, %v5510
      %v5513 = vpack.c.bf16 %v5512, %v5512
      %s5514 = scalar_lea.vmem %s1, 160
      %v5515 = vld [vmem:[%s5514] sm:$0xf]
      %v5516 = vld [vmem:[%s5514 + $0x4] sm:$0xf]
      %v5517 = vld [vmem:[%s5514 + $0x8] sm:$0xf]
      %v5518 = vld [vmem:[%s5514 + $0xc] sm:$0xf]
      %v5519 = vld [vmem:[%s5514 + $0x10] sm:$0xf]
      %v5520 = vld [vmem:[%s5514 + $0x14] sm:$0xf]
      %v5521 = vld [vmem:[%s5514 + $0x18] sm:$0xf]
      %v5522 = vld [vmem:[%s5514 + $0x1c] sm:$0xf]
      %s5523 = scalar_lea.vmem %s2, 5
      %v5524 = vld [vmem:[%s5523] sm:$0x1]
      %v5526 = vlaneseq
      %v5527 = vshrl.u32 %v5526, 7
      %v5528 = vsub.s32 0, %v5527
      %v5529 = vrot.slane %v5524, %v5528
      %v5539 = vunpack.c.l.b16 %v5515
      %v5540 = vunpack.c.l.b16 %v5516
      %v5541 = vunpack.c.l.b16 %v5517
      %v5542 = vunpack.c.l.b16 %v5518
      %v5543 = vunpack.c.l.b16 %v5519
      %v5544 = vunpack.c.l.b16 %v5520
      %v5545 = vunpack.c.l.b16 %v5521
      %v5546 = vunpack.c.l.b16 %v5522
      %v5547 = vpack.c.b16 %v5540, %v5539
      %v5548 = vpack.c.b16 %v5542, %v5541
      %v5549 = vpack.c.b16 %v5544, %v5543
      %v5550 = vpack.c.b16 %v5546, %v5545
      %v5556 = vsel %vm610, %v5513, 0
      %5558 = vmatprep.subr.bf16.mxu0 0
      %5559 = vmatpush1.bf16.msra.mxu0 %v5547
      %5560 = vmatprep.subr.bf16.mxu0 0
      %5561 = vmatpush1.bf16.msra.mxu0 %v5548
      %5562 = vmatprep.subr.bf16.mxu0 0
      %5563 = vmatpush1.bf16.msra.mxu0 %v5549
      %5564 = vmatprep.subr.bf16.mxu0 0
      %5565 = vmatpush1.bf16.msra.mxu0 %v5550
      %5566 = vmatprep.subr.bf16.mxu0 0
      %5567 = vmatpush1.bf16.msra.mxu0 0
      %5568 = vmatprep.subr.bf16.mxu0 0
      %5569 = vmatpush1.bf16.msra.mxu0 0
      %5570 = vmatprep.subr.bf16.mxu0 0
      %5571 = vmatpush1.bf16.msra.mxu0 0
      %5572 = vmatprep.subr.bf16.mxu0 0
      %5573 = vmatpush1.bf16.msra.mxu0 0
      %5574 = vmatprep.subr.bf16.mxu0 0
      %5575 = vmatpush1.bf16.msra.mxu0 0
      %5576 = vmatprep.subr.bf16.mxu0 0
      %5577 = vmatpush1.bf16.msra.mxu0 0
      %5578 = vmatprep.subr.bf16.mxu0 0
      %5579 = vmatpush1.bf16.msra.mxu0 0
      %5580 = vmatprep.subr.bf16.mxu0 0
      %5581 = vmatpush1.bf16.msra.mxu0 0
      %5582 = vmatprep.subr.bf16.mxu0 0
      %5583 = vmatpush1.bf16.msra.mxu0 0
      %5584 = vmatprep.subr.bf16.mxu0 0
      %5585 = vmatpush1.bf16.msra.mxu0 0
      %5586 = vmatprep.subr.bf16.mxu0 0
      %5587 = vmatpush1.bf16.msra.mxu0 0
      %5588 = vmatprep.subr.bf16.mxu0 0
      %5589 = vmatpush1.bf16.msra.mxu0 0
      %5590 = vmatprep.mubr.bf16.mxu0 0
      %5591 = vmatmul.mubr.bf16.gmra.mrb[0].mxu0 %v5556
      %v5592 = vpop.f32.mrb[0].mxu0
      %v5593 = vadd.f32 %v5529, %v5592
      %v5594 = vpop.f32.mrb[0].mxu0
      %v5595 = vpop.f32.mrb[0].mxu0
      %v5596 = vpop.f32.mrb[0].mxu0
      %5597 = vdwg.mxu0
      %v5598 = vpack.c.bf16 %v3606, %v3605
      %v5599 = vpack.c.bf16 %v3607, %v3607
      %s5600 = scalar_lea.vmem %s3, 160
      %v5601 = vld [vmem:[%s5600] sm:$0xf]
      %v5602 = vld [vmem:[%s5600 + $0x4] sm:$0xf]
      %v5603 = vld [vmem:[%s5600 + $0x8] sm:$0xf]
      %v5604 = vld [vmem:[%s5600 + $0xc] sm:$0xf]
      %v5605 = vld [vmem:[%s5600 + $0x10] sm:$0xf]
      %v5606 = vld [vmem:[%s5600 + $0x14] sm:$0xf]
      %v5607 = vld [vmem:[%s5600 + $0x18] sm:$0xf]
      %v5608 = vld [vmem:[%s5600 + $0x1c] sm:$0xf]
      %s5609 = scalar_lea.vmem %s4, 5
      %v5610 = vld [vmem:[%s5609] sm:$0x1]
      %v5612 = vlaneseq
      %v5613 = vshrl.u32 %v5612, 7
      %v5614 = vsub.s32 0, %v5613
      %v5615 = vrot.slane %v5610, %v5614
      %v5618 = vshrl.u32 %v5598, 16
      %v5620 = vrot.slane %v5618, 2
      %v5621 = vshll.u32 %v5598, 16
      %v5623 = vrot.slane %v5621, 3
      %v5624 = vor.u32 %v5620, %v5623
      %v5626 = vshrl.u32 %v5599, 16
      %v5628 = vrot.slane %v5626, 2
      %v5629 = vshll.u32 %v5599, 16
      %v5631 = vrot.slane %v5629, 3
      %v5632 = vor.u32 %v5628, %v5631
      %v5633 = vsel %vm568, %v5624, %v5632
      %v5642 = vunpack.c.l.b16 %v5601
      %v5643 = vunpack.c.l.b16 %v5602
      %v5644 = vunpack.c.l.b16 %v5603
      %v5645 = vunpack.c.l.b16 %v5604
      %v5646 = vunpack.c.l.b16 %v5605
      %v5647 = vunpack.c.l.b16 %v5606
      %v5648 = vunpack.c.l.b16 %v5607
      %v5649 = vunpack.c.l.b16 %v5608
      %v5650 = vpack.c.b16 %v5643, %v5642
      %v5651 = vpack.c.b16 %v5645, %v5644
      %v5652 = vpack.c.b16 %v5647, %v5646
      %v5653 = vpack.c.b16 %v5649, %v5648
      %v5659 = vsel %vm610, %v5633, 0
      %5661 = vmatprep.subr.bf16.mxu0 0
      %5662 = vmatpush1.bf16.msra.mxu0 %v5650
      %5663 = vmatprep.subr.bf16.mxu0 0
      %5664 = vmatpush1.bf16.msra.mxu0 %v5651
      %5665 = vmatprep.subr.bf16.mxu0 0
      %5666 = vmatpush1.bf16.msra.mxu0 %v5652
      %5667 = vmatprep.subr.bf16.mxu0 0
      %5668 = vmatpush1.bf16.msra.mxu0 %v5653
      %5669 = vmatprep.subr.bf16.mxu0 0
      %5670 = vmatpush1.bf16.msra.mxu0 0
      %5671 = vmatprep.subr.bf16.mxu0 0
      %5672 = vmatpush1.bf16.msra.mxu0 0
      %5673 = vmatprep.subr.bf16.mxu0 0
      %5674 = vmatpush1.bf16.msra.mxu0 0
      %5675 = vmatprep.subr.bf16.mxu0 0
      %5676 = vmatpush1.bf16.msra.mxu0 0
      %5677 = vmatprep.subr.bf16.mxu0 0
      %5678 = vmatpush1.bf16.msra.mxu0 0
      %5679 = vmatprep.subr.bf16.mxu0 0
      %5680 = vmatpush1.bf16.msra.mxu0 0
      %5681 = vmatprep.subr.bf16.mxu0 0
      %5682 = vmatpush1.bf16.msra.mxu0 0
      %5683 = vmatprep.subr.bf16.mxu0 0
      %5684 = vmatpush1.bf16.msra.mxu0 0
      %5685 = vmatprep.subr.bf16.mxu0 0
      %5686 = vmatpush1.bf16.msra.mxu0 0
      %5687 = vmatprep.subr.bf16.mxu0 0
      %5688 = vmatpush1.bf16.msra.mxu0 0
      %5689 = vmatprep.subr.bf16.mxu0 0
      %5690 = vmatpush1.bf16.msra.mxu0 0
      %5691 = vmatprep.subr.bf16.mxu0 0
      %5692 = vmatpush1.bf16.msra.mxu0 0
      %5693 = vmatprep.mubr.bf16.mxu0 0
      %5694 = vmatmul.mubr.bf16.gmra.mrb[0].mxu0 %v5659
      %v5695 = vpop.f32.mrb[0].mxu0
      %v5696 = vadd.f32 %v5615, %v5695
      %v5697 = vpop.f32.mrb[0].mxu0
      %v5698 = vpop.f32.mrb[0].mxu0
      %v5699 = vadd.f32 %v5615, %v5698
      %v5700 = vpop.f32.mrb[0].mxu0
      %5701 = vdwg.mxu0
      %v5702 = vpack.c.bf16 %v5593, %v5593
      %v5703 = vpack.c.bf16 %v5699, %v5696
      %v5705 = vsel %vm739, %v5702, 0
      %v5708 = vsel %vm739, %v5703, 0
      %5710 = vmatprep.subr.bf16.mxu0 0
      %5711 = vmatpush1.bf16.xpose.msra.mxu0 %v5708
      %5712 = vmatprep.subr.bf16.mxu0 0
      %5713 = vmatpush1.bf16.xpose.msra.mxu0 0
      %5714 = vmatprep.subr.bf16.mxu0 0
      %5715 = vmatpush1.bf16.xpose.msra.mxu0 0
      %5716 = vmatprep.subr.bf16.mxu0 0
      %5717 = vmatpush1.bf16.xpose.msra.mxu0 0
      %5718 = vmatprep.subr.bf16.mxu0 0
      %5719 = vmatpush1.bf16.xpose.msra.mxu0 0
      %5720 = vmatprep.subr.bf16.mxu0 0
      %5721 = vmatpush1.bf16.xpose.msra.mxu0 0
      %5722 = vmatprep.subr.bf16.mxu0 0
      %5723 = vmatpush1.bf16.xpose.msra.mxu0 0
      %5724 = vmatprep.subr.bf16.mxu0 0
      %5725 = vmatpush1.bf16.xpose.msra.mxu0 0
      %5726 = vmatprep.subr.bf16.mxu0 0
      %5727 = vmatpush1.bf16.xpose.msra.mxu0 0
      %5728 = vmatprep.subr.bf16.mxu0 0
      %5729 = vmatpush1.bf16.xpose.msra.mxu0 0
      %5730 = vmatprep.subr.bf16.mxu0 0
      %5731 = vmatpush1.bf16.xpose.msra.mxu0 0
      %5732 = vmatprep.subr.bf16.mxu0 0
      %5733 = vmatpush1.bf16.xpose.msra.mxu0 0
      %5734 = vmatprep.subr.bf16.mxu0 0
      %5735 = vmatpush1.bf16.xpose.msra.mxu0 0
      %5736 = vmatprep.subr.bf16.mxu0 0
      %5737 = vmatpush1.bf16.xpose.msra.mxu0 0
      %5738 = vmatprep.subr.bf16.mxu0 0
      %5739 = vmatpush1.bf16.xpose.msra.mxu0 0
      %5740 = vmatprep.subr.bf16.mxu0 0
      %5741 = vmatpush1.bf16.xpose.msra.mxu0 0
      %5742 = vmatprep.mubr.bf16.mxu0 0
      %5743 = vmatmul.mubr.bf16.gmra.mrb[0].mxu0 %v5705
      %v5744 = vpop.f32.mrb[0].mxu0
      %v5745 = vadd.f32 0.0, %v5744
      %v5746 = vpop.f32.mrb[0].mxu0
      %v5747 = vpop.f32.mrb[0].mxu0
      %v5748 = vpop.f32.mrb[0].mxu0
      %5749 = vdwg.mxu0
      %v5750 = vsel %vm1786, %v5745, -inf
      %5751 = vmax.xlane.f32.xlu0 %v5750
      %v5752 = vpop.xlane.xlu0 %5751
      %v5753 = vsub.f32 %v5745, %v5752
      %v5754 = vmul.f32 %v5753, 1.442695
      %v5755 = vpow.pop %v5754
      %v5756 = vsel %vm1786, %v5755, 0.0
      %5757 = vadd.xlane.f32.xlu0 %v5756
      %v5758 = vpop.xlane.xlu0 %5757
      %v5759 = vrcp.pop %v5758
      %v5760 = vmul.f32 %v5755, %v5759
      %v5761 = vpack.c.bf16 %v5760, %v5760
      %5763 = vrot.lane.b32.xlu0 %v5703, 64
      %v5764 = vpop.permute.xlu0 %5763
      %v5767 = vsel %vm787, %v5761, 0
      %5769 = vmatprep.subr.bf16.mxu0 0
      %5770 = vmatpush1.bf16.msra.mxu0 %v5764
      %5771 = vmatprep.subr.bf16.mxu0 0
      %5772 = vmatpush1.bf16.msra.mxu0 0
      %5773 = vmatprep.subr.bf16.mxu0 0
      %5774 = vmatpush1.bf16.msra.mxu0 0
      %5775 = vmatprep.subr.bf16.mxu0 0
      %5776 = vmatpush1.bf16.msra.mxu0 0
      %5777 = vmatprep.subr.bf16.mxu0 0
      %5778 = vmatpush1.bf16.msra.mxu0 0
      %5779 = vmatprep.subr.bf16.mxu0 0
      %5780 = vmatpush1.bf16.msra.mxu0 0
      %5781 = vmatprep.subr.bf16.mxu0 0
      %5782 = vmatpush1.bf16.msra.mxu0 0
      %5783 = vmatprep.subr.bf16.mxu0 0
      %5784 = vmatpush1.bf16.msra.mxu0 0
      %5785 = vmatprep.subr.bf16.mxu0 0
      %5786 = vmatpush1.bf16.msra.mxu0 0
      %5787 = vmatprep.subr.bf16.mxu0 0
      %5788 = vmatpush1.bf16.msra.mxu0 0
      %5789 = vmatprep.subr.bf16.mxu0 0
      %5790 = vmatpush1.bf16.msra.mxu0 0
      %5791 = vmatprep.subr.bf16.mxu0 0
      %5792 = vmatpush1.bf16.msra.mxu0 0
      %5793 = vmatprep.subr.bf16.mxu0 0
      %5794 = vmatpush1.bf16.msra.mxu0 0
      %5795 = vmatprep.subr.bf16.mxu0 0
      %5796 = vmatpush1.bf16.msra.mxu0 0
      %5797 = vmatprep.subr.bf16.mxu0 0
      %5798 = vmatpush1.bf16.msra.mxu0 0
      %5799 = vmatprep.subr.bf16.mxu0 0
      %5800 = vmatpush1.bf16.msra.mxu0 0
      %5801 = vmatprep.mubr.bf16.mxu0 0
      %5802 = vmatmul.mubr.bf16.gmra.mrb[0].mxu0 %v5767
      %v5803 = vpop.f32.mrb[0].mxu0
      %v5804 = vadd.f32 0.0, %v5803
      %v5805 = vpop.f32.mrb[0].mxu0
      %v5806 = vpop.f32.mrb[0].mxu0
      %v5807 = vpop.f32.mrb[0].mxu0
      %5808 = vdwg.mxu0
      %5810 = vrot.lane.b32.xlu0 %v5702, 96
      %v5811 = vpop.permute.xlu0 %5810
      %5812 = vrot.lane.b32.xlu0 %v5703, 96
      %v5813 = vpop.permute.xlu0 %5812
      %v5815 = vsel %vm739, %v5811, 0
      %v5818 = vsel %vm739, %v5813, 0
      %5820 = vmatprep.subr.bf16.mxu0 0
      %5821 = vmatpush1.bf16.xpose.msra.mxu0 %v5818
      %5822 = vmatprep.subr.bf16.mxu0 0
      %5823 = vmatpush1.bf16.xpose.msra.mxu0 0
      %5824 = vmatprep.subr.bf16.mxu0 0
      %5825 = vmatpush1.bf16.xpose.msra.mxu0 0
      %5826 = vmatprep.subr.bf16.mxu0 0
      %5827 = vmatpush1.bf16.xpose.msra.mxu0 0
      %5828 = vmatprep.subr.bf16.mxu0 0
      %5829 = vmatpush1.bf16.xpose.msra.mxu0 0
      %5830 = vmatprep.subr.bf16.mxu0 0
      %5831 = vmatpush1.bf16.xpose.msra.mxu0 0
      %5832 = vmatprep.subr.bf16.mxu0 0
      %5833 = vmatpush1.bf16.xpose.msra.mxu0 0
      %5834 = vmatprep.subr.bf16.mxu0 0
      %5835 = vmatpush1.bf16.xpose.msra.mxu0 0
      %5836 = vmatprep.subr.bf16.mxu0 0
      %5837 = vmatpush1.bf16.xpose.msra.mxu0 0
      %5838 = vmatprep.subr.bf16.mxu0 0
      %5839 = vmatpush1.bf16.xpose.msra.mxu0 0
      %5840 = vmatprep.subr.bf16.mxu0 0
      %5841 = vmatpush1.bf16.xpose.msra.mxu0 0
      %5842 = vmatprep.subr.bf16.mxu0 0
      %5843 = vmatpush1.bf16.xpose.msra.mxu0 0
      %5844 = vmatprep.subr.bf16.mxu0 0
      %5845 = vmatpush1.bf16.xpose.msra.mxu0 0
      %5846 = vmatprep.subr.bf16.mxu0 0
      %5847 = vmatpush1.bf16.xpose.msra.mxu0 0
      %5848 = vmatprep.subr.bf16.mxu0 0
      %5849 = vmatpush1.bf16.xpose.msra.mxu0 0
      %5850 = vmatprep.subr.bf16.mxu0 0
      %5851 = vmatpush1.bf16.xpose.msra.mxu0 0
      %5852 = vmatprep.mubr.bf16.mxu0 0
      %5853 = vmatmul.mubr.bf16.gmra.mrb[0].mxu0 %v5815
      %v5854 = vpop.f32.mrb[0].mxu0
      %v5855 = vadd.f32 0.0, %v5854
      %v5856 = vpop.f32.mrb[0].mxu0
      %v5857 = vpop.f32.mrb[0].mxu0
      %v5858 = vpop.f32.mrb[0].mxu0
      %5859 = vdwg.mxu0
      %v5860 = vsel %vm1786, %v5855, -inf
      %5861 = vmax.xlane.f32.xlu0 %v5860
      %v5862 = vpop.xlane.xlu0 %5861
      %v5863 = vsub.f32 %v5855, %v5862
      %v5864 = vmul.f32 %v5863, 1.442695
      %v5865 = vpow.pop %v5864
      %v5866 = vsel %vm1786, %v5865, 0.0
      %5867 = vadd.xlane.f32.xlu0 %v5866
      %v5868 = vpop.xlane.xlu0 %5867
      %v5869 = vrcp.pop %v5868
      %v5870 = vmul.f32 %v5865, %v5869
      %v5871 = vpack.c.bf16 %v5870, %v5870
      %5872 = vrot.lane.b32.xlu0 %v5703, 32
      %v5873 = vpop.permute.xlu0 %5872
      %v5876 = vsel %vm787, %v5871, 0
      %5878 = vmatprep.subr.bf16.mxu0 0
      %5879 = vmatpush1.bf16.msra.mxu0 %v5873
      %5880 = vmatprep.subr.bf16.mxu0 0
      %5881 = vmatpush1.bf16.msra.mxu0 0
      %5882 = vmatprep.subr.bf16.mxu0 0
      %5883 = vmatpush1.bf16.msra.mxu0 0
      %5884 = vmatprep.subr.bf16.mxu0 0
      %5885 = vmatpush1.bf16.msra.mxu0 0
      %5886 = vmatprep.subr.bf16.mxu0 0
      %5887 = vmatpush1.bf16.msra.mxu0 0
      %5888 = vmatprep.subr.bf16.mxu0 0
      %5889 = vmatpush1.bf16.msra.mxu0 0
      %5890 = vmatprep.subr.bf16.mxu0 0
      %5891 = vmatpush1.bf16.msra.mxu0 0
      %5892 = vmatprep.subr.bf16.mxu0 0
      %5893 = vmatpush1.bf16.msra.mxu0 0
      %5894 = vmatprep.subr.bf16.mxu0 0
      %5895 = vmatpush1.bf16.msra.mxu0 0
      %5896 = vmatprep.subr.bf16.mxu0 0
      %5897 = vmatpush1.bf16.msra.mxu0 0
      %5898 = vmatprep.subr.bf16.mxu0 0
      %5899 = vmatpush1.bf16.msra.mxu0 0
      %5900 = vmatprep.subr.bf16.mxu0 0
      %5901 = vmatpush1.bf16.msra.mxu0 0
      %5902 = vmatprep.subr.bf16.mxu0 0
      %5903 = vmatpush1.bf16.msra.mxu0 0
      %5904 = vmatprep.subr.bf16.mxu0 0
      %5905 = vmatpush1.bf16.msra.mxu0 0
      %5906 = vmatprep.subr.bf16.mxu0 0
      %5907 = vmatpush1.bf16.msra.mxu0 0
      %5908 = vmatprep.subr.bf16.mxu0 0
      %5909 = vmatpush1.bf16.msra.mxu0 0
      %5910 = vmatprep.mubr.bf16.mxu0 0
      %5911 = vmatmul.mubr.bf16.gmra.mrb[0].mxu0 %v5876
      %v5912 = vpop.f32.mrb[0].mxu0
      %v5913 = vadd.f32 0.0, %v5912
      %v5914 = vpop.f32.mrb[0].mxu0
      %v5915 = vpop.f32.mrb[0].mxu0
      %v5916 = vpop.f32.mrb[0].mxu0
      %5917 = vdwg.mxu0
      %5919 = vrot.lane.b32.xlu0 %v5913, 32
      %v5920 = vpop.permute.xlu0 %5919
      %v5922 = vsel %vm739, %v5804, %v5920
      %v5923 = vpack.c.bf16 %v5922, %v5922
      %s5924 = scalar_lea.vmem %s5, 160
      %v5925 = vld [vmem:[%s5924] sm:$0xf]
      %v5926 = vld [vmem:[%s5924 + $0x4] sm:$0xf]
      %v5927 = vld [vmem:[%s5924 + $0x8] sm:$0xf]
      %v5928 = vld [vmem:[%s5924 + $0xc] sm:$0xf]
      %v5929 = vld [vmem:[%s5924 + $0x10] sm:$0xf]
      %v5930 = vld [vmem:[%s5924 + $0x14] sm:$0xf]
      %v5931 = vld [vmem:[%s5924 + $0x18] sm:$0xf]
      %v5932 = vld [vmem:[%s5924 + $0x1c] sm:$0xf]
      %s5933 = scalar_lea.vmem %s6, 5
      %v5934 = vld [vmem:[%s5933] sm:$0x1]
      %v5936 = vlaneseq
      %v5937 = vshrl.u32 %v5936, 7
      %v5938 = vsub.s32 0, %v5937
      %v5939 = vrot.slane %v5934, %v5938
      %v5949 = vunpack.c.l.b16 %v5925
      %v5950 = vunpack.c.l.b16 %v5926
      %v5951 = vunpack.c.l.b16 %v5927
      %v5952 = vunpack.c.l.b16 %v5928
      %v5953 = vunpack.c.l.b16 %v5929
      %v5954 = vunpack.c.l.b16 %v5930
      %v5955 = vunpack.c.l.b16 %v5931
      %v5956 = vunpack.c.l.b16 %v5932
      %v5957 = vpack.c.b16 %v5950, %v5949
      %v5958 = vpack.c.b16 %v5952, %v5951
      %v5959 = vpack.c.b16 %v5954, %v5953
      %v5960 = vpack.c.b16 %v5956, %v5955
      %v5966 = vsel %vm610, %v5923, 0
      %5968 = vmatprep.subr.bf16.mxu0 0
      %5969 = vmatpush1.bf16.msra.mxu0 %v5957
      %5970 = vmatprep.subr.bf16.mxu0 0
      %5971 = vmatpush1.bf16.msra.mxu0 %v5958
      %5972 = vmatprep.subr.bf16.mxu0 0
      %5973 = vmatpush1.bf16.msra.mxu0 %v5959
      %5974 = vmatprep.subr.bf16.mxu0 0
      %5975 = vmatpush1.bf16.msra.mxu0 %v5960
      %5976 = vmatprep.subr.bf16.mxu0 0
      %5977 = vmatpush1.bf16.msra.mxu0 0
      %5978 = vmatprep.subr.bf16.mxu0 0
      %5979 = vmatpush1.bf16.msra.mxu0 0
      %5980 = vmatprep.subr.bf16.mxu0 0
      %5981 = vmatpush1.bf16.msra.mxu0 0
      %5982 = vmatprep.subr.bf16.mxu0 0
      %5983 = vmatpush1.bf16.msra.mxu0 0
      %5984 = vmatprep.subr.bf16.mxu0 0
      %5985 = vmatpush1.bf16.msra.mxu0 0
      %5986 = vmatprep.subr.bf16.mxu0 0
      %5987 = vmatpush1.bf16.msra.mxu0 0
      %5988 = vmatprep.subr.bf16.mxu0 0
      %5989 = vmatpush1.bf16.msra.mxu0 0
      %5990 = vmatprep.subr.bf16.mxu0 0
      %5991 = vmatpush1.bf16.msra.mxu0 0
      %5992 = vmatprep.subr.bf16.mxu0 0
      %5993 = vmatpush1.bf16.msra.mxu0 0
      %5994 = vmatprep.subr.bf16.mxu0 0
      %5995 = vmatpush1.bf16.msra.mxu0 0
      %5996 = vmatprep.subr.bf16.mxu0 0
      %5997 = vmatpush1.bf16.msra.mxu0 0
      %5998 = vmatprep.subr.bf16.mxu0 0
      %5999 = vmatpush1.bf16.msra.mxu0 0
      %6000 = vmatprep.mubr.bf16.mxu0 0
      %6001 = vmatmul.mubr.bf16.gmra.mrb[0].mxu0 %v5966
      %v6002 = vpop.f32.mrb[0].mxu0
      %v6003 = vadd.f32 %v5939, %v6002
      %v6004 = vpop.f32.mrb[0].mxu0
      %v6005 = vpop.f32.mrb[0].mxu0
      %v6006 = vpop.f32.mrb[0].mxu0
      %6007 = vdwg.mxu0
      %v6008 = vadd.f32 %v5512, %v6003
      %s6009 = scalar_lea.vmem %s7, 5
      %v6010 = vld [vmem:[%s6009] sm:$0x1]
      %s6011 = scalar_lea.vmem %s8, 5
      %v6012 = vld [vmem:[%s6011] sm:$0x1]
      %v6013 = vsel %vm1096, %v6008, 0.0
      %6014 = vadd.xlane.f32.xlu0 %v6013
      %v6015 = vpop.xlane.xlu0 %6014
      %v6016 = vmul.f32 %v6015, %v1100
      %v6017 = vsub.f32 %v6008, %v6016
      %v6018 = vmul.f32 %v6017, %v6017
      %v6019 = vsel %vm1096, %v6018, 0.0
      %6020 = vadd.xlane.f32.xlu0 %v6019
      %v6021 = vpop.xlane.xlu0 %6020
      %v6022 = vmul.f32 %v6021, %v1100
      %v6023 = vadd.f32 %v6022, 1e-06
      %v6024 = vrsqrt.pop %v6023
      %v6025 = vmul.f32 %v6017, %v6024
      %v6027 = vlaneseq
      %v6028 = vshrl.u32 %v6027, 7
      %v6029 = vsub.s32 0, %v6028
      %v6030 = vrot.slane %v6010, %v6029
      %v6032 = vmul.f32 %v6025, %v6030
      %v6034 = vlaneseq
      %v6035 = vshrl.u32 %v6034, 7
      %v6036 = vsub.s32 0, %v6035
      %v6037 = vrot.slane %v6012, %v6036
      %v6039 = vadd.f32 %v6032, %v6037
      %v6040 = vpack.c.bf16 %v6039, %v6039
      %s6041 = scalar_lea.vmem %s9, 320
      %v6042 = vld [vmem:[%s6041] sm:$0xff]
      %v6043 = vld [vmem:[%s6041 + $0x8] sm:$0xff]
      %v6044 = vld [vmem:[%s6041 + $0x10] sm:$0xff]
      %v6045 = vld [vmem:[%s6041 + $0x18] sm:$0xff]
      %v6046 = vld [vmem:[%s6041 + $0x20] sm:$0xff]
      %v6047 = vld [vmem:[%s6041 + $0x28] sm:$0xff]
      %v6048 = vld [vmem:[%s6041 + $0x30] sm:$0xff]
      %v6049 = vld [vmem:[%s6041 + $0x38] sm:$0xff]
      %s6050 = scalar_lea.vmem %s10, 10
      %v6051 = vld [vmem:[%s6050] sm:$0x3]
      %v6053 = vlaneseq
      %v6054 = vshrl.u32 %v6053, 7
      %v6055 = vsub.s32 0, %v6054
      %v6056 = vrot.slane %v6051, %v6055
      %v6057 = vlaneseq
      %v6058 = vshrl.u32 %v6057, 7
      %v6059 = vsub.s32 1, %v6058
      %v6060 = vrot.slane %v6051, %v6059
      %v6071 = vunpack.c.l.b16 %v6042
      %v6072 = vunpack.c.h.b16 %v6042
      %v6073 = vunpack.c.l.b16 %v6043
      %v6074 = vunpack.c.h.b16 %v6043
      %v6075 = vunpack.c.l.b16 %v6044
      %v6076 = vunpack.c.h.b16 %v6044
      %v6077 = vunpack.c.l.b16 %v6045
      %v6078 = vunpack.c.h.b16 %v6045
      %v6079 = vunpack.c.l.b16 %v6046
      %v6080 = vunpack.c.h.b16 %v6046
      %v6081 = vunpack.c.l.b16 %v6047
      %v6082 = vunpack.c.h.b16 %v6047
      %v6083 = vunpack.c.l.b16 %v6048
      %v6084 = vunpack.c.h.b16 %v6048
      %v6085 = vunpack.c.l.b16 %v6049
      %v6086 = vunpack.c.h.b16 %v6049
      %v6087 = vpack.c.b16 %v6073, %v6071
      %v6088 = vpack.c.b16 %v6074, %v6072
      %v6089 = vpack.c.b16 %v6077, %v6075
      %v6090 = vpack.c.b16 %v6078, %v6076
      %v6091 = vpack.c.b16 %v6081, %v6079
      %v6092 = vpack.c.b16 %v6082, %v6080
      %v6093 = vpack.c.b16 %v6085, %v6083
      %v6094 = vpack.c.b16 %v6086, %v6084
      %v6104 = vsel %vm610, %v6040, 0
      %6106 = vmatprep.subr.bf16.mxu0 %v6088
      %6107 = vmatpush1.bf16.msra.mxu0 %v6087
      %6108 = vmatprep.subr.bf16.mxu0 %v6090
      %6109 = vmatpush1.bf16.msra.mxu0 %v6089
      %6110 = vmatprep.subr.bf16.mxu0 %v6092
      %6111 = vmatpush1.bf16.msra.mxu0 %v6091
      %6112 = vmatprep.subr.bf16.mxu0 %v6094
      %6113 = vmatpush1.bf16.msra.mxu0 %v6093
      %6114 = vmatprep.subr.bf16.mxu0 0
      %6115 = vmatpush1.bf16.msra.mxu0 0
      %6116 = vmatprep.subr.bf16.mxu0 0
      %6117 = vmatpush1.bf16.msra.mxu0 0
      %6118 = vmatprep.subr.bf16.mxu0 0
      %6119 = vmatpush1.bf16.msra.mxu0 0
      %6120 = vmatprep.subr.bf16.mxu0 0
      %6121 = vmatpush1.bf16.msra.mxu0 0
      %6122 = vmatprep.subr.bf16.mxu0 0
      %6123 = vmatpush1.bf16.msra.mxu0 0
      %6124 = vmatprep.subr.bf16.mxu0 0
      %6125 = vmatpush1.bf16.msra.mxu0 0
      %6126 = vmatprep.subr.bf16.mxu0 0
      %6127 = vmatpush1.bf16.msra.mxu0 0
      %6128 = vmatprep.subr.bf16.mxu0 0
      %6129 = vmatpush1.bf16.msra.mxu0 0
      %6130 = vmatprep.subr.bf16.mxu0 0
      %6131 = vmatpush1.bf16.msra.mxu0 0
      %6132 = vmatprep.subr.bf16.mxu0 0
      %6133 = vmatpush1.bf16.msra.mxu0 0
      %6134 = vmatprep.subr.bf16.mxu0 0
      %6135 = vmatpush1.bf16.msra.mxu0 0
      %6136 = vmatprep.subr.bf16.mxu0 0
      %6137 = vmatpush1.bf16.msra.mxu0 0
      %6138 = vmatprep.mubr.bf16.mxu0 0
      %6139 = vmatmul.mubr.bf16.gmra.mrb[0].mxu0 %v6104
      %v6140 = vpop.f32.mrb[0].mxu0
      %v6141 = vadd.f32 %v6056, %v6140
      %v6142 = vpop.f32.mrb[0].mxu0
      %v6143 = vadd.f32 %v6060, %v6142
      %v6144 = vpop.f32.mrb[0].mxu0
      %v6145 = vpop.f32.mrb[0].mxu0
      %6146 = vdwg.mxu0
      %v6147 = vmul.f32 %v6141, 0.5
      %v6148 = vmul.f32 %v6143, 0.5
      %v6149 = vmul.f32 %v6141, 0.70710677
      %v6150 = vmul.f32 %v6143, 0.70710677
      %v6151 = verf.f32.pop %v6149
      %v6152 = verf.f32.pop %v6150
      %v6153 = vadd.f32 %v6151, 1.0
      %v6154 = vadd.f32 %v6152, 1.0
      %v6155 = vmul.f32 %v6147, %v6153
      %v6156 = vmul.f32 %v6148, %v6154
      %v6157 = vpack.c.bf16 %v6155, %v6155
      %v6158 = vpack.c.bf16 %v6156, %v6156
      %s6159 = scalar_lea.vmem %s11, 640
      %v6160 = vld [vmem:[%s6159] sm:$0xf]
      %v6161 = vld [vmem:[%s6159 + $0x4] sm:$0xf]
      %v6162 = vld [vmem:[%s6159 + $0x8] sm:$0xf]
      %v6163 = vld [vmem:[%s6159 + $0xc] sm:$0xf]
      %v6164 = vld [vmem:[%s6159 + $0x10] sm:$0xf]
      %v6165 = vld [vmem:[%s6159 + $0x14] sm:$0xf]
      %v6166 = vld [vmem:[%s6159 + $0x18] sm:$0xf]
      %v6167 = vld [vmem:[%s6159 + $0x1c] sm:$0xf]
      %v6168 = vld [vmem:[%s6159 + $0x20] sm:$0xf]
      %v6169 = vld [vmem:[%s6159 + $0x24] sm:$0xf]
      %v6170 = vld [vmem:[%s6159 + $0x28] sm:$0xf]
      %v6171 = vld [vmem:[%s6159 + $0x2c] sm:$0xf]
      %v6172 = vld [vmem:[%s6159 + $0x30] sm:$0xf]
      %v6173 = vld [vmem:[%s6159 + $0x34] sm:$0xf]
      %v6174 = vld [vmem:[%s6159 + $0x38] sm:$0xf]
      %v6175 = vld [vmem:[%s6159 + $0x3c] sm:$0xf]
      %v6176 = vld [vmem:[%s6159 + $0x40] sm:$0xf]
      %v6177 = vld [vmem:[%s6159 + $0x44] sm:$0xf]
      %v6178 = vld [vmem:[%s6159 + $0x48] sm:$0xf]
      %v6179 = vld [vmem:[%s6159 + $0x4c] sm:$0xf]
      %v6180 = vld [vmem:[%s6159 + $0x50] sm:$0xf]
      %v6181 = vld [vmem:[%s6159 + $0x54] sm:$0xf]
      %v6182 = vld [vmem:[%s6159 + $0x58] sm:$0xf]
      %v6183 = vld [vmem:[%s6159 + $0x5c] sm:$0xf]
      %v6184 = vld [vmem:[%s6159 + $0x60] sm:$0xf]
      %v6185 = vld [vmem:[%s6159 + $0x64] sm:$0xf]
      %v6186 = vld [vmem:[%s6159 + $0x68] sm:$0xf]
      %v6187 = vld [vmem:[%s6159 + $0x6c] sm:$0xf]
      %v6188 = vld [vmem:[%s6159 + $0x70] sm:$0xf]
      %v6189 = vld [vmem:[%s6159 + $0x74] sm:$0xf]
      %v6190 = vld [vmem:[%s6159 + $0x78] sm:$0xf]
      %v6191 = vld [vmem:[%s6159 + $0x7c] sm:$0xf]
      %s6192 = scalar_lea.vmem %s12, 5
      %v6193 = vld [vmem:[%s6192] sm:$0x1]
      %v6195 = vlaneseq
      %v6196 = vshrl.u32 %v6195, 7
      %v6197 = vsub.s32 0, %v6196
      %v6198 = vrot.slane %v6193, %v6197
      %v6232 = vunpack.c.l.b16 %v6160
      %v6233 = vunpack.c.l.b16 %v6161
      %v6234 = vunpack.c.l.b16 %v6162
      %v6235 = vunpack.c.l.b16 %v6163
      %v6236 = vunpack.c.l.b16 %v6164
      %v6237 = vunpack.c.l.b16 %v6165
      %v6238 = vunpack.c.l.b16 %v6166
      %v6239 = vunpack.c.l.b16 %v6167
      %v6240 = vunpack.c.l.b16 %v6168
      %v6241 = vunpack.c.l.b16 %v6169
      %v6242 = vunpack.c.l.b16 %v6170
      %v6243 = vunpack.c.l.b16 %v6171
      %v6244 = vunpack.c.l.b16 %v6172
      %v6245 = vunpack.c.l.b16 %v6173
      %v6246 = vunpack.c.l.b16 %v6174
      %v6247 = vunpack.c.l.b16 %v6175
      %v6248 = vunpack.c.l.b16 %v6176
      %v6249 = vunpack.c.l.b16 %v6177
      %v6250 = vunpack.c.l.b16 %v6178
      %v6251 = vunpack.c.l.b16 %v6179
      %v6252 = vunpack.c.l.b16 %v6180
      %v6253 = vunpack.c.l.b16 %v6181
      %v6254 = vunpack.c.l.b16 %v6182
      %v6255 = vunpack.c.l.b16 %v6183
      %v6256 = vunpack.c.l.b16 %v6184
      %v6257 = vunpack.c.l.b16 %v6185
      %v6258 = vunpack.c.l.b16 %v6186
      %v6259 = vunpack.c.l.b16 %v6187
      %v6260 = vunpack.c.l.b16 %v6188
      %v6261 = vunpack.c.l.b16 %v6189
      %v6262 = vunpack.c.l.b16 %v6190
      %v6263 = vunpack.c.l.b16 %v6191
      %v6264 = vpack.c.b16 %v6233, %v6232
      %v6265 = vpack.c.b16 %v6235, %v6234
      %v6266 = vpack.c.b16 %v6237, %v6236
      %v6267 = vpack.c.b16 %v6239, %v6238
      %v6268 = vpack.c.b16 %v6241, %v6240
      %v6269 = vpack.c.b16 %v6243, %v6242
      %v6270 = vpack.c.b16 %v6245, %v6244
      %v6271 = vpack.c.b16 %v6247, %v6246
      %v6272 = vpack.c.b16 %v6249, %v6248
      %v6273 = vpack.c.b16 %v6251, %v6250
      %v6274 = vpack.c.b16 %v6253, %v6252
      %v6275 = vpack.c.b16 %v6255, %v6254
      %v6276 = vpack.c.b16 %v6257, %v6256
      %v6277 = vpack.c.b16 %v6259, %v6258
      %v6278 = vpack.c.b16 %v6261, %v6260
      %v6279 = vpack.c.b16 %v6263, %v6262
      %6296 = vmatprep.subr.bf16.mxu0 0
      %6297 = vmatpush1.bf16.msra.mxu0 %v6264
      %6298 = vmatprep.subr.bf16.mxu0 0
      %6299 = vmatpush1.bf16.msra.mxu0 %v6265
      %6300 = vmatprep.subr.bf16.mxu0 0
      %6301 = vmatpush1.bf16.msra.mxu0 %v6266
      %6302 = vmatprep.subr.bf16.mxu0 0
      %6303 = vmatpush1.bf16.msra.mxu0 %v6267
      %6304 = vmatprep.subr.bf16.mxu0 0
      %6305 = vmatpush1.bf16.msra.mxu0 %v6268
      %6306 = vmatprep.subr.bf16.mxu0 0
      %6307 = vmatpush1.bf16.msra.mxu0 %v6269
      %6308 = vmatprep.subr.bf16.mxu0 0
      %6309 = vmatpush1.bf16.msra.mxu0 %v6270
      %6310 = vmatprep.subr.bf16.mxu0 0
      %6311 = vmatpush1.bf16.msra.mxu0 %v6271
      %6312 = vmatprep.subr.bf16.mxu0 0
      %6313 = vmatpush1.bf16.msra.mxu0 %v6272
      %6314 = vmatprep.subr.bf16.mxu0 0
      %6315 = vmatpush1.bf16.msra.mxu0 %v6273
      %6316 = vmatprep.subr.bf16.mxu0 0
      %6317 = vmatpush1.bf16.msra.mxu0 %v6274
      %6318 = vmatprep.subr.bf16.mxu0 0
      %6319 = vmatpush1.bf16.msra.mxu0 %v6275
      %6320 = vmatprep.subr.bf16.mxu0 0
      %6321 = vmatpush1.bf16.msra.mxu0 %v6276
      %6322 = vmatprep.subr.bf16.mxu0 0
      %6323 = vmatpush1.bf16.msra.mxu0 %v6277
      %6324 = vmatprep.subr.bf16.mxu0 0
      %6325 = vmatpush1.bf16.msra.mxu0 %v6278
      %6326 = vmatprep.subr.bf16.mxu0 0
      %6327 = vmatpush1.bf16.msra.mxu0 %v6279
      %6328 = vmatprep.mubr.bf16.mxu0 %v6158
      %6329 = vmatmul.mubr.bf16.gmra.mrb[0].mxu0 %v6157
      %v6330 = vpop.f32.mrb[0].mxu0
      %v6331 = vadd.f32 %v6198, %v6330
      %v6332 = vpop.f32.mrb[0].mxu0
      %v6333 = vpop.f32.mrb[0].mxu0
      %v6334 = vpop.f32.mrb[0].mxu0
      %6335 = vdwg.mxu0
      %v6336 = vadd.f32 %v6039, %v6331
      %s6337 = scalar_lea.vmem %s13, 5
      %v6338 = vld [vmem:[%s6337] sm:$0x1]
      %s6339 = scalar_lea.vmem %s14, 5
      %v6340 = vld [vmem:[%s6339] sm:$0x1]
      %v6341 = vsel %vm1096, %v6336, 0.0
      %6342 = vadd.xlane.f32.xlu0 %v6341
      %v6343 = vpop.xlane.xlu0 %6342
      %v6344 = vmul.f32 %v6343, %v1100
      %v6345 = vsub.f32 %v6336, %v6344
      %v6346 = vmul.f32 %v6345, %v6345
      %v6347 = vsel %vm1096, %v6346, 0.0
      %6348 = vadd.xlane.f32.xlu0 %v6347
      %v6349 = vpop.xlane.xlu0 %6348
      %v6350 = vmul.f32 %v6349, %v1100
      %v6351 = vadd.f32 %v6350, 1e-06
      %v6352 = vrsqrt.pop %v6351
      %v6353 = vmul.f32 %v6345, %v6352
      %v6355 = vlaneseq
      %v6356 = vshrl.u32 %v6355, 7
      %v6357 = vsub.s32 0, %v6356
      %v6358 = vrot.slane %v6338, %v6357
      %v6360 = vmul.f32 %v6353, %v6358
      %v6362 = vlaneseq
      %v6363 = vshrl.u32 %v6362, 7
      %v6364 = vsub.s32 0, %v6363
      %v6365 = vrot.slane %v6340, %v6364
      %v6367 = vadd.f32 %v6360, %v6365
      %v6368 = vpack.c.bf16 %v6367, %v6367
      %v6369 = vld [vmem:[%s15] sm:$0xf]
      %v6370 = vld [vmem:[%s15 + $0x4] sm:$0xf]
      %v6371 = vld [vmem:[%s15 + $0x8] sm:$0xf]
      %v6372 = vld [vmem:[%s15 + $0xc] sm:$0xf]
      %v6373 = vld [vmem:[%s15 + $0x10] sm:$0xf]
      %v6374 = vld [vmem:[%s15 + $0x14] sm:$0xf]
      %v6375 = vld [vmem:[%s15 + $0x18] sm:$0xf]
      %v6376 = vld [vmem:[%s15 + $0x1c] sm:$0xf]
      %v6377 = vld [vmem:[%s16] sm:$0x1]
      %v6379 = vlaneseq
      %v6380 = vshrl.u32 %v6379, 7
      %v6381 = vsub.s32 0, %v6380
      %v6382 = vrot.slane %v6377, %v6381
      %v6392 = vunpack.c.l.b16 %v6369
      %v6393 = vunpack.c.l.b16 %v6370
      %v6394 = vunpack.c.l.b16 %v6371
      %v6395 = vunpack.c.l.b16 %v6372
      %v6396 = vunpack.c.l.b16 %v6373
      %v6397 = vunpack.c.l.b16 %v6374
      %v6398 = vunpack.c.l.b16 %v6375
      %v6399 = vunpack.c.l.b16 %v6376
      %v6400 = vpack.c.b16 %v6393, %v6392
      %v6401 = vpack.c.b16 %v6395, %v6394
      %v6402 = vpack.c.b16 %v6397, %v6396
      %v6403 = vpack.c.b16 %v6399, %v6398
      %v6409 = vsel %vm610, %v6368, 0
      %6411 = vmatprep.subr.bf16.mxu0 0
      %6412 = vmatpush1.bf16.msra.mxu0 %v6400
      %6413 = vmatprep.subr.bf16.mxu0 0
      %6414 = vmatpush1.bf16.msra.mxu0 %v6401
      %6415 = vmatprep.subr.bf16.mxu0 0
      %6416 = vmatpush1.bf16.msra.mxu0 %v6402
      %6417 = vmatprep.subr.bf16.mxu0 0
      %6418 = vmatpush1.bf16.msra.mxu0 %v6403
      %6419 = vmatprep.subr.bf16.mxu0 0
      %6420 = vmatpush1.bf16.msra.mxu0 0
      %6421 = vmatprep.subr.bf16.mxu0 0
      %6422 = vmatpush1.bf16.msra.mxu0 0
      %6423 = vmatprep.subr.bf16.mxu0 0
      %6424 = vmatpush1.bf16.msra.mxu0 0
      %6425 = vmatprep.subr.bf16.mxu0 0
      %6426 = vmatpush1.bf16.msra.mxu0 0
      %6427 = vmatprep.subr.bf16.mxu0 0
      %6428 = vmatpush1.bf16.msra.mxu0 0
      %6429 = vmatprep.subr.bf16.mxu0 0
      %6430 = vmatpush1.bf16.msra.mxu0 0
      %6431 = vmatprep.subr.bf16.mxu0 0
      %6432 = vmatpush1.bf16.msra.mxu0 0
      %6433 = vmatprep.subr.bf16.mxu0 0
      %6434 = vmatpush1.bf16.msra.mxu0 0
      %6435 = vmatprep.subr.bf16.mxu0 0
      %6436 = vmatpush1.bf16.msra.mxu0 0
      %6437 = vmatprep.subr.bf16.mxu0 0
      %6438 = vmatpush1.bf16.msra.mxu0 0
      %6439 = vmatprep.subr.bf16.mxu0 0
      %6440 = vmatpush1.bf16.msra.mxu0 0
      %6441 = vmatprep.subr.bf16.mxu0 0
      %6442 = vmatpush1.bf16.msra.mxu0 0
      %6443 = vmatprep.mubr.bf16.mxu0 0
      %6444 = vmatmul.mubr.bf16.gmra.mrb[0].mxu0 %v6409
      %v6445 = vpop.f32.mrb[0].mxu0
      %v6446 = vadd.f32 %v6382, %v6445
      %v6447 = vpop.f32.mrb[0].mxu0
      %v6448 = vpop.f32.mrb[0].mxu0
      %v6449 = vpop.f32.mrb[0].mxu0
      %6450 = vdwg.mxu0
      %v6451 = vsel %vm1077, %v6446, -inf
      %6452 = vmax.xlane.f32.xlu0 %v6451
      %v6453 = vpop.xlane.xlu0 %6452
      %v6454 = vsub.f32 %v6446, %v6453
      %v6455 = vmul.f32 %v6454, 1.442695
      %v6456 = vpow.pop %v6455
      %v6457 = vsel %vm1077, %v6456, 0.0
      %6458 = vadd.xlane.f32.xlu0 %v6457
      %v6459 = vpop.xlane.xlu0 %6458
      %v6460 = vrcp.pop %v6459
      %v6461 = vmul.f32 %v6456, %v6460
      %6462 = vst [vmem:[%s546] sm:$0x1f] %v6461
      %p6463 = scmp.lt.s32.totalorder %s28, 1
      %s6464 = scalar_select %p6463, %s28, 1
      %s6465 = smul.addr %s6464, 8
      %s6466 = scalar_lea.vmem %s17, %s6465
      // Predicated region
      $region89: #{cppd_forward_test.1} parent=87 // pred_check
        %p6467 = pneg %p408
      $region90: #{cppd_forward_test.1} parent=87 // pred_check_branch
        %6469 = sbr.rel (%p6467) target = $region92
      $region91: #{cppd_forward_test.1} parent=87 // pred_region
        _
      $region92: #{cppd_forward_test.1} parent=87 // pred_fallthru
        _
    $region88: #{cppd_forward_test.1} parent=5 // pred_fallthru
      _
    %p6470 = scmp.le.s32.totalorder 2, %s23
    // Predicated region
    $region93: #{cppd_forward_test.1} parent=5 // pred_check
      %p6471 = pneg %p6470
    $region94: #{cppd_forward_test.1} parent=5 // pred_check_branch
      %6473 = sbr.rel (%p6471) target = $region96
    $region95: #{cppd_forward_test.1} parent=5 // pred_region
      %s6474 = ssub.s32 %s23, 2
      // Predicated region
      $region97: #{cppd_forward_test.1} parent=95 // pred_check
        %p6475 = pneg %p414
      $region98: #{cppd_forward_test.1} parent=95 // pred_check_branch
        %6477 = sbr.rel (%p6475) target = $region100
      $region99: #{cppd_forward_test.1} parent=95 // pred_region
        %p6478 = scmp.lt.s32.totalorder %s29, 1
        %s6479 = scalar_select %p6478, %s29, 1
        %s6480 = smul.addr %s6479, 8
        %s6481 = scalar_lea.vmem %s17, %s6480
      $region100: #{cppd_forward_test.1} parent=95 // pred_fallthru
        _
    $region96: #{cppd_forward_test.1} parent=5 // pred_fallthru
      _
  $region6: #{cppd_forward_test.1} parent=0 // loop_footer
    %s27 = sadd.s32 1, %s23
  $region7: #{cppd_forward_test.1} parent=0 // loop_footer_branch
    %22 = sbr.rel target = $region3
  $region8: #{cppd_forward_test.1} parent=0 // loop_exit
    _

</llo_original>
